<compile_context>
chip_gen: v6e
topology: v6e:2x2x1
jax: 0.10.0
libtpu: 0.0.40
codegen_flags: <defaults>
</compile_context>

<pallas_src>
from collections import OrderedDict

import jax
import jax.numpy as jnp
from jax.experimental import pallas as pl
from jax.experimental.pallas import tpu as pltpu

# ----------------------------- config --------------------------------------
N_NODES = 8
EMB_DIM = 16
HIDDEN = 32
N_HIDDEN = 2          # number of (ReLU, Linear(H,H)) blocks in the MLP
TILE = 25600          # lane-dense output tile (multiple of 128); 8 tiles total

# (name, flat_out_dim, final view shape) — matches the PyTorch forward exactly.
HEAD_SPECS = [
    ("vitals_conv1.weight", 1 * 32 * 3, (32, 1, 3)),
    ("vitals_conv1.bias",   32,         (32,)),
    ("vitals_conv2.weight", 64 * 32 * 3, (64, 32, 3)),
    ("vitals_conv2.bias",   64,         (64,)),
    ("vitals_conv3.weight", 128 * 64 * 3, (128, 64, 3)),
    ("vitals_conv3.bias",   128,        (128,)),
    ("labs_conv1.weight",   1 * 32 * 3, (32, 1, 3)),
    ("labs_conv1.bias",     32,         (32,)),
    ("labs_conv2.weight",   64 * 32 * 3, (64, 32, 3)),
    ("labs_conv2.bias",     64,         (64,)),
    ("labs_conv3.weight",   128 * 64 * 3, (128, 64, 3)),
    ("labs_conv3.bias",     128,        (128,)),
    ("fc1.weight",          128 * (128 * 2 * 4), (128, 128 * 2 * 4)),
    ("fc1.bias",            128,        (128,)),
    ("fc2.weight",          64 * 128,   (64, 128)),
    ("fc2.bias",            64,         (64,)),
    ("fc3.weight",          32 * 64,    (32, 64)),
    ("fc3.bias",            32,         (32,)),
    ("output.weight",       1 * 32,     (1, 32)),
    ("output.bias",         1,          (1,)),
]
TOTAL = sum(n for _, n, _ in HEAD_SPECS)            # 203649
N_TILES = pl.cdiv(TOTAL, TILE)                      # 8
TOTAL_PAD = N_TILES * TILE                          # 204800


# ----------------------------- kernel ---------------------------------------
def hyper_kernel(emd_ref, w0_ref, b0_ref, wh_ref, bh_ref, w_ref, b_ref, o_ref):
    """Fused: recompute tiny MLP features, then one lane-dense head tile.

    The MLP recompute (a few 32x32 f32 matmuls) is free — it hides under the
    1.6 MB bf16 weight-tile DMA.  Recomputing per step (instead of caching in
    scratch at program_id==0) keeps the 'parallel' grid axis safe when it is
    sharded across two TensorCores on v7x.
    """
    h = jnp.dot(emd_ref[...], w0_ref[...],
                preferred_element_type=jnp.float32) + b0_ref[...]
    for i in range(N_HIDDEN):            # static unroll, N_HIDDEN is tiny
        h = jnp.maximum(h, 0.0)
        h = jnp.dot(h, wh_ref[i], preferred_element_type=jnp.float32) + bh_ref[i]

    # (1, H) bf16 @ (H, TILE) bf16 with f32 MXU accumulation.
    # One contiguous bf16 weight block per step; output stays f32.
    h_bf = h.astype(jnp.bfloat16)
    o_ref[...] = (
        jnp.dot(h_bf, w_ref[0], preferred_element_type=jnp.float32)
        + b_ref[0].astype(jnp.float32)
    )
    # TODO(synk): verify via pl.lower_as_mlir that the M=1 dot lowers to vmatmul
    # (MXU) and not a VPU broadcast-FMA chain; if not, batch rows to force MXU.


# ----------------------------- wrapper ---------------------------------------
# Advisory cost estimate: lets XLA overlap the surrounding gather / slicing
# with this (bandwidth-bound) custom call.
_MLP_FLOPS = 2 * EMB_DIM * HIDDEN + N_HIDDEN * 2 * HIDDEN * HIDDEN
_COST = pl.CostEstimate(
    flops=N_TILES * (_MLP_FLOPS + 2 * HIDDEN * TILE),
    transcendentals=0,
    bytes_accessed=(2 * HIDDEN * TOTAL_PAD          # heads_w read (bf16)
                    + 2 * TOTAL_PAD                 # heads_b read (bf16)
                    + 4 * TOTAL_PAD                 # output write (f32)
                    + 4 * (EMB_DIM * HIDDEN + N_HIDDEN * HIDDEN * HIDDEN
                           + (N_HIDDEN + 1) * HIDDEN + EMB_DIM)),
)


@jax.jit
def cnn_hyper_forward(idx, params):
    # Embedding lookup (single scalar index, as the PyTorch forward implies).
    emd = params["embeddings"][idx][None, :]            # (1, E)

    out_flat = pl.pallas_call(
        hyper_kernel,
        out_shape=jax.ShapeDtypeStruct((1, TOTAL_PAD), jnp.float32),
        grid_spec=pltpu.PrefetchScalarGridSpec(
            num_scalar_prefetch=0,
            grid=(N_TILES,),
            in_specs=[
                # tiny MLP operands: whole array, resident across all steps
                pl.BlockSpec((1, EMB_DIM), lambda j: (0, 0)),
                pl.BlockSpec((EMB_DIM, HIDDEN), lambda j: (0, 0)),
                pl.BlockSpec((1, HIDDEN), lambda j: (0, 0)),
                pl.BlockSpec((N_HIDDEN, HIDDEN, HIDDEN), lambda j: (0, 0, 0)),
                pl.BlockSpec((N_HIDDEN, 1, HIDDEN), lambda j: (0, 0, 0)),
                # head weights (bf16): tile-major, one contiguous block per step
                pl.BlockSpec((1, HIDDEN, TILE), lambda j: (j, 0, 0)),
                pl.BlockSpec((1, 1, TILE), lambda j: (j, 0, 0)),
            ],
            out_specs=pl.BlockSpec((1, TILE), lambda j: (0, j)),
        ),
        compiler_params=pltpu.CompilerParams(
            dimension_semantics=("parallel",),
            vmem_limit_bytes=32 * 1024 * 1024),
        cost_estimate=_COST,
    )(emd, params["mlp_w0"], params["mlp_b0"], params["mlp_wh"],
      params["mlp_bh"], params["heads_w"], params["heads_b"])

    out_flat = out_flat[0]                               # (TOTAL_PAD,)

    # Unflatten into the target-network parameter dict (module semantics).
    # NOTE: if a downstream consumer can take the flat slab directly, skip this
    # to save ~20 tiny slice/reshape ops and ~1.6 MB of extra HBM traffic.
    weights = OrderedDict()
    off = 0
    for name, n, shape in HEAD_SPECS:
        weights[name] = out_flat[off:off + n].reshape(shape)
        off += n
    return weights, emd[0]


def init_params(key):
    """Deterministic synthetic parameter init (not a checkpoint load)."""
    ks = jax.random.split(key, 6)

    def uinit(k, shape, fan_in):
        bound = 1.0 / jnp.sqrt(float(fan_in))
        return jax.random.uniform(k, shape, jnp.float32, -bound, bound)

    params = {}
    params["embeddings"] = jax.random.normal(ks[0], (N_NODES, EMB_DIM), jnp.float32)
    params["mlp_w0"] = uinit(ks[1], (EMB_DIM, HIDDEN), EMB_DIM)
    params["mlp_b0"] = uinit(ks[2], (1, HIDDEN), EMB_DIM)
    params["mlp_wh"] = uinit(ks[3], (max(N_HIDDEN, 1), HIDDEN, HIDDEN), HIDDEN)
    params["mlp_bh"] = uinit(ks[4], (max(N_HIDDEN, 1), 1, HIDDEN), HIDDEN)

    # Concatenated head weights, zero-padded past TOTAL, stored in bf16, then
    # re-laid out tile-major (N_TILES, HIDDEN, TILE) so each grid step's block
    # is one contiguous HBM region.
    hk = jax.random.split(ks[5], 2 * len(HEAD_SPECS))
    w_chunks, b_chunks = [], []
    for i, (_, n, _) in enumerate(HEAD_SPECS):
        w_chunks.append(uinit(hk[2 * i], (HIDDEN, n), HIDDEN))
        b_chunks.append(uinit(hk[2 * i + 1], (1, n), HIDDEN))
    heads_w = jnp.concatenate(w_chunks, axis=1)          # (H, TOTAL)
    heads_b = jnp.concatenate(b_chunks, axis=1)          # (1, TOTAL)
    pad = TOTAL_PAD - TOTAL
    heads_w = jnp.pad(heads_w, ((0, 0), (0, pad))).astype(jnp.bfloat16)
    heads_b = jnp.pad(heads_b, ((0, 0), (0, pad))).astype(jnp.bfloat16)
    params["heads_w"] = heads_w.reshape(HIDDEN, N_TILES, TILE).transpose(1, 0, 2)
    params["heads_b"] = heads_b.reshape(1, N_TILES, TILE).transpose(1, 0, 2)
    return params


def reference_forward(idx, params):
    """Pure-JAX reference, quantizing identically to the kernel's bf16 path."""
    emd = params["embeddings"][idx][None, :]
    h = emd @ params["mlp_w0"] + params["mlp_b0"]
    for i in range(N_HIDDEN):
        h = jnp.maximum(h, 0.0)
        h = h @ params["mlp_wh"][i] + params["mlp_bh"][i]
    # Match the kernel: round h to bf16, use the stored bf16 heads, f32 math.
    h_q = h.astype(jnp.bfloat16).astype(jnp.float32)
    w2d = params["heads_w"].transpose(1, 0, 2).reshape(
        HIDDEN, TOTAL_PAD).astype(jnp.float32)
    b2d = params["heads_b"].transpose(1, 0, 2).reshape(
        1, TOTAL_PAD).astype(jnp.float32)
    out = (jnp.dot(h_q, w2d, precision=jax.lax.Precision.HIGHEST) + b2d)[0]
    weights = OrderedDict()
    off = 0
    for name, n, shape in HEAD_SPECS:
        weights[name] = out[off:off + n].reshape(shape)
        off += n
    return weights, emd[0]


if __name__ == "__main__":
    key = jax.random.PRNGKey(0)
    params = init_params(key)
    idx = jnp.array(3, dtype=jnp.int32)   # scalar node index, as in the module

    weights, emd = cnn_hyper_forward(idx, params)
    jax.block_until_ready(weights)
    jax.block_until_ready(emd)

    ref_weights, ref_emd = reference_forward(idx, params)
    for name in ref_weights:
        assert weights[name].shape == ref_weights[name].shape, name
        assert jnp.allclose(weights[name], ref_weights[name],
                            rtol=5e-3, atol=5e-3), name
    assert jnp.allclose(emd, ref_emd, atol=1e-5)

    print("KERNEL_OK")
</pallas_src>

<mosaic_0001>
module attributes {stable_mosaic.version = 11 : i64} {
  func.func @hyper_kernel(%arg0: i32, %arg1: memref<1x16xf32, #tpu.memory_space<vmem>>, %arg2: memref<16x32xf32, #tpu.memory_space<vmem>>, %arg3: memref<1x32xf32, #tpu.memory_space<vmem>>, %arg4: memref<2x32x32xf32, #tpu.memory_space<vmem>>, %arg5: memref<2x1x32xf32, #tpu.memory_space<vmem>>, %arg6: memref<1x32x25600xbf16, #tpu.memory_space<vmem>>, %arg7: memref<1x1x25600xbf16, #tpu.memory_space<vmem>>, %arg8: memref<1x25600xf32, #tpu.memory_space<vmem>>) attributes {dimension_semantics = [#tpu.dimension_semantics<parallel>], iteration_bounds = array<i64: 8>, scalar_prefetch = 0 : i64, scratch_operands = 0 : i64, tpu.core_type = #tpu.core_type<tc>, window_params = [{pipeline_mode = #tpu.pipeline_mode<synchronous>, transform_indices = @transform_0, window_bounds = array<i64: 1, 16>}, {pipeline_mode = #tpu.pipeline_mode<synchronous>, transform_indices = @transform_1, window_bounds = array<i64: 16, 32>}, {pipeline_mode = #tpu.pipeline_mode<synchronous>, transform_indices = @transform_2, window_bounds = array<i64: 1, 32>}, {pipeline_mode = #tpu.pipeline_mode<synchronous>, transform_indices = @transform_3, window_bounds = array<i64: 2, 32, 32>}, {pipeline_mode = #tpu.pipeline_mode<synchronous>, transform_indices = @transform_4, window_bounds = array<i64: 2, 1, 32>}, {transform_indices = @transform_5, window_bounds = array<i64: 1, 32, 25600>}, {transform_indices = @transform_6, window_bounds = array<i64: 1, 1, 25600>}, {transform_indices = @transform_7, window_bounds = array<i64: 1, 25600>}]} {
    %c0 = arith.constant 0 : index
    %c0_0 = arith.constant 0 : index
    %0 = vector.load %arg1[%c0, %c0_0] : memref<1x16xf32, #tpu.memory_space<vmem>>, vector<1x16xf32>
    %c0_1 = arith.constant 0 : index
    %c0_2 = arith.constant 0 : index
    %1 = vector.load %arg2[%c0_1, %c0_2] : memref<16x32xf32, #tpu.memory_space<vmem>>, vector<16x32xf32>
    %cst = arith.constant dense<0.000000e+00> : vector<1x32xf32>
    %2 = tpu.matmul %0, %1, %cst {dimension_numbers = #tpu.dot_dimension_numbers<[1], [0], [0], [1], [0, 0, 1, 1], [], []>} : vector<1x16xf32>, vector<16x32xf32>, vector<1x32xf32> -> vector<1x32xf32>
    %c0_3 = arith.constant 0 : index
    %c0_4 = arith.constant 0 : index
    %3 = vector.load %arg3[%c0_3, %c0_4] : memref<1x32xf32, #tpu.memory_space<vmem>>, vector<1x32xf32>
    %4 = arith.addf %2, %3 : vector<1x32xf32>
    %cst_5 = arith.constant 0.000000e+00 : f32
    %5 = vector.broadcast %cst_5 : f32 to vector<1x32xf32>
    %6 = arith.maximumf %4, %5 : vector<1x32xf32>
    %c0_6 = arith.constant 0 : index
    %c0_7 = arith.constant 0 : index
    %c0_8 = arith.constant 0 : index
    %7 = vector.load %arg4[%c0_6, %c0_7, %c0_8] : memref<2x32x32xf32, #tpu.memory_space<vmem>>, vector<1x32x32xf32>
    %8 = vector.shape_cast %7 : vector<1x32x32xf32> to vector<32x32xf32>
    %cst_9 = arith.constant dense<0.000000e+00> : vector<1x32xf32>
    %9 = tpu.matmul %6, %8, %cst_9 {dimension_numbers = #tpu.dot_dimension_numbers<[1], [0], [0], [1], [0, 0, 1, 1], [], []>} : vector<1x32xf32>, vector<32x32xf32>, vector<1x32xf32> -> vector<1x32xf32>
    %c0_10 = arith.constant 0 : index
    %c0_11 = arith.constant 0 : index
    %c0_12 = arith.constant 0 : index
    %10 = vector.load %arg5[%c0_10, %c0_11, %c0_12] : memref<2x1x32xf32, #tpu.memory_space<vmem>>, vector<1x1x32xf32>
    %11 = vector.shape_cast %10 : vector<1x1x32xf32> to vector<1x32xf32>
    %12 = arith.addf %9, %11 : vector<1x32xf32>
    %cst_13 = arith.constant 0.000000e+00 : f32
    %13 = vector.broadcast %cst_13 : f32 to vector<1x32xf32>
    %14 = arith.maximumf %12, %13 : vector<1x32xf32>
    %c1 = arith.constant 1 : index
    %c0_14 = arith.constant 0 : index
    %c0_15 = arith.constant 0 : index
    %15 = vector.load %arg4[%c1, %c0_14, %c0_15] : memref<2x32x32xf32, #tpu.memory_space<vmem>>, vector<1x32x32xf32>
    %16 = vector.shape_cast %15 : vector<1x32x32xf32> to vector<32x32xf32>
    %cst_16 = arith.constant dense<0.000000e+00> : vector<1x32xf32>
    %17 = tpu.matmul %14, %16, %cst_16 {dimension_numbers = #tpu.dot_dimension_numbers<[1], [0], [0], [1], [0, 0, 1, 1], [], []>} : vector<1x32xf32>, vector<32x32xf32>, vector<1x32xf32> -> vector<1x32xf32>
    %c1_17 = arith.constant 1 : index
    %c0_18 = arith.constant 0 : index
    %c0_19 = arith.constant 0 : index
    %18 = vector.load %arg5[%c1_17, %c0_18, %c0_19] : memref<2x1x32xf32, #tpu.memory_space<vmem>>, vector<1x1x32xf32>
    %19 = vector.shape_cast %18 : vector<1x1x32xf32> to vector<1x32xf32>
    %20 = arith.addf %17, %19 : vector<1x32xf32>
    %21 = arith.truncf %20 : vector<1x32xf32> to vector<1x32xbf16>
    %c0_20 = arith.constant 0 : index
    %c0_21 = arith.constant 0 : index
    %c0_22 = arith.constant 0 : index
    %22 = vector.load %arg6[%c0_20, %c0_21, %c0_22] : memref<1x32x25600xbf16, #tpu.memory_space<vmem>>, vector<1x32x25600xbf16>
    %23 = vector.shape_cast %22 : vector<1x32x25600xbf16> to vector<32x25600xbf16>
    %cst_23 = arith.constant dense<0.000000e+00> : vector<1x25600xf32>
    %24 = tpu.matmul %21, %23, %cst_23 {dimension_numbers = #tpu.dot_dimension_numbers<[1], [0], [0], [1], [0, 0, 1, 1], [], []>} : vector<1x32xbf16>, vector<32x25600xbf16>, vector<1x25600xf32> -> vector<1x25600xf32>
    %c0_24 = arith.constant 0 : index
    %c0_25 = arith.constant 0 : index
    %c0_26 = arith.constant 0 : index
    %25 = vector.load %arg7[%c0_24, %c0_25, %c0_26] : memref<1x1x25600xbf16, #tpu.memory_space<vmem>>, vector<1x1x25600xbf16>
    %26 = vector.shape_cast %25 : vector<1x1x25600xbf16> to vector<1x25600xbf16>
    %27 = arith.extf %26 : vector<1x25600xbf16> to vector<1x25600xf32>
    %28 = arith.addf %24, %27 : vector<1x25600xf32>
    %c0_27 = arith.constant 0 : index
    %c0_28 = arith.constant 0 : index
    %29 = vector.load %arg8[%c0_27, %c0_28] : memref<1x25600xf32, #tpu.memory_space<vmem>>, vector<1x25600xf32>
    tpu.vector_store %arg8[%c0_27, %c0_28], %28 {strides = array<i32>} : memref<1x25600xf32, #tpu.memory_space<vmem>>, vector<1x25600xf32>,
    return
  }
  func.func @transform_0(%arg0: i32) -> (i32, i32) {
    %c0_i32 = arith.constant 0 : i32
    %c0_i32_0 = arith.constant 0 : i32
    %c0_i32_1 = arith.constant 0 : i32
    return %c0_i32, %c0_i32_0 : i32, i32
  }
  func.func @transform_1(%arg0: i32) -> (i32, i32) {
    %c0_i32 = arith.constant 0 : i32
    %c0_i32_0 = arith.constant 0 : i32
    %c0_i32_1 = arith.constant 0 : i32
    return %c0_i32, %c0_i32_0 : i32, i32
  }
  func.func @transform_2(%arg0: i32) -> (i32, i32) {
    %c0_i32 = arith.constant 0 : i32
    %c0_i32_0 = arith.constant 0 : i32
    %c0_i32_1 = arith.constant 0 : i32
    return %c0_i32, %c0_i32_0 : i32, i32
  }
  func.func @transform_3(%arg0: i32) -> (i32, i32, i32) {
    %c0_i32 = arith.constant 0 : i32
    %c0_i32_0 = arith.constant 0 : i32
    %c0_i32_1 = arith.constant 0 : i32
    %c0_i32_2 = arith.constant 0 : i32
    return %c0_i32, %c0_i32_0, %c0_i32_1 : i32, i32, i32
  }
  func.func @transform_4(%arg0: i32) -> (i32, i32, i32) {
    %c0_i32 = arith.constant 0 : i32
    %c0_i32_0 = arith.constant 0 : i32
    %c0_i32_1 = arith.constant 0 : i32
    %c0_i32_2 = arith.constant 0 : i32
    return %c0_i32, %c0_i32_0, %c0_i32_1 : i32, i32, i32
  }
  func.func @transform_5(%arg0: i32) -> (i32, i32, i32) {
    %c0_i32 = arith.constant 0 : i32
    %c0_i32_0 = arith.constant 0 : i32
    %c0_i32_1 = arith.constant 0 : i32
    return %arg0, %c0_i32, %c0_i32_0 : i32, i32, i32
  }
  func.func @transform_6(%arg0: i32) -> (i32, i32, i32) {
    %c0_i32 = arith.constant 0 : i32
    %c0_i32_0 = arith.constant 0 : i32
    %c0_i32_1 = arith.constant 0 : i32
    return %arg0, %c0_i32, %c0_i32_0 : i32, i32, i32
  }
  func.func @transform_7(%arg0: i32) -> (i32, i32) {
    %c0_i32 = arith.constant 0 : i32
    %c0_i32_0 = arith.constant 0 : i32
    return %c0_i32, %arg0 : i32, i32
  }
}

</mosaic_0001>

<llo_original>
// kernel: cnn_hyper_forward.1
$region0: #{cnn_hyper_forward.1}
  #allocation0 [shape = 'u32[]', space=smem, size = 0x4, offset = 0x4, fixed_abs, tag = 'smem constant byte address 0x4 - core index']
  #allocation1 [shape = 'u32[144,128]{1,0:T(1,128)}', space=vmem, size = 0x12000, scoped, tag = 'internal scratch']
  %s0 = inlined_call_operand.vmem [shape: f32[1,16], index: 0, kind: input, shape index: {}]
  %s1 = inlined_call_operand.hbm [shape: f32[16,32], index: 1, kind: input, shape index: {}]
  %s2 = inlined_call_operand.hbm [shape: f32[1,32], index: 2, kind: input, shape index: {}]
  %s3 = inlined_call_operand.hbm [shape: f32[2,32,32], index: 3, kind: input, shape index: {}]
  %s4 = inlined_call_operand.hbm [shape: f32[2,1,32], index: 4, kind: input, shape index: {}]
  %s5 = inlined_call_operand.hbm [shape: bf16[8,32,25600], index: 5, kind: input, shape index: {}]
  %s6 = inlined_call_operand.vmem [shape: bf16[8,1,25600], index: 6, kind: input, shape index: {}]
  %s7 = inlined_call_operand.vmem [shape: f32[1,204800], index: 7, kind: output, shape index: {}]
  %s8 = sld [smem:[#allocation0]]
  $region81: #{cnn_hyper_forward.1} parent=0
    _
  %s10 = ssub.s32 1, %s8
  %s11 = scalar_select 0, %s10, %s8
  $region1: #{cnn_hyper_forward.1} parent=0
    #allocation2 [shape = 'u8[8192]{0}', space=vmem, size = 0x2000, scoped, tag = 'input window, operand 1, single buffered']
    #allocation3 [shape = 's32[2]{0}', space=sflag, size = 0x8, scoped, tag = 'scoped memory for cnn_hyper_forward.1']
    #allocation4 [shape = 'u8[512]{0}', space=vmem, size = 0x400, scoped, tag = 'input window, operand 2, single buffered']
    #allocation5 [shape = 's32[1]{0}', space=sflag, size = 0x4, scoped, tag = 'scoped memory for cnn_hyper_forward.1']
    #allocation6 [shape = 'u8[32768]{0}', space=vmem, size = 0x8000, scoped, tag = 'input window, operand 3, single buffered']
    #allocation7 [shape = 'u8[1024]{0}', space=vmem, size = 0x400, scoped, tag = 'input window, operand 4, single buffered']
    #allocation8 [shape = 's32[1]{0}', space=sflag, size = 0x4, scoped, tag = 'scoped memory for cnn_hyper_forward.1']
    #allocation9 [shape = 'u8[3276800]{0}', space=vmem, size = 0x320000, scoped, tag = 'input window, operand 5']
    %12 = vsyncpa [#allocation3], 0
    %13 = vsyncpa [#allocation5], 0
    %14 = vsyncpa [#allocation8], 0
    loop: start=0, step=1, limit=10
    $region2: #{cnn_hyper_forward.1} parent=1 // loop_pre_header
      _
    $region3: #{cnn_hyper_forward.1} parent=1 // loop_header
      %s16 = sphi 0, %s20
      %p17 = scmp.ge.s32.totalorder %s16, 10
      %s24 = sphi 0, %s24
      %s26 = sphi 0, %s24
      %s27 = sphi 0, %s26
      %s41 = sphi 0, %s27
      %s45 = sphi 0, %s45
      %s47 = sphi 0, %s45
      %s48 = sphi 0, %s47
      %s62 = sphi 0, %s48
      %s66 = sphi 0, %s66
      %s68 = sphi 0, %s66
      %s69 = sphi 0, %s68
      %s83 = sphi 0, %s69
      %s87 = sphi 0, %s87
      %s89 = sphi 0, %s87
      %s90 = sphi 0, %s89
      %s104 = sphi 0, %s90
      %s108 = sphi 0, %s108
      %s110 = sphi 0, %s108
      %s111 = sphi 0, %s110
      %s125 = sphi 0, %s111
      %s131 = sphi 0, %s133
      %s134 = sphi 0, %s131
      %s135 = sphi 0, %s134
      %s151 = sphi 0, %s135
      %s157 = sphi 0, %s159
      %s160 = sphi 0, %s157
      %s161 = sphi 0, %s160
      %s177 = sphi 0, %s161
      %s183 = sphi 0, %s185
      %s186 = sphi 0, %s183
      %s187 = sphi 0, %s186
      %s203 = sphi 0, %s187
    $region4: #{cnn_hyper_forward.1} parent=1 // loop_header_branch
      %19 = sbr.rel (%p17) target = $region8
    $region5: #{cnn_hyper_forward.1} parent=1 // loop_body
      %s21 = ssub.s32 %s16, 1
      %s22 = ssub.s32 %s16, 2
      %s23 = sadd.s32 %s16, 1
      %s25 = sadd.s32 %s24, 1
      %p28 = scmp.eq.s32.totalorder %s16, 7
      %p29 = scmp.ne.s32.totalorder %s24, %s26
      %p30 = scmp.eq.s32.totalorder %s16, 0
      %p31 = por %p29, %p30
      %p32 = scmp.ne.s32.totalorder %s24, %s26
      %p33 = scmp.eq.s32.totalorder %s21, 7
      %p34 = por %p32, %p33
      %p35 = scmp.ne.s32.totalorder %s26, %s27
      %p36 = scmp.eq.s32.totalorder %s21, 0
      %p37 = por %p35, %p36
      %p38 = scmp.ne.s32.totalorder %s26, %s27
      %p39 = scmp.eq.s32.totalorder %s22, 7
      %p40 = por %p38, %p39
      %p42 = scmp.ne.s32.totalorder %s27, %s41
      %p43 = scmp.eq.s32.totalorder %s22, 0
      %p44 = por %p42, %p43
      %s46 = sadd.s32 %s45, 1
      %p49 = scmp.eq.s32.totalorder %s16, 7
      %p50 = scmp.ne.s32.totalorder %s45, %s47
      %p51 = scmp.eq.s32.totalorder %s16, 0
      %p52 = por %p50, %p51
      %p53 = scmp.ne.s32.totalorder %s45, %s47
      %p54 = scmp.eq.s32.totalorder %s21, 7
      %p55 = por %p53, %p54
      %p56 = scmp.ne.s32.totalorder %s47, %s48
      %p57 = scmp.eq.s32.totalorder %s21, 0
      %p58 = por %p56, %p57
      %p59 = scmp.ne.s32.totalorder %s47, %s48
      %p60 = scmp.eq.s32.totalorder %s22, 7
      %p61 = por %p59, %p60
      %p63 = scmp.ne.s32.totalorder %s48, %s62
      %p64 = scmp.eq.s32.totalorder %s22, 0
      %p65 = por %p63, %p64
      %s67 = sadd.s32 %s66, 1
      %p70 = scmp.eq.s32.totalorder %s16, 7
      %p71 = scmp.ne.s32.totalorder %s66, %s68
      %p72 = scmp.eq.s32.totalorder %s16, 0
      %p73 = por %p71, %p72
      %p74 = scmp.ne.s32.totalorder %s66, %s68
      %p75 = scmp.eq.s32.totalorder %s21, 7
      %p76 = por %p74, %p75
      %p77 = scmp.ne.s32.totalorder %s68, %s69
      %p78 = scmp.eq.s32.totalorder %s21, 0
      %p79 = por %p77, %p78
      %p80 = scmp.ne.s32.totalorder %s68, %s69
      %p81 = scmp.eq.s32.totalorder %s22, 7
      %p82 = por %p80, %p81
      %p84 = scmp.ne.s32.totalorder %s69, %s83
      %p85 = scmp.eq.s32.totalorder %s22, 0
      %p86 = por %p84, %p85
      %s88 = sadd.s32 %s87, 1
      %p91 = scmp.eq.s32.totalorder %s16, 7
      %p92 = scmp.ne.s32.totalorder %s87, %s89
      %p93 = scmp.eq.s32.totalorder %s16, 0
      %p94 = por %p92, %p93
      %p95 = scmp.ne.s32.totalorder %s87, %s89
      %p96 = scmp.eq.s32.totalorder %s21, 7
      %p97 = por %p95, %p96
      %p98 = scmp.ne.s32.totalorder %s89, %s90
      %p99 = scmp.eq.s32.totalorder %s21, 0
      %p100 = por %p98, %p99
      %p101 = scmp.ne.s32.totalorder %s89, %s90
      %p102 = scmp.eq.s32.totalorder %s22, 7
      %p103 = por %p101, %p102
      %p105 = scmp.ne.s32.totalorder %s90, %s104
      %p106 = scmp.eq.s32.totalorder %s22, 0
      %p107 = por %p105, %p106
      %s109 = sadd.s32 %s108, 1
      %p112 = scmp.eq.s32.totalorder %s16, 7
      %p113 = scmp.ne.s32.totalorder %s108, %s110
      %p114 = scmp.eq.s32.totalorder %s16, 0
      %p115 = por %p113, %p114
      %p116 = scmp.ne.s32.totalorder %s108, %s110
      %p117 = scmp.eq.s32.totalorder %s21, 7
      %p118 = por %p116, %p117
      %p119 = scmp.ne.s32.totalorder %s110, %s111
      %p120 = scmp.eq.s32.totalorder %s21, 0
      %p121 = por %p119, %p120
      %p122 = scmp.ne.s32.totalorder %s110, %s111
      %p123 = scmp.eq.s32.totalorder %s22, 7
      %p124 = por %p122, %p123
      %p126 = scmp.ne.s32.totalorder %s111, %s125
      %p127 = scmp.eq.s32.totalorder %s22, 0
      %p128 = por %p126, %p127
      %s129 = ssub.s32 %s16, %s23
      %p130 = scmp.eq.s32.totalorder %s129, 0
      %s132 = sadd.s32 %s131, 1
      %s133 = scalar_select %p130, %s131, %s132
      %p136 = pneg %p130
      %p137 = scmp.eq.s32.totalorder %s16, 7
      %p138 = por %p136, %p137
      %p139 = scmp.ne.s32.totalorder %s131, %s134
      %p140 = scmp.eq.s32.totalorder %s16, 0
      %p141 = por %p139, %p140
      %p142 = scmp.ne.s32.totalorder %s131, %s134
      %p143 = scmp.eq.s32.totalorder %s21, 7
      %p144 = por %p142, %p143
      %p145 = scmp.ne.s32.totalorder %s134, %s135
      %p146 = scmp.eq.s32.totalorder %s21, 0
      %p147 = por %p145, %p146
      %p148 = scmp.ne.s32.totalorder %s134, %s135
      %p149 = scmp.eq.s32.totalorder %s22, 7
      %p150 = por %p148, %p149
      %p152 = scmp.ne.s32.totalorder %s135, %s151
      %p153 = scmp.eq.s32.totalorder %s22, 0
      %p154 = por %p152, %p153
      %s155 = ssub.s32 %s16, %s23
      %p156 = scmp.eq.s32.totalorder %s155, 0
      %s158 = sadd.s32 %s157, 1
      %s159 = scalar_select %p156, %s157, %s158
      %p162 = pneg %p156
      %p163 = scmp.eq.s32.totalorder %s16, 7
      %p164 = por %p162, %p163
      %p165 = scmp.ne.s32.totalorder %s157, %s160
      %p166 = scmp.eq.s32.totalorder %s16, 0
      %p167 = por %p165, %p166
      %p168 = scmp.ne.s32.totalorder %s157, %s160
      %p169 = scmp.eq.s32.totalorder %s21, 7
      %p170 = por %p168, %p169
      %p171 = scmp.ne.s32.totalorder %s160, %s161
      %p172 = scmp.eq.s32.totalorder %s21, 0
      %p173 = por %p171, %p172
      %p174 = scmp.ne.s32.totalorder %s160, %s161
      %p175 = scmp.eq.s32.totalorder %s22, 7
      %p176 = por %p174, %p175
      %p178 = scmp.ne.s32.totalorder %s161, %s177
      %p179 = scmp.eq.s32.totalorder %s22, 0
      %p180 = por %p178, %p179
      %s181 = ssub.s32 %s16, %s23
      %p182 = scmp.eq.s32.totalorder %s181, 0
      %s184 = sadd.s32 %s183, 1
      %s185 = scalar_select %p182, %s183, %s184
      %p188 = pneg %p182
      %p189 = scmp.eq.s32.totalorder %s16, 7
      %p190 = por %p188, %p189
      %p191 = scmp.ne.s32.totalorder %s183, %s186
      %p192 = scmp.eq.s32.totalorder %s16, 0
      %p193 = por %p191, %p192
      %p194 = scmp.ne.s32.totalorder %s183, %s186
      %p195 = scmp.eq.s32.totalorder %s21, 7
      %p196 = por %p194, %p195
      %p197 = scmp.ne.s32.totalorder %s186, %s187
      %p198 = scmp.eq.s32.totalorder %s21, 0
      %p199 = por %p197, %p198
      %p200 = scmp.ne.s32.totalorder %s186, %s187
      %p201 = scmp.eq.s32.totalorder %s22, 7
      %p202 = por %p200, %p201
      %p204 = scmp.ne.s32.totalorder %s187, %s203
      %p205 = scmp.eq.s32.totalorder %s22, 0
      %p206 = por %p204, %p205
      %p207 = scmp.le.s32.totalorder 1, %s16
      %p208 = scmp.lt.s32.totalorder %s16, 9
      %p209 = pnand %p207, %p208
      %p210 = pneg %p209
      // Predicated region
      $region9: #{cnn_hyper_forward.1} parent=5 // pred_check
        _
      $region10: #{cnn_hyper_forward.1} parent=5 // pred_check_branch
        %212 = sbr.rel (%p209) target = $region12
      $region11: #{cnn_hyper_forward.1} parent=5 // pred_region
        %s213 = ssub.s32 %s16, 1
        // Predicated region
        $region13: #{cnn_hyper_forward.1} parent=11 // pred_check
          %p214 = pneg %p37
        $region14: #{cnn_hyper_forward.1} parent=11 // pred_check_branch
          %216 = sbr.rel (%p214) target = $region16
        $region15: #{cnn_hyper_forward.1} parent=11 // pred_region
          _
        $region16: #{cnn_hyper_forward.1} parent=11 // pred_fallthru
          _
        // Predicated region
        $region17: #{cnn_hyper_forward.1} parent=11 // pred_check
          %p217 = pneg %p58
        $region18: #{cnn_hyper_forward.1} parent=11 // pred_check_branch
          %219 = sbr.rel (%p217) target = $region20
        $region19: #{cnn_hyper_forward.1} parent=11 // pred_region
          %s221 = ssub.s32 256, 256
          %222 = vsyncadd [#allocation3], %s221
          %s223 = sshll.u32 [#allocation2], 4
          %s224 = int_to_ptr.vmem [resolvable:$true] %s223
          %229 = dma.hbm_to_vmem [thread:$0]  %s1, 256, %s224, [#allocation3], 128, 128, 8
        $region20: #{cnn_hyper_forward.1} parent=11 // pred_fallthru
          _
        // Predicated region
        $region21: #{cnn_hyper_forward.1} parent=11 // pred_check
          %p230 = pneg %p79
        $region22: #{cnn_hyper_forward.1} parent=11 // pred_check_branch
          %232 = sbr.rel (%p230) target = $region24
        $region23: #{cnn_hyper_forward.1} parent=11 // pred_region
          %s234 = ssub.s32 16, 16
          %235 = vsyncadd [#allocation5], %s234
          %s237 = sshll.u32 [#allocation4], 4
          %s238 = int_to_ptr.vmem [resolvable:$true] %s237
          %240 = dma.hbm_to_vmem [thread:$0]  %s2, 16, %s238, [#allocation5]
        $region24: #{cnn_hyper_forward.1} parent=11 // pred_fallthru
          _
        // Predicated region
        $region25: #{cnn_hyper_forward.1} parent=11 // pred_check
          %p241 = pneg %p100
        $region26: #{cnn_hyper_forward.1} parent=11 // pred_check_branch
          %243 = sbr.rel (%p241) target = $region28
        $region27: #{cnn_hyper_forward.1} parent=11 // pred_region
          %s245 = ssub.s32 1024, 1024
          %246 = vsyncadd [#allocation5], %s245
          %s247 = sshll.u32 [#allocation6], 4
          %s248 = int_to_ptr.vmem [resolvable:$true] %s247
          %253 = dma.hbm_to_vmem [thread:$0]  %s3, 1024, %s248, [#allocation5], 128, 128, 8
        $region28: #{cnn_hyper_forward.1} parent=11 // pred_fallthru
          _
        // Predicated region
        $region29: #{cnn_hyper_forward.1} parent=11 // pred_check
          %p254 = pneg %p121
        $region30: #{cnn_hyper_forward.1} parent=11 // pred_check_branch
          %256 = sbr.rel (%p254) target = $region32
        $region31: #{cnn_hyper_forward.1} parent=11 // pred_region
          %s258 = ssub.s32 32, 32
          %259 = vsyncadd [#allocation8], %s258
          %s260 = sshll.u32 [#allocation7], 4
          %s261 = int_to_ptr.vmem [resolvable:$true] %s260
          %266 = dma.hbm_to_vmem [thread:$0]  %s4, 32, %s261, [#allocation8], 16, 16, 1
        $region32: #{cnn_hyper_forward.1} parent=11 // pred_fallthru
          _
      $region12: #{cnn_hyper_forward.1} parent=5 // pred_fallthru
        _
      %p267 = scmp.lt.s32.totalorder %s16, 8
      // Predicated region
      $region33: #{cnn_hyper_forward.1} parent=5 // pred_check
        %p268 = pneg %p267
      $region34: #{cnn_hyper_forward.1} parent=5 // pred_check_branch
        %270 = sbr.rel (%p268) target = $region36
      $region35: #{cnn_hyper_forward.1} parent=5 // pred_region
        // Predicated region
        $region37: #{cnn_hyper_forward.1} parent=35 // pred_check
          %p271 = pneg %p141
        $region38: #{cnn_hyper_forward.1} parent=35 // pred_check_branch
          %273 = sbr.rel (%p271) target = $region40
        $region39: #{cnn_hyper_forward.1} parent=35 // pred_region
          %s274 = sand.u32 %s16, 1
          %s275 = scalar_lea.sflag [#allocation3], %s274
          %s276 = sand.u32 %s131, 1
          %s277 = smul.addr %s276, 3200
          %s278 = scalar_lea.vmem [#allocation9], %s277
          %s280 = ssub.s32 51200, 51200
          %281 = vsyncadd %s275, %s280
          %s282 = smul.addr %s16, 800
          %s283 = smul.addr %s282, 64
          %s284 = scalar_lea.hbm %s5, %s283
          %s285 = sshll.u32 %s278, 4
          %s286 = int_to_ptr.vmem [resolvable:$true] %s285
          %291 = dma.hbm_to_vmem [thread:$0]  %s284, 51200, %s286, %s275, 12800, 12800, 800
        $region40: #{cnn_hyper_forward.1} parent=35 // pred_fallthru
          _
        // Predicated region
        $region41: #{cnn_hyper_forward.1} parent=35 // pred_check
          %p292 = pneg %p167
        $region42: #{cnn_hyper_forward.1} parent=35 // pred_check_branch
          %294 = sbr.rel (%p292) target = $region44
        $region43: #{cnn_hyper_forward.1} parent=35 // pred_region
          %p295 = scmp.lt.s32.totalorder %s16, 7
          %s296 = scalar_select %p295, %s16, 7
          %s297 = smul.addr %s296, 200
          %s298 = scalar_lea.vmem %s6, %s297
        $region44: #{cnn_hyper_forward.1} parent=35 // pred_fallthru
          _
      $region36: #{cnn_hyper_forward.1} parent=5 // pred_fallthru
        _
      %p299 = scmp.le.s32.totalorder 1, %s16
      %p300 = scmp.lt.s32.totalorder %s16, 9
      %p301 = pnand %p299, %p300
      %p302 = pneg %p301
      // Predicated region
      $region45: #{cnn_hyper_forward.1} parent=5 // pred_check
        _
      $region46: #{cnn_hyper_forward.1} parent=5 // pred_check_branch
        %304 = sbr.rel (%p301) target = $region48
      $region47: #{cnn_hyper_forward.1} parent=5 // pred_region
        %s305 = ssub.s32 %s16, 1
        // Predicated region
        $region49: #{cnn_hyper_forward.1} parent=47 // pred_check
          %p306 = pneg %p58
        $region50: #{cnn_hyper_forward.1} parent=47 // pred_check_branch
          %308 = sbr.rel (%p306) target = $region52
        $region51: #{cnn_hyper_forward.1} parent=47 // pred_region
          %309 = dma.done [#allocation3], 256
        $region52: #{cnn_hyper_forward.1} parent=47 // pred_fallthru
          _
        // Predicated region
        $region53: #{cnn_hyper_forward.1} parent=47 // pred_check
          %p310 = pneg %p79
        $region54: #{cnn_hyper_forward.1} parent=47 // pred_check_branch
          %312 = sbr.rel (%p310) target = $region56
        $region55: #{cnn_hyper_forward.1} parent=47 // pred_region
          %313 = dma.done [#allocation5], 16
        $region56: #{cnn_hyper_forward.1} parent=47 // pred_fallthru
          _
        // Predicated region
        $region57: #{cnn_hyper_forward.1} parent=47 // pred_check
          %p314 = pneg %p100
        $region58: #{cnn_hyper_forward.1} parent=47 // pred_check_branch
          %316 = sbr.rel (%p314) target = $region60
        $region59: #{cnn_hyper_forward.1} parent=47 // pred_region
          %317 = dma.done [#allocation5], 1024
        $region60: #{cnn_hyper_forward.1} parent=47 // pred_fallthru
          _
        // Predicated region
        $region61: #{cnn_hyper_forward.1} parent=47 // pred_check
          %p318 = pneg %p121
        $region62: #{cnn_hyper_forward.1} parent=47 // pred_check_branch
          %320 = sbr.rel (%p318) target = $region64
        $region63: #{cnn_hyper_forward.1} parent=47 // pred_region
          %321 = dma.done [#allocation8], 32
        $region64: #{cnn_hyper_forward.1} parent=47 // pred_fallthru
          _
        %s322 = sand.u32 %s21, 1
        %s323 = scalar_lea.sflag [#allocation3], %s322
        %s324 = sand.u32 %s134, 1
        %s325 = smul.addr %s324, 3200
        %s326 = scalar_lea.vmem [#allocation9], %s325
        // Predicated region
        $region65: #{cnn_hyper_forward.1} parent=47 // pred_check
          %p327 = pneg %p147
        $region66: #{cnn_hyper_forward.1} parent=47 // pred_check_branch
          %329 = sbr.rel (%p327) target = $region68
        $region67: #{cnn_hyper_forward.1} parent=47 // pred_region
          %330 = dma.done %s323, 51200
        $region68: #{cnn_hyper_forward.1} parent=47 // pred_fallthru
          _
        %p331 = pneg %p37
        %p332 = pneg %p34
        %p333 = pneg %p58
        %p334 = pneg %p55
        %p335 = pneg %p79
        %p336 = pneg %p76
        %p337 = pneg %p100
        %p338 = pneg %p97
        %p339 = pneg %p121
        %p340 = pneg %p118
        %s341 = sand.u32 %s21, 1
        %s342 = scalar_lea.sflag [#allocation3], %s341
        %s343 = sand.u32 %s134, 1
        %s344 = smul.addr %s343, 3200
        %s345 = scalar_lea.vmem [#allocation9], %s344
        %p346 = pneg %p147
        %p347 = pneg %p144
        %p348 = scmp.lt.s32.totalorder %s21, 7
        %s349 = scalar_select %p348, %s21, 7
        %s350 = smul.addr %s349, 200
        %s351 = scalar_lea.vmem %s6, %s350
        %p352 = pneg %p173
        %p353 = pneg %p170
        %p354 = pneg %p199
        %p355 = pneg %p196
        %s356 = smul.u32 200, %s21
        %p357 = scmp.lt.s32.totalorder %s356, 1599
        %s358 = scalar_select %p357, %s356, 1599
        %s359 = scalar_lea.vmem %s7, %s358
        %p360 = scmp.lt.s32.totalorder %s21, 7
        %s361 = scalar_select %p360, %s21, 7
        %s362 = smul.addr %s361, 200
        %s363 = scalar_lea.vmem %s6, %s362
        %s364 = smul.u32 200, %s21
        %p365 = scmp.lt.s32.totalorder %s364, 1599
        %s366 = scalar_select %p365, %s364, 1599
        %s367 = scalar_lea.vmem %s7, %s366
        %s368 = smul.u32 200, %s21
        %v370 = vld [vmem:[%s0] sm:$0x1]
        %v371 = vld [vmem:[#allocation2] sm:$0xff]
        %v372 = vld [vmem:[#allocation2 + $0x8] sm:$0xff]
        %v373 = vld [vmem:[#allocation4] sm:$0x1]
        %vm374 = vcmask 130048
        %v376 = vsel %vm374, %v370, 0
        %378 = vmatprep.subr.mxu0 0.0
        %379 = vmatpush1.msra.mxu0 0.0
        %380 = vmatprep.subr.mxu0 0.0
        %381 = vmatpush1.msra.mxu0 0.0
        %382 = vmatprep.subr.mxu0 0.0
        %383 = vmatpush1.msra.mxu0 0.0
        %384 = vmatprep.subr.mxu0 0.0
        %385 = vmatpush1.msra.mxu0 0.0
        %386 = vmatprep.subr.mxu0 0.0
        %387 = vmatpush1.msra.mxu0 0.0
        %388 = vmatprep.subr.mxu0 0.0
        %389 = vmatpush1.msra.mxu0 0.0
        %390 = vmatprep.subr.mxu0 0.0
        %391 = vmatpush1.msra.mxu0 0.0
        %392 = vmatprep.subr.mxu0 0.0
        %393 = vmatpush1.msra.mxu0 0.0
        %394 = vmatprep.subr.mxu0 0.0
        %395 = vmatpush1.msra.mxu0 0.0
        %396 = vmatprep.subr.mxu0 0.0
        %397 = vmatpush1.msra.mxu0 0.0
        %398 = vmatprep.subr.mxu0 0.0
        %399 = vmatpush1.msra.mxu0 0.0
        %400 = vmatprep.subr.mxu0 0.0
        %401 = vmatpush1.msra.mxu0 0.0
        %402 = vmatprep.subr.mxu0 0.0
        %403 = vmatpush1.msra.mxu0 0.0
        %404 = vmatprep.subr.mxu0 0.0
        %405 = vmatpush1.msra.mxu0 0.0
        %406 = vmatprep.subr.mxu0 0.0
        %407 = vmatpush1.msra.mxu0 %v372
        %408 = vmatprep.subr.mxu0 0.0
        %409 = vmatpush1.msra.mxu0 %v371
        %410 = vmatprep.subr.mxu0 0.0
        %411 = vmatpush2.msra.mxu0 0.0
        %412 = vmatprep.subr.mxu0 0.0
        %413 = vmatpush2.msra.mxu0 0.0
        %414 = vmatprep.subr.mxu0 0.0
        %415 = vmatpush2.msra.mxu0 0.0
        %416 = vmatprep.subr.mxu0 0.0
        %417 = vmatpush2.msra.mxu0 0.0
        %418 = vmatprep.subr.mxu0 0.0
        %419 = vmatpush2.msra.mxu0 0.0
        %420 = vmatprep.subr.mxu0 0.0
        %421 = vmatpush2.msra.mxu0 0.0
        %422 = vmatprep.subr.mxu0 0.0
        %423 = vmatpush2.msra.mxu0 0.0
        %424 = vmatprep.subr.mxu0 0.0
        %425 = vmatpush2.msra.mxu0 0.0
        %426 = vmatprep.subr.mxu0 0.0
        %427 = vmatpush2.msra.mxu0 0.0
        %428 = vmatprep.subr.mxu0 0.0
        %429 = vmatpush2.msra.mxu0 0.0
        %430 = vmatprep.subr.mxu0 0.0
        %431 = vmatpush2.msra.mxu0 0.0
        %432 = vmatprep.subr.mxu0 0.0
        %433 = vmatpush2.msra.mxu0 0.0
        %434 = vmatprep.subr.mxu0 0.0
        %435 = vmatpush2.msra.mxu0 0.0
        %436 = vmatprep.subr.mxu0 0.0
        %437 = vmatpush2.msra.mxu0 0.0
        %438 = vmatprep.subr.mxu0 0.0
        %439 = vmatpush2.msra.mxu0 0.0
        %440 = vmatprep.subr.mxu0 0.0
        %441 = vmatpush2.msra.mxu0 0.0
        %442 = vmatprep.mubr.f32.mxu0 0.0
        %443 = vmatmul.mubr.f32.gmra.mxu0 %v376
        %v444 = vpop.f32.mrf.mxu0
        %v445 = vadd.f32 %v373, %v444
        %v446 = vpop.f32.mrf.mxu0
        %447 = vdwg.mxu0
        %v448 = vmax.f32 %v445, 0.0
        %v449 = vld [vmem:[#allocation6] sm:$0xff]
        %v450 = vld [vmem:[#allocation6 + $0x8] sm:$0xff]
        %v451 = vld [vmem:[#allocation6 + $0x10] sm:$0xff]
        %v452 = vld [vmem:[#allocation6 + $0x18] sm:$0xff]
        %v453 = vld [vmem:[#allocation7] sm:$0x1]
        %vm454 = vcmask 261120
        %v456 = vsel %vm454, %v448, 0
        %458 = vmatprep.subr.mxu0 0.0
        %459 = vmatpush1.msra.mxu0 0.0
        %460 = vmatprep.subr.mxu0 0.0
        %461 = vmatpush1.msra.mxu0 0.0
        %462 = vmatprep.subr.mxu0 0.0
        %463 = vmatpush1.msra.mxu0 0.0
        %464 = vmatprep.subr.mxu0 0.0
        %465 = vmatpush1.msra.mxu0 0.0
        %466 = vmatprep.subr.mxu0 0.0
        %467 = vmatpush1.msra.mxu0 0.0
        %468 = vmatprep.subr.mxu0 0.0
        %469 = vmatpush1.msra.mxu0 0.0
        %470 = vmatprep.subr.mxu0 0.0
        %471 = vmatpush1.msra.mxu0 0.0
        %472 = vmatprep.subr.mxu0 0.0
        %473 = vmatpush1.msra.mxu0 0.0
        %474 = vmatprep.subr.mxu0 0.0
        %475 = vmatpush1.msra.mxu0 0.0
        %476 = vmatprep.subr.mxu0 0.0
        %477 = vmatpush1.msra.mxu0 0.0
        %478 = vmatprep.subr.mxu0 0.0
        %479 = vmatpush1.msra.mxu0 0.0
        %480 = vmatprep.subr.mxu0 0.0
        %481 = vmatpush1.msra.mxu0 0.0
        %482 = vmatprep.subr.mxu0 0.0
        %483 = vmatpush1.msra.mxu0 %v452
        %484 = vmatprep.subr.mxu0 0.0
        %485 = vmatpush1.msra.mxu0 %v451
        %486 = vmatprep.subr.mxu0 0.0
        %487 = vmatpush1.msra.mxu0 %v450
        %488 = vmatprep.subr.mxu0 0.0
        %489 = vmatpush1.msra.mxu0 %v449
        %490 = vmatprep.subr.mxu0 0.0
        %491 = vmatpush2.msra.mxu0 0.0
        %492 = vmatprep.subr.mxu0 0.0
        %493 = vmatpush2.msra.mxu0 0.0
        %494 = vmatprep.subr.mxu0 0.0
        %495 = vmatpush2.msra.mxu0 0.0
        %496 = vmatprep.subr.mxu0 0.0
        %497 = vmatpush2.msra.mxu0 0.0
        %498 = vmatprep.subr.mxu0 0.0
        %499 = vmatpush2.msra.mxu0 0.0
        %500 = vmatprep.subr.mxu0 0.0
        %501 = vmatpush2.msra.mxu0 0.0
        %502 = vmatprep.subr.mxu0 0.0
        %503 = vmatpush2.msra.mxu0 0.0
        %504 = vmatprep.subr.mxu0 0.0
        %505 = vmatpush2.msra.mxu0 0.0
        %506 = vmatprep.subr.mxu0 0.0
        %507 = vmatpush2.msra.mxu0 0.0
        %508 = vmatprep.subr.mxu0 0.0
        %509 = vmatpush2.msra.mxu0 0.0
        %510 = vmatprep.subr.mxu0 0.0
        %511 = vmatpush2.msra.mxu0 0.0
        %512 = vmatprep.subr.mxu0 0.0
        %513 = vmatpush2.msra.mxu0 0.0
        %514 = vmatprep.subr.mxu0 0.0
        %515 = vmatpush2.msra.mxu0 0.0
        %516 = vmatprep.subr.mxu0 0.0
        %517 = vmatpush2.msra.mxu0 0.0
        %518 = vmatprep.subr.mxu0 0.0
        %519 = vmatpush2.msra.mxu0 0.0
        %520 = vmatprep.subr.mxu0 0.0
        %521 = vmatpush2.msra.mxu0 0.0
        %522 = vmatprep.mubr.f32.mxu0 0.0
        %523 = vmatmul.mubr.f32.gmra.mxu0 %v456
        %v524 = vpop.f32.mrf.mxu0
        %v525 = vadd.f32 %v453, %v524
        %v526 = vpop.f32.mrf.mxu0
        %527 = vdwg.mxu0
        %v528 = vmax.f32 %v525, 0.0
        %s529 = scalar_lea.vmem [#allocation6], 32
        %v530 = vld [vmem:[%s529] sm:$0xff]
        %v531 = vld [vmem:[%s529 + $0x8] sm:$0xff]
        %v532 = vld [vmem:[%s529 + $0x10] sm:$0xff]
        %v533 = vld [vmem:[%s529 + $0x18] sm:$0xff]
        %s534 = scalar_lea.vmem [#allocation7], 1
        %v535 = vld [vmem:[%s534] sm:$0x1]
        %v537 = vsel %vm454, %v528, 0
        %539 = vmatprep.subr.mxu0 0.0
        %540 = vmatpush1.msra.mxu0 0.0
        %541 = vmatprep.subr.mxu0 0.0
        %542 = vmatpush1.msra.mxu0 0.0
        %543 = vmatprep.subr.mxu0 0.0
        %544 = vmatpush1.msra.mxu0 0.0
        %545 = vmatprep.subr.mxu0 0.0
        %546 = vmatpush1.msra.mxu0 0.0
        %547 = vmatprep.subr.mxu0 0.0
        %548 = vmatpush1.msra.mxu0 0.0
        %549 = vmatprep.subr.mxu0 0.0
        %550 = vmatpush1.msra.mxu0 0.0
        %551 = vmatprep.subr.mxu0 0.0
        %552 = vmatpush1.msra.mxu0 0.0
        %553 = vmatprep.subr.mxu0 0.0
        %554 = vmatpush1.msra.mxu0 0.0
        %555 = vmatprep.subr.mxu0 0.0
        %556 = vmatpush1.msra.mxu0 0.0
        %557 = vmatprep.subr.mxu0 0.0
        %558 = vmatpush1.msra.mxu0 0.0
        %559 = vmatprep.subr.mxu0 0.0
        %560 = vmatpush1.msra.mxu0 0.0
        %561 = vmatprep.subr.mxu0 0.0
        %562 = vmatpush1.msra.mxu0 0.0
        %563 = vmatprep.subr.mxu0 0.0
        %564 = vmatpush1.msra.mxu0 %v533
        %565 = vmatprep.subr.mxu0 0.0
        %566 = vmatpush1.msra.mxu0 %v532
        %567 = vmatprep.subr.mxu0 0.0
        %568 = vmatpush1.msra.mxu0 %v531
        %569 = vmatprep.subr.mxu0 0.0
        %570 = vmatpush1.msra.mxu0 %v530
        %571 = vmatprep.subr.mxu0 0.0
        %572 = vmatpush2.msra.mxu0 0.0
        %573 = vmatprep.subr.mxu0 0.0
        %574 = vmatpush2.msra.mxu0 0.0
        %575 = vmatprep.subr.mxu0 0.0
        %576 = vmatpush2.msra.mxu0 0.0
        %577 = vmatprep.subr.mxu0 0.0
        %578 = vmatpush2.msra.mxu0 0.0
        %579 = vmatprep.subr.mxu0 0.0
        %580 = vmatpush2.msra.mxu0 0.0
        %581 = vmatprep.subr.mxu0 0.0
        %582 = vmatpush2.msra.mxu0 0.0
        %583 = vmatprep.subr.mxu0 0.0
        %584 = vmatpush2.msra.mxu0 0.0
        %585 = vmatprep.subr.mxu0 0.0
        %586 = vmatpush2.msra.mxu0 0.0
        %587 = vmatprep.subr.mxu0 0.0
        %588 = vmatpush2.msra.mxu0 0.0
        %589 = vmatprep.subr.mxu0 0.0
        %590 = vmatpush2.msra.mxu0 0.0
        %591 = vmatprep.subr.mxu0 0.0
        %592 = vmatpush2.msra.mxu0 0.0
        %593 = vmatprep.subr.mxu0 0.0
        %594 = vmatpush2.msra.mxu0 0.0
        %595 = vmatprep.subr.mxu0 0.0
        %596 = vmatpush2.msra.mxu0 0.0
        %597 = vmatprep.subr.mxu0 0.0
        %598 = vmatpush2.msra.mxu0 0.0
        %599 = vmatprep.subr.mxu0 0.0
        %600 = vmatpush2.msra.mxu0 0.0
        %601 = vmatprep.subr.mxu0 0.0
        %602 = vmatpush2.msra.mxu0 0.0
        %603 = vmatprep.mubr.f32.mxu0 0.0
        %604 = vmatmul.mubr.f32.gmra.mxu0 %v537
        %v605 = vpop.f32.mrf.mxu0
        %v606 = vadd.f32 %v535, %v605
        %v607 = vpop.f32.mrf.mxu0
        %608 = vdwg.mxu0
        %v609 = vpack.c.bf16 %v606, %v606
        %v610 = vld [vmem:[%s326] sm:$0xff]
        %v611 = vld [vmem:[%s326 + $0x8] sm:$0xff]
        %v612 = vld [vmem:[%s326 + $0x10] sm:$0xff]
        %v613 = vld [vmem:[%s326 + $0x18] sm:$0xff]
        %v614 = vld [vmem:[%s326 + $0x20] sm:$0xff]
        %v615 = vld [vmem:[%s326 + $0x28] sm:$0xff]
        %v616 = vld [vmem:[%s326 + $0x30] sm:$0xff]
        %v617 = vld [vmem:[%s326 + $0x38] sm:$0xff]
        %v618 = vld [vmem:[%s326 + $0x40] sm:$0xff]
        %v619 = vld [vmem:[%s326 + $0x48] sm:$0xff]
        %v620 = vld [vmem:[%s326 + $0x50] sm:$0xff]
        %v621 = vld [vmem:[%s326 + $0x58] sm:$0xff]
        %v622 = vld [vmem:[%s326 + $0x60] sm:$0xff]
        %v623 = vld [vmem:[%s326 + $0x68] sm:$0xff]
        %v624 = vld [vmem:[%s326 + $0x70] sm:$0xff]
        %v625 = vld [vmem:[%s326 + $0x78] sm:$0xff]
        %v626 = vld [vmem:[%s326 + $0x80] sm:$0xff]
        %v627 = vld [vmem:[%s326 + $0x88] sm:$0xff]
        %v628 = vld [vmem:[%s326 + $0x90] sm:$0xff]
        %v629 = vld [vmem:[%s326 + $0x98] sm:$0xff]
        %v630 = vld [vmem:[%s326 + $0xa0] sm:$0xff]
        %v631 = vld [vmem:[%s326 + $0xa8] sm:$0xff]
        %v632 = vld [vmem:[%s326 + $0xb0] sm:$0xff]
        %v633 = vld [vmem:[%s326 + $0xb8] sm:$0xff]
        %v634 = vld [vmem:[%s326 + $0xc0] sm:$0xff]
        %v635 = vld [vmem:[%s326 + $0xc8] sm:$0xff]
        %v636 = vld [vmem:[%s326 + $0xd0] sm:$0xff]
        %v637 = vld [vmem:[%s326 + $0xd8] sm:$0xff]
        %v638 = vld [vmem:[%s326 + $0xe0] sm:$0xff]
        %v639 = vld [vmem:[%s326 + $0xe8] sm:$0xff]
        %v640 = vld [vmem:[%s326 + $0xf0] sm:$0xff]
        %v641 = vld [vmem:[%s326 + $0xf8] sm:$0xff]
        %v642 = vld [vmem:[%s326 + $0x100] sm:$0xff]
        %v643 = vld [vmem:[%s326 + $0x108] sm:$0xff]
        %v644 = vld [vmem:[%s326 + $0x110] sm:$0xff]
        %v645 = vld [vmem:[%s326 + $0x118] sm:$0xff]
        %v646 = vld [vmem:[%s326 + $0x120] sm:$0xff]
        %v647 = vld [vmem:[%s326 + $0x128] sm:$0xff]
        %v648 = vld [vmem:[%s326 + $0x130] sm:$0xff]
        %v649 = vld [vmem:[%s326 + $0x138] sm:$0xff]
        %v650 = vld [vmem:[%s326 + $0x140] sm:$0xff]
        %v651 = vld [vmem:[%s326 + $0x148] sm:$0xff]
        %v652 = vld [vmem:[%s326 + $0x150] sm:$0xff]
        %v653 = vld [vmem:[%s326 + $0x158] sm:$0xff]
        %v654 = vld [vmem:[%s326 + $0x160] sm:$0xff]
        %v655 = vld [vmem:[%s326 + $0x168] sm:$0xff]
        %v656 = vld [vmem:[%s326 + $0x170] sm:$0xff]
        %v657 = vld [vmem:[%s326 + $0x178] sm:$0xff]
        %v658 = vld [vmem:[%s326 + $0x180] sm:$0xff]
        %v659 = vld [vmem:[%s326 + $0x188] sm:$0xff]
        %v660 = vld [vmem:[%s326 + $0x190] sm:$0xff]
        %v661 = vld [vmem:[%s326 + $0x198] sm:$0xff]
        %v662 = vld [vmem:[%s326 + $0x1a0] sm:$0xff]
        %v663 = vld [vmem:[%s326 + $0x1a8] sm:$0xff]
        %v664 = vld [vmem:[%s326 + $0x1b0] sm:$0xff]
        %v665 = vld [vmem:[%s326 + $0x1b8] sm:$0xff]
        %v666 = vld [vmem:[%s326 + $0x1c0] sm:$0xff]
        %v667 = vld [vmem:[%s326 + $0x1c8] sm:$0xff]
        %v668 = vld [vmem:[%s326 + $0x1d0] sm:$0xff]
        %v669 = vld [vmem:[%s326 + $0x1d8] sm:$0xff]
        %v670 = vld [vmem:[%s326 + $0x1e0] sm:$0xff]
        %v671 = vld [vmem:[%s326 + $0x1e8] sm:$0xff]
        %v672 = vld [vmem:[%s326 + $0x1f0] sm:$0xff]
        %v673 = vld [vmem:[%s326 + $0x1f8] sm:$0xff]
        %v674 = vld [vmem:[%s326 + $0x200] sm:$0xff]
        %v675 = vld [vmem:[%s326 + $0x208] sm:$0xff]
        %v676 = vld [vmem:[%s326 + $0x210] sm:$0xff]
        %v677 = vld [vmem:[%s326 + $0x218] sm:$0xff]
        %v678 = vld [vmem:[%s326 + $0x220] sm:$0xff]
        %v679 = vld [vmem:[%s326 + $0x228] sm:$0xff]
        %v680 = vld [vmem:[%s326 + $0x230] sm:$0xff]
        %v681 = vld [vmem:[%s326 + $0x238] sm:$0xff]
        %v682 = vld [vmem:[%s326 + $0x240] sm:$0xff]
        %v683 = vld [vmem:[%s326 + $0x248] sm:$0xff]
        %v684 = vld [vmem:[%s326 + $0x250] sm:$0xff]
        %v685 = vld [vmem:[%s326 + $0x258] sm:$0xff]
        %v686 = vld [vmem:[%s326 + $0x260] sm:$0xff]
        %v687 = vld [vmem:[%s326 + $0x268] sm:$0xff]
        %v688 = vld [vmem:[%s326 + $0x270] sm:$0xff]
        %v689 = vld [vmem:[%s326 + $0x278] sm:$0xff]
        %v690 = vld [vmem:[%s326 + $0x280] sm:$0xff]
        %v691 = vld [vmem:[%s326 + $0x288] sm:$0xff]
        %v692 = vld [vmem:[%s326 + $0x290] sm:$0xff]
        %v693 = vld [vmem:[%s326 + $0x298] sm:$0xff]
        %v694 = vld [vmem:[%s326 + $0x2a0] sm:$0xff]
        %v695 = vld [vmem:[%s326 + $0x2a8] sm:$0xff]
        %v696 = vld [vmem:[%s326 + $0x2b0] sm:$0xff]
        %v697 = vld [vmem:[%s326 + $0x2b8] sm:$0xff]
        %v698 = vld [vmem:[%s326 + $0x2c0] sm:$0xff]
        %v699 = vld [vmem:[%s326 + $0x2c8] sm:$0xff]
        %v700 = vld [vmem:[%s326 + $0x2d0] sm:$0xff]
        %v701 = vld [vmem:[%s326 + $0x2d8] sm:$0xff]
        %v702 = vld [vmem:[%s326 + $0x2e0] sm:$0xff]
        %v703 = vld [vmem:[%s326 + $0x2e8] sm:$0xff]
        %v704 = vld [vmem:[%s326 + $0x2f0] sm:$0xff]
        %v705 = vld [vmem:[%s326 + $0x2f8] sm:$0xff]
        %v706 = vld [vmem:[%s326 + $0x300] sm:$0xff]
        %v707 = vld [vmem:[%s326 + $0x308] sm:$0xff]
        %v708 = vld [vmem:[%s326 + $0x310] sm:$0xff]
        %v709 = vld [vmem:[%s326 + $0x318] sm:$0xff]
        %v710 = vld [vmem:[%s326 + $0x320] sm:$0xff]
        %v711 = vld [vmem:[%s326 + $0x328] sm:$0xff]
        %v712 = vld [vmem:[%s326 + $0x330] sm:$0xff]
        %v713 = vld [vmem:[%s326 + $0x338] sm:$0xff]
        %v714 = vld [vmem:[%s326 + $0x340] sm:$0xff]
        %v715 = vld [vmem:[%s326 + $0x348] sm:$0xff]
        %v716 = vld [vmem:[%s326 + $0x350] sm:$0xff]
        %v717 = vld [vmem:[%s326 + $0x358] sm:$0xff]
        %v718 = vld [vmem:[%s326 + $0x360] sm:$0xff]
        %v719 = vld [vmem:[%s326 + $0x368] sm:$0xff]
        %v720 = vld [vmem:[%s326 + $0x370] sm:$0xff]
        %v721 = vld [vmem:[%s326 + $0x378] sm:$0xff]
        %v722 = vld [vmem:[%s326 + $0x380] sm:$0xff]
        %v723 = vld [vmem:[%s326 + $0x388] sm:$0xff]
        %v724 = vld [vmem:[%s326 + $0x390] sm:$0xff]
        %v725 = vld [vmem:[%s326 + $0x398] sm:$0xff]
        %v726 = vld [vmem:[%s326 + $0x3a0] sm:$0xff]
        %v727 = vld [vmem:[%s326 + $0x3a8] sm:$0xff]
        %v728 = vld [vmem:[%s326 + $0x3b0] sm:$0xff]
        %v729 = vld [vmem:[%s326 + $0x3b8] sm:$0xff]
        %v730 = vld [vmem:[%s326 + $0x3c0] sm:$0xff]
        %v731 = vld [vmem:[%s326 + $0x3c8] sm:$0xff]
        %v732 = vld [vmem:[%s326 + $0x3d0] sm:$0xff]
        %v733 = vld [vmem:[%s326 + $0x3d8] sm:$0xff]
        %v734 = vld [vmem:[%s326 + $0x3e0] sm:$0xff]
        %v735 = vld [vmem:[%s326 + $0x3e8] sm:$0xff]
        %v736 = vld [vmem:[%s326 + $0x3f0] sm:$0xff]
        %v737 = vld [vmem:[%s326 + $0x3f8] sm:$0xff]
        %v738 = vld [vmem:[%s326 + $0x400] sm:$0xff]
        %v739 = vld [vmem:[%s326 + $0x408] sm:$0xff]
        %v740 = vld [vmem:[%s326 + $0x410] sm:$0xff]
        %v741 = vld [vmem:[%s326 + $0x418] sm:$0xff]
        %v742 = vld [vmem:[%s326 + $0x420] sm:$0xff]
        %v743 = vld [vmem:[%s326 + $0x428] sm:$0xff]
        %v744 = vld [vmem:[%s326 + $0x430] sm:$0xff]
        %v745 = vld [vmem:[%s326 + $0x438] sm:$0xff]
        %v746 = vld [vmem:[%s326 + $0x440] sm:$0xff]
        %v747 = vld [vmem:[%s326 + $0x448] sm:$0xff]
        %v748 = vld [vmem:[%s326 + $0x450] sm:$0xff]
        %v749 = vld [vmem:[%s326 + $0x458] sm:$0xff]
        %v750 = vld [vmem:[%s326 + $0x460] sm:$0xff]
        %v751 = vld [vmem:[%s326 + $0x468] sm:$0xff]
        %v752 = vld [vmem:[%s326 + $0x470] sm:$0xff]
        %v753 = vld [vmem:[%s326 + $0x478] sm:$0xff]
        %v754 = vld [vmem:[%s326 + $0x480] sm:$0xff]
        %v755 = vld [vmem:[%s326 + $0x488] sm:$0xff]
        %v756 = vld [vmem:[%s326 + $0x490] sm:$0xff]
        %v757 = vld [vmem:[%s326 + $0x498] sm:$0xff]
        %v758 = vld [vmem:[%s326 + $0x4a0] sm:$0xff]
        %v759 = vld [vmem:[%s326 + $0x4a8] sm:$0xff]
        %v760 = vld [vmem:[%s326 + $0x4b0] sm:$0xff]
        %v761 = vld [vmem:[%s326 + $0x4b8] sm:$0xff]
        %v762 = vld [vmem:[%s326 + $0x4c0] sm:$0xff]
        %v763 = vld [vmem:[%s326 + $0x4c8] sm:$0xff]
        %v764 = vld [vmem:[%s326 + $0x4d0] sm:$0xff]
        %v765 = vld [vmem:[%s326 + $0x4d8] sm:$0xff]
        %v766 = vld [vmem:[%s326 + $0x4e0] sm:$0xff]
        %v767 = vld [vmem:[%s326 + $0x4e8] sm:$0xff]
        %v768 = vld [vmem:[%s326 + $0x4f0] sm:$0xff]
        %v769 = vld [vmem:[%s326 + $0x4f8] sm:$0xff]
        %v770 = vld [vmem:[%s326 + $0x500] sm:$0xff]
        %v771 = vld [vmem:[%s326 + $0x508] sm:$0xff]
        %v772 = vld [vmem:[%s326 + $0x510] sm:$0xff]
        %v773 = vld [vmem:[%s326 + $0x518] sm:$0xff]
        %v774 = vld [vmem:[%s326 + $0x520] sm:$0xff]
        %v775 = vld [vmem:[%s326 + $0x528] sm:$0xff]
        %v776 = vld [vmem:[%s326 + $0x530] sm:$0xff]
        %v777 = vld [vmem:[%s326 + $0x538] sm:$0xff]
        %v778 = vld [vmem:[%s326 + $0x540] sm:$0xff]
        %v779 = vld [vmem:[%s326 + $0x548] sm:$0xff]
        %v780 = vld [vmem:[%s326 + $0x550] sm:$0xff]
        %v781 = vld [vmem:[%s326 + $0x558] sm:$0xff]
        %v782 = vld [vmem:[%s326 + $0x560] sm:$0xff]
        %v783 = vld [vmem:[%s326 + $0x568] sm:$0xff]
        %v784 = vld [vmem:[%s326 + $0x570] sm:$0xff]
        %v785 = vld [vmem:[%s326 + $0x578] sm:$0xff]
        %v786 = vld [vmem:[%s326 + $0x580] sm:$0xff]
        %v787 = vld [vmem:[%s326 + $0x588] sm:$0xff]
        %v788 = vld [vmem:[%s326 + $0x590] sm:$0xff]
        %v789 = vld [vmem:[%s326 + $0x598] sm:$0xff]
        %v790 = vld [vmem:[%s326 + $0x5a0] sm:$0xff]
        %v791 = vld [vmem:[%s326 + $0x5a8] sm:$0xff]
        %v792 = vld [vmem:[%s326 + $0x5b0] sm:$0xff]
        %v793 = vld [vmem:[%s326 + $0x5b8] sm:$0xff]
        %v794 = vld [vmem:[%s326 + $0x5c0] sm:$0xff]
        %v795 = vld [vmem:[%s326 + $0x5c8] sm:$0xff]
        %v796 = vld [vmem:[%s326 + $0x5d0] sm:$0xff]
        %v797 = vld [vmem:[%s326 + $0x5d8] sm:$0xff]
        %v798 = vld [vmem:[%s326 + $0x5e0] sm:$0xff]
        %v799 = vld [vmem:[%s326 + $0x5e8] sm:$0xff]
        %v800 = vld [vmem:[%s326 + $0x5f0] sm:$0xff]
        %v801 = vld [vmem:[%s326 + $0x5f8] sm:$0xff]
        %v802 = vld [vmem:[%s326 + $0x600] sm:$0xff]
        %v803 = vld [vmem:[%s326 + $0x608] sm:$0xff]
        %v804 = vld [vmem:[%s326 + $0x610] sm:$0xff]
        %v805 = vld [vmem:[%s326 + $0x618] sm:$0xff]
        %v806 = vld [vmem:[%s326 + $0x620] sm:$0xff]
        %v807 = vld [vmem:[%s326 + $0x628] sm:$0xff]
        %v808 = vld [vmem:[%s326 + $0x630] sm:$0xff]
        %v809 = vld [vmem:[%s326 + $0x638] sm:$0xff]
        %v810 = vld [vmem:[%s326 + $0x640] sm:$0xff]
        %v811 = vld [vmem:[%s326 + $0x648] sm:$0xff]
        %v812 = vld [vmem:[%s326 + $0x650] sm:$0xff]
        %v813 = vld [vmem:[%s326 + $0x658] sm:$0xff]
        %v814 = vld [vmem:[%s326 + $0x660] sm:$0xff]
        %v815 = vld [vmem:[%s326 + $0x668] sm:$0xff]
        %v816 = vld [vmem:[%s326 + $0x670] sm:$0xff]
        %v817 = vld [vmem:[%s326 + $0x678] sm:$0xff]
        %v818 = vld [vmem:[%s326 + $0x680] sm:$0xff]
        %v819 = vld [vmem:[%s326 + $0x688] sm:$0xff]
        %v820 = vld [vmem:[%s326 + $0x690] sm:$0xff]
        %v821 = vld [vmem:[%s326 + $0x698] sm:$0xff]
        %v822 = vld [vmem:[%s326 + $0x6a0] sm:$0xff]
        %v823 = vld [vmem:[%s326 + $0x6a8] sm:$0xff]
        %v824 = vld [vmem:[%s326 + $0x6b0] sm:$0xff]
        %v825 = vld [vmem:[%s326 + $0x6b8] sm:$0xff]
        %v826 = vld [vmem:[%s326 + $0x6c0] sm:$0xff]
        %v827 = vld [vmem:[%s326 + $0x6c8] sm:$0xff]
        %v828 = vld [vmem:[%s326 + $0x6d0] sm:$0xff]
        %v829 = vld [vmem:[%s326 + $0x6d8] sm:$0xff]
        %v830 = vld [vmem:[%s326 + $0x6e0] sm:$0xff]
        %v831 = vld [vmem:[%s326 + $0x6e8] sm:$0xff]
        %v832 = vld [vmem:[%s326 + $0x6f0] sm:$0xff]
        %v833 = vld [vmem:[%s326 + $0x6f8] sm:$0xff]
        %v834 = vld [vmem:[%s326 + $0x700] sm:$0xff]
        %v835 = vld [vmem:[%s326 + $0x708] sm:$0xff]
        %v836 = vld [vmem:[%s326 + $0x710] sm:$0xff]
        %v837 = vld [vmem:[%s326 + $0x718] sm:$0xff]
        %v838 = vld [vmem:[%s326 + $0x720] sm:$0xff]
        %v839 = vld [vmem:[%s326 + $0x728] sm:$0xff]
        %v840 = vld [vmem:[%s326 + $0x730] sm:$0xff]
        %v841 = vld [vmem:[%s326 + $0x738] sm:$0xff]
        %v842 = vld [vmem:[%s326 + $0x740] sm:$0xff]
        %v843 = vld [vmem:[%s326 + $0x748] sm:$0xff]
        %v844 = vld [vmem:[%s326 + $0x750] sm:$0xff]
        %v845 = vld [vmem:[%s326 + $0x758] sm:$0xff]
        %v846 = vld [vmem:[%s326 + $0x760] sm:$0xff]
        %v847 = vld [vmem:[%s326 + $0x768] sm:$0xff]
        %v848 = vld [vmem:[%s326 + $0x770] sm:$0xff]
        %v849 = vld [vmem:[%s326 + $0x778] sm:$0xff]
        %v850 = vld [vmem:[%s326 + $0x780] sm:$0xff]
        %v851 = vld [vmem:[%s326 + $0x788] sm:$0xff]
        %v852 = vld [vmem:[%s326 + $0x790] sm:$0xff]
        %v853 = vld [vmem:[%s326 + $0x798] sm:$0xff]
        %v854 = vld [vmem:[%s326 + $0x7a0] sm:$0xff]
        %v855 = vld [vmem:[%s326 + $0x7a8] sm:$0xff]
        %v856 = vld [vmem:[%s326 + $0x7b0] sm:$0xff]
        %v857 = vld [vmem:[%s326 + $0x7b8] sm:$0xff]
        %v858 = vld [vmem:[%s326 + $0x7c0] sm:$0xff]
        %v859 = vld [vmem:[%s326 + $0x7c8] sm:$0xff]
        %v860 = vld [vmem:[%s326 + $0x7d0] sm:$0xff]
        %v861 = vld [vmem:[%s326 + $0x7d8] sm:$0xff]
        %v862 = vld [vmem:[%s326 + $0x7e0] sm:$0xff]
        %v863 = vld [vmem:[%s326 + $0x7e8] sm:$0xff]
        %v864 = vld [vmem:[%s326 + $0x7f0] sm:$0xff]
        %v865 = vld [vmem:[%s326 + $0x7f8] sm:$0xff]
        %v866 = vld [vmem:[%s326 + $0x800] sm:$0xff]
        %v867 = vld [vmem:[%s326 + $0x808] sm:$0xff]
        %v868 = vld [vmem:[%s326 + $0x810] sm:$0xff]
        %v869 = vld [vmem:[%s326 + $0x818] sm:$0xff]
        %v870 = vld [vmem:[%s326 + $0x820] sm:$0xff]
        %v871 = vld [vmem:[%s326 + $0x828] sm:$0xff]
        %v872 = vld [vmem:[%s326 + $0x830] sm:$0xff]
        %v873 = vld [vmem:[%s326 + $0x838] sm:$0xff]
        %v874 = vld [vmem:[%s326 + $0x840] sm:$0xff]
        %v875 = vld [vmem:[%s326 + $0x848] sm:$0xff]
        %v876 = vld [vmem:[%s326 + $0x850] sm:$0xff]
        %v877 = vld [vmem:[%s326 + $0x858] sm:$0xff]
        %v878 = vld [vmem:[%s326 + $0x860] sm:$0xff]
        %v879 = vld [vmem:[%s326 + $0x868] sm:$0xff]
        %v880 = vld [vmem:[%s326 + $0x870] sm:$0xff]
        %v881 = vld [vmem:[%s326 + $0x878] sm:$0xff]
        %v882 = vld [vmem:[%s326 + $0x880] sm:$0xff]
        %v883 = vld [vmem:[%s326 + $0x888] sm:$0xff]
        %v884 = vld [vmem:[%s326 + $0x890] sm:$0xff]
        %v885 = vld [vmem:[%s326 + $0x898] sm:$0xff]
        %v886 = vld [vmem:[%s326 + $0x8a0] sm:$0xff]
        %v887 = vld [vmem:[%s326 + $0x8a8] sm:$0xff]
        %v888 = vld [vmem:[%s326 + $0x8b0] sm:$0xff]
        %v889 = vld [vmem:[%s326 + $0x8b8] sm:$0xff]
        %v890 = vld [vmem:[%s326 + $0x8c0] sm:$0xff]
        %v891 = vld [vmem:[%s326 + $0x8c8] sm:$0xff]
        %v892 = vld [vmem:[%s326 + $0x8d0] sm:$0xff]
        %v893 = vld [vmem:[%s326 + $0x8d8] sm:$0xff]
        %v894 = vld [vmem:[%s326 + $0x8e0] sm:$0xff]
        %v895 = vld [vmem:[%s326 + $0x8e8] sm:$0xff]
        %v896 = vld [vmem:[%s326 + $0x8f0] sm:$0xff]
        %v897 = vld [vmem:[%s326 + $0x8f8] sm:$0xff]
        %v898 = vld [vmem:[%s326 + $0x900] sm:$0xff]
        %v899 = vld [vmem:[%s326 + $0x908] sm:$0xff]
        %v900 = vld [vmem:[%s326 + $0x910] sm:$0xff]
        %v901 = vld [vmem:[%s326 + $0x918] sm:$0xff]
        %v902 = vld [vmem:[%s326 + $0x920] sm:$0xff]
        %v903 = vld [vmem:[%s326 + $0x928] sm:$0xff]
        %v904 = vld [vmem:[%s326 + $0x930] sm:$0xff]
        %v905 = vld [vmem:[%s326 + $0x938] sm:$0xff]
        %v906 = vld [vmem:[%s326 + $0x940] sm:$0xff]
        %v907 = vld [vmem:[%s326 + $0x948] sm:$0xff]
        %v908 = vld [vmem:[%s326 + $0x950] sm:$0xff]
        %v909 = vld [vmem:[%s326 + $0x958] sm:$0xff]
        %v910 = vld [vmem:[%s326 + $0x960] sm:$0xff]
        %v911 = vld [vmem:[%s326 + $0x968] sm:$0xff]
        %v912 = vld [vmem:[%s326 + $0x970] sm:$0xff]
        %v913 = vld [vmem:[%s326 + $0x978] sm:$0xff]
        %v914 = vld [vmem:[%s326 + $0x980] sm:$0xff]
        %v915 = vld [vmem:[%s326 + $0x988] sm:$0xff]
        %v916 = vld [vmem:[%s326 + $0x990] sm:$0xff]
        %v917 = vld [vmem:[%s326 + $0x998] sm:$0xff]
        %v918 = vld [vmem:[%s326 + $0x9a0] sm:$0xff]
        %v919 = vld [vmem:[%s326 + $0x9a8] sm:$0xff]
        %v920 = vld [vmem:[%s326 + $0x9b0] sm:$0xff]
        %v921 = vld [vmem:[%s326 + $0x9b8] sm:$0xff]
        %v922 = vld [vmem:[%s326 + $0x9c0] sm:$0xff]
        %v923 = vld [vmem:[%s326 + $0x9c8] sm:$0xff]
        %v924 = vld [vmem:[%s326 + $0x9d0] sm:$0xff]
        %v925 = vld [vmem:[%s326 + $0x9d8] sm:$0xff]
        %v926 = vld [vmem:[%s326 + $0x9e0] sm:$0xff]
        %v927 = vld [vmem:[%s326 + $0x9e8] sm:$0xff]
        %v928 = vld [vmem:[%s326 + $0x9f0] sm:$0xff]
        %v929 = vld [vmem:[%s326 + $0x9f8] sm:$0xff]
        %v930 = vld [vmem:[%s326 + $0xa00] sm:$0xff]
        %v931 = vld [vmem:[%s326 + $0xa08] sm:$0xff]
        %v932 = vld [vmem:[%s326 + $0xa10] sm:$0xff]
        %v933 = vld [vmem:[%s326 + $0xa18] sm:$0xff]
        %v934 = vld [vmem:[%s326 + $0xa20] sm:$0xff]
        %v935 = vld [vmem:[%s326 + $0xa28] sm:$0xff]
        %v936 = vld [vmem:[%s326 + $0xa30] sm:$0xff]
        %v937 = vld [vmem:[%s326 + $0xa38] sm:$0xff]
        %v938 = vld [vmem:[%s326 + $0xa40] sm:$0xff]
        %v939 = vld [vmem:[%s326 + $0xa48] sm:$0xff]
        %v940 = vld [vmem:[%s326 + $0xa50] sm:$0xff]
        %v941 = vld [vmem:[%s326 + $0xa58] sm:$0xff]
        %v942 = vld [vmem:[%s326 + $0xa60] sm:$0xff]
        %v943 = vld [vmem:[%s326 + $0xa68] sm:$0xff]
        %v944 = vld [vmem:[%s326 + $0xa70] sm:$0xff]
        %v945 = vld [vmem:[%s326 + $0xa78] sm:$0xff]
        %v946 = vld [vmem:[%s326 + $0xa80] sm:$0xff]
        %v947 = vld [vmem:[%s326 + $0xa88] sm:$0xff]
        %v948 = vld [vmem:[%s326 + $0xa90] sm:$0xff]
        %v949 = vld [vmem:[%s326 + $0xa98] sm:$0xff]
        %v950 = vld [vmem:[%s326 + $0xaa0] sm:$0xff]
        %v951 = vld [vmem:[%s326 + $0xaa8] sm:$0xff]
        %v952 = vld [vmem:[%s326 + $0xab0] sm:$0xff]
        %v953 = vld [vmem:[%s326 + $0xab8] sm:$0xff]
        %v954 = vld [vmem:[%s326 + $0xac0] sm:$0xff]
        %v955 = vld [vmem:[%s326 + $0xac8] sm:$0xff]
        %v956 = vld [vmem:[%s326 + $0xad0] sm:$0xff]
        %v957 = vld [vmem:[%s326 + $0xad8] sm:$0xff]
        %v958 = vld [vmem:[%s326 + $0xae0] sm:$0xff]
        %v959 = vld [vmem:[%s326 + $0xae8] sm:$0xff]
        %v960 = vld [vmem:[%s326 + $0xaf0] sm:$0xff]
        %v961 = vld [vmem:[%s326 + $0xaf8] sm:$0xff]
        %v962 = vld [vmem:[%s326 + $0xb00] sm:$0xff]
        %v963 = vld [vmem:[%s326 + $0xb08] sm:$0xff]
        %v964 = vld [vmem:[%s326 + $0xb10] sm:$0xff]
        %v965 = vld [vmem:[%s326 + $0xb18] sm:$0xff]
        %v966 = vld [vmem:[%s326 + $0xb20] sm:$0xff]
        %v967 = vld [vmem:[%s326 + $0xb28] sm:$0xff]
        %v968 = vld [vmem:[%s326 + $0xb30] sm:$0xff]
        %v969 = vld [vmem:[%s326 + $0xb38] sm:$0xff]
        %v970 = vld [vmem:[%s326 + $0xb40] sm:$0xff]
        %v971 = vld [vmem:[%s326 + $0xb48] sm:$0xff]
        %v972 = vld [vmem:[%s326 + $0xb50] sm:$0xff]
        %v973 = vld [vmem:[%s326 + $0xb58] sm:$0xff]
        %v974 = vld [vmem:[%s326 + $0xb60] sm:$0xff]
        %v975 = vld [vmem:[%s326 + $0xb68] sm:$0xff]
        %v976 = vld [vmem:[%s326 + $0xb70] sm:$0xff]
        %v977 = vld [vmem:[%s326 + $0xb78] sm:$0xff]
        %v978 = vld [vmem:[%s326 + $0xb80] sm:$0xff]
        %v979 = vld [vmem:[%s326 + $0xb88] sm:$0xff]
        %v980 = vld [vmem:[%s326 + $0xb90] sm:$0xff]
        %v981 = vld [vmem:[%s326 + $0xb98] sm:$0xff]
        %v982 = vld [vmem:[%s326 + $0xba0] sm:$0xff]
        %v983 = vld [vmem:[%s326 + $0xba8] sm:$0xff]
        %v984 = vld [vmem:[%s326 + $0xbb0] sm:$0xff]
        %v985 = vld [vmem:[%s326 + $0xbb8] sm:$0xff]
        %v986 = vld [vmem:[%s326 + $0xbc0] sm:$0xff]
        %v987 = vld [vmem:[%s326 + $0xbc8] sm:$0xff]
        %v988 = vld [vmem:[%s326 + $0xbd0] sm:$0xff]
        %v989 = vld [vmem:[%s326 + $0xbd8] sm:$0xff]
        %v990 = vld [vmem:[%s326 + $0xbe0] sm:$0xff]
        %v991 = vld [vmem:[%s326 + $0xbe8] sm:$0xff]
        %v992 = vld [vmem:[%s326 + $0xbf0] sm:$0xff]
        %v993 = vld [vmem:[%s326 + $0xbf8] sm:$0xff]
        %v994 = vld [vmem:[%s326 + $0xc00] sm:$0xff]
        %v995 = vld [vmem:[%s326 + $0xc08] sm:$0xff]
        %v996 = vld [vmem:[%s326 + $0xc10] sm:$0xff]
        %v997 = vld [vmem:[%s326 + $0xc18] sm:$0xff]
        %v998 = vld [vmem:[%s326 + $0xc20] sm:$0xff]
        %v999 = vld [vmem:[%s326 + $0xc28] sm:$0xff]
        %v1000 = vld [vmem:[%s326 + $0xc30] sm:$0xff]
        %v1001 = vld [vmem:[%s326 + $0xc38] sm:$0xff]
        %v1002 = vld [vmem:[%s326 + $0xc40] sm:$0xff]
        %v1003 = vld [vmem:[%s326 + $0xc48] sm:$0xff]
        %v1004 = vld [vmem:[%s326 + $0xc50] sm:$0xff]
        %v1005 = vld [vmem:[%s326 + $0xc58] sm:$0xff]
        %v1006 = vld [vmem:[%s326 + $0xc60] sm:$0xff]
        %v1007 = vld [vmem:[%s326 + $0xc68] sm:$0xff]
        %v1008 = vld [vmem:[%s326 + $0xc70] sm:$0xff]
        %v1009 = vld [vmem:[%s326 + $0xc78] sm:$0xff]
        %v1010 = vld [vmem:[%s363] sm:$0xff]
        %v1011 = vld [vmem:[%s363 + $0x8] sm:$0xff]
        %v1012 = vld [vmem:[%s363 + $0x10] sm:$0xff]
        %v1013 = vld [vmem:[%s363 + $0x18] sm:$0xff]
        %v1014 = vld [vmem:[%s363 + $0x20] sm:$0xff]
        %v1015 = vld [vmem:[%s363 + $0x28] sm:$0xff]
        %v1016 = vld [vmem:[%s363 + $0x30] sm:$0xff]
        %v1017 = vld [vmem:[%s363 + $0x38] sm:$0xff]
        %v1018 = vld [vmem:[%s363 + $0x40] sm:$0xff]
        %v1019 = vld [vmem:[%s363 + $0x48] sm:$0xff]
        %v1020 = vld [vmem:[%s363 + $0x50] sm:$0xff]
        %v1021 = vld [vmem:[%s363 + $0x58] sm:$0xff]
        %v1022 = vld [vmem:[%s363 + $0x60] sm:$0xff]
        %v1023 = vld [vmem:[%s363 + $0x68] sm:$0xff]
        %v1024 = vld [vmem:[%s363 + $0x70] sm:$0xff]
        %v1025 = vld [vmem:[%s363 + $0x78] sm:$0xff]
        %v1026 = vld [vmem:[%s363 + $0x80] sm:$0xff]
        %v1027 = vld [vmem:[%s363 + $0x88] sm:$0xff]
        %v1028 = vld [vmem:[%s363 + $0x90] sm:$0xff]
        %v1029 = vld [vmem:[%s363 + $0x98] sm:$0xff]
        %v1030 = vld [vmem:[%s363 + $0xa0] sm:$0xff]
        %v1031 = vld [vmem:[%s363 + $0xa8] sm:$0xff]
        %v1032 = vld [vmem:[%s363 + $0xb0] sm:$0xff]
        %v1033 = vld [vmem:[%s363 + $0xb8] sm:$0xff]
        %v1034 = vld [vmem:[%s363 + $0xc0] sm:$0xff]
        %v1035 = vunpack.c.l.bf16 %v1010
        %v1036 = vunpack.c.h.bf16 %v1010
        %v1037 = vunpack.c.l.bf16 %v1011
        %v1038 = vunpack.c.h.bf16 %v1011
        %v1039 = vunpack.c.l.bf16 %v1012
        %v1040 = vunpack.c.h.bf16 %v1012
        %v1041 = vunpack.c.l.bf16 %v1013
        %v1042 = vunpack.c.h.bf16 %v1013
        %v1043 = vunpack.c.l.bf16 %v1014
        %v1044 = vunpack.c.h.bf16 %v1014
        %v1045 = vunpack.c.l.bf16 %v1015
        %v1046 = vunpack.c.h.bf16 %v1015
        %v1047 = vunpack.c.l.bf16 %v1016
        %v1048 = vunpack.c.h.bf16 %v1016
        %v1049 = vunpack.c.l.bf16 %v1017
        %v1050 = vunpack.c.h.bf16 %v1017
        %v1051 = vunpack.c.l.bf16 %v1018
        %v1052 = vunpack.c.h.bf16 %v1018
        %v1053 = vunpack.c.l.bf16 %v1019
        %v1054 = vunpack.c.h.bf16 %v1019
        %v1055 = vunpack.c.l.bf16 %v1020
        %v1056 = vunpack.c.h.bf16 %v1020
        %v1057 = vunpack.c.l.bf16 %v1021
        %v1058 = vunpack.c.h.bf16 %v1021
        %v1059 = vunpack.c.l.bf16 %v1022
        %v1060 = vunpack.c.h.bf16 %v1022
        %v1061 = vunpack.c.l.bf16 %v1023
        %v1062 = vunpack.c.h.bf16 %v1023
        %v1063 = vunpack.c.l.bf16 %v1024
        %v1064 = vunpack.c.h.bf16 %v1024
        %v1065 = vunpack.c.l.bf16 %v1025
        %v1066 = vunpack.c.h.bf16 %v1025
        %v1067 = vunpack.c.l.bf16 %v1026
        %v1068 = vunpack.c.h.bf16 %v1026
        %v1069 = vunpack.c.l.bf16 %v1027
        %v1070 = vunpack.c.h.bf16 %v1027
        %v1071 = vunpack.c.l.bf16 %v1028
        %v1072 = vunpack.c.h.bf16 %v1028
        %v1073 = vunpack.c.l.bf16 %v1029
        %v1074 = vunpack.c.h.bf16 %v1029
        %v1075 = vunpack.c.l.bf16 %v1030
        %v1076 = vunpack.c.h.bf16 %v1030
        %v1077 = vunpack.c.l.bf16 %v1031
        %v1078 = vunpack.c.h.bf16 %v1031
        %v1079 = vunpack.c.l.bf16 %v1032
        %v1080 = vunpack.c.h.bf16 %v1032
        %v1081 = vunpack.c.l.bf16 %v1033
        %v1082 = vunpack.c.h.bf16 %v1033
        %v1083 = vunpack.c.l.bf16 %v1034
        %v1084 = vunpack.c.h.bf16 %v1034
        %v1485 = vunpack.c.l.b16 %v610
        %v1486 = vunpack.c.h.b16 %v610
        %v1487 = vunpack.c.l.b16 %v611
        %v1488 = vunpack.c.h.b16 %v611
        %v1489 = vunpack.c.l.b16 %v612
        %v1490 = vunpack.c.h.b16 %v612
        %v1491 = vunpack.c.l.b16 %v613
        %v1492 = vunpack.c.h.b16 %v613
        %v1493 = vunpack.c.l.b16 %v614
        %v1494 = vunpack.c.h.b16 %v614
        %v1495 = vunpack.c.l.b16 %v615
        %v1496 = vunpack.c.h.b16 %v615
        %v1497 = vunpack.c.l.b16 %v616
        %v1498 = vunpack.c.h.b16 %v616
        %v1499 = vunpack.c.l.b16 %v617
        %v1500 = vunpack.c.h.b16 %v617
        %v1501 = vunpack.c.l.b16 %v618
        %v1502 = vunpack.c.h.b16 %v618
        %v1503 = vunpack.c.l.b16 %v619
        %v1504 = vunpack.c.h.b16 %v619
        %v1505 = vunpack.c.l.b16 %v620
        %v1506 = vunpack.c.h.b16 %v620
        %v1507 = vunpack.c.l.b16 %v621
        %v1508 = vunpack.c.h.b16 %v621
        %v1509 = vunpack.c.l.b16 %v622
        %v1510 = vunpack.c.h.b16 %v622
        %v1511 = vunpack.c.l.b16 %v623
        %v1512 = vunpack.c.h.b16 %v623
        %v1513 = vunpack.c.l.b16 %v624
        %v1514 = vunpack.c.h.b16 %v624
        %v1515 = vunpack.c.l.b16 %v625
        %v1516 = vunpack.c.h.b16 %v625
        %v1517 = vunpack.c.l.b16 %v626
        %v1518 = vunpack.c.h.b16 %v626
        %v1519 = vunpack.c.l.b16 %v627
        %v1520 = vunpack.c.h.b16 %v627
        %v1521 = vunpack.c.l.b16 %v628
        %v1522 = vunpack.c.h.b16 %v628
        %v1523 = vunpack.c.l.b16 %v629
        %v1524 = vunpack.c.h.b16 %v629
        %v1525 = vunpack.c.l.b16 %v630
        %v1526 = vunpack.c.h.b16 %v630
        %v1527 = vunpack.c.l.b16 %v631
        %v1528 = vunpack.c.h.b16 %v631
        %v1529 = vunpack.c.l.b16 %v632
        %v1530 = vunpack.c.h.b16 %v632
        %v1531 = vunpack.c.l.b16 %v633
        %v1532 = vunpack.c.h.b16 %v633
        %v1533 = vunpack.c.l.b16 %v634
        %v1534 = vunpack.c.h.b16 %v634
        %v1535 = vunpack.c.l.b16 %v635
        %v1536 = vunpack.c.h.b16 %v635
        %v1537 = vunpack.c.l.b16 %v636
        %v1538 = vunpack.c.h.b16 %v636
        %v1539 = vunpack.c.l.b16 %v637
        %v1540 = vunpack.c.h.b16 %v637
        %v1541 = vunpack.c.l.b16 %v638
        %v1542 = vunpack.c.h.b16 %v638
        %v1543 = vunpack.c.l.b16 %v639
        %v1544 = vunpack.c.h.b16 %v639
        %v1545 = vunpack.c.l.b16 %v640
        %v1546 = vunpack.c.h.b16 %v640
        %v1547 = vunpack.c.l.b16 %v641
        %v1548 = vunpack.c.h.b16 %v641
        %v1549 = vunpack.c.l.b16 %v642
        %v1550 = vunpack.c.h.b16 %v642
        %v1551 = vunpack.c.l.b16 %v643
        %v1552 = vunpack.c.h.b16 %v643
        %v1553 = vunpack.c.l.b16 %v644
        %v1554 = vunpack.c.h.b16 %v644
        %v1555 = vunpack.c.l.b16 %v645
        %v1556 = vunpack.c.h.b16 %v645
        %v1557 = vunpack.c.l.b16 %v646
        %v1558 = vunpack.c.h.b16 %v646
        %v1559 = vunpack.c.l.b16 %v647
        %v1560 = vunpack.c.h.b16 %v647
        %v1561 = vunpack.c.l.b16 %v648
        %v1562 = vunpack.c.h.b16 %v648
        %v1563 = vunpack.c.l.b16 %v649
        %v1564 = vunpack.c.h.b16 %v649
        %v1565 = vunpack.c.l.b16 %v650
        %v1566 = vunpack.c.h.b16 %v650
        %v1567 = vunpack.c.l.b16 %v651
        %v1568 = vunpack.c.h.b16 %v651
        %v1569 = vunpack.c.l.b16 %v652
        %v1570 = vunpack.c.h.b16 %v652
        %v1571 = vunpack.c.l.b16 %v653
        %v1572 = vunpack.c.h.b16 %v653
        %v1573 = vunpack.c.l.b16 %v654
        %v1574 = vunpack.c.h.b16 %v654
        %v1575 = vunpack.c.l.b16 %v655
        %v1576 = vunpack.c.h.b16 %v655
        %v1577 = vunpack.c.l.b16 %v656
        %v1578 = vunpack.c.h.b16 %v656
        %v1579 = vunpack.c.l.b16 %v657
        %v1580 = vunpack.c.h.b16 %v657
        %v1581 = vunpack.c.l.b16 %v658
        %v1582 = vunpack.c.h.b16 %v658
        %v1583 = vunpack.c.l.b16 %v659
        %v1584 = vunpack.c.h.b16 %v659
        %v1585 = vunpack.c.l.b16 %v660
        %v1586 = vunpack.c.h.b16 %v660
        %v1587 = vunpack.c.l.b16 %v661
        %v1588 = vunpack.c.h.b16 %v661
        %v1589 = vunpack.c.l.b16 %v662
        %v1590 = vunpack.c.h.b16 %v662
        %v1591 = vunpack.c.l.b16 %v663
        %v1592 = vunpack.c.h.b16 %v663
        %v1593 = vunpack.c.l.b16 %v664
        %v1594 = vunpack.c.h.b16 %v664
        %v1595 = vunpack.c.l.b16 %v665
        %v1596 = vunpack.c.h.b16 %v665
        %v1597 = vunpack.c.l.b16 %v666
        %v1598 = vunpack.c.h.b16 %v666
        %v1599 = vunpack.c.l.b16 %v667
        %v1600 = vunpack.c.h.b16 %v667
        %v1601 = vunpack.c.l.b16 %v668
        %v1602 = vunpack.c.h.b16 %v668
        %v1603 = vunpack.c.l.b16 %v669
        %v1604 = vunpack.c.h.b16 %v669
        %v1605 = vunpack.c.l.b16 %v670
        %v1606 = vunpack.c.h.b16 %v670
        %v1607 = vunpack.c.l.b16 %v671
        %v1608 = vunpack.c.h.b16 %v671
        %v1609 = vunpack.c.l.b16 %v672
        %v1610 = vunpack.c.h.b16 %v672
        %v1611 = vunpack.c.l.b16 %v673
        %v1612 = vunpack.c.h.b16 %v673
        %v1613 = vunpack.c.l.b16 %v674
        %v1614 = vunpack.c.h.b16 %v674
        %v1615 = vunpack.c.l.b16 %v675
        %v1616 = vunpack.c.h.b16 %v675
        %v1617 = vunpack.c.l.b16 %v676
        %v1618 = vunpack.c.h.b16 %v676
        %v1619 = vunpack.c.l.b16 %v677
        %v1620 = vunpack.c.h.b16 %v677
        %v1621 = vunpack.c.l.b16 %v678
        %v1622 = vunpack.c.h.b16 %v678
        %v1623 = vunpack.c.l.b16 %v679
        %v1624 = vunpack.c.h.b16 %v679
        %v1625 = vunpack.c.l.b16 %v680
        %v1626 = vunpack.c.h.b16 %v680
        %v1627 = vunpack.c.l.b16 %v681
        %v1628 = vunpack.c.h.b16 %v681
        %v1629 = vunpack.c.l.b16 %v682
        %v1630 = vunpack.c.h.b16 %v682
        %v1631 = vunpack.c.l.b16 %v683
        %v1632 = vunpack.c.h.b16 %v683
        %v1633 = vunpack.c.l.b16 %v684
        %v1634 = vunpack.c.h.b16 %v684
        %v1635 = vunpack.c.l.b16 %v685
        %v1636 = vunpack.c.h.b16 %v685
        %v1637 = vunpack.c.l.b16 %v686
        %v1638 = vunpack.c.h.b16 %v686
        %v1639 = vunpack.c.l.b16 %v687
        %v1640 = vunpack.c.h.b16 %v687
        %v1641 = vunpack.c.l.b16 %v688
        %v1642 = vunpack.c.h.b16 %v688
        %v1643 = vunpack.c.l.b16 %v689
        %v1644 = vunpack.c.h.b16 %v689
        %v1645 = vunpack.c.l.b16 %v690
        %v1646 = vunpack.c.h.b16 %v690
        %v1647 = vunpack.c.l.b16 %v691
        %v1648 = vunpack.c.h.b16 %v691
        %v1649 = vunpack.c.l.b16 %v692
        %v1650 = vunpack.c.h.b16 %v692
        %v1651 = vunpack.c.l.b16 %v693
        %v1652 = vunpack.c.h.b16 %v693
        %v1653 = vunpack.c.l.b16 %v694
        %v1654 = vunpack.c.h.b16 %v694
        %v1655 = vunpack.c.l.b16 %v695
        %v1656 = vunpack.c.h.b16 %v695
        %v1657 = vunpack.c.l.b16 %v696
        %v1658 = vunpack.c.h.b16 %v696
        %v1659 = vunpack.c.l.b16 %v697
        %v1660 = vunpack.c.h.b16 %v697
        %v1661 = vunpack.c.l.b16 %v698
        %v1662 = vunpack.c.h.b16 %v698
        %v1663 = vunpack.c.l.b16 %v699
        %v1664 = vunpack.c.h.b16 %v699
        %v1665 = vunpack.c.l.b16 %v700
        %v1666 = vunpack.c.h.b16 %v700
        %v1667 = vunpack.c.l.b16 %v701
        %v1668 = vunpack.c.h.b16 %v701
        %v1669 = vunpack.c.l.b16 %v702
        %v1670 = vunpack.c.h.b16 %v702
        %v1671 = vunpack.c.l.b16 %v703
        %v1672 = vunpack.c.h.b16 %v703
        %v1673 = vunpack.c.l.b16 %v704
        %v1674 = vunpack.c.h.b16 %v704
        %v1675 = vunpack.c.l.b16 %v705
        %v1676 = vunpack.c.h.b16 %v705
        %v1677 = vunpack.c.l.b16 %v706
        %v1678 = vunpack.c.h.b16 %v706
        %v1679 = vunpack.c.l.b16 %v707
        %v1680 = vunpack.c.h.b16 %v707
        %v1681 = vunpack.c.l.b16 %v708
        %v1682 = vunpack.c.h.b16 %v708
        %v1683 = vunpack.c.l.b16 %v709
        %v1684 = vunpack.c.h.b16 %v709
        %v1685 = vunpack.c.l.b16 %v710
        %v1686 = vunpack.c.h.b16 %v710
        %v1687 = vunpack.c.l.b16 %v711
        %v1688 = vunpack.c.h.b16 %v711
        %v1689 = vunpack.c.l.b16 %v712
        %v1690 = vunpack.c.h.b16 %v712
        %v1691 = vunpack.c.l.b16 %v713
        %v1692 = vunpack.c.h.b16 %v713
        %v1693 = vunpack.c.l.b16 %v714
        %v1694 = vunpack.c.h.b16 %v714
        %v1695 = vunpack.c.l.b16 %v715
        %v1696 = vunpack.c.h.b16 %v715
        %v1697 = vunpack.c.l.b16 %v716
        %v1698 = vunpack.c.h.b16 %v716
        %v1699 = vunpack.c.l.b16 %v717
        %v1700 = vunpack.c.h.b16 %v717
        %v1701 = vunpack.c.l.b16 %v718
        %v1702 = vunpack.c.h.b16 %v718
        %v1703 = vunpack.c.l.b16 %v719
        %v1704 = vunpack.c.h.b16 %v719
        %v1705 = vunpack.c.l.b16 %v720
        %v1706 = vunpack.c.h.b16 %v720
        %v1707 = vunpack.c.l.b16 %v721
        %v1708 = vunpack.c.h.b16 %v721
        %v1709 = vunpack.c.l.b16 %v722
        %v1710 = vunpack.c.h.b16 %v722
        %v1711 = vunpack.c.l.b16 %v723
        %v1712 = vunpack.c.h.b16 %v723
        %v1713 = vunpack.c.l.b16 %v724
        %v1714 = vunpack.c.h.b16 %v724
        %v1715 = vunpack.c.l.b16 %v725
        %v1716 = vunpack.c.h.b16 %v725
        %v1717 = vunpack.c.l.b16 %v726
        %v1718 = vunpack.c.h.b16 %v726
        %v1719 = vunpack.c.l.b16 %v727
        %v1720 = vunpack.c.h.b16 %v727
        %v1721 = vunpack.c.l.b16 %v728
        %v1722 = vunpack.c.h.b16 %v728
        %v1723 = vunpack.c.l.b16 %v729
        %v1724 = vunpack.c.h.b16 %v729
        %v1725 = vunpack.c.l.b16 %v730
        %v1726 = vunpack.c.h.b16 %v730
        %v1727 = vunpack.c.l.b16 %v731
        %v1728 = vunpack.c.h.b16 %v731
        %v1729 = vunpack.c.l.b16 %v732
        %v1730 = vunpack.c.h.b16 %v732
        %v1731 = vunpack.c.l.b16 %v733
        %v1732 = vunpack.c.h.b16 %v733
        %v1733 = vunpack.c.l.b16 %v734
        %v1734 = vunpack.c.h.b16 %v734
        %v1735 = vunpack.c.l.b16 %v735
        %v1736 = vunpack.c.h.b16 %v735
        %v1737 = vunpack.c.l.b16 %v736
        %v1738 = vunpack.c.h.b16 %v736
        %v1739 = vunpack.c.l.b16 %v737
        %v1740 = vunpack.c.h.b16 %v737
        %v1741 = vunpack.c.l.b16 %v738
        %v1742 = vunpack.c.h.b16 %v738
        %v1743 = vunpack.c.l.b16 %v739
        %v1744 = vunpack.c.h.b16 %v739
        %v1745 = vunpack.c.l.b16 %v740
        %v1746 = vunpack.c.h.b16 %v740
        %v1747 = vunpack.c.l.b16 %v741
        %v1748 = vunpack.c.h.b16 %v741
        %v1749 = vunpack.c.l.b16 %v742
        %v1750 = vunpack.c.h.b16 %v742
        %v1751 = vunpack.c.l.b16 %v743
        %v1752 = vunpack.c.h.b16 %v743
        %v1753 = vunpack.c.l.b16 %v744
        %v1754 = vunpack.c.h.b16 %v744
        %v1755 = vunpack.c.l.b16 %v745
        %v1756 = vunpack.c.h.b16 %v745
        %v1757 = vunpack.c.l.b16 %v746
        %v1758 = vunpack.c.h.b16 %v746
        %v1759 = vunpack.c.l.b16 %v747
        %v1760 = vunpack.c.h.b16 %v747
        %v1761 = vunpack.c.l.b16 %v748
        %v1762 = vunpack.c.h.b16 %v748
        %v1763 = vunpack.c.l.b16 %v749
        %v1764 = vunpack.c.h.b16 %v749
        %v1765 = vunpack.c.l.b16 %v750
        %v1766 = vunpack.c.h.b16 %v750
        %v1767 = vunpack.c.l.b16 %v751
        %v1768 = vunpack.c.h.b16 %v751
        %v1769 = vunpack.c.l.b16 %v752
        %v1770 = vunpack.c.h.b16 %v752
        %v1771 = vunpack.c.l.b16 %v753
        %v1772 = vunpack.c.h.b16 %v753
        %v1773 = vunpack.c.l.b16 %v754
        %v1774 = vunpack.c.h.b16 %v754
        %v1775 = vunpack.c.l.b16 %v755
        %v1776 = vunpack.c.h.b16 %v755
        %v1777 = vunpack.c.l.b16 %v756
        %v1778 = vunpack.c.h.b16 %v756
        %v1779 = vunpack.c.l.b16 %v757
        %v1780 = vunpack.c.h.b16 %v757
        %v1781 = vunpack.c.l.b16 %v758
        %v1782 = vunpack.c.h.b16 %v758
        %v1783 = vunpack.c.l.b16 %v759
        %v1784 = vunpack.c.h.b16 %v759
        %v1785 = vunpack.c.l.b16 %v760
        %v1786 = vunpack.c.h.b16 %v760
        %v1787 = vunpack.c.l.b16 %v761
        %v1788 = vunpack.c.h.b16 %v761
        %v1789 = vunpack.c.l.b16 %v762
        %v1790 = vunpack.c.h.b16 %v762
        %v1791 = vunpack.c.l.b16 %v763
        %v1792 = vunpack.c.h.b16 %v763
        %v1793 = vunpack.c.l.b16 %v764
        %v1794 = vunpack.c.h.b16 %v764
        %v1795 = vunpack.c.l.b16 %v765
        %v1796 = vunpack.c.h.b16 %v765
        %v1797 = vunpack.c.l.b16 %v766
        %v1798 = vunpack.c.h.b16 %v766
        %v1799 = vunpack.c.l.b16 %v767
        %v1800 = vunpack.c.h.b16 %v767
        %v1801 = vunpack.c.l.b16 %v768
        %v1802 = vunpack.c.h.b16 %v768
        %v1803 = vunpack.c.l.b16 %v769
        %v1804 = vunpack.c.h.b16 %v769
        %v1805 = vunpack.c.l.b16 %v770
        %v1806 = vunpack.c.h.b16 %v770
        %v1807 = vunpack.c.l.b16 %v771
        %v1808 = vunpack.c.h.b16 %v771
        %v1809 = vunpack.c.l.b16 %v772
        %v1810 = vunpack.c.h.b16 %v772
        %v1811 = vunpack.c.l.b16 %v773
        %v1812 = vunpack.c.h.b16 %v773
        %v1813 = vunpack.c.l.b16 %v774
        %v1814 = vunpack.c.h.b16 %v774
        %v1815 = vunpack.c.l.b16 %v775
        %v1816 = vunpack.c.h.b16 %v775
        %v1817 = vunpack.c.l.b16 %v776
        %v1818 = vunpack.c.h.b16 %v776
        %v1819 = vunpack.c.l.b16 %v777
        %v1820 = vunpack.c.h.b16 %v777
        %v1821 = vunpack.c.l.b16 %v778
        %v1822 = vunpack.c.h.b16 %v778
        %v1823 = vunpack.c.l.b16 %v779
        %v1824 = vunpack.c.h.b16 %v779
        %v1825 = vunpack.c.l.b16 %v780
        %v1826 = vunpack.c.h.b16 %v780
        %v1827 = vunpack.c.l.b16 %v781
        %v1828 = vunpack.c.h.b16 %v781
        %v1829 = vunpack.c.l.b16 %v782
        %v1830 = vunpack.c.h.b16 %v782
        %v1831 = vunpack.c.l.b16 %v783
        %v1832 = vunpack.c.h.b16 %v783
        %v1833 = vunpack.c.l.b16 %v784
        %v1834 = vunpack.c.h.b16 %v784
        %v1835 = vunpack.c.l.b16 %v785
        %v1836 = vunpack.c.h.b16 %v785
        %v1837 = vunpack.c.l.b16 %v786
        %v1838 = vunpack.c.h.b16 %v786
        %v1839 = vunpack.c.l.b16 %v787
        %v1840 = vunpack.c.h.b16 %v787
        %v1841 = vunpack.c.l.b16 %v788
        %v1842 = vunpack.c.h.b16 %v788
        %v1843 = vunpack.c.l.b16 %v789
        %v1844 = vunpack.c.h.b16 %v789
        %v1845 = vunpack.c.l.b16 %v790
        %v1846 = vunpack.c.h.b16 %v790
        %v1847 = vunpack.c.l.b16 %v791
        %v1848 = vunpack.c.h.b16 %v791
        %v1849 = vunpack.c.l.b16 %v792
        %v1850 = vunpack.c.h.b16 %v792
        %v1851 = vunpack.c.l.b16 %v793
        %v1852 = vunpack.c.h.b16 %v793
        %v1853 = vunpack.c.l.b16 %v794
        %v1854 = vunpack.c.h.b16 %v794
        %v1855 = vunpack.c.l.b16 %v795
        %v1856 = vunpack.c.h.b16 %v795
        %v1857 = vunpack.c.l.b16 %v796
        %v1858 = vunpack.c.h.b16 %v796
        %v1859 = vunpack.c.l.b16 %v797
        %v1860 = vunpack.c.h.b16 %v797
        %v1861 = vunpack.c.l.b16 %v798
        %v1862 = vunpack.c.h.b16 %v798
        %v1863 = vunpack.c.l.b16 %v799
        %v1864 = vunpack.c.h.b16 %v799
        %v1865 = vunpack.c.l.b16 %v800
        %v1866 = vunpack.c.h.b16 %v800
        %v1867 = vunpack.c.l.b16 %v801
        %v1868 = vunpack.c.h.b16 %v801
        %v1869 = vunpack.c.l.b16 %v802
        %v1870 = vunpack.c.h.b16 %v802
        %v1871 = vunpack.c.l.b16 %v803
        %v1872 = vunpack.c.h.b16 %v803
        %v1873 = vunpack.c.l.b16 %v804
        %v1874 = vunpack.c.h.b16 %v804
        %v1875 = vunpack.c.l.b16 %v805
        %v1876 = vunpack.c.h.b16 %v805
        %v1877 = vunpack.c.l.b16 %v806
        %v1878 = vunpack.c.h.b16 %v806
        %v1879 = vunpack.c.l.b16 %v807
        %v1880 = vunpack.c.h.b16 %v807
        %v1881 = vunpack.c.l.b16 %v808
        %v1882 = vunpack.c.h.b16 %v808
        %v1883 = vunpack.c.l.b16 %v809
        %v1884 = vunpack.c.h.b16 %v809
        %v1885 = vunpack.c.l.b16 %v810
        %v1886 = vunpack.c.h.b16 %v810
        %v1887 = vunpack.c.l.b16 %v811
        %v1888 = vunpack.c.h.b16 %v811
        %v1889 = vunpack.c.l.b16 %v812
        %v1890 = vunpack.c.h.b16 %v812
        %v1891 = vunpack.c.l.b16 %v813
        %v1892 = vunpack.c.h.b16 %v813
        %v1893 = vunpack.c.l.b16 %v814
        %v1894 = vunpack.c.h.b16 %v814
        %v1895 = vunpack.c.l.b16 %v815
        %v1896 = vunpack.c.h.b16 %v815
        %v1897 = vunpack.c.l.b16 %v816
        %v1898 = vunpack.c.h.b16 %v816
        %v1899 = vunpack.c.l.b16 %v817
        %v1900 = vunpack.c.h.b16 %v817
        %v1901 = vunpack.c.l.b16 %v818
        %v1902 = vunpack.c.h.b16 %v818
        %v1903 = vunpack.c.l.b16 %v819
        %v1904 = vunpack.c.h.b16 %v819
        %v1905 = vunpack.c.l.b16 %v820
        %v1906 = vunpack.c.h.b16 %v820
        %v1907 = vunpack.c.l.b16 %v821
        %v1908 = vunpack.c.h.b16 %v821
        %v1909 = vunpack.c.l.b16 %v822
        %v1910 = vunpack.c.h.b16 %v822
        %v1911 = vunpack.c.l.b16 %v823
        %v1912 = vunpack.c.h.b16 %v823
        %v1913 = vunpack.c.l.b16 %v824
        %v1914 = vunpack.c.h.b16 %v824
        %v1915 = vunpack.c.l.b16 %v825
        %v1916 = vunpack.c.h.b16 %v825
        %v1917 = vunpack.c.l.b16 %v826
        %v1918 = vunpack.c.h.b16 %v826
        %v1919 = vunpack.c.l.b16 %v827
        %v1920 = vunpack.c.h.b16 %v827
        %v1921 = vunpack.c.l.b16 %v828
        %v1922 = vunpack.c.h.b16 %v828
        %v1923 = vunpack.c.l.b16 %v829
        %v1924 = vunpack.c.h.b16 %v829
        %v1925 = vunpack.c.l.b16 %v830
        %v1926 = vunpack.c.h.b16 %v830
        %v1927 = vunpack.c.l.b16 %v831
        %v1928 = vunpack.c.h.b16 %v831
        %v1929 = vunpack.c.l.b16 %v832
        %v1930 = vunpack.c.h.b16 %v832
        %v1931 = vunpack.c.l.b16 %v833
        %v1932 = vunpack.c.h.b16 %v833
        %v1933 = vunpack.c.l.b16 %v834
        %v1934 = vunpack.c.h.b16 %v834
        %v1935 = vunpack.c.l.b16 %v835
        %v1936 = vunpack.c.h.b16 %v835
        %v1937 = vunpack.c.l.b16 %v836
        %v1938 = vunpack.c.h.b16 %v836
        %v1939 = vunpack.c.l.b16 %v837
        %v1940 = vunpack.c.h.b16 %v837
        %v1941 = vunpack.c.l.b16 %v838
        %v1942 = vunpack.c.h.b16 %v838
        %v1943 = vunpack.c.l.b16 %v839
        %v1944 = vunpack.c.h.b16 %v839
        %v1945 = vunpack.c.l.b16 %v840
        %v1946 = vunpack.c.h.b16 %v840
        %v1947 = vunpack.c.l.b16 %v841
        %v1948 = vunpack.c.h.b16 %v841
        %v1949 = vunpack.c.l.b16 %v842
        %v1950 = vunpack.c.h.b16 %v842
        %v1951 = vunpack.c.l.b16 %v843
        %v1952 = vunpack.c.h.b16 %v843
        %v1953 = vunpack.c.l.b16 %v844
        %v1954 = vunpack.c.h.b16 %v844
        %v1955 = vunpack.c.l.b16 %v845
        %v1956 = vunpack.c.h.b16 %v845
        %v1957 = vunpack.c.l.b16 %v846
        %v1958 = vunpack.c.h.b16 %v846
        %v1959 = vunpack.c.l.b16 %v847
        %v1960 = vunpack.c.h.b16 %v847
        %v1961 = vunpack.c.l.b16 %v848
        %v1962 = vunpack.c.h.b16 %v848
        %v1963 = vunpack.c.l.b16 %v849
        %v1964 = vunpack.c.h.b16 %v849
        %v1965 = vunpack.c.l.b16 %v850
        %v1966 = vunpack.c.h.b16 %v850
        %v1967 = vunpack.c.l.b16 %v851
        %v1968 = vunpack.c.h.b16 %v851
        %v1969 = vunpack.c.l.b16 %v852
        %v1970 = vunpack.c.h.b16 %v852
        %v1971 = vunpack.c.l.b16 %v853
        %v1972 = vunpack.c.h.b16 %v853
        %v1973 = vunpack.c.l.b16 %v854
        %v1974 = vunpack.c.h.b16 %v854
        %v1975 = vunpack.c.l.b16 %v855
        %v1976 = vunpack.c.h.b16 %v855
        %v1977 = vunpack.c.l.b16 %v856
        %v1978 = vunpack.c.h.b16 %v856
        %v1979 = vunpack.c.l.b16 %v857
        %v1980 = vunpack.c.h.b16 %v857
        %v1981 = vunpack.c.l.b16 %v858
        %v1982 = vunpack.c.h.b16 %v858
        %v1983 = vunpack.c.l.b16 %v859
        %v1984 = vunpack.c.h.b16 %v859
        %v1985 = vunpack.c.l.b16 %v860
        %v1986 = vunpack.c.h.b16 %v860
        %v1987 = vunpack.c.l.b16 %v861
        %v1988 = vunpack.c.h.b16 %v861
        %v1989 = vunpack.c.l.b16 %v862
        %v1990 = vunpack.c.h.b16 %v862
        %v1991 = vunpack.c.l.b16 %v863
        %v1992 = vunpack.c.h.b16 %v863
        %v1993 = vunpack.c.l.b16 %v864
        %v1994 = vunpack.c.h.b16 %v864
        %v1995 = vunpack.c.l.b16 %v865
        %v1996 = vunpack.c.h.b16 %v865
        %v1997 = vunpack.c.l.b16 %v866
        %v1998 = vunpack.c.h.b16 %v866
        %v1999 = vunpack.c.l.b16 %v867
        %v2000 = vunpack.c.h.b16 %v867
        %v2001 = vunpack.c.l.b16 %v868
        %v2002 = vunpack.c.h.b16 %v868
        %v2003 = vunpack.c.l.b16 %v869
        %v2004 = vunpack.c.h.b16 %v869
        %v2005 = vunpack.c.l.b16 %v870
        %v2006 = vunpack.c.h.b16 %v870
        %v2007 = vunpack.c.l.b16 %v871
        %v2008 = vunpack.c.h.b16 %v871
        %v2009 = vunpack.c.l.b16 %v872
        %v2010 = vunpack.c.h.b16 %v872
        %v2011 = vunpack.c.l.b16 %v873
        %v2012 = vunpack.c.h.b16 %v873
        %v2013 = vunpack.c.l.b16 %v874
        %v2014 = vunpack.c.h.b16 %v874
        %v2015 = vunpack.c.l.b16 %v875
        %v2016 = vunpack.c.h.b16 %v875
        %v2017 = vunpack.c.l.b16 %v876
        %v2018 = vunpack.c.h.b16 %v876
        %v2019 = vunpack.c.l.b16 %v877
        %v2020 = vunpack.c.h.b16 %v877
        %v2021 = vunpack.c.l.b16 %v878
        %v2022 = vunpack.c.h.b16 %v878
        %v2023 = vunpack.c.l.b16 %v879
        %v2024 = vunpack.c.h.b16 %v879
        %v2025 = vunpack.c.l.b16 %v880
        %v2026 = vunpack.c.h.b16 %v880
        %v2027 = vunpack.c.l.b16 %v881
        %v2028 = vunpack.c.h.b16 %v881
        %v2029 = vunpack.c.l.b16 %v882
        %v2030 = vunpack.c.h.b16 %v882
        %v2031 = vunpack.c.l.b16 %v883
        %v2032 = vunpack.c.h.b16 %v883
        %v2033 = vunpack.c.l.b16 %v884
        %v2034 = vunpack.c.h.b16 %v884
        %v2035 = vunpack.c.l.b16 %v885
        %v2036 = vunpack.c.h.b16 %v885
        %v2037 = vunpack.c.l.b16 %v886
        %v2038 = vunpack.c.h.b16 %v886
        %v2039 = vunpack.c.l.b16 %v887
        %v2040 = vunpack.c.h.b16 %v887
        %v2041 = vunpack.c.l.b16 %v888
        %v2042 = vunpack.c.h.b16 %v888
        %v2043 = vunpack.c.l.b16 %v889
        %v2044 = vunpack.c.h.b16 %v889
        %v2045 = vunpack.c.l.b16 %v890
        %v2046 = vunpack.c.h.b16 %v890
        %v2047 = vunpack.c.l.b16 %v891
        %v2048 = vunpack.c.h.b16 %v891
        %v2049 = vunpack.c.l.b16 %v892
        %v2050 = vunpack.c.h.b16 %v892
        %v2051 = vunpack.c.l.b16 %v893
        %v2052 = vunpack.c.h.b16 %v893
        %v2053 = vunpack.c.l.b16 %v894
        %v2054 = vunpack.c.h.b16 %v894
        %v2055 = vunpack.c.l.b16 %v895
        %v2056 = vunpack.c.h.b16 %v895
        %v2057 = vunpack.c.l.b16 %v896
        %v2058 = vunpack.c.h.b16 %v896
        %v2059 = vunpack.c.l.b16 %v897
        %v2060 = vunpack.c.h.b16 %v897
        %v2061 = vunpack.c.l.b16 %v898
        %v2062 = vunpack.c.h.b16 %v898
        %v2063 = vunpack.c.l.b16 %v899
        %v2064 = vunpack.c.h.b16 %v899
        %v2065 = vunpack.c.l.b16 %v900
        %v2066 = vunpack.c.h.b16 %v900
        %v2067 = vunpack.c.l.b16 %v901
        %v2068 = vunpack.c.h.b16 %v901
        %v2069 = vunpack.c.l.b16 %v902
        %v2070 = vunpack.c.h.b16 %v902
        %v2071 = vunpack.c.l.b16 %v903
        %v2072 = vunpack.c.h.b16 %v903
        %v2073 = vunpack.c.l.b16 %v904
        %v2074 = vunpack.c.h.b16 %v904
        %v2075 = vunpack.c.l.b16 %v905
        %v2076 = vunpack.c.h.b16 %v905
        %v2077 = vunpack.c.l.b16 %v906
        %v2078 = vunpack.c.h.b16 %v906
        %v2079 = vunpack.c.l.b16 %v907
        %v2080 = vunpack.c.h.b16 %v907
        %v2081 = vunpack.c.l.b16 %v908
        %v2082 = vunpack.c.h.b16 %v908
        %v2083 = vunpack.c.l.b16 %v909
        %v2084 = vunpack.c.h.b16 %v909
        %v2085 = vunpack.c.l.b16 %v910
        %v2086 = vunpack.c.h.b16 %v910
        %v2087 = vunpack.c.l.b16 %v911
        %v2088 = vunpack.c.h.b16 %v911
        %v2089 = vunpack.c.l.b16 %v912
        %v2090 = vunpack.c.h.b16 %v912
        %v2091 = vunpack.c.l.b16 %v913
        %v2092 = vunpack.c.h.b16 %v913
        %v2093 = vunpack.c.l.b16 %v914
        %v2094 = vunpack.c.h.b16 %v914
        %v2095 = vunpack.c.l.b16 %v915
        %v2096 = vunpack.c.h.b16 %v915
        %v2097 = vunpack.c.l.b16 %v916
        %v2098 = vunpack.c.h.b16 %v916
        %v2099 = vunpack.c.l.b16 %v917
        %v2100 = vunpack.c.h.b16 %v917
        %v2101 = vunpack.c.l.b16 %v918
        %v2102 = vunpack.c.h.b16 %v918
        %v2103 = vunpack.c.l.b16 %v919
        %v2104 = vunpack.c.h.b16 %v919
        %v2105 = vunpack.c.l.b16 %v920
        %v2106 = vunpack.c.h.b16 %v920
        %v2107 = vunpack.c.l.b16 %v921
        %v2108 = vunpack.c.h.b16 %v921
        %v2109 = vunpack.c.l.b16 %v922
        %v2110 = vunpack.c.h.b16 %v922
        %v2111 = vunpack.c.l.b16 %v923
        %v2112 = vunpack.c.h.b16 %v923
        %v2113 = vunpack.c.l.b16 %v924
        %v2114 = vunpack.c.h.b16 %v924
        %v2115 = vunpack.c.l.b16 %v925
        %v2116 = vunpack.c.h.b16 %v925
        %v2117 = vunpack.c.l.b16 %v926
        %v2118 = vunpack.c.h.b16 %v926
        %v2119 = vunpack.c.l.b16 %v927
        %v2120 = vunpack.c.h.b16 %v927
        %v2121 = vunpack.c.l.b16 %v928
        %v2122 = vunpack.c.h.b16 %v928
        %v2123 = vunpack.c.l.b16 %v929
        %v2124 = vunpack.c.h.b16 %v929
        %v2125 = vunpack.c.l.b16 %v930
        %v2126 = vunpack.c.h.b16 %v930
        %v2127 = vunpack.c.l.b16 %v931
        %v2128 = vunpack.c.h.b16 %v931
        %v2129 = vunpack.c.l.b16 %v932
        %v2130 = vunpack.c.h.b16 %v932
        %v2131 = vunpack.c.l.b16 %v933
        %v2132 = vunpack.c.h.b16 %v933
        %v2133 = vunpack.c.l.b16 %v934
        %v2134 = vunpack.c.h.b16 %v934
        %v2135 = vunpack.c.l.b16 %v935
        %v2136 = vunpack.c.h.b16 %v935
        %v2137 = vunpack.c.l.b16 %v936
        %v2138 = vunpack.c.h.b16 %v936
        %v2139 = vunpack.c.l.b16 %v937
        %v2140 = vunpack.c.h.b16 %v937
        %v2141 = vunpack.c.l.b16 %v938
        %v2142 = vunpack.c.h.b16 %v938
        %v2143 = vunpack.c.l.b16 %v939
        %v2144 = vunpack.c.h.b16 %v939
        %v2145 = vunpack.c.l.b16 %v940
        %v2146 = vunpack.c.h.b16 %v940
        %v2147 = vunpack.c.l.b16 %v941
        %v2148 = vunpack.c.h.b16 %v941
        %v2149 = vunpack.c.l.b16 %v942
        %v2150 = vunpack.c.h.b16 %v942
        %v2151 = vunpack.c.l.b16 %v943
        %v2152 = vunpack.c.h.b16 %v943
        %v2153 = vunpack.c.l.b16 %v944
        %v2154 = vunpack.c.h.b16 %v944
        %v2155 = vunpack.c.l.b16 %v945
        %v2156 = vunpack.c.h.b16 %v945
        %v2157 = vunpack.c.l.b16 %v946
        %v2158 = vunpack.c.h.b16 %v946
        %v2159 = vunpack.c.l.b16 %v947
        %v2160 = vunpack.c.h.b16 %v947
        %v2161 = vunpack.c.l.b16 %v948
        %v2162 = vunpack.c.h.b16 %v948
        %v2163 = vunpack.c.l.b16 %v949
        %v2164 = vunpack.c.h.b16 %v949
        %v2165 = vunpack.c.l.b16 %v950
        %v2166 = vunpack.c.h.b16 %v950
        %v2167 = vunpack.c.l.b16 %v951
        %v2168 = vunpack.c.h.b16 %v951
        %v2169 = vunpack.c.l.b16 %v952
        %v2170 = vunpack.c.h.b16 %v952
        %v2171 = vunpack.c.l.b16 %v953
        %v2172 = vunpack.c.h.b16 %v953
        %v2173 = vunpack.c.l.b16 %v954
        %v2174 = vunpack.c.h.b16 %v954
        %v2175 = vunpack.c.l.b16 %v955
        %v2176 = vunpack.c.h.b16 %v955
        %v2177 = vunpack.c.l.b16 %v956
        %v2178 = vunpack.c.h.b16 %v956
        %v2179 = vunpack.c.l.b16 %v957
        %v2180 = vunpack.c.h.b16 %v957
        %v2181 = vunpack.c.l.b16 %v958
        %v2182 = vunpack.c.h.b16 %v958
        %v2183 = vunpack.c.l.b16 %v959
        %v2184 = vunpack.c.h.b16 %v959
        %v2185 = vunpack.c.l.b16 %v960
        %v2186 = vunpack.c.h.b16 %v960
        %v2187 = vunpack.c.l.b16 %v961
        %v2188 = vunpack.c.h.b16 %v961
        %v2189 = vunpack.c.l.b16 %v962
        %v2190 = vunpack.c.h.b16 %v962
        %v2191 = vunpack.c.l.b16 %v963
        %v2192 = vunpack.c.h.b16 %v963
        %v2193 = vunpack.c.l.b16 %v964
        %v2194 = vunpack.c.h.b16 %v964
        %v2195 = vunpack.c.l.b16 %v965
        %v2196 = vunpack.c.h.b16 %v965
        %v2197 = vunpack.c.l.b16 %v966
        %v2198 = vunpack.c.h.b16 %v966
        %v2199 = vunpack.c.l.b16 %v967
        %v2200 = vunpack.c.h.b16 %v967
        %v2201 = vunpack.c.l.b16 %v968
        %v2202 = vunpack.c.h.b16 %v968
        %v2203 = vunpack.c.l.b16 %v969
        %v2204 = vunpack.c.h.b16 %v969
        %v2205 = vunpack.c.l.b16 %v970
        %v2206 = vunpack.c.h.b16 %v970
        %v2207 = vunpack.c.l.b16 %v971
        %v2208 = vunpack.c.h.b16 %v971
        %v2209 = vunpack.c.l.b16 %v972
        %v2210 = vunpack.c.h.b16 %v972
        %v2211 = vunpack.c.l.b16 %v973
        %v2212 = vunpack.c.h.b16 %v973
        %v2213 = vunpack.c.l.b16 %v974
        %v2214 = vunpack.c.h.b16 %v974
        %v2215 = vunpack.c.l.b16 %v975
        %v2216 = vunpack.c.h.b16 %v975
        %v2217 = vunpack.c.l.b16 %v976
        %v2218 = vunpack.c.h.b16 %v976
        %v2219 = vunpack.c.l.b16 %v977
        %v2220 = vunpack.c.h.b16 %v977
        %v2221 = vunpack.c.l.b16 %v978
        %v2222 = vunpack.c.h.b16 %v978
        %v2223 = vunpack.c.l.b16 %v979
        %v2224 = vunpack.c.h.b16 %v979
        %v2225 = vunpack.c.l.b16 %v980
        %v2226 = vunpack.c.h.b16 %v980
        %v2227 = vunpack.c.l.b16 %v981
        %v2228 = vunpack.c.h.b16 %v981
        %v2229 = vunpack.c.l.b16 %v982
        %v2230 = vunpack.c.h.b16 %v982
        %v2231 = vunpack.c.l.b16 %v983
        %v2232 = vunpack.c.h.b16 %v983
        %v2233 = vunpack.c.l.b16 %v984
        %v2234 = vunpack.c.h.b16 %v984
        %v2235 = vunpack.c.l.b16 %v985
        %v2236 = vunpack.c.h.b16 %v985
        %v2237 = vunpack.c.l.b16 %v986
        %v2238 = vunpack.c.h.b16 %v986
        %v2239 = vunpack.c.l.b16 %v987
        %v2240 = vunpack.c.h.b16 %v987
        %v2241 = vunpack.c.l.b16 %v988
        %v2242 = vunpack.c.h.b16 %v988
        %v2243 = vunpack.c.l.b16 %v989
        %v2244 = vunpack.c.h.b16 %v989
        %v2245 = vunpack.c.l.b16 %v990
        %v2246 = vunpack.c.h.b16 %v990
        %v2247 = vunpack.c.l.b16 %v991
        %v2248 = vunpack.c.h.b16 %v991
        %v2249 = vunpack.c.l.b16 %v992
        %v2250 = vunpack.c.h.b16 %v992
        %v2251 = vunpack.c.l.b16 %v993
        %v2252 = vunpack.c.h.b16 %v993
        %v2253 = vunpack.c.l.b16 %v994
        %v2254 = vunpack.c.h.b16 %v994
        %v2255 = vunpack.c.l.b16 %v995
        %v2256 = vunpack.c.h.b16 %v995
        %v2257 = vunpack.c.l.b16 %v996
        %v2258 = vunpack.c.h.b16 %v996
        %v2259 = vunpack.c.l.b16 %v997
        %v2260 = vunpack.c.h.b16 %v997
        %v2261 = vunpack.c.l.b16 %v998
        %v2262 = vunpack.c.h.b16 %v998
        %v2263 = vunpack.c.l.b16 %v999
        %v2264 = vunpack.c.h.b16 %v999
        %v2265 = vunpack.c.l.b16 %v1000
        %v2266 = vunpack.c.h.b16 %v1000
        %v2267 = vunpack.c.l.b16 %v1001
        %v2268 = vunpack.c.h.b16 %v1001
        %v2269 = vunpack.c.l.b16 %v1002
        %v2270 = vunpack.c.h.b16 %v1002
        %v2271 = vunpack.c.l.b16 %v1003
        %v2272 = vunpack.c.h.b16 %v1003
        %v2273 = vunpack.c.l.b16 %v1004
        %v2274 = vunpack.c.h.b16 %v1004
        %v2275 = vunpack.c.l.b16 %v1005
        %v2276 = vunpack.c.h.b16 %v1005
        %v2277 = vunpack.c.l.b16 %v1006
        %v2278 = vunpack.c.h.b16 %v1006
        %v2279 = vunpack.c.l.b16 %v1007
        %v2280 = vunpack.c.h.b16 %v1007
        %v2281 = vunpack.c.l.b16 %v1008
        %v2282 = vunpack.c.h.b16 %v1008
        %v2283 = vunpack.c.l.b16 %v1009
        %v2284 = vunpack.c.h.b16 %v1009
        %v2285 = vpack.c.b16 %v1685, %v1485
        %v2286 = vpack.c.b16 %v1686, %v1486
        %v2287 = vpack.c.b16 %v1687, %v1487
        %v2288 = vpack.c.b16 %v1688, %v1488
        %v2289 = vpack.c.b16 %v1689, %v1489
        %v2290 = vpack.c.b16 %v1690, %v1490
        %v2291 = vpack.c.b16 %v1691, %v1491
        %v2292 = vpack.c.b16 %v1692, %v1492
        %v2293 = vpack.c.b16 %v1693, %v1493
        %v2294 = vpack.c.b16 %v1694, %v1494
        %v2295 = vpack.c.b16 %v1695, %v1495
        %v2296 = vpack.c.b16 %v1696, %v1496
        %v2297 = vpack.c.b16 %v1697, %v1497
        %v2298 = vpack.c.b16 %v1698, %v1498
        %v2299 = vpack.c.b16 %v1699, %v1499
        %v2300 = vpack.c.b16 %v1700, %v1500
        %v2301 = vpack.c.b16 %v1701, %v1501
        %v2302 = vpack.c.b16 %v1702, %v1502
        %v2303 = vpack.c.b16 %v1703, %v1503
        %v2304 = vpack.c.b16 %v1704, %v1504
        %v2305 = vpack.c.b16 %v1705, %v1505
        %v2306 = vpack.c.b16 %v1706, %v1506
        %v2307 = vpack.c.b16 %v1707, %v1507
        %v2308 = vpack.c.b16 %v1708, %v1508
        %v2309 = vpack.c.b16 %v1709, %v1509
        %v2310 = vpack.c.b16 %v1710, %v1510
        %v2311 = vpack.c.b16 %v1711, %v1511
        %v2312 = vpack.c.b16 %v1712, %v1512
        %v2313 = vpack.c.b16 %v1713, %v1513
        %v2314 = vpack.c.b16 %v1714, %v1514
        %v2315 = vpack.c.b16 %v1715, %v1515
        %v2316 = vpack.c.b16 %v1716, %v1516
        %v2317 = vpack.c.b16 %v1717, %v1517
        %v2318 = vpack.c.b16 %v1718, %v1518
        %v2319 = vpack.c.b16 %v1719, %v1519
        %v2320 = vpack.c.b16 %v1720, %v1520
        %v2321 = vpack.c.b16 %v1721, %v1521
        %v2322 = vpack.c.b16 %v1722, %v1522
        %v2323 = vpack.c.b16 %v1723, %v1523
        %v2324 = vpack.c.b16 %v1724, %v1524
        %v2325 = vpack.c.b16 %v1725, %v1525
        %v2326 = vpack.c.b16 %v1726, %v1526
        %v2327 = vpack.c.b16 %v1727, %v1527
        %v2328 = vpack.c.b16 %v1728, %v1528
        %v2329 = vpack.c.b16 %v1729, %v1529
        %v2330 = vpack.c.b16 %v1730, %v1530
        %v2331 = vpack.c.b16 %v1731, %v1531
        %v2332 = vpack.c.b16 %v1732, %v1532
        %v2333 = vpack.c.b16 %v1733, %v1533
        %v2334 = vpack.c.b16 %v1734, %v1534
        %v2335 = vpack.c.b16 %v1735, %v1535
        %v2336 = vpack.c.b16 %v1736, %v1536
        %v2337 = vpack.c.b16 %v1737, %v1537
        %v2338 = vpack.c.b16 %v1738, %v1538
        %v2339 = vpack.c.b16 %v1739, %v1539
        %v2340 = vpack.c.b16 %v1740, %v1540
        %v2341 = vpack.c.b16 %v1741, %v1541
        %v2342 = vpack.c.b16 %v1742, %v1542
        %v2343 = vpack.c.b16 %v1743, %v1543
        %v2344 = vpack.c.b16 %v1744, %v1544
        %v2345 = vpack.c.b16 %v1745, %v1545
        %v2346 = vpack.c.b16 %v1746, %v1546
        %v2347 = vpack.c.b16 %v1747, %v1547
        %v2348 = vpack.c.b16 %v1748, %v1548
        %v2349 = vpack.c.b16 %v1749, %v1549
        %v2350 = vpack.c.b16 %v1750, %v1550
        %v2351 = vpack.c.b16 %v1751, %v1551
        %v2352 = vpack.c.b16 %v1752, %v1552
        %v2353 = vpack.c.b16 %v1753, %v1553
        %v2354 = vpack.c.b16 %v1754, %v1554
        %v2355 = vpack.c.b16 %v1755, %v1555
        %v2356 = vpack.c.b16 %v1756, %v1556
        %v2357 = vpack.c.b16 %v1757, %v1557
        %v2358 = vpack.c.b16 %v1758, %v1558
        %v2359 = vpack.c.b16 %v1759, %v1559
        %v2360 = vpack.c.b16 %v1760, %v1560
        %v2361 = vpack.c.b16 %v1761, %v1561
        %v2362 = vpack.c.b16 %v1762, %v1562
        %v2363 = vpack.c.b16 %v1763, %v1563
        %v2364 = vpack.c.b16 %v1764, %v1564
        %v2365 = vpack.c.b16 %v1765, %v1565
        %v2366 = vpack.c.b16 %v1766, %v1566
        %v2367 = vpack.c.b16 %v1767, %v1567
        %v2368 = vpack.c.b16 %v1768, %v1568
        %v2369 = vpack.c.b16 %v1769, %v1569
        %v2370 = vpack.c.b16 %v1770, %v1570
        %v2371 = vpack.c.b16 %v1771, %v1571
        %v2372 = vpack.c.b16 %v1772, %v1572
        %v2373 = vpack.c.b16 %v1773, %v1573
        %v2374 = vpack.c.b16 %v1774, %v1574
        %v2375 = vpack.c.b16 %v1775, %v1575
        %v2376 = vpack.c.b16 %v1776, %v1576
        %v2377 = vpack.c.b16 %v1777, %v1577
        %v2378 = vpack.c.b16 %v1778, %v1578
        %v2379 = vpack.c.b16 %v1779, %v1579
        %v2380 = vpack.c.b16 %v1780, %v1580
        %v2381 = vpack.c.b16 %v1781, %v1581
        %v2382 = vpack.c.b16 %v1782, %v1582
        %v2383 = vpack.c.b16 %v1783, %v1583
        %v2384 = vpack.c.b16 %v1784, %v1584
        %v2385 = vpack.c.b16 %v1785, %v1585
        %v2386 = vpack.c.b16 %v1786, %v1586
        %v2387 = vpack.c.b16 %v1787, %v1587
        %v2388 = vpack.c.b16 %v1788, %v1588
        %v2389 = vpack.c.b16 %v1789, %v1589
        %v2390 = vpack.c.b16 %v1790, %v1590
        %v2391 = vpack.c.b16 %v1791, %v1591
        %v2392 = vpack.c.b16 %v1792, %v1592
        %v2393 = vpack.c.b16 %v1793, %v1593
        %v2394 = vpack.c.b16 %v1794, %v1594
        %v2395 = vpack.c.b16 %v1795, %v1595
        %v2396 = vpack.c.b16 %v1796, %v1596
        %v2397 = vpack.c.b16 %v1797, %v1597
        %v2398 = vpack.c.b16 %v1798, %v1598
        %v2399 = vpack.c.b16 %v1799, %v1599
        %v2400 = vpack.c.b16 %v1800, %v1600
        %v2401 = vpack.c.b16 %v1801, %v1601
        %v2402 = vpack.c.b16 %v1802, %v1602
        %v2403 = vpack.c.b16 %v1803, %v1603
        %v2404 = vpack.c.b16 %v1804, %v1604
        %v2405 = vpack.c.b16 %v1805, %v1605
        %v2406 = vpack.c.b16 %v1806, %v1606
        %v2407 = vpack.c.b16 %v1807, %v1607
        %v2408 = vpack.c.b16 %v1808, %v1608
        %v2409 = vpack.c.b16 %v1809, %v1609
        %v2410 = vpack.c.b16 %v1810, %v1610
        %v2411 = vpack.c.b16 %v1811, %v1611
        %v2412 = vpack.c.b16 %v1812, %v1612
        %v2413 = vpack.c.b16 %v1813, %v1613
        %v2414 = vpack.c.b16 %v1814, %v1614
        %v2415 = vpack.c.b16 %v1815, %v1615
        %v2416 = vpack.c.b16 %v1816, %v1616
        %v2417 = vpack.c.b16 %v1817, %v1617
        %v2418 = vpack.c.b16 %v1818, %v1618
        %v2419 = vpack.c.b16 %v1819, %v1619
        %v2420 = vpack.c.b16 %v1820, %v1620
        %v2421 = vpack.c.b16 %v1821, %v1621
        %v2422 = vpack.c.b16 %v1822, %v1622
        %v2423 = vpack.c.b16 %v1823, %v1623
        %v2424 = vpack.c.b16 %v1824, %v1624
        %v2425 = vpack.c.b16 %v1825, %v1625
        %v2426 = vpack.c.b16 %v1826, %v1626
        %v2427 = vpack.c.b16 %v1827, %v1627
        %v2428 = vpack.c.b16 %v1828, %v1628
        %v2429 = vpack.c.b16 %v1829, %v1629
        %v2430 = vpack.c.b16 %v1830, %v1630
        %v2431 = vpack.c.b16 %v1831, %v1631
        %v2432 = vpack.c.b16 %v1832, %v1632
        %v2433 = vpack.c.b16 %v1833, %v1633
        %v2434 = vpack.c.b16 %v1834, %v1634
        %v2435 = vpack.c.b16 %v1835, %v1635
        %v2436 = vpack.c.b16 %v1836, %v1636
        %v2437 = vpack.c.b16 %v1837, %v1637
        %v2438 = vpack.c.b16 %v1838, %v1638
        %v2439 = vpack.c.b16 %v1839, %v1639
        %v2440 = vpack.c.b16 %v1840, %v1640
        %v2441 = vpack.c.b16 %v1841, %v1641
        %v2442 = vpack.c.b16 %v1842, %v1642
        %v2443 = vpack.c.b16 %v1843, %v1643
        %v2444 = vpack.c.b16 %v1844, %v1644
        %v2445 = vpack.c.b16 %v1845, %v1645
        %v2446 = vpack.c.b16 %v1846, %v1646
        %v2447 = vpack.c.b16 %v1847, %v1647
        %v2448 = vpack.c.b16 %v1848, %v1648
        %v2449 = vpack.c.b16 %v1849, %v1649
        %v2450 = vpack.c.b16 %v1850, %v1650
        %v2451 = vpack.c.b16 %v1851, %v1651
        %v2452 = vpack.c.b16 %v1852, %v1652
        %v2453 = vpack.c.b16 %v1853, %v1653
        %v2454 = vpack.c.b16 %v1854, %v1654
        %v2455 = vpack.c.b16 %v1855, %v1655
        %v2456 = vpack.c.b16 %v1856, %v1656
        %v2457 = vpack.c.b16 %v1857, %v1657
        %v2458 = vpack.c.b16 %v1858, %v1658
        %v2459 = vpack.c.b16 %v1859, %v1659
        %v2460 = vpack.c.b16 %v1860, %v1660
        %v2461 = vpack.c.b16 %v1861, %v1661
        %v2462 = vpack.c.b16 %v1862, %v1662
        %v2463 = vpack.c.b16 %v1863, %v1663
        %v2464 = vpack.c.b16 %v1864, %v1664
        %v2465 = vpack.c.b16 %v1865, %v1665
        %v2466 = vpack.c.b16 %v1866, %v1666
        %v2467 = vpack.c.b16 %v1867, %v1667
        %v2468 = vpack.c.b16 %v1868, %v1668
        %v2469 = vpack.c.b16 %v1869, %v1669
        %v2470 = vpack.c.b16 %v1870, %v1670
        %v2471 = vpack.c.b16 %v1871, %v1671
        %v2472 = vpack.c.b16 %v1872, %v1672
        %v2473 = vpack.c.b16 %v1873, %v1673
        %v2474 = vpack.c.b16 %v1874, %v1674
        %v2475 = vpack.c.b16 %v1875, %v1675
        %v2476 = vpack.c.b16 %v1876, %v1676
        %v2477 = vpack.c.b16 %v1877, %v1677
        %v2478 = vpack.c.b16 %v1878, %v1678
        %v2479 = vpack.c.b16 %v1879, %v1679
        %v2480 = vpack.c.b16 %v1880, %v1680
        %v2481 = vpack.c.b16 %v1881, %v1681
        %v2482 = vpack.c.b16 %v1882, %v1682
        %v2483 = vpack.c.b16 %v1883, %v1683
        %v2484 = vpack.c.b16 %v1884, %v1684
        %v2485 = vpack.c.b16 %v2085, %v1885
        %v2486 = vpack.c.b16 %v2086, %v1886
        %v2487 = vpack.c.b16 %v2087, %v1887
        %v2488 = vpack.c.b16 %v2088, %v1888
        %v2489 = vpack.c.b16 %v2089, %v1889
        %v2490 = vpack.c.b16 %v2090, %v1890
        %v2491 = vpack.c.b16 %v2091, %v1891
        %v2492 = vpack.c.b16 %v2092, %v1892
        %v2493 = vpack.c.b16 %v2093, %v1893
        %v2494 = vpack.c.b16 %v2094, %v1894
        %v2495 = vpack.c.b16 %v2095, %v1895
        %v2496 = vpack.c.b16 %v2096, %v1896
        %v2497 = vpack.c.b16 %v2097, %v1897
        %v2498 = vpack.c.b16 %v2098, %v1898
        %v2499 = vpack.c.b16 %v2099, %v1899
        %v2500 = vpack.c.b16 %v2100, %v1900
        %v2501 = vpack.c.b16 %v2101, %v1901
        %v2502 = vpack.c.b16 %v2102, %v1902
        %v2503 = vpack.c.b16 %v2103, %v1903
        %v2504 = vpack.c.b16 %v2104, %v1904
        %v2505 = vpack.c.b16 %v2105, %v1905
        %v2506 = vpack.c.b16 %v2106, %v1906
        %v2507 = vpack.c.b16 %v2107, %v1907
        %v2508 = vpack.c.b16 %v2108, %v1908
        %v2509 = vpack.c.b16 %v2109, %v1909
        %v2510 = vpack.c.b16 %v2110, %v1910
        %v2511 = vpack.c.b16 %v2111, %v1911
        %v2512 = vpack.c.b16 %v2112, %v1912
        %v2513 = vpack.c.b16 %v2113, %v1913
        %v2514 = vpack.c.b16 %v2114, %v1914
        %v2515 = vpack.c.b16 %v2115, %v1915
        %v2516 = vpack.c.b16 %v2116, %v1916
        %v2517 = vpack.c.b16 %v2117, %v1917
        %v2518 = vpack.c.b16 %v2118, %v1918
        %v2519 = vpack.c.b16 %v2119, %v1919
        %v2520 = vpack.c.b16 %v2120, %v1920
        %v2521 = vpack.c.b16 %v2121, %v1921
        %v2522 = vpack.c.b16 %v2122, %v1922
        %v2523 = vpack.c.b16 %v2123, %v1923
        %v2524 = vpack.c.b16 %v2124, %v1924
        %v2525 = vpack.c.b16 %v2125, %v1925
        %v2526 = vpack.c.b16 %v2126, %v1926
        %v2527 = vpack.c.b16 %v2127, %v1927
        %v2528 = vpack.c.b16 %v2128, %v1928
        %v2529 = vpack.c.b16 %v2129, %v1929
        %v2530 = vpack.c.b16 %v2130, %v1930
        %v2531 = vpack.c.b16 %v2131, %v1931
        %v2532 = vpack.c.b16 %v2132, %v1932
        %v2533 = vpack.c.b16 %v2133, %v1933
        %v2534 = vpack.c.b16 %v2134, %v1934
        %v2535 = vpack.c.b16 %v2135, %v1935
        %v2536 = vpack.c.b16 %v2136, %v1936
        %v2537 = vpack.c.b16 %v2137, %v1937
        %v2538 = vpack.c.b16 %v2138, %v1938
        %v2539 = vpack.c.b16 %v2139, %v1939
        %v2540 = vpack.c.b16 %v2140, %v1940
        %v2541 = vpack.c.b16 %v2141, %v1941
        %v2542 = vpack.c.b16 %v2142, %v1942
        %v2543 = vpack.c.b16 %v2143, %v1943
        %v2544 = vpack.c.b16 %v2144, %v1944
        %v2545 = vpack.c.b16 %v2145, %v1945
        %v2546 = vpack.c.b16 %v2146, %v1946
        %v2547 = vpack.c.b16 %v2147, %v1947
        %v2548 = vpack.c.b16 %v2148, %v1948
        %v2549 = vpack.c.b16 %v2149, %v1949
        %v2550 = vpack.c.b16 %v2150, %v1950
        %v2551 = vpack.c.b16 %v2151, %v1951
        %v2552 = vpack.c.b16 %v2152, %v1952
        %v2553 = vpack.c.b16 %v2153, %v1953
        %v2554 = vpack.c.b16 %v2154, %v1954
        %v2555 = vpack.c.b16 %v2155, %v1955
        %v2556 = vpack.c.b16 %v2156, %v1956
        %v2557 = vpack.c.b16 %v2157, %v1957
        %v2558 = vpack.c.b16 %v2158, %v1958
        %v2559 = vpack.c.b16 %v2159, %v1959
        %v2560 = vpack.c.b16 %v2160, %v1960
        %v2561 = vpack.c.b16 %v2161, %v1961
        %v2562 = vpack.c.b16 %v2162, %v1962
        %v2563 = vpack.c.b16 %v2163, %v1963
        %v2564 = vpack.c.b16 %v2164, %v1964
        %v2565 = vpack.c.b16 %v2165, %v1965
        %v2566 = vpack.c.b16 %v2166, %v1966
        %v2567 = vpack.c.b16 %v2167, %v1967
        %v2568 = vpack.c.b16 %v2168, %v1968
        %v2569 = vpack.c.b16 %v2169, %v1969
        %v2570 = vpack.c.b16 %v2170, %v1970
        %v2571 = vpack.c.b16 %v2171, %v1971
        %v2572 = vpack.c.b16 %v2172, %v1972
        %v2573 = vpack.c.b16 %v2173, %v1973
        %v2574 = vpack.c.b16 %v2174, %v1974
        %v2575 = vpack.c.b16 %v2175, %v1975
        %v2576 = vpack.c.b16 %v2176, %v1976
        %v2577 = vpack.c.b16 %v2177, %v1977
        %v2578 = vpack.c.b16 %v2178, %v1978
        %v2579 = vpack.c.b16 %v2179, %v1979
        %v2580 = vpack.c.b16 %v2180, %v1980
        %v2581 = vpack.c.b16 %v2181, %v1981
        %v2582 = vpack.c.b16 %v2182, %v1982
        %v2583 = vpack.c.b16 %v2183, %v1983
        %v2584 = vpack.c.b16 %v2184, %v1984
        %v2585 = vpack.c.b16 %v2185, %v1985
        %v2586 = vpack.c.b16 %v2186, %v1986
        %v2587 = vpack.c.b16 %v2187, %v1987
        %v2588 = vpack.c.b16 %v2188, %v1988
        %v2589 = vpack.c.b16 %v2189, %v1989
        %v2590 = vpack.c.b16 %v2190, %v1990
        %v2591 = vpack.c.b16 %v2191, %v1991
        %v2592 = vpack.c.b16 %v2192, %v1992
        %v2593 = vpack.c.b16 %v2193, %v1993
        %v2594 = vpack.c.b16 %v2194, %v1994
        %v2595 = vpack.c.b16 %v2195, %v1995
        %v2596 = vpack.c.b16 %v2196, %v1996
        %v2597 = vpack.c.b16 %v2197, %v1997
        %v2598 = vpack.c.b16 %v2198, %v1998
        %v2599 = vpack.c.b16 %v2199, %v1999
        %v2600 = vpack.c.b16 %v2200, %v2000
        %v2601 = vpack.c.b16 %v2201, %v2001
        %v2602 = vpack.c.b16 %v2202, %v2002
        %v2603 = vpack.c.b16 %v2203, %v2003
        %v2604 = vpack.c.b16 %v2204, %v2004
        %v2605 = vpack.c.b16 %v2205, %v2005
        %v2606 = vpack.c.b16 %v2206, %v2006
        %v2607 = vpack.c.b16 %v2207, %v2007
        %v2608 = vpack.c.b16 %v2208, %v2008
        %v2609 = vpack.c.b16 %v2209, %v2009
        %v2610 = vpack.c.b16 %v2210, %v2010
        %v2611 = vpack.c.b16 %v2211, %v2011
        %v2612 = vpack.c.b16 %v2212, %v2012
        %v2613 = vpack.c.b16 %v2213, %v2013
        %v2614 = vpack.c.b16 %v2214, %v2014
        %v2615 = vpack.c.b16 %v2215, %v2015
        %v2616 = vpack.c.b16 %v2216, %v2016
        %v2617 = vpack.c.b16 %v2217, %v2017
        %v2618 = vpack.c.b16 %v2218, %v2018
        %v2619 = vpack.c.b16 %v2219, %v2019
        %v2620 = vpack.c.b16 %v2220, %v2020
        %v2621 = vpack.c.b16 %v2221, %v2021
        %v2622 = vpack.c.b16 %v2222, %v2022
        %v2623 = vpack.c.b16 %v2223, %v2023
        %v2624 = vpack.c.b16 %v2224, %v2024
        %v2625 = vpack.c.b16 %v2225, %v2025
        %v2626 = vpack.c.b16 %v2226, %v2026
        %v2627 = vpack.c.b16 %v2227, %v2027
        %v2628 = vpack.c.b16 %v2228, %v2028
        %v2629 = vpack.c.b16 %v2229, %v2029
        %v2630 = vpack.c.b16 %v2230, %v2030
        %v2631 = vpack.c.b16 %v2231, %v2031
        %v2632 = vpack.c.b16 %v2232, %v2032
        %v2633 = vpack.c.b16 %v2233, %v2033
        %v2634 = vpack.c.b16 %v2234, %v2034
        %v2635 = vpack.c.b16 %v2235, %v2035
        %v2636 = vpack.c.b16 %v2236, %v2036
        %v2637 = vpack.c.b16 %v2237, %v2037
        %v2638 = vpack.c.b16 %v2238, %v2038
        %v2639 = vpack.c.b16 %v2239, %v2039
        %v2640 = vpack.c.b16 %v2240, %v2040
        %v2641 = vpack.c.b16 %v2241, %v2041
        %v2642 = vpack.c.b16 %v2242, %v2042
        %v2643 = vpack.c.b16 %v2243, %v2043
        %v2644 = vpack.c.b16 %v2244, %v2044
        %v2645 = vpack.c.b16 %v2245, %v2045
        %v2646 = vpack.c.b16 %v2246, %v2046
        %v2647 = vpack.c.b16 %v2247, %v2047
        %v2648 = vpack.c.b16 %v2248, %v2048
        %v2649 = vpack.c.b16 %v2249, %v2049
        %v2650 = vpack.c.b16 %v2250, %v2050
        %v2651 = vpack.c.b16 %v2251, %v2051
        %v2652 = vpack.c.b16 %v2252, %v2052
        %v2653 = vpack.c.b16 %v2253, %v2053
        %v2654 = vpack.c.b16 %v2254, %v2054
        %v2655 = vpack.c.b16 %v2255, %v2055
        %v2656 = vpack.c.b16 %v2256, %v2056
        %v2657 = vpack.c.b16 %v2257, %v2057
        %v2658 = vpack.c.b16 %v2258, %v2058
        %v2659 = vpack.c.b16 %v2259, %v2059
        %v2660 = vpack.c.b16 %v2260, %v2060
        %v2661 = vpack.c.b16 %v2261, %v2061
        %v2662 = vpack.c.b16 %v2262, %v2062
        %v2663 = vpack.c.b16 %v2263, %v2063
        %v2664 = vpack.c.b16 %v2264, %v2064
        %v2665 = vpack.c.b16 %v2265, %v2065
        %v2666 = vpack.c.b16 %v2266, %v2066
        %v2667 = vpack.c.b16 %v2267, %v2067
        %v2668 = vpack.c.b16 %v2268, %v2068
        %v2669 = vpack.c.b16 %v2269, %v2069
        %v2670 = vpack.c.b16 %v2270, %v2070
        %v2671 = vpack.c.b16 %v2271, %v2071
        %v2672 = vpack.c.b16 %v2272, %v2072
        %v2673 = vpack.c.b16 %v2273, %v2073
        %v2674 = vpack.c.b16 %v2274, %v2074
        %v2675 = vpack.c.b16 %v2275, %v2075
        %v2676 = vpack.c.b16 %v2276, %v2076
        %v2677 = vpack.c.b16 %v2277, %v2077
        %v2678 = vpack.c.b16 %v2278, %v2078
        %v2679 = vpack.c.b16 %v2279, %v2079
        %v2680 = vpack.c.b16 %v2280, %v2080
        %v2681 = vpack.c.b16 %v2281, %v2081
        %v2682 = vpack.c.b16 %v2282, %v2082
        %v2683 = vpack.c.b16 %v2283, %v2083
        %v2684 = vpack.c.b16 %v2284, %v2084
        %v3135 = vlaneseq
        %v3136 = vshrl.u32 %v3135, 7
        %v3137 = vsub.s32 0, %v3136
        %v3138 = vrot.slane %v1035, %v3137
        %v3139 = vlaneseq
        %v3140 = vshrl.u32 %v3139, 7
        %v3141 = vsub.s32 2, %v3140
        %v3142 = vrot.slane %v1035, %v3141
        %v3143 = vlaneseq
        %v3144 = vshrl.u32 %v3143, 7
        %v3145 = vsub.s32 4, %v3144
        %v3146 = vrot.slane %v1035, %v3145
        %v3147 = vlaneseq
        %v3148 = vshrl.u32 %v3147, 7
        %v3149 = vsub.s32 6, %v3148
        %v3150 = vrot.slane %v1035, %v3149
        %v3151 = vlaneseq
        %v3152 = vshrl.u32 %v3151, 7
        %v3153 = vsub.s32 0, %v3152
        %v3154 = vrot.slane %v1036, %v3153
        %v3155 = vlaneseq
        %v3156 = vshrl.u32 %v3155, 7
        %v3157 = vsub.s32 2, %v3156
        %v3158 = vrot.slane %v1036, %v3157
        %v3159 = vlaneseq
        %v3160 = vshrl.u32 %v3159, 7
        %v3161 = vsub.s32 4, %v3160
        %v3162 = vrot.slane %v1036, %v3161
        %v3163 = vlaneseq
        %v3164 = vshrl.u32 %v3163, 7
        %v3165 = vsub.s32 6, %v3164
        %v3166 = vrot.slane %v1036, %v3165
        %v3167 = vlaneseq
        %v3168 = vshrl.u32 %v3167, 7
        %v3169 = vsub.s32 0, %v3168
        %v3170 = vrot.slane %v1037, %v3169
        %v3171 = vlaneseq
        %v3172 = vshrl.u32 %v3171, 7
        %v3173 = vsub.s32 2, %v3172
        %v3174 = vrot.slane %v1037, %v3173
        %v3175 = vlaneseq
        %v3176 = vshrl.u32 %v3175, 7
        %v3177 = vsub.s32 4, %v3176
        %v3178 = vrot.slane %v1037, %v3177
        %v3179 = vlaneseq
        %v3180 = vshrl.u32 %v3179, 7
        %v3181 = vsub.s32 6, %v3180
        %v3182 = vrot.slane %v1037, %v3181
        %v3183 = vlaneseq
        %v3184 = vshrl.u32 %v3183, 7
        %v3185 = vsub.s32 0, %v3184
        %v3186 = vrot.slane %v1038, %v3185
        %v3187 = vlaneseq
        %v3188 = vshrl.u32 %v3187, 7
        %v3189 = vsub.s32 2, %v3188
        %v3190 = vrot.slane %v1038, %v3189
        %v3191 = vlaneseq
        %v3192 = vshrl.u32 %v3191, 7
        %v3193 = vsub.s32 4, %v3192
        %v3194 = vrot.slane %v1038, %v3193
        %v3195 = vlaneseq
        %v3196 = vshrl.u32 %v3195, 7
        %v3197 = vsub.s32 6, %v3196
        %v3198 = vrot.slane %v1038, %v3197
        %v3199 = vlaneseq
        %v3200 = vshrl.u32 %v3199, 7
        %v3201 = vsub.s32 0, %v3200
        %v3202 = vrot.slane %v1039, %v3201
        %v3203 = vlaneseq
        %v3204 = vshrl.u32 %v3203, 7
        %v3205 = vsub.s32 2, %v3204
        %v3206 = vrot.slane %v1039, %v3205
        %v3207 = vlaneseq
        %v3208 = vshrl.u32 %v3207, 7
        %v3209 = vsub.s32 4, %v3208
        %v3210 = vrot.slane %v1039, %v3209
        %v3211 = vlaneseq
        %v3212 = vshrl.u32 %v3211, 7
        %v3213 = vsub.s32 6, %v3212
        %v3214 = vrot.slane %v1039, %v3213
        %v3215 = vlaneseq
        %v3216 = vshrl.u32 %v3215, 7
        %v3217 = vsub.s32 0, %v3216
        %v3218 = vrot.slane %v1040, %v3217
        %v3219 = vlaneseq
        %v3220 = vshrl.u32 %v3219, 7
        %v3221 = vsub.s32 2, %v3220
        %v3222 = vrot.slane %v1040, %v3221
        %v3223 = vlaneseq
        %v3224 = vshrl.u32 %v3223, 7
        %v3225 = vsub.s32 4, %v3224
        %v3226 = vrot.slane %v1040, %v3225
        %v3227 = vlaneseq
        %v3228 = vshrl.u32 %v3227, 7
        %v3229 = vsub.s32 6, %v3228
        %v3230 = vrot.slane %v1040, %v3229
        %v3231 = vlaneseq
        %v3232 = vshrl.u32 %v3231, 7
        %v3233 = vsub.s32 0, %v3232
        %v3234 = vrot.slane %v1041, %v3233
        %v3235 = vlaneseq
        %v3236 = vshrl.u32 %v3235, 7
        %v3237 = vsub.s32 2, %v3236
        %v3238 = vrot.slane %v1041, %v3237
        %v3239 = vlaneseq
        %v3240 = vshrl.u32 %v3239, 7
        %v3241 = vsub.s32 4, %v3240
        %v3242 = vrot.slane %v1041, %v3241
        %v3243 = vlaneseq
        %v3244 = vshrl.u32 %v3243, 7
        %v3245 = vsub.s32 6, %v3244
        %v3246 = vrot.slane %v1041, %v3245
        %v3247 = vlaneseq
        %v3248 = vshrl.u32 %v3247, 7
        %v3249 = vsub.s32 0, %v3248
        %v3250 = vrot.slane %v1042, %v3249
        %v3251 = vlaneseq
        %v3252 = vshrl.u32 %v3251, 7
        %v3253 = vsub.s32 2, %v3252
        %v3254 = vrot.slane %v1042, %v3253
        %v3255 = vlaneseq
        %v3256 = vshrl.u32 %v3255, 7
        %v3257 = vsub.s32 4, %v3256
        %v3258 = vrot.slane %v1042, %v3257
        %v3259 = vlaneseq
        %v3260 = vshrl.u32 %v3259, 7
        %v3261 = vsub.s32 6, %v3260
        %v3262 = vrot.slane %v1042, %v3261
        %v3263 = vlaneseq
        %v3264 = vshrl.u32 %v3263, 7
        %v3265 = vsub.s32 0, %v3264
        %v3266 = vrot.slane %v1043, %v3265
        %v3267 = vlaneseq
        %v3268 = vshrl.u32 %v3267, 7
        %v3269 = vsub.s32 2, %v3268
        %v3270 = vrot.slane %v1043, %v3269
        %v3271 = vlaneseq
        %v3272 = vshrl.u32 %v3271, 7
        %v3273 = vsub.s32 4, %v3272
        %v3274 = vrot.slane %v1043, %v3273
        %v3275 = vlaneseq
        %v3276 = vshrl.u32 %v3275, 7
        %v3277 = vsub.s32 6, %v3276
        %v3278 = vrot.slane %v1043, %v3277
        %v3279 = vlaneseq
        %v3280 = vshrl.u32 %v3279, 7
        %v3281 = vsub.s32 0, %v3280
        %v3282 = vrot.slane %v1044, %v3281
        %v3283 = vlaneseq
        %v3284 = vshrl.u32 %v3283, 7
        %v3285 = vsub.s32 2, %v3284
        %v3286 = vrot.slane %v1044, %v3285
        %v3287 = vlaneseq
        %v3288 = vshrl.u32 %v3287, 7
        %v3289 = vsub.s32 4, %v3288
        %v3290 = vrot.slane %v1044, %v3289
        %v3291 = vlaneseq
        %v3292 = vshrl.u32 %v3291, 7
        %v3293 = vsub.s32 6, %v3292
        %v3294 = vrot.slane %v1044, %v3293
        %v3295 = vlaneseq
        %v3296 = vshrl.u32 %v3295, 7
        %v3297 = vsub.s32 0, %v3296
        %v3298 = vrot.slane %v1045, %v3297
        %v3299 = vlaneseq
        %v3300 = vshrl.u32 %v3299, 7
        %v3301 = vsub.s32 2, %v3300
        %v3302 = vrot.slane %v1045, %v3301
        %v3303 = vlaneseq
        %v3304 = vshrl.u32 %v3303, 7
        %v3305 = vsub.s32 4, %v3304
        %v3306 = vrot.slane %v1045, %v3305
        %v3307 = vlaneseq
        %v3308 = vshrl.u32 %v3307, 7
        %v3309 = vsub.s32 6, %v3308
        %v3310 = vrot.slane %v1045, %v3309
        %v3311 = vlaneseq
        %v3312 = vshrl.u32 %v3311, 7
        %v3313 = vsub.s32 0, %v3312
        %v3314 = vrot.slane %v1046, %v3313
        %v3315 = vlaneseq
        %v3316 = vshrl.u32 %v3315, 7
        %v3317 = vsub.s32 2, %v3316
        %v3318 = vrot.slane %v1046, %v3317
        %v3319 = vlaneseq
        %v3320 = vshrl.u32 %v3319, 7
        %v3321 = vsub.s32 4, %v3320
        %v3322 = vrot.slane %v1046, %v3321
        %v3323 = vlaneseq
        %v3324 = vshrl.u32 %v3323, 7
        %v3325 = vsub.s32 6, %v3324
        %v3326 = vrot.slane %v1046, %v3325
        %v3327 = vlaneseq
        %v3328 = vshrl.u32 %v3327, 7
        %v3329 = vsub.s32 0, %v3328
        %v3330 = vrot.slane %v1047, %v3329
        %v3331 = vlaneseq
        %v3332 = vshrl.u32 %v3331, 7
        %v3333 = vsub.s32 2, %v3332
        %v3334 = vrot.slane %v1047, %v3333
        %v3335 = vlaneseq
        %v3336 = vshrl.u32 %v3335, 7
        %v3337 = vsub.s32 4, %v3336
        %v3338 = vrot.slane %v1047, %v3337
        %v3339 = vlaneseq
        %v3340 = vshrl.u32 %v3339, 7
        %v3341 = vsub.s32 6, %v3340
        %v3342 = vrot.slane %v1047, %v3341
        %v3343 = vlaneseq
        %v3344 = vshrl.u32 %v3343, 7
        %v3345 = vsub.s32 0, %v3344
        %v3346 = vrot.slane %v1048, %v3345
        %v3347 = vlaneseq
        %v3348 = vshrl.u32 %v3347, 7
        %v3349 = vsub.s32 2, %v3348
        %v3350 = vrot.slane %v1048, %v3349
        %v3351 = vlaneseq
        %v3352 = vshrl.u32 %v3351, 7
        %v3353 = vsub.s32 4, %v3352
        %v3354 = vrot.slane %v1048, %v3353
        %v3355 = vlaneseq
        %v3356 = vshrl.u32 %v3355, 7
        %v3357 = vsub.s32 6, %v3356
        %v3358 = vrot.slane %v1048, %v3357
        %v3359 = vlaneseq
        %v3360 = vshrl.u32 %v3359, 7
        %v3361 = vsub.s32 0, %v3360
        %v3362 = vrot.slane %v1049, %v3361
        %v3363 = vlaneseq
        %v3364 = vshrl.u32 %v3363, 7
        %v3365 = vsub.s32 2, %v3364
        %v3366 = vrot.slane %v1049, %v3365
        %v3367 = vlaneseq
        %v3368 = vshrl.u32 %v3367, 7
        %v3369 = vsub.s32 4, %v3368
        %v3370 = vrot.slane %v1049, %v3369
        %v3371 = vlaneseq
        %v3372 = vshrl.u32 %v3371, 7
        %v3373 = vsub.s32 6, %v3372
        %v3374 = vrot.slane %v1049, %v3373
        %v3375 = vlaneseq
        %v3376 = vshrl.u32 %v3375, 7
        %v3377 = vsub.s32 0, %v3376
        %v3378 = vrot.slane %v1050, %v3377
        %v3379 = vlaneseq
        %v3380 = vshrl.u32 %v3379, 7
        %v3381 = vsub.s32 2, %v3380
        %v3382 = vrot.slane %v1050, %v3381
        %v3383 = vlaneseq
        %v3384 = vshrl.u32 %v3383, 7
        %v3385 = vsub.s32 4, %v3384
        %v3386 = vrot.slane %v1050, %v3385
        %v3387 = vlaneseq
        %v3388 = vshrl.u32 %v3387, 7
        %v3389 = vsub.s32 6, %v3388
        %v3390 = vrot.slane %v1050, %v3389
        %v3391 = vlaneseq
        %v3392 = vshrl.u32 %v3391, 7
        %v3393 = vsub.s32 0, %v3392
        %v3394 = vrot.slane %v1051, %v3393
        %v3395 = vlaneseq
        %v3396 = vshrl.u32 %v3395, 7
        %v3397 = vsub.s32 2, %v3396
        %v3398 = vrot.slane %v1051, %v3397
        %v3399 = vlaneseq
        %v3400 = vshrl.u32 %v3399, 7
        %v3401 = vsub.s32 4, %v3400
        %v3402 = vrot.slane %v1051, %v3401
        %v3403 = vlaneseq
        %v3404 = vshrl.u32 %v3403, 7
        %v3405 = vsub.s32 6, %v3404
        %v3406 = vrot.slane %v1051, %v3405
        %v3407 = vlaneseq
        %v3408 = vshrl.u32 %v3407, 7
        %v3409 = vsub.s32 0, %v3408
        %v3410 = vrot.slane %v1052, %v3409
        %v3411 = vlaneseq
        %v3412 = vshrl.u32 %v3411, 7
        %v3413 = vsub.s32 2, %v3412
        %v3414 = vrot.slane %v1052, %v3413
        %v3415 = vlaneseq
        %v3416 = vshrl.u32 %v3415, 7
        %v3417 = vsub.s32 4, %v3416
        %v3418 = vrot.slane %v1052, %v3417
        %v3419 = vlaneseq
        %v3420 = vshrl.u32 %v3419, 7
        %v3421 = vsub.s32 6, %v3420
        %v3422 = vrot.slane %v1052, %v3421
        %v3423 = vlaneseq
        %v3424 = vshrl.u32 %v3423, 7
        %v3425 = vsub.s32 0, %v3424
        %v3426 = vrot.slane %v1053, %v3425
        %v3427 = vlaneseq
        %v3428 = vshrl.u32 %v3427, 7
        %v3429 = vsub.s32 2, %v3428
        %v3430 = vrot.slane %v1053, %v3429
        %v3431 = vlaneseq
        %v3432 = vshrl.u32 %v3431, 7
        %v3433 = vsub.s32 4, %v3432
        %v3434 = vrot.slane %v1053, %v3433
        %v3435 = vlaneseq
        %v3436 = vshrl.u32 %v3435, 7
        %v3437 = vsub.s32 6, %v3436
        %v3438 = vrot.slane %v1053, %v3437
        %v3439 = vlaneseq
        %v3440 = vshrl.u32 %v3439, 7
        %v3441 = vsub.s32 0, %v3440
        %v3442 = vrot.slane %v1054, %v3441
        %v3443 = vlaneseq
        %v3444 = vshrl.u32 %v3443, 7
        %v3445 = vsub.s32 2, %v3444
        %v3446 = vrot.slane %v1054, %v3445
        %v3447 = vlaneseq
        %v3448 = vshrl.u32 %v3447, 7
        %v3449 = vsub.s32 4, %v3448
        %v3450 = vrot.slane %v1054, %v3449
        %v3451 = vlaneseq
        %v3452 = vshrl.u32 %v3451, 7
        %v3453 = vsub.s32 6, %v3452
        %v3454 = vrot.slane %v1054, %v3453
        %v3455 = vlaneseq
        %v3456 = vshrl.u32 %v3455, 7
        %v3457 = vsub.s32 0, %v3456
        %v3458 = vrot.slane %v1055, %v3457
        %v3459 = vlaneseq
        %v3460 = vshrl.u32 %v3459, 7
        %v3461 = vsub.s32 2, %v3460
        %v3462 = vrot.slane %v1055, %v3461
        %v3463 = vlaneseq
        %v3464 = vshrl.u32 %v3463, 7
        %v3465 = vsub.s32 4, %v3464
        %v3466 = vrot.slane %v1055, %v3465
        %v3467 = vlaneseq
        %v3468 = vshrl.u32 %v3467, 7
        %v3469 = vsub.s32 6, %v3468
        %v3470 = vrot.slane %v1055, %v3469
        %v3471 = vlaneseq
        %v3472 = vshrl.u32 %v3471, 7
        %v3473 = vsub.s32 0, %v3472
        %v3474 = vrot.slane %v1056, %v3473
        %v3475 = vlaneseq
        %v3476 = vshrl.u32 %v3475, 7
        %v3477 = vsub.s32 2, %v3476
        %v3478 = vrot.slane %v1056, %v3477
        %v3479 = vlaneseq
        %v3480 = vshrl.u32 %v3479, 7
        %v3481 = vsub.s32 4, %v3480
        %v3482 = vrot.slane %v1056, %v3481
        %v3483 = vlaneseq
        %v3484 = vshrl.u32 %v3483, 7
        %v3485 = vsub.s32 6, %v3484
        %v3486 = vrot.slane %v1056, %v3485
        %v3487 = vlaneseq
        %v3488 = vshrl.u32 %v3487, 7
        %v3489 = vsub.s32 0, %v3488
        %v3490 = vrot.slane %v1057, %v3489
        %v3491 = vlaneseq
        %v3492 = vshrl.u32 %v3491, 7
        %v3493 = vsub.s32 2, %v3492
        %v3494 = vrot.slane %v1057, %v3493
        %v3495 = vlaneseq
        %v3496 = vshrl.u32 %v3495, 7
        %v3497 = vsub.s32 4, %v3496
        %v3498 = vrot.slane %v1057, %v3497
        %v3499 = vlaneseq
        %v3500 = vshrl.u32 %v3499, 7
        %v3501 = vsub.s32 6, %v3500
        %v3502 = vrot.slane %v1057, %v3501
        %v3503 = vlaneseq
        %v3504 = vshrl.u32 %v3503, 7
        %v3505 = vsub.s32 0, %v3504
        %v3506 = vrot.slane %v1058, %v3505
        %v3507 = vlaneseq
        %v3508 = vshrl.u32 %v3507, 7
        %v3509 = vsub.s32 2, %v3508
        %v3510 = vrot.slane %v1058, %v3509
        %v3511 = vlaneseq
        %v3512 = vshrl.u32 %v3511, 7
        %v3513 = vsub.s32 4, %v3512
        %v3514 = vrot.slane %v1058, %v3513
        %v3515 = vlaneseq
        %v3516 = vshrl.u32 %v3515, 7
        %v3517 = vsub.s32 6, %v3516
        %v3518 = vrot.slane %v1058, %v3517
        %v3519 = vlaneseq
        %v3520 = vshrl.u32 %v3519, 7
        %v3521 = vsub.s32 0, %v3520
        %v3522 = vrot.slane %v1059, %v3521
        %v3523 = vlaneseq
        %v3524 = vshrl.u32 %v3523, 7
        %v3525 = vsub.s32 2, %v3524
        %v3526 = vrot.slane %v1059, %v3525
        %v3527 = vlaneseq
        %v3528 = vshrl.u32 %v3527, 7
        %v3529 = vsub.s32 4, %v3528
        %v3530 = vrot.slane %v1059, %v3529
        %v3531 = vlaneseq
        %v3532 = vshrl.u32 %v3531, 7
        %v3533 = vsub.s32 6, %v3532
        %v3534 = vrot.slane %v1059, %v3533
        %v3535 = vlaneseq
        %v3536 = vshrl.u32 %v3535, 7
        %v3537 = vsub.s32 0, %v3536
        %v3538 = vrot.slane %v1060, %v3537
        %v3539 = vlaneseq
        %v3540 = vshrl.u32 %v3539, 7
        %v3541 = vsub.s32 2, %v3540
        %v3542 = vrot.slane %v1060, %v3541
        %v3543 = vlaneseq
        %v3544 = vshrl.u32 %v3543, 7
        %v3545 = vsub.s32 4, %v3544
        %v3546 = vrot.slane %v1060, %v3545
        %v3547 = vlaneseq
        %v3548 = vshrl.u32 %v3547, 7
        %v3549 = vsub.s32 6, %v3548
        %v3550 = vrot.slane %v1060, %v3549
        %v3551 = vlaneseq
        %v3552 = vshrl.u32 %v3551, 7
        %v3553 = vsub.s32 0, %v3552
        %v3554 = vrot.slane %v1061, %v3553
        %v3555 = vlaneseq
        %v3556 = vshrl.u32 %v3555, 7
        %v3557 = vsub.s32 2, %v3556
        %v3558 = vrot.slane %v1061, %v3557
        %v3559 = vlaneseq
        %v3560 = vshrl.u32 %v3559, 7
        %v3561 = vsub.s32 4, %v3560
        %v3562 = vrot.slane %v1061, %v3561
        %v3563 = vlaneseq
        %v3564 = vshrl.u32 %v3563, 7
        %v3565 = vsub.s32 6, %v3564
        %v3566 = vrot.slane %v1061, %v3565
        %v3567 = vlaneseq
        %v3568 = vshrl.u32 %v3567, 7
        %v3569 = vsub.s32 0, %v3568
        %v3570 = vrot.slane %v1062, %v3569
        %v3571 = vlaneseq
        %v3572 = vshrl.u32 %v3571, 7
        %v3573 = vsub.s32 2, %v3572
        %v3574 = vrot.slane %v1062, %v3573
        %v3575 = vlaneseq
        %v3576 = vshrl.u32 %v3575, 7
        %v3577 = vsub.s32 4, %v3576
        %v3578 = vrot.slane %v1062, %v3577
        %v3579 = vlaneseq
        %v3580 = vshrl.u32 %v3579, 7
        %v3581 = vsub.s32 6, %v3580
        %v3582 = vrot.slane %v1062, %v3581
        %v3583 = vlaneseq
        %v3584 = vshrl.u32 %v3583, 7
        %v3585 = vsub.s32 0, %v3584
        %v3586 = vrot.slane %v1063, %v3585
        %v3587 = vlaneseq
        %v3588 = vshrl.u32 %v3587, 7
        %v3589 = vsub.s32 2, %v3588
        %v3590 = vrot.slane %v1063, %v3589
        %v3591 = vlaneseq
        %v3592 = vshrl.u32 %v3591, 7
        %v3593 = vsub.s32 4, %v3592
        %v3594 = vrot.slane %v1063, %v3593
        %v3595 = vlaneseq
        %v3596 = vshrl.u32 %v3595, 7
        %v3597 = vsub.s32 6, %v3596
        %v3598 = vrot.slane %v1063, %v3597
        %v3599 = vlaneseq
        %v3600 = vshrl.u32 %v3599, 7
        %v3601 = vsub.s32 0, %v3600
        %v3602 = vrot.slane %v1064, %v3601
        %v3603 = vlaneseq
        %v3604 = vshrl.u32 %v3603, 7
        %v3605 = vsub.s32 2, %v3604
        %v3606 = vrot.slane %v1064, %v3605
        %v3607 = vlaneseq
        %v3608 = vshrl.u32 %v3607, 7
        %v3609 = vsub.s32 4, %v3608
        %v3610 = vrot.slane %v1064, %v3609
        %v3611 = vlaneseq
        %v3612 = vshrl.u32 %v3611, 7
        %v3613 = vsub.s32 6, %v3612
        %v3614 = vrot.slane %v1064, %v3613
        %v3615 = vlaneseq
        %v3616 = vshrl.u32 %v3615, 7
        %v3617 = vsub.s32 0, %v3616
        %v3618 = vrot.slane %v1065, %v3617
        %v3619 = vlaneseq
        %v3620 = vshrl.u32 %v3619, 7
        %v3621 = vsub.s32 2, %v3620
        %v3622 = vrot.slane %v1065, %v3621
        %v3623 = vlaneseq
        %v3624 = vshrl.u32 %v3623, 7
        %v3625 = vsub.s32 4, %v3624
        %v3626 = vrot.slane %v1065, %v3625
        %v3627 = vlaneseq
        %v3628 = vshrl.u32 %v3627, 7
        %v3629 = vsub.s32 6, %v3628
        %v3630 = vrot.slane %v1065, %v3629
        %v3631 = vlaneseq
        %v3632 = vshrl.u32 %v3631, 7
        %v3633 = vsub.s32 0, %v3632
        %v3634 = vrot.slane %v1066, %v3633
        %v3635 = vlaneseq
        %v3636 = vshrl.u32 %v3635, 7
        %v3637 = vsub.s32 2, %v3636
        %v3638 = vrot.slane %v1066, %v3637
        %v3639 = vlaneseq
        %v3640 = vshrl.u32 %v3639, 7
        %v3641 = vsub.s32 4, %v3640
        %v3642 = vrot.slane %v1066, %v3641
        %v3643 = vlaneseq
        %v3644 = vshrl.u32 %v3643, 7
        %v3645 = vsub.s32 6, %v3644
        %v3646 = vrot.slane %v1066, %v3645
        %v3647 = vlaneseq
        %v3648 = vshrl.u32 %v3647, 7
        %v3649 = vsub.s32 0, %v3648
        %v3650 = vrot.slane %v1067, %v3649
        %v3651 = vlaneseq
        %v3652 = vshrl.u32 %v3651, 7
        %v3653 = vsub.s32 2, %v3652
        %v3654 = vrot.slane %v1067, %v3653
        %v3655 = vlaneseq
        %v3656 = vshrl.u32 %v3655, 7
        %v3657 = vsub.s32 4, %v3656
        %v3658 = vrot.slane %v1067, %v3657
        %v3659 = vlaneseq
        %v3660 = vshrl.u32 %v3659, 7
        %v3661 = vsub.s32 6, %v3660
        %v3662 = vrot.slane %v1067, %v3661
        %v3663 = vlaneseq
        %v3664 = vshrl.u32 %v3663, 7
        %v3665 = vsub.s32 0, %v3664
        %v3666 = vrot.slane %v1068, %v3665
        %v3667 = vlaneseq
        %v3668 = vshrl.u32 %v3667, 7
        %v3669 = vsub.s32 2, %v3668
        %v3670 = vrot.slane %v1068, %v3669
        %v3671 = vlaneseq
        %v3672 = vshrl.u32 %v3671, 7
        %v3673 = vsub.s32 4, %v3672
        %v3674 = vrot.slane %v1068, %v3673
        %v3675 = vlaneseq
        %v3676 = vshrl.u32 %v3675, 7
        %v3677 = vsub.s32 6, %v3676
        %v3678 = vrot.slane %v1068, %v3677
        %v3679 = vlaneseq
        %v3680 = vshrl.u32 %v3679, 7
        %v3681 = vsub.s32 0, %v3680
        %v3682 = vrot.slane %v1069, %v3681
        %v3683 = vlaneseq
        %v3684 = vshrl.u32 %v3683, 7
        %v3685 = vsub.s32 2, %v3684
        %v3686 = vrot.slane %v1069, %v3685
        %v3687 = vlaneseq
        %v3688 = vshrl.u32 %v3687, 7
        %v3689 = vsub.s32 4, %v3688
        %v3690 = vrot.slane %v1069, %v3689
        %v3691 = vlaneseq
        %v3692 = vshrl.u32 %v3691, 7
        %v3693 = vsub.s32 6, %v3692
        %v3694 = vrot.slane %v1069, %v3693
        %v3695 = vlaneseq
        %v3696 = vshrl.u32 %v3695, 7
        %v3697 = vsub.s32 0, %v3696
        %v3698 = vrot.slane %v1070, %v3697
        %v3699 = vlaneseq
        %v3700 = vshrl.u32 %v3699, 7
        %v3701 = vsub.s32 2, %v3700
        %v3702 = vrot.slane %v1070, %v3701
        %v3703 = vlaneseq
        %v3704 = vshrl.u32 %v3703, 7
        %v3705 = vsub.s32 4, %v3704
        %v3706 = vrot.slane %v1070, %v3705
        %v3707 = vlaneseq
        %v3708 = vshrl.u32 %v3707, 7
        %v3709 = vsub.s32 6, %v3708
        %v3710 = vrot.slane %v1070, %v3709
        %v3711 = vlaneseq
        %v3712 = vshrl.u32 %v3711, 7
        %v3713 = vsub.s32 0, %v3712
        %v3714 = vrot.slane %v1071, %v3713
        %v3715 = vlaneseq
        %v3716 = vshrl.u32 %v3715, 7
        %v3717 = vsub.s32 2, %v3716
        %v3718 = vrot.slane %v1071, %v3717
        %v3719 = vlaneseq
        %v3720 = vshrl.u32 %v3719, 7
        %v3721 = vsub.s32 4, %v3720
        %v3722 = vrot.slane %v1071, %v3721
        %v3723 = vlaneseq
        %v3724 = vshrl.u32 %v3723, 7
        %v3725 = vsub.s32 6, %v3724
        %v3726 = vrot.slane %v1071, %v3725
        %v3727 = vlaneseq
        %v3728 = vshrl.u32 %v3727, 7
        %v3729 = vsub.s32 0, %v3728
        %v3730 = vrot.slane %v1072, %v3729
        %v3731 = vlaneseq
        %v3732 = vshrl.u32 %v3731, 7
        %v3733 = vsub.s32 2, %v3732
        %v3734 = vrot.slane %v1072, %v3733
        %v3735 = vlaneseq
        %v3736 = vshrl.u32 %v3735, 7
        %v3737 = vsub.s32 4, %v3736
        %v3738 = vrot.slane %v1072, %v3737
        %v3739 = vlaneseq
        %v3740 = vshrl.u32 %v3739, 7
        %v3741 = vsub.s32 6, %v3740
        %v3742 = vrot.slane %v1072, %v3741
        %v3743 = vlaneseq
        %v3744 = vshrl.u32 %v3743, 7
        %v3745 = vsub.s32 0, %v3744
        %v3746 = vrot.slane %v1073, %v3745
        %v3747 = vlaneseq
        %v3748 = vshrl.u32 %v3747, 7
        %v3749 = vsub.s32 2, %v3748
        %v3750 = vrot.slane %v1073, %v3749
        %v3751 = vlaneseq
        %v3752 = vshrl.u32 %v3751, 7
        %v3753 = vsub.s32 4, %v3752
        %v3754 = vrot.slane %v1073, %v3753
        %v3755 = vlaneseq
        %v3756 = vshrl.u32 %v3755, 7
        %v3757 = vsub.s32 6, %v3756
        %v3758 = vrot.slane %v1073, %v3757
        %v3759 = vlaneseq
        %v3760 = vshrl.u32 %v3759, 7
        %v3761 = vsub.s32 0, %v3760
        %v3762 = vrot.slane %v1074, %v3761
        %v3763 = vlaneseq
        %v3764 = vshrl.u32 %v3763, 7
        %v3765 = vsub.s32 2, %v3764
        %v3766 = vrot.slane %v1074, %v3765
        %v3767 = vlaneseq
        %v3768 = vshrl.u32 %v3767, 7
        %v3769 = vsub.s32 4, %v3768
        %v3770 = vrot.slane %v1074, %v3769
        %v3771 = vlaneseq
        %v3772 = vshrl.u32 %v3771, 7
        %v3773 = vsub.s32 6, %v3772
        %v3774 = vrot.slane %v1074, %v3773
        %v3775 = vlaneseq
        %v3776 = vshrl.u32 %v3775, 7
        %v3777 = vsub.s32 0, %v3776
        %v3778 = vrot.slane %v1075, %v3777
        %v3779 = vlaneseq
        %v3780 = vshrl.u32 %v3779, 7
        %v3781 = vsub.s32 2, %v3780
        %v3782 = vrot.slane %v1075, %v3781
        %v3783 = vlaneseq
        %v3784 = vshrl.u32 %v3783, 7
        %v3785 = vsub.s32 4, %v3784
        %v3786 = vrot.slane %v1075, %v3785
        %v3787 = vlaneseq
        %v3788 = vshrl.u32 %v3787, 7
        %v3789 = vsub.s32 6, %v3788
        %v3790 = vrot.slane %v1075, %v3789
        %v3791 = vlaneseq
        %v3792 = vshrl.u32 %v3791, 7
        %v3793 = vsub.s32 0, %v3792
        %v3794 = vrot.slane %v1076, %v3793
        %v3795 = vlaneseq
        %v3796 = vshrl.u32 %v3795, 7
        %v3797 = vsub.s32 2, %v3796
        %v3798 = vrot.slane %v1076, %v3797
        %v3799 = vlaneseq
        %v3800 = vshrl.u32 %v3799, 7
        %v3801 = vsub.s32 4, %v3800
        %v3802 = vrot.slane %v1076, %v3801
        %v3803 = vlaneseq
        %v3804 = vshrl.u32 %v3803, 7
        %v3805 = vsub.s32 6, %v3804
        %v3806 = vrot.slane %v1076, %v3805
        %v3807 = vlaneseq
        %v3808 = vshrl.u32 %v3807, 7
        %v3809 = vsub.s32 0, %v3808
        %v3810 = vrot.slane %v1077, %v3809
        %v3811 = vlaneseq
        %v3812 = vshrl.u32 %v3811, 7
        %v3813 = vsub.s32 2, %v3812
        %v3814 = vrot.slane %v1077, %v3813
        %v3815 = vlaneseq
        %v3816 = vshrl.u32 %v3815, 7
        %v3817 = vsub.s32 4, %v3816
        %v3818 = vrot.slane %v1077, %v3817
        %v3819 = vlaneseq
        %v3820 = vshrl.u32 %v3819, 7
        %v3821 = vsub.s32 6, %v3820
        %v3822 = vrot.slane %v1077, %v3821
        %v3823 = vlaneseq
        %v3824 = vshrl.u32 %v3823, 7
        %v3825 = vsub.s32 0, %v3824
        %v3826 = vrot.slane %v1078, %v3825
        %v3827 = vlaneseq
        %v3828 = vshrl.u32 %v3827, 7
        %v3829 = vsub.s32 2, %v3828
        %v3830 = vrot.slane %v1078, %v3829
        %v3831 = vlaneseq
        %v3832 = vshrl.u32 %v3831, 7
        %v3833 = vsub.s32 4, %v3832
        %v3834 = vrot.slane %v1078, %v3833
        %v3835 = vlaneseq
        %v3836 = vshrl.u32 %v3835, 7
        %v3837 = vsub.s32 6, %v3836
        %v3838 = vrot.slane %v1078, %v3837
        %v3839 = vlaneseq
        %v3840 = vshrl.u32 %v3839, 7
        %v3841 = vsub.s32 0, %v3840
        %v3842 = vrot.slane %v1079, %v3841
        %v3843 = vlaneseq
        %v3844 = vshrl.u32 %v3843, 7
        %v3845 = vsub.s32 2, %v3844
        %v3846 = vrot.slane %v1079, %v3845
        %v3847 = vlaneseq
        %v3848 = vshrl.u32 %v3847, 7
        %v3849 = vsub.s32 4, %v3848
        %v3850 = vrot.slane %v1079, %v3849
        %v3851 = vlaneseq
        %v3852 = vshrl.u32 %v3851, 7
        %v3853 = vsub.s32 6, %v3852
        %v3854 = vrot.slane %v1079, %v3853
        %v3855 = vlaneseq
        %v3856 = vshrl.u32 %v3855, 7
        %v3857 = vsub.s32 0, %v3856
        %v3858 = vrot.slane %v1080, %v3857
        %v3859 = vlaneseq
        %v3860 = vshrl.u32 %v3859, 7
        %v3861 = vsub.s32 2, %v3860
        %v3862 = vrot.slane %v1080, %v3861
        %v3863 = vlaneseq
        %v3864 = vshrl.u32 %v3863, 7
        %v3865 = vsub.s32 4, %v3864
        %v3866 = vrot.slane %v1080, %v3865
        %v3867 = vlaneseq
        %v3868 = vshrl.u32 %v3867, 7
        %v3869 = vsub.s32 6, %v3868
        %v3870 = vrot.slane %v1080, %v3869
        %v3871 = vlaneseq
        %v3872 = vshrl.u32 %v3871, 7
        %v3873 = vsub.s32 0, %v3872
        %v3874 = vrot.slane %v1081, %v3873
        %v3875 = vlaneseq
        %v3876 = vshrl.u32 %v3875, 7
        %v3877 = vsub.s32 2, %v3876
        %v3878 = vrot.slane %v1081, %v3877
        %v3879 = vlaneseq
        %v3880 = vshrl.u32 %v3879, 7
        %v3881 = vsub.s32 4, %v3880
        %v3882 = vrot.slane %v1081, %v3881
        %v3883 = vlaneseq
        %v3884 = vshrl.u32 %v3883, 7
        %v3885 = vsub.s32 6, %v3884
        %v3886 = vrot.slane %v1081, %v3885
        %v3887 = vlaneseq
        %v3888 = vshrl.u32 %v3887, 7
        %v3889 = vsub.s32 0, %v3888
        %v3890 = vrot.slane %v1082, %v3889
        %v3891 = vlaneseq
        %v3892 = vshrl.u32 %v3891, 7
        %v3893 = vsub.s32 2, %v3892
        %v3894 = vrot.slane %v1082, %v3893
        %v3895 = vlaneseq
        %v3896 = vshrl.u32 %v3895, 7
        %v3897 = vsub.s32 4, %v3896
        %v3898 = vrot.slane %v1082, %v3897
        %v3899 = vlaneseq
        %v3900 = vshrl.u32 %v3899, 7
        %v3901 = vsub.s32 6, %v3900
        %v3902 = vrot.slane %v1082, %v3901
        %v3903 = vlaneseq
        %v3904 = vshrl.u32 %v3903, 7
        %v3905 = vsub.s32 0, %v3904
        %v3906 = vrot.slane %v1083, %v3905
        %v3907 = vlaneseq
        %v3908 = vshrl.u32 %v3907, 7
        %v3909 = vsub.s32 2, %v3908
        %v3910 = vrot.slane %v1083, %v3909
        %v3911 = vlaneseq
        %v3912 = vshrl.u32 %v3911, 7
        %v3913 = vsub.s32 4, %v3912
        %v3914 = vrot.slane %v1083, %v3913
        %v3915 = vlaneseq
        %v3916 = vshrl.u32 %v3915, 7
        %v3917 = vsub.s32 6, %v3916
        %v3918 = vrot.slane %v1083, %v3917
        %v3919 = vlaneseq
        %v3920 = vshrl.u32 %v3919, 7
        %v3921 = vsub.s32 0, %v3920
        %v3922 = vrot.slane %v1084, %v3921
        %v3923 = vlaneseq
        %v3924 = vshrl.u32 %v3923, 7
        %v3925 = vsub.s32 2, %v3924
        %v3926 = vrot.slane %v1084, %v3925
        %v3927 = vlaneseq
        %v3928 = vshrl.u32 %v3927, 7
        %v3929 = vsub.s32 4, %v3928
        %v3930 = vrot.slane %v1084, %v3929
        %v3931 = vlaneseq
        %v3932 = vshrl.u32 %v3931, 7
        %v3933 = vsub.s32 6, %v3932
        %v3934 = vrot.slane %v1084, %v3933
        %v4136 = vsel %vm454, %v609, 0
        %4138 = vmatprep.subr.bf16.mxu0 0
        %4139 = vmatpush1.bf16.msra.mxu0 0
        %4140 = vmatprep.subr.bf16.mxu0 0
        %4141 = vmatpush1.bf16.msra.mxu0 0
        %4142 = vmatprep.subr.bf16.mxu0 0
        %4143 = vmatpush1.bf16.msra.mxu0 0
        %4144 = vmatprep.subr.bf16.mxu0 0
        %4145 = vmatpush1.bf16.msra.mxu0 0
        %4146 = vmatprep.subr.bf16.mxu0 0
        %4147 = vmatpush1.bf16.msra.mxu0 0
        %4148 = vmatprep.subr.bf16.mxu0 0
        %4149 = vmatpush1.bf16.msra.mxu0 0
        %4150 = vmatprep.subr.bf16.mxu0 %v2486
        %4151 = vmatpush1.bf16.msra.mxu0 %v2485
        %4152 = vmatprep.subr.bf16.mxu0 %v2286
        %4153 = vmatpush1.bf16.msra.mxu0 %v2285
        %4154 = vmatprep.subr.bf16.mxu0 0
        %4155 = vmatpush2.bf16.msra.mxu0 0
        %4156 = vmatprep.subr.bf16.mxu0 0
        %4157 = vmatpush2.bf16.msra.mxu0 0
        %4158 = vmatprep.subr.bf16.mxu0 0
        %4159 = vmatpush2.bf16.msra.mxu0 0
        %4160 = vmatprep.subr.bf16.mxu0 0
        %4161 = vmatpush2.bf16.msra.mxu0 0
        %4162 = vmatprep.subr.bf16.mxu0 0
        %4163 = vmatpush2.bf16.msra.mxu0 0
        %4164 = vmatprep.subr.bf16.mxu0 0
        %4165 = vmatpush2.bf16.msra.mxu0 0
        %4166 = vmatprep.subr.bf16.mxu0 0
        %4167 = vmatpush2.bf16.msra.mxu0 0
        %4168 = vmatprep.subr.bf16.mxu0 0
        %4169 = vmatpush2.bf16.msra.mxu0 0
        %4170 = vmatprep.mubr.bf16.mxu0 0
        %4171 = vmatmul.mubr.bf16.gmra.mxu0 %v4136
        %v4172 = vpop.f32.mrf.mxu0
        %v4173 = vadd.f32 %v3138, %v4172
        %v4174 = vpop.f32.mrf.mxu0
        %v4175 = vadd.f32 %v3142, %v4174
        %v4176 = vpop.f32.mrf.mxu0
        %v4177 = vpop.f32.mrf.mxu0
        %4178 = vdwg.mxu0
        %4179 = vmatprep.subr.bf16.mxu0 0
        %4180 = vmatpush1.bf16.msra.mxu0 0
        %4181 = vmatprep.subr.bf16.mxu0 0
        %4182 = vmatpush1.bf16.msra.mxu0 0
        %4183 = vmatprep.subr.bf16.mxu0 0
        %4184 = vmatpush1.bf16.msra.mxu0 0
        %4185 = vmatprep.subr.bf16.mxu0 0
        %4186 = vmatpush1.bf16.msra.mxu0 0
        %4187 = vmatprep.subr.bf16.mxu0 0
        %4188 = vmatpush1.bf16.msra.mxu0 0
        %4189 = vmatprep.subr.bf16.mxu0 0
        %4190 = vmatpush1.bf16.msra.mxu0 0
        %4191 = vmatprep.subr.bf16.mxu0 %v2488
        %4192 = vmatpush1.bf16.msra.mxu0 %v2487
        %4193 = vmatprep.subr.bf16.mxu0 %v2288
        %4194 = vmatpush1.bf16.msra.mxu0 %v2287
        %4195 = vmatprep.subr.bf16.mxu0 0
        %4196 = vmatpush2.bf16.msra.mxu0 0
        %4197 = vmatprep.subr.bf16.mxu0 0
        %4198 = vmatpush2.bf16.msra.mxu0 0
        %4199 = vmatprep.subr.bf16.mxu0 0
        %4200 = vmatpush2.bf16.msra.mxu0 0
        %4201 = vmatprep.subr.bf16.mxu0 0
        %4202 = vmatpush2.bf16.msra.mxu0 0
        %4203 = vmatprep.subr.bf16.mxu0 0
        %4204 = vmatpush2.bf16.msra.mxu0 0
        %4205 = vmatprep.subr.bf16.mxu0 0
        %4206 = vmatpush2.bf16.msra.mxu0 0
        %4207 = vmatprep.subr.bf16.mxu0 0
        %4208 = vmatpush2.bf16.msra.mxu0 0
        %4209 = vmatprep.subr.bf16.mxu0 0
        %4210 = vmatpush2.bf16.msra.mxu0 0
        %4211 = vmatprep.mubr.bf16.mxu0 0
        %4212 = vmatmul.mubr.bf16.gmra.mxu0 %v4136
        %v4213 = vpop.f32.mrf.mxu0
        %v4214 = vadd.f32 %v3146, %v4213
        %v4215 = vpop.f32.mrf.mxu0
        %v4216 = vadd.f32 %v3150, %v4215
        %v4217 = vpop.f32.mrf.mxu0
        %v4218 = vpop.f32.mrf.mxu0
        %4219 = vdwg.mxu0
        %4220 = vmatprep.subr.bf16.mxu0 0
        %4221 = vmatpush1.bf16.msra.mxu0 0
        %4222 = vmatprep.subr.bf16.mxu0 0
        %4223 = vmatpush1.bf16.msra.mxu0 0
        %4224 = vmatprep.subr.bf16.mxu0 0
        %4225 = vmatpush1.bf16.msra.mxu0 0
        %4226 = vmatprep.subr.bf16.mxu0 0
        %4227 = vmatpush1.bf16.msra.mxu0 0
        %4228 = vmatprep.subr.bf16.mxu0 0
        %4229 = vmatpush1.bf16.msra.mxu0 0
        %4230 = vmatprep.subr.bf16.mxu0 0
        %4231 = vmatpush1.bf16.msra.mxu0 0
        %4232 = vmatprep.subr.bf16.mxu0 %v2490
        %4233 = vmatpush1.bf16.msra.mxu0 %v2489
        %4234 = vmatprep.subr.bf16.mxu0 %v2290
        %4235 = vmatpush1.bf16.msra.mxu0 %v2289
        %4236 = vmatprep.subr.bf16.mxu0 0
        %4237 = vmatpush2.bf16.msra.mxu0 0
        %4238 = vmatprep.subr.bf16.mxu0 0
        %4239 = vmatpush2.bf16.msra.mxu0 0
        %4240 = vmatprep.subr.bf16.mxu0 0
        %4241 = vmatpush2.bf16.msra.mxu0 0
        %4242 = vmatprep.subr.bf16.mxu0 0
        %4243 = vmatpush2.bf16.msra.mxu0 0
        %4244 = vmatprep.subr.bf16.mxu0 0
        %4245 = vmatpush2.bf16.msra.mxu0 0
        %4246 = vmatprep.subr.bf16.mxu0 0
        %4247 = vmatpush2.bf16.msra.mxu0 0
        %4248 = vmatprep.subr.bf16.mxu0 0
        %4249 = vmatpush2.bf16.msra.mxu0 0
        %4250 = vmatprep.subr.bf16.mxu0 0
        %4251 = vmatpush2.bf16.msra.mxu0 0
        %4252 = vmatprep.mubr.bf16.mxu0 0
        %4253 = vmatmul.mubr.bf16.gmra.mxu0 %v4136
        %v4254 = vpop.f32.mrf.mxu0
        %v4255 = vadd.f32 %v3154, %v4254
        %v4256 = vpop.f32.mrf.mxu0
        %v4257 = vadd.f32 %v3158, %v4256
        %v4258 = vpop.f32.mrf.mxu0
        %v4259 = vpop.f32.mrf.mxu0
        %4260 = vdwg.mxu0
        %4261 = vmatprep.subr.bf16.mxu0 0
        %4262 = vmatpush1.bf16.msra.mxu0 0
        %4263 = vmatprep.subr.bf16.mxu0 0
        %4264 = vmatpush1.bf16.msra.mxu0 0
        %4265 = vmatprep.subr.bf16.mxu0 0
        %4266 = vmatpush1.bf16.msra.mxu0 0
        %4267 = vmatprep.subr.bf16.mxu0 0
        %4268 = vmatpush1.bf16.msra.mxu0 0
        %4269 = vmatprep.subr.bf16.mxu0 0
        %4270 = vmatpush1.bf16.msra.mxu0 0
        %4271 = vmatprep.subr.bf16.mxu0 0
        %4272 = vmatpush1.bf16.msra.mxu0 0
        %4273 = vmatprep.subr.bf16.mxu0 %v2492
        %4274 = vmatpush1.bf16.msra.mxu0 %v2491
        %4275 = vmatprep.subr.bf16.mxu0 %v2292
        %4276 = vmatpush1.bf16.msra.mxu0 %v2291
        %4277 = vmatprep.subr.bf16.mxu0 0
        %4278 = vmatpush2.bf16.msra.mxu0 0
        %4279 = vmatprep.subr.bf16.mxu0 0
        %4280 = vmatpush2.bf16.msra.mxu0 0
        %4281 = vmatprep.subr.bf16.mxu0 0
        %4282 = vmatpush2.bf16.msra.mxu0 0
        %4283 = vmatprep.subr.bf16.mxu0 0
        %4284 = vmatpush2.bf16.msra.mxu0 0
        %4285 = vmatprep.subr.bf16.mxu0 0
        %4286 = vmatpush2.bf16.msra.mxu0 0
        %4287 = vmatprep.subr.bf16.mxu0 0
        %4288 = vmatpush2.bf16.msra.mxu0 0
        %4289 = vmatprep.subr.bf16.mxu0 0
        %4290 = vmatpush2.bf16.msra.mxu0 0
        %4291 = vmatprep.subr.bf16.mxu0 0
        %4292 = vmatpush2.bf16.msra.mxu0 0
        %4293 = vmatprep.mubr.bf16.mxu0 0
        %4294 = vmatmul.mubr.bf16.gmra.mxu0 %v4136
        %v4295 = vpop.f32.mrf.mxu0
        %v4296 = vadd.f32 %v3162, %v4295
        %v4297 = vpop.f32.mrf.mxu0
        %v4298 = vadd.f32 %v3166, %v4297
        %v4299 = vpop.f32.mrf.mxu0
        %v4300 = vpop.f32.mrf.mxu0
        %4301 = vdwg.mxu0
        %4302 = vmatprep.subr.bf16.mxu0 0
        %4303 = vmatpush1.bf16.msra.mxu0 0
        %4304 = vmatprep.subr.bf16.mxu0 0
        %4305 = vmatpush1.bf16.msra.mxu0 0
        %4306 = vmatprep.subr.bf16.mxu0 0
        %4307 = vmatpush1.bf16.msra.mxu0 0
        %4308 = vmatprep.subr.bf16.mxu0 0
        %4309 = vmatpush1.bf16.msra.mxu0 0
        %4310 = vmatprep.subr.bf16.mxu0 0
        %4311 = vmatpush1.bf16.msra.mxu0 0
        %4312 = vmatprep.subr.bf16.mxu0 0
        %4313 = vmatpush1.bf16.msra.mxu0 0
        %4314 = vmatprep.subr.bf16.mxu0 %v2494
        %4315 = vmatpush1.bf16.msra.mxu0 %v2493
        %4316 = vmatprep.subr.bf16.mxu0 %v2294
        %4317 = vmatpush1.bf16.msra.mxu0 %v2293
        %4318 = vmatprep.subr.bf16.mxu0 0
        %4319 = vmatpush2.bf16.msra.mxu0 0
        %4320 = vmatprep.subr.bf16.mxu0 0
        %4321 = vmatpush2.bf16.msra.mxu0 0
        %4322 = vmatprep.subr.bf16.mxu0 0
        %4323 = vmatpush2.bf16.msra.mxu0 0
        %4324 = vmatprep.subr.bf16.mxu0 0
        %4325 = vmatpush2.bf16.msra.mxu0 0
        %4326 = vmatprep.subr.bf16.mxu0 0
        %4327 = vmatpush2.bf16.msra.mxu0 0
        %4328 = vmatprep.subr.bf16.mxu0 0
        %4329 = vmatpush2.bf16.msra.mxu0 0
        %4330 = vmatprep.subr.bf16.mxu0 0
        %4331 = vmatpush2.bf16.msra.mxu0 0
        %4332 = vmatprep.subr.bf16.mxu0 0
        %4333 = vmatpush2.bf16.msra.mxu0 0
        %4334 = vmatprep.mubr.bf16.mxu0 0
        %4335 = vmatmul.mubr.bf16.gmra.mxu0 %v4136
        %v4336 = vpop.f32.mrf.mxu0
        %v4337 = vadd.f32 %v3170, %v4336
        %v4338 = vpop.f32.mrf.mxu0
        %v4339 = vadd.f32 %v3174, %v4338
        %v4340 = vpop.f32.mrf.mxu0
        %v4341 = vpop.f32.mrf.mxu0
        %4342 = vdwg.mxu0
        %4343 = vmatprep.subr.bf16.mxu0 0
        %4344 = vmatpush1.bf16.msra.mxu0 0
        %4345 = vmatprep.subr.bf16.mxu0 0
        %4346 = vmatpush1.bf16.msra.mxu0 0
        %4347 = vmatprep.subr.bf16.mxu0 0
        %4348 = vmatpush1.bf16.msra.mxu0 0
        %4349 = vmatprep.subr.bf16.mxu0 0
        %4350 = vmatpush1.bf16.msra.mxu0 0
        %4351 = vmatprep.subr.bf16.mxu0 0
        %4352 = vmatpush1.bf16.msra.mxu0 0
        %4353 = vmatprep.subr.bf16.mxu0 0
        %4354 = vmatpush1.bf16.msra.mxu0 0
        %4355 = vmatprep.subr.bf16.mxu0 %v2496
        %4356 = vmatpush1.bf16.msra.mxu0 %v2495
        %4357 = vmatprep.subr.bf16.mxu0 %v2296
        %4358 = vmatpush1.bf16.msra.mxu0 %v2295
        %4359 = vmatprep.subr.bf16.mxu0 0
        %4360 = vmatpush2.bf16.msra.mxu0 0
        %4361 = vmatprep.subr.bf16.mxu0 0
        %4362 = vmatpush2.bf16.msra.mxu0 0
        %4363 = vmatprep.subr.bf16.mxu0 0
        %4364 = vmatpush2.bf16.msra.mxu0 0
        %4365 = vmatprep.subr.bf16.mxu0 0
        %4366 = vmatpush2.bf16.msra.mxu0 0
        %4367 = vmatprep.subr.bf16.mxu0 0
        %4368 = vmatpush2.bf16.msra.mxu0 0
        %4369 = vmatprep.subr.bf16.mxu0 0
        %4370 = vmatpush2.bf16.msra.mxu0 0
        %4371 = vmatprep.subr.bf16.mxu0 0
        %4372 = vmatpush2.bf16.msra.mxu0 0
        %4373 = vmatprep.subr.bf16.mxu0 0
        %4374 = vmatpush2.bf16.msra.mxu0 0
        %4375 = vmatprep.mubr.bf16.mxu0 0
        %4376 = vmatmul.mubr.bf16.gmra.mxu0 %v4136
        %v4377 = vpop.f32.mrf.mxu0
        %v4378 = vadd.f32 %v3178, %v4377
        %v4379 = vpop.f32.mrf.mxu0
        %v4380 = vadd.f32 %v3182, %v4379
        %v4381 = vpop.f32.mrf.mxu0
        %v4382 = vpop.f32.mrf.mxu0
        %4383 = vdwg.mxu0
        %4384 = vmatprep.subr.bf16.mxu0 0
        %4385 = vmatpush1.bf16.msra.mxu0 0
        %4386 = vmatprep.subr.bf16.mxu0 0
        %4387 = vmatpush1.bf16.msra.mxu0 0
        %4388 = vmatprep.subr.bf16.mxu0 0
        %4389 = vmatpush1.bf16.msra.mxu0 0
        %4390 = vmatprep.subr.bf16.mxu0 0
        %4391 = vmatpush1.bf16.msra.mxu0 0
        %4392 = vmatprep.subr.bf16.mxu0 0
        %4393 = vmatpush1.bf16.msra.mxu0 0
        %4394 = vmatprep.subr.bf16.mxu0 0
        %4395 = vmatpush1.bf16.msra.mxu0 0
        %4396 = vmatprep.subr.bf16.mxu0 %v2498
        %4397 = vmatpush1.bf16.msra.mxu0 %v2497
        %4398 = vmatprep.subr.bf16.mxu0 %v2298
        %4399 = vmatpush1.bf16.msra.mxu0 %v2297
        %4400 = vmatprep.subr.bf16.mxu0 0
        %4401 = vmatpush2.bf16.msra.mxu0 0
        %4402 = vmatprep.subr.bf16.mxu0 0
        %4403 = vmatpush2.bf16.msra.mxu0 0
        %4404 = vmatprep.subr.bf16.mxu0 0
        %4405 = vmatpush2.bf16.msra.mxu0 0
        %4406 = vmatprep.subr.bf16.mxu0 0
        %4407 = vmatpush2.bf16.msra.mxu0 0
        %4408 = vmatprep.subr.bf16.mxu0 0
        %4409 = vmatpush2.bf16.msra.mxu0 0
        %4410 = vmatprep.subr.bf16.mxu0 0
        %4411 = vmatpush2.bf16.msra.mxu0 0
        %4412 = vmatprep.subr.bf16.mxu0 0
        %4413 = vmatpush2.bf16.msra.mxu0 0
        %4414 = vmatprep.subr.bf16.mxu0 0
        %4415 = vmatpush2.bf16.msra.mxu0 0
        %4416 = vmatprep.mubr.bf16.mxu0 0
        %4417 = vmatmul.mubr.bf16.gmra.mxu0 %v4136
        %v4418 = vpop.f32.mrf.mxu0
        %v4419 = vadd.f32 %v3186, %v4418
        %v4420 = vpop.f32.mrf.mxu0
        %v4421 = vadd.f32 %v3190, %v4420
        %v4422 = vpop.f32.mrf.mxu0
        %v4423 = vpop.f32.mrf.mxu0
        %4424 = vdwg.mxu0
        %4425 = vmatprep.subr.bf16.mxu0 0
        %4426 = vmatpush1.bf16.msra.mxu0 0
        %4427 = vmatprep.subr.bf16.mxu0 0
        %4428 = vmatpush1.bf16.msra.mxu0 0
        %4429 = vmatprep.subr.bf16.mxu0 0
        %4430 = vmatpush1.bf16.msra.mxu0 0
        %4431 = vmatprep.subr.bf16.mxu0 0
        %4432 = vmatpush1.bf16.msra.mxu0 0
        %4433 = vmatprep.subr.bf16.mxu0 0
        %4434 = vmatpush1.bf16.msra.mxu0 0
        %4435 = vmatprep.subr.bf16.mxu0 0
        %4436 = vmatpush1.bf16.msra.mxu0 0
        %4437 = vmatprep.subr.bf16.mxu0 %v2500
        %4438 = vmatpush1.bf16.msra.mxu0 %v2499
        %4439 = vmatprep.subr.bf16.mxu0 %v2300
        %4440 = vmatpush1.bf16.msra.mxu0 %v2299
        %4441 = vmatprep.subr.bf16.mxu0 0
        %4442 = vmatpush2.bf16.msra.mxu0 0
        %4443 = vmatprep.subr.bf16.mxu0 0
        %4444 = vmatpush2.bf16.msra.mxu0 0
        %4445 = vmatprep.subr.bf16.mxu0 0
        %4446 = vmatpush2.bf16.msra.mxu0 0
        %4447 = vmatprep.subr.bf16.mxu0 0
        %4448 = vmatpush2.bf16.msra.mxu0 0
        %4449 = vmatprep.subr.bf16.mxu0 0
        %4450 = vmatpush2.bf16.msra.mxu0 0
        %4451 = vmatprep.subr.bf16.mxu0 0
        %4452 = vmatpush2.bf16.msra.mxu0 0
        %4453 = vmatprep.subr.bf16.mxu0 0
        %4454 = vmatpush2.bf16.msra.mxu0 0
        %4455 = vmatprep.subr.bf16.mxu0 0
        %4456 = vmatpush2.bf16.msra.mxu0 0
        %4457 = vmatprep.mubr.bf16.mxu0 0
        %4458 = vmatmul.mubr.bf16.gmra.mxu0 %v4136
        %v4459 = vpop.f32.mrf.mxu0
        %v4460 = vadd.f32 %v3194, %v4459
        %v4461 = vpop.f32.mrf.mxu0
        %v4462 = vadd.f32 %v3198, %v4461
        %v4463 = vpop.f32.mrf.mxu0
        %v4464 = vpop.f32.mrf.mxu0
        %4465 = vdwg.mxu0
        %4466 = vmatprep.subr.bf16.mxu0 0
        %4467 = vmatpush1.bf16.msra.mxu0 0
        %4468 = vmatprep.subr.bf16.mxu0 0
        %4469 = vmatpush1.bf16.msra.mxu0 0
        %4470 = vmatprep.subr.bf16.mxu0 0
        %4471 = vmatpush1.bf16.msra.mxu0 0
        %4472 = vmatprep.subr.bf16.mxu0 0
        %4473 = vmatpush1.bf16.msra.mxu0 0
        %4474 = vmatprep.subr.bf16.mxu0 0
        %4475 = vmatpush1.bf16.msra.mxu0 0
        %4476 = vmatprep.subr.bf16.mxu0 0
        %4477 = vmatpush1.bf16.msra.mxu0 0
        %4478 = vmatprep.subr.bf16.mxu0 %v2502
        %4479 = vmatpush1.bf16.msra.mxu0 %v2501
        %4480 = vmatprep.subr.bf16.mxu0 %v2302
        %4481 = vmatpush1.bf16.msra.mxu0 %v2301
        %4482 = vmatprep.subr.bf16.mxu0 0
        %4483 = vmatpush2.bf16.msra.mxu0 0
        %4484 = vmatprep.subr.bf16.mxu0 0
        %4485 = vmatpush2.bf16.msra.mxu0 0
        %4486 = vmatprep.subr.bf16.mxu0 0
        %4487 = vmatpush2.bf16.msra.mxu0 0
        %4488 = vmatprep.subr.bf16.mxu0 0
        %4489 = vmatpush2.bf16.msra.mxu0 0
        %4490 = vmatprep.subr.bf16.mxu0 0
        %4491 = vmatpush2.bf16.msra.mxu0 0
        %4492 = vmatprep.subr.bf16.mxu0 0
        %4493 = vmatpush2.bf16.msra.mxu0 0
        %4494 = vmatprep.subr.bf16.mxu0 0
        %4495 = vmatpush2.bf16.msra.mxu0 0
        %4496 = vmatprep.subr.bf16.mxu0 0
        %4497 = vmatpush2.bf16.msra.mxu0 0
        %4498 = vmatprep.mubr.bf16.mxu0 0
        %4499 = vmatmul.mubr.bf16.gmra.mxu0 %v4136
        %v4500 = vpop.f32.mrf.mxu0
        %v4501 = vadd.f32 %v3202, %v4500
        %v4502 = vpop.f32.mrf.mxu0
        %v4503 = vadd.f32 %v3206, %v4502
        %v4504 = vpop.f32.mrf.mxu0
        %v4505 = vpop.f32.mrf.mxu0
        %4506 = vdwg.mxu0
        %4507 = vmatprep.subr.bf16.mxu0 0
        %4508 = vmatpush1.bf16.msra.mxu0 0
        %4509 = vmatprep.subr.bf16.mxu0 0
        %4510 = vmatpush1.bf16.msra.mxu0 0
        %4511 = vmatprep.subr.bf16.mxu0 0
        %4512 = vmatpush1.bf16.msra.mxu0 0
        %4513 = vmatprep.subr.bf16.mxu0 0
        %4514 = vmatpush1.bf16.msra.mxu0 0
        %4515 = vmatprep.subr.bf16.mxu0 0
        %4516 = vmatpush1.bf16.msra.mxu0 0
        %4517 = vmatprep.subr.bf16.mxu0 0
        %4518 = vmatpush1.bf16.msra.mxu0 0
        %4519 = vmatprep.subr.bf16.mxu0 %v2504
        %4520 = vmatpush1.bf16.msra.mxu0 %v2503
        %4521 = vmatprep.subr.bf16.mxu0 %v2304
        %4522 = vmatpush1.bf16.msra.mxu0 %v2303
        %4523 = vmatprep.subr.bf16.mxu0 0
        %4524 = vmatpush2.bf16.msra.mxu0 0
        %4525 = vmatprep.subr.bf16.mxu0 0
        %4526 = vmatpush2.bf16.msra.mxu0 0
        %4527 = vmatprep.subr.bf16.mxu0 0
        %4528 = vmatpush2.bf16.msra.mxu0 0
        %4529 = vmatprep.subr.bf16.mxu0 0
        %4530 = vmatpush2.bf16.msra.mxu0 0
        %4531 = vmatprep.subr.bf16.mxu0 0
        %4532 = vmatpush2.bf16.msra.mxu0 0
        %4533 = vmatprep.subr.bf16.mxu0 0
        %4534 = vmatpush2.bf16.msra.mxu0 0
        %4535 = vmatprep.subr.bf16.mxu0 0
        %4536 = vmatpush2.bf16.msra.mxu0 0
        %4537 = vmatprep.subr.bf16.mxu0 0
        %4538 = vmatpush2.bf16.msra.mxu0 0
        %4539 = vmatprep.mubr.bf16.mxu0 0
        %4540 = vmatmul.mubr.bf16.gmra.mxu0 %v4136
        %v4541 = vpop.f32.mrf.mxu0
        %v4542 = vadd.f32 %v3210, %v4541
        %v4543 = vpop.f32.mrf.mxu0
        %v4544 = vadd.f32 %v3214, %v4543
        %v4545 = vpop.f32.mrf.mxu0
        %v4546 = vpop.f32.mrf.mxu0
        %4547 = vdwg.mxu0
        %4548 = vmatprep.subr.bf16.mxu0 0
        %4549 = vmatpush1.bf16.msra.mxu0 0
        %4550 = vmatprep.subr.bf16.mxu0 0
        %4551 = vmatpush1.bf16.msra.mxu0 0
        %4552 = vmatprep.subr.bf16.mxu0 0
        %4553 = vmatpush1.bf16.msra.mxu0 0
        %4554 = vmatprep.subr.bf16.mxu0 0
        %4555 = vmatpush1.bf16.msra.mxu0 0
        %4556 = vmatprep.subr.bf16.mxu0 0
        %4557 = vmatpush1.bf16.msra.mxu0 0
        %4558 = vmatprep.subr.bf16.mxu0 0
        %4559 = vmatpush1.bf16.msra.mxu0 0
        %4560 = vmatprep.subr.bf16.mxu0 %v2506
        %4561 = vmatpush1.bf16.msra.mxu0 %v2505
        %4562 = vmatprep.subr.bf16.mxu0 %v2306
        %4563 = vmatpush1.bf16.msra.mxu0 %v2305
        %4564 = vmatprep.subr.bf16.mxu0 0
        %4565 = vmatpush2.bf16.msra.mxu0 0
        %4566 = vmatprep.subr.bf16.mxu0 0
        %4567 = vmatpush2.bf16.msra.mxu0 0
        %4568 = vmatprep.subr.bf16.mxu0 0
        %4569 = vmatpush2.bf16.msra.mxu0 0
        %4570 = vmatprep.subr.bf16.mxu0 0
        %4571 = vmatpush2.bf16.msra.mxu0 0
        %4572 = vmatprep.subr.bf16.mxu0 0
        %4573 = vmatpush2.bf16.msra.mxu0 0
        %4574 = vmatprep.subr.bf16.mxu0 0
        %4575 = vmatpush2.bf16.msra.mxu0 0
        %4576 = vmatprep.subr.bf16.mxu0 0
        %4577 = vmatpush2.bf16.msra.mxu0 0
        %4578 = vmatprep.subr.bf16.mxu0 0
        %4579 = vmatpush2.bf16.msra.mxu0 0
        %4580 = vmatprep.mubr.bf16.mxu0 0
        %4581 = vmatmul.mubr.bf16.gmra.mxu0 %v4136
        %v4582 = vpop.f32.mrf.mxu0
        %v4583 = vadd.f32 %v3218, %v4582
        %v4584 = vpop.f32.mrf.mxu0
        %v4585 = vadd.f32 %v3222, %v4584
        %v4586 = vpop.f32.mrf.mxu0
        %v4587 = vpop.f32.mrf.mxu0
        %4588 = vdwg.mxu0
        %4589 = vmatprep.subr.bf16.mxu0 0
        %4590 = vmatpush1.bf16.msra.mxu0 0
        %4591 = vmatprep.subr.bf16.mxu0 0
        %4592 = vmatpush1.bf16.msra.mxu0 0
        %4593 = vmatprep.subr.bf16.mxu0 0
        %4594 = vmatpush1.bf16.msra.mxu0 0
        %4595 = vmatprep.subr.bf16.mxu0 0
        %4596 = vmatpush1.bf16.msra.mxu0 0
        %4597 = vmatprep.subr.bf16.mxu0 0
        %4598 = vmatpush1.bf16.msra.mxu0 0
        %4599 = vmatprep.subr.bf16.mxu0 0
        %4600 = vmatpush1.bf16.msra.mxu0 0
        %4601 = vmatprep.subr.bf16.mxu0 %v2508
        %4602 = vmatpush1.bf16.msra.mxu0 %v2507
        %4603 = vmatprep.subr.bf16.mxu0 %v2308
        %4604 = vmatpush1.bf16.msra.mxu0 %v2307
        %4605 = vmatprep.subr.bf16.mxu0 0
        %4606 = vmatpush2.bf16.msra.mxu0 0
        %4607 = vmatprep.subr.bf16.mxu0 0
        %4608 = vmatpush2.bf16.msra.mxu0 0
        %4609 = vmatprep.subr.bf16.mxu0 0
        %4610 = vmatpush2.bf16.msra.mxu0 0
        %4611 = vmatprep.subr.bf16.mxu0 0
        %4612 = vmatpush2.bf16.msra.mxu0 0
        %4613 = vmatprep.subr.bf16.mxu0 0
        %4614 = vmatpush2.bf16.msra.mxu0 0
        %4615 = vmatprep.subr.bf16.mxu0 0
        %4616 = vmatpush2.bf16.msra.mxu0 0
        %4617 = vmatprep.subr.bf16.mxu0 0
        %4618 = vmatpush2.bf16.msra.mxu0 0
        %4619 = vmatprep.subr.bf16.mxu0 0
        %4620 = vmatpush2.bf16.msra.mxu0 0
        %4621 = vmatprep.mubr.bf16.mxu0 0
        %4622 = vmatmul.mubr.bf16.gmra.mxu0 %v4136
        %v4623 = vpop.f32.mrf.mxu0
        %v4624 = vadd.f32 %v3226, %v4623
        %v4625 = vpop.f32.mrf.mxu0
        %v4626 = vadd.f32 %v3230, %v4625
        %v4627 = vpop.f32.mrf.mxu0
        %v4628 = vpop.f32.mrf.mxu0
        %4629 = vdwg.mxu0
        %4630 = vmatprep.subr.bf16.mxu0 0
        %4631 = vmatpush1.bf16.msra.mxu0 0
        %4632 = vmatprep.subr.bf16.mxu0 0
        %4633 = vmatpush1.bf16.msra.mxu0 0
        %4634 = vmatprep.subr.bf16.mxu0 0
        %4635 = vmatpush1.bf16.msra.mxu0 0
        %4636 = vmatprep.subr.bf16.mxu0 0
        %4637 = vmatpush1.bf16.msra.mxu0 0
        %4638 = vmatprep.subr.bf16.mxu0 0
        %4639 = vmatpush1.bf16.msra.mxu0 0
        %4640 = vmatprep.subr.bf16.mxu0 0
        %4641 = vmatpush1.bf16.msra.mxu0 0
        %4642 = vmatprep.subr.bf16.mxu0 %v2510
        %4643 = vmatpush1.bf16.msra.mxu0 %v2509
        %4644 = vmatprep.subr.bf16.mxu0 %v2310
        %4645 = vmatpush1.bf16.msra.mxu0 %v2309
        %4646 = vmatprep.subr.bf16.mxu0 0
        %4647 = vmatpush2.bf16.msra.mxu0 0
        %4648 = vmatprep.subr.bf16.mxu0 0
        %4649 = vmatpush2.bf16.msra.mxu0 0
        %4650 = vmatprep.subr.bf16.mxu0 0
        %4651 = vmatpush2.bf16.msra.mxu0 0
        %4652 = vmatprep.subr.bf16.mxu0 0
        %4653 = vmatpush2.bf16.msra.mxu0 0
        %4654 = vmatprep.subr.bf16.mxu0 0
        %4655 = vmatpush2.bf16.msra.mxu0 0
        %4656 = vmatprep.subr.bf16.mxu0 0
        %4657 = vmatpush2.bf16.msra.mxu0 0
        %4658 = vmatprep.subr.bf16.mxu0 0
        %4659 = vmatpush2.bf16.msra.mxu0 0
        %4660 = vmatprep.subr.bf16.mxu0 0
        %4661 = vmatpush2.bf16.msra.mxu0 0
        %4662 = vmatprep.mubr.bf16.mxu0 0
        %4663 = vmatmul.mubr.bf16.gmra.mxu0 %v4136
        %v4664 = vpop.f32.mrf.mxu0
        %v4665 = vadd.f32 %v3234, %v4664
        %v4666 = vpop.f32.mrf.mxu0
        %v4667 = vadd.f32 %v3238, %v4666
        %v4668 = vpop.f32.mrf.mxu0
        %v4669 = vpop.f32.mrf.mxu0
        %4670 = vdwg.mxu0
        %4671 = vmatprep.subr.bf16.mxu0 0
        %4672 = vmatpush1.bf16.msra.mxu0 0
        %4673 = vmatprep.subr.bf16.mxu0 0
        %4674 = vmatpush1.bf16.msra.mxu0 0
        %4675 = vmatprep.subr.bf16.mxu0 0
        %4676 = vmatpush1.bf16.msra.mxu0 0
        %4677 = vmatprep.subr.bf16.mxu0 0
        %4678 = vmatpush1.bf16.msra.mxu0 0
        %4679 = vmatprep.subr.bf16.mxu0 0
        %4680 = vmatpush1.bf16.msra.mxu0 0
        %4681 = vmatprep.subr.bf16.mxu0 0
        %4682 = vmatpush1.bf16.msra.mxu0 0
        %4683 = vmatprep.subr.bf16.mxu0 %v2512
        %4684 = vmatpush1.bf16.msra.mxu0 %v2511
        %4685 = vmatprep.subr.bf16.mxu0 %v2312
        %4686 = vmatpush1.bf16.msra.mxu0 %v2311
        %4687 = vmatprep.subr.bf16.mxu0 0
        %4688 = vmatpush2.bf16.msra.mxu0 0
        %4689 = vmatprep.subr.bf16.mxu0 0
        %4690 = vmatpush2.bf16.msra.mxu0 0
        %4691 = vmatprep.subr.bf16.mxu0 0
        %4692 = vmatpush2.bf16.msra.mxu0 0
        %4693 = vmatprep.subr.bf16.mxu0 0
        %4694 = vmatpush2.bf16.msra.mxu0 0
        %4695 = vmatprep.subr.bf16.mxu0 0
        %4696 = vmatpush2.bf16.msra.mxu0 0
        %4697 = vmatprep.subr.bf16.mxu0 0
        %4698 = vmatpush2.bf16.msra.mxu0 0
        %4699 = vmatprep.subr.bf16.mxu0 0
        %4700 = vmatpush2.bf16.msra.mxu0 0
        %4701 = vmatprep.subr.bf16.mxu0 0
        %4702 = vmatpush2.bf16.msra.mxu0 0
        %4703 = vmatprep.mubr.bf16.mxu0 0
        %4704 = vmatmul.mubr.bf16.gmra.mxu0 %v4136
        %v4705 = vpop.f32.mrf.mxu0
        %v4706 = vadd.f32 %v3242, %v4705
        %v4707 = vpop.f32.mrf.mxu0
        %v4708 = vadd.f32 %v3246, %v4707
        %v4709 = vpop.f32.mrf.mxu0
        %v4710 = vpop.f32.mrf.mxu0
        %4711 = vdwg.mxu0
        %4712 = vmatprep.subr.bf16.mxu0 0
        %4713 = vmatpush1.bf16.msra.mxu0 0
        %4714 = vmatprep.subr.bf16.mxu0 0
        %4715 = vmatpush1.bf16.msra.mxu0 0
        %4716 = vmatprep.subr.bf16.mxu0 0
        %4717 = vmatpush1.bf16.msra.mxu0 0
        %4718 = vmatprep.subr.bf16.mxu0 0
        %4719 = vmatpush1.bf16.msra.mxu0 0
        %4720 = vmatprep.subr.bf16.mxu0 0
        %4721 = vmatpush1.bf16.msra.mxu0 0
        %4722 = vmatprep.subr.bf16.mxu0 0
        %4723 = vmatpush1.bf16.msra.mxu0 0
        %4724 = vmatprep.subr.bf16.mxu0 %v2514
        %4725 = vmatpush1.bf16.msra.mxu0 %v2513
        %4726 = vmatprep.subr.bf16.mxu0 %v2314
        %4727 = vmatpush1.bf16.msra.mxu0 %v2313
        %4728 = vmatprep.subr.bf16.mxu0 0
        %4729 = vmatpush2.bf16.msra.mxu0 0
        %4730 = vmatprep.subr.bf16.mxu0 0
        %4731 = vmatpush2.bf16.msra.mxu0 0
        %4732 = vmatprep.subr.bf16.mxu0 0
        %4733 = vmatpush2.bf16.msra.mxu0 0
        %4734 = vmatprep.subr.bf16.mxu0 0
        %4735 = vmatpush2.bf16.msra.mxu0 0
        %4736 = vmatprep.subr.bf16.mxu0 0
        %4737 = vmatpush2.bf16.msra.mxu0 0
        %4738 = vmatprep.subr.bf16.mxu0 0
        %4739 = vmatpush2.bf16.msra.mxu0 0
        %4740 = vmatprep.subr.bf16.mxu0 0
        %4741 = vmatpush2.bf16.msra.mxu0 0
        %4742 = vmatprep.subr.bf16.mxu0 0
        %4743 = vmatpush2.bf16.msra.mxu0 0
        %4744 = vmatprep.mubr.bf16.mxu0 0
        %4745 = vmatmul.mubr.bf16.gmra.mxu0 %v4136
        %v4746 = vpop.f32.mrf.mxu0
        %v4747 = vadd.f32 %v3250, %v4746
        %v4748 = vpop.f32.mrf.mxu0
        %v4749 = vadd.f32 %v3254, %v4748
        %v4750 = vpop.f32.mrf.mxu0
        %v4751 = vpop.f32.mrf.mxu0
        %4752 = vdwg.mxu0
        %4753 = vmatprep.subr.bf16.mxu0 0
        %4754 = vmatpush1.bf16.msra.mxu0 0
        %4755 = vmatprep.subr.bf16.mxu0 0
        %4756 = vmatpush1.bf16.msra.mxu0 0
        %4757 = vmatprep.subr.bf16.mxu0 0
        %4758 = vmatpush1.bf16.msra.mxu0 0
        %4759 = vmatprep.subr.bf16.mxu0 0
        %4760 = vmatpush1.bf16.msra.mxu0 0
        %4761 = vmatprep.subr.bf16.mxu0 0
        %4762 = vmatpush1.bf16.msra.mxu0 0
        %4763 = vmatprep.subr.bf16.mxu0 0
        %4764 = vmatpush1.bf16.msra.mxu0 0
        %4765 = vmatprep.subr.bf16.mxu0 %v2516
        %4766 = vmatpush1.bf16.msra.mxu0 %v2515
        %4767 = vmatprep.subr.bf16.mxu0 %v2316
        %4768 = vmatpush1.bf16.msra.mxu0 %v2315
        %4769 = vmatprep.subr.bf16.mxu0 0
        %4770 = vmatpush2.bf16.msra.mxu0 0
        %4771 = vmatprep.subr.bf16.mxu0 0
        %4772 = vmatpush2.bf16.msra.mxu0 0
        %4773 = vmatprep.subr.bf16.mxu0 0
        %4774 = vmatpush2.bf16.msra.mxu0 0
        %4775 = vmatprep.subr.bf16.mxu0 0
        %4776 = vmatpush2.bf16.msra.mxu0 0
        %4777 = vmatprep.subr.bf16.mxu0 0
        %4778 = vmatpush2.bf16.msra.mxu0 0
        %4779 = vmatprep.subr.bf16.mxu0 0
        %4780 = vmatpush2.bf16.msra.mxu0 0
        %4781 = vmatprep.subr.bf16.mxu0 0
        %4782 = vmatpush2.bf16.msra.mxu0 0
        %4783 = vmatprep.subr.bf16.mxu0 0
        %4784 = vmatpush2.bf16.msra.mxu0 0
        %4785 = vmatprep.mubr.bf16.mxu0 0
        %4786 = vmatmul.mubr.bf16.gmra.mxu0 %v4136
        %v4787 = vpop.f32.mrf.mxu0
        %v4788 = vadd.f32 %v3258, %v4787
        %v4789 = vpop.f32.mrf.mxu0
        %v4790 = vadd.f32 %v3262, %v4789
        %v4791 = vpop.f32.mrf.mxu0
        %v4792 = vpop.f32.mrf.mxu0
        %4793 = vdwg.mxu0
        %4794 = vmatprep.subr.bf16.mxu0 0
        %4795 = vmatpush1.bf16.msra.mxu0 0
        %4796 = vmatprep.subr.bf16.mxu0 0
        %4797 = vmatpush1.bf16.msra.mxu0 0
        %4798 = vmatprep.subr.bf16.mxu0 0
        %4799 = vmatpush1.bf16.msra.mxu0 0
        %4800 = vmatprep.subr.bf16.mxu0 0
        %4801 = vmatpush1.bf16.msra.mxu0 0
        %4802 = vmatprep.subr.bf16.mxu0 0
        %4803 = vmatpush1.bf16.msra.mxu0 0
        %4804 = vmatprep.subr.bf16.mxu0 0
        %4805 = vmatpush1.bf16.msra.mxu0 0
        %4806 = vmatprep.subr.bf16.mxu0 %v2518
        %4807 = vmatpush1.bf16.msra.mxu0 %v2517
        %4808 = vmatprep.subr.bf16.mxu0 %v2318
        %4809 = vmatpush1.bf16.msra.mxu0 %v2317
        %4810 = vmatprep.subr.bf16.mxu0 0
        %4811 = vmatpush2.bf16.msra.mxu0 0
        %4812 = vmatprep.subr.bf16.mxu0 0
        %4813 = vmatpush2.bf16.msra.mxu0 0
        %4814 = vmatprep.subr.bf16.mxu0 0
        %4815 = vmatpush2.bf16.msra.mxu0 0
        %4816 = vmatprep.subr.bf16.mxu0 0
        %4817 = vmatpush2.bf16.msra.mxu0 0
        %4818 = vmatprep.subr.bf16.mxu0 0
        %4819 = vmatpush2.bf16.msra.mxu0 0
        %4820 = vmatprep.subr.bf16.mxu0 0
        %4821 = vmatpush2.bf16.msra.mxu0 0
        %4822 = vmatprep.subr.bf16.mxu0 0
        %4823 = vmatpush2.bf16.msra.mxu0 0
        %4824 = vmatprep.subr.bf16.mxu0 0
        %4825 = vmatpush2.bf16.msra.mxu0 0
        %4826 = vmatprep.mubr.bf16.mxu0 0
        %4827 = vmatmul.mubr.bf16.gmra.mxu0 %v4136
        %v4828 = vpop.f32.mrf.mxu0
        %v4829 = vadd.f32 %v3266, %v4828
        %v4830 = vpop.f32.mrf.mxu0
        %v4831 = vadd.f32 %v3270, %v4830
        %v4832 = vpop.f32.mrf.mxu0
        %v4833 = vpop.f32.mrf.mxu0
        %4834 = vdwg.mxu0
        %4835 = vmatprep.subr.bf16.mxu0 0
        %4836 = vmatpush1.bf16.msra.mxu0 0
        %4837 = vmatprep.subr.bf16.mxu0 0
        %4838 = vmatpush1.bf16.msra.mxu0 0
        %4839 = vmatprep.subr.bf16.mxu0 0
        %4840 = vmatpush1.bf16.msra.mxu0 0
        %4841 = vmatprep.subr.bf16.mxu0 0
        %4842 = vmatpush1.bf16.msra.mxu0 0
        %4843 = vmatprep.subr.bf16.mxu0 0
        %4844 = vmatpush1.bf16.msra.mxu0 0
        %4845 = vmatprep.subr.bf16.mxu0 0
        %4846 = vmatpush1.bf16.msra.mxu0 0
        %4847 = vmatprep.subr.bf16.mxu0 %v2520
        %4848 = vmatpush1.bf16.msra.mxu0 %v2519
        %4849 = vmatprep.subr.bf16.mxu0 %v2320
        %4850 = vmatpush1.bf16.msra.mxu0 %v2319
        %4851 = vmatprep.subr.bf16.mxu0 0
        %4852 = vmatpush2.bf16.msra.mxu0 0
        %4853 = vmatprep.subr.bf16.mxu0 0
        %4854 = vmatpush2.bf16.msra.mxu0 0
        %4855 = vmatprep.subr.bf16.mxu0 0
        %4856 = vmatpush2.bf16.msra.mxu0 0
        %4857 = vmatprep.subr.bf16.mxu0 0
        %4858 = vmatpush2.bf16.msra.mxu0 0
        %4859 = vmatprep.subr.bf16.mxu0 0
        %4860 = vmatpush2.bf16.msra.mxu0 0
        %4861 = vmatprep.subr.bf16.mxu0 0
        %4862 = vmatpush2.bf16.msra.mxu0 0
        %4863 = vmatprep.subr.bf16.mxu0 0
        %4864 = vmatpush2.bf16.msra.mxu0 0
        %4865 = vmatprep.subr.bf16.mxu0 0
        %4866 = vmatpush2.bf16.msra.mxu0 0
        %4867 = vmatprep.mubr.bf16.mxu0 0
        %4868 = vmatmul.mubr.bf16.gmra.mxu0 %v4136
        %v4869 = vpop.f32.mrf.mxu0
        %v4870 = vadd.f32 %v3274, %v4869
        %v4871 = vpop.f32.mrf.mxu0
        %v4872 = vadd.f32 %v3278, %v4871
        %v4873 = vpop.f32.mrf.mxu0
        %v4874 = vpop.f32.mrf.mxu0
        %4875 = vdwg.mxu0
        %4876 = vmatprep.subr.bf16.mxu0 0
        %4877 = vmatpush1.bf16.msra.mxu0 0
        %4878 = vmatprep.subr.bf16.mxu0 0
        %4879 = vmatpush1.bf16.msra.mxu0 0
        %4880 = vmatprep.subr.bf16.mxu0 0
        %4881 = vmatpush1.bf16.msra.mxu0 0
        %4882 = vmatprep.subr.bf16.mxu0 0
        %4883 = vmatpush1.bf16.msra.mxu0 0
        %4884 = vmatprep.subr.bf16.mxu0 0
        %4885 = vmatpush1.bf16.msra.mxu0 0
        %4886 = vmatprep.subr.bf16.mxu0 0
        %4887 = vmatpush1.bf16.msra.mxu0 0
        %4888 = vmatprep.subr.bf16.mxu0 %v2522
        %4889 = vmatpush1.bf16.msra.mxu0 %v2521
        %4890 = vmatprep.subr.bf16.mxu0 %v2322
        %4891 = vmatpush1.bf16.msra.mxu0 %v2321
        %4892 = vmatprep.subr.bf16.mxu0 0
        %4893 = vmatpush2.bf16.msra.mxu0 0
        %4894 = vmatprep.subr.bf16.mxu0 0
        %4895 = vmatpush2.bf16.msra.mxu0 0
        %4896 = vmatprep.subr.bf16.mxu0 0
        %4897 = vmatpush2.bf16.msra.mxu0 0
        %4898 = vmatprep.subr.bf16.mxu0 0
        %4899 = vmatpush2.bf16.msra.mxu0 0
        %4900 = vmatprep.subr.bf16.mxu0 0
        %4901 = vmatpush2.bf16.msra.mxu0 0
        %4902 = vmatprep.subr.bf16.mxu0 0
        %4903 = vmatpush2.bf16.msra.mxu0 0
        %4904 = vmatprep.subr.bf16.mxu0 0
        %4905 = vmatpush2.bf16.msra.mxu0 0
        %4906 = vmatprep.subr.bf16.mxu0 0
        %4907 = vmatpush2.bf16.msra.mxu0 0
        %4908 = vmatprep.mubr.bf16.mxu0 0
        %4909 = vmatmul.mubr.bf16.gmra.mxu0 %v4136
        %v4910 = vpop.f32.mrf.mxu0
        %v4911 = vadd.f32 %v3282, %v4910
        %v4912 = vpop.f32.mrf.mxu0
        %v4913 = vadd.f32 %v3286, %v4912
        %v4914 = vpop.f32.mrf.mxu0
        %v4915 = vpop.f32.mrf.mxu0
        %4916 = vdwg.mxu0
        %4917 = vmatprep.subr.bf16.mxu0 0
        %4918 = vmatpush1.bf16.msra.mxu0 0
        %4919 = vmatprep.subr.bf16.mxu0 0
        %4920 = vmatpush1.bf16.msra.mxu0 0
        %4921 = vmatprep.subr.bf16.mxu0 0
        %4922 = vmatpush1.bf16.msra.mxu0 0
        %4923 = vmatprep.subr.bf16.mxu0 0
        %4924 = vmatpush1.bf16.msra.mxu0 0
        %4925 = vmatprep.subr.bf16.mxu0 0
        %4926 = vmatpush1.bf16.msra.mxu0 0
        %4927 = vmatprep.subr.bf16.mxu0 0
        %4928 = vmatpush1.bf16.msra.mxu0 0
        %4929 = vmatprep.subr.bf16.mxu0 %v2524
        %4930 = vmatpush1.bf16.msra.mxu0 %v2523
        %4931 = vmatprep.subr.bf16.mxu0 %v2324
        %4932 = vmatpush1.bf16.msra.mxu0 %v2323
        %4933 = vmatprep.subr.bf16.mxu0 0
        %4934 = vmatpush2.bf16.msra.mxu0 0
        %4935 = vmatprep.subr.bf16.mxu0 0
        %4936 = vmatpush2.bf16.msra.mxu0 0
        %4937 = vmatprep.subr.bf16.mxu0 0
        %4938 = vmatpush2.bf16.msra.mxu0 0
        %4939 = vmatprep.subr.bf16.mxu0 0
        %4940 = vmatpush2.bf16.msra.mxu0 0
        %4941 = vmatprep.subr.bf16.mxu0 0
        %4942 = vmatpush2.bf16.msra.mxu0 0
        %4943 = vmatprep.subr.bf16.mxu0 0
        %4944 = vmatpush2.bf16.msra.mxu0 0
        %4945 = vmatprep.subr.bf16.mxu0 0
        %4946 = vmatpush2.bf16.msra.mxu0 0
        %4947 = vmatprep.subr.bf16.mxu0 0
        %4948 = vmatpush2.bf16.msra.mxu0 0
        %4949 = vmatprep.mubr.bf16.mxu0 0
        %4950 = vmatmul.mubr.bf16.gmra.mxu0 %v4136
        %v4951 = vpop.f32.mrf.mxu0
        %v4952 = vadd.f32 %v3290, %v4951
        %v4953 = vpop.f32.mrf.mxu0
        %v4954 = vadd.f32 %v3294, %v4953
        %v4955 = vpop.f32.mrf.mxu0
        %v4956 = vpop.f32.mrf.mxu0
        %4957 = vdwg.mxu0
        %4958 = vmatprep.subr.bf16.mxu0 0
        %4959 = vmatpush1.bf16.msra.mxu0 0
        %4960 = vmatprep.subr.bf16.mxu0 0
        %4961 = vmatpush1.bf16.msra.mxu0 0
        %4962 = vmatprep.subr.bf16.mxu0 0
        %4963 = vmatpush1.bf16.msra.mxu0 0
        %4964 = vmatprep.subr.bf16.mxu0 0
        %4965 = vmatpush1.bf16.msra.mxu0 0
        %4966 = vmatprep.subr.bf16.mxu0 0
        %4967 = vmatpush1.bf16.msra.mxu0 0
        %4968 = vmatprep.subr.bf16.mxu0 0
        %4969 = vmatpush1.bf16.msra.mxu0 0
        %4970 = vmatprep.subr.bf16.mxu0 %v2526
        %4971 = vmatpush1.bf16.msra.mxu0 %v2525
        %4972 = vmatprep.subr.bf16.mxu0 %v2326
        %4973 = vmatpush1.bf16.msra.mxu0 %v2325
        %4974 = vmatprep.subr.bf16.mxu0 0
        %4975 = vmatpush2.bf16.msra.mxu0 0
        %4976 = vmatprep.subr.bf16.mxu0 0
        %4977 = vmatpush2.bf16.msra.mxu0 0
        %4978 = vmatprep.subr.bf16.mxu0 0
        %4979 = vmatpush2.bf16.msra.mxu0 0
        %4980 = vmatprep.subr.bf16.mxu0 0
        %4981 = vmatpush2.bf16.msra.mxu0 0
        %4982 = vmatprep.subr.bf16.mxu0 0
        %4983 = vmatpush2.bf16.msra.mxu0 0
        %4984 = vmatprep.subr.bf16.mxu0 0
        %4985 = vmatpush2.bf16.msra.mxu0 0
        %4986 = vmatprep.subr.bf16.mxu0 0
        %4987 = vmatpush2.bf16.msra.mxu0 0
        %4988 = vmatprep.subr.bf16.mxu0 0
        %4989 = vmatpush2.bf16.msra.mxu0 0
        %4990 = vmatprep.mubr.bf16.mxu0 0
        %4991 = vmatmul.mubr.bf16.gmra.mxu0 %v4136
        %v4992 = vpop.f32.mrf.mxu0
        %v4993 = vadd.f32 %v3298, %v4992
        %v4994 = vpop.f32.mrf.mxu0
        %v4995 = vadd.f32 %v3302, %v4994
        %v4996 = vpop.f32.mrf.mxu0
        %v4997 = vpop.f32.mrf.mxu0
        %4998 = vdwg.mxu0
        %4999 = vmatprep.subr.bf16.mxu0 0
        %5000 = vmatpush1.bf16.msra.mxu0 0
        %5001 = vmatprep.subr.bf16.mxu0 0
        %5002 = vmatpush1.bf16.msra.mxu0 0
        %5003 = vmatprep.subr.bf16.mxu0 0
        %5004 = vmatpush1.bf16.msra.mxu0 0
        %5005 = vmatprep.subr.bf16.mxu0 0
        %5006 = vmatpush1.bf16.msra.mxu0 0
        %5007 = vmatprep.subr.bf16.mxu0 0
        %5008 = vmatpush1.bf16.msra.mxu0 0
        %5009 = vmatprep.subr.bf16.mxu0 0
        %5010 = vmatpush1.bf16.msra.mxu0 0
        %5011 = vmatprep.subr.bf16.mxu0 %v2528
        %5012 = vmatpush1.bf16.msra.mxu0 %v2527
        %5013 = vmatprep.subr.bf16.mxu0 %v2328
        %5014 = vmatpush1.bf16.msra.mxu0 %v2327
        %5015 = vmatprep.subr.bf16.mxu0 0
        %5016 = vmatpush2.bf16.msra.mxu0 0
        %5017 = vmatprep.subr.bf16.mxu0 0
        %5018 = vmatpush2.bf16.msra.mxu0 0
        %5019 = vmatprep.subr.bf16.mxu0 0
        %5020 = vmatpush2.bf16.msra.mxu0 0
        %5021 = vmatprep.subr.bf16.mxu0 0
        %5022 = vmatpush2.bf16.msra.mxu0 0
        %5023 = vmatprep.subr.bf16.mxu0 0
        %5024 = vmatpush2.bf16.msra.mxu0 0
        %5025 = vmatprep.subr.bf16.mxu0 0
        %5026 = vmatpush2.bf16.msra.mxu0 0
        %5027 = vmatprep.subr.bf16.mxu0 0
        %5028 = vmatpush2.bf16.msra.mxu0 0
        %5029 = vmatprep.subr.bf16.mxu0 0
        %5030 = vmatpush2.bf16.msra.mxu0 0
        %5031 = vmatprep.mubr.bf16.mxu0 0
        %5032 = vmatmul.mubr.bf16.gmra.mxu0 %v4136
        %v5033 = vpop.f32.mrf.mxu0
        %v5034 = vadd.f32 %v3306, %v5033
        %v5035 = vpop.f32.mrf.mxu0
        %v5036 = vadd.f32 %v3310, %v5035
        %v5037 = vpop.f32.mrf.mxu0
        %v5038 = vpop.f32.mrf.mxu0
        %5039 = vdwg.mxu0
        %5040 = vmatprep.subr.bf16.mxu0 0
        %5041 = vmatpush1.bf16.msra.mxu0 0
        %5042 = vmatprep.subr.bf16.mxu0 0
        %5043 = vmatpush1.bf16.msra.mxu0 0
        %5044 = vmatprep.subr.bf16.mxu0 0
        %5045 = vmatpush1.bf16.msra.mxu0 0
        %5046 = vmatprep.subr.bf16.mxu0 0
        %5047 = vmatpush1.bf16.msra.mxu0 0
        %5048 = vmatprep.subr.bf16.mxu0 0
        %5049 = vmatpush1.bf16.msra.mxu0 0
        %5050 = vmatprep.subr.bf16.mxu0 0
        %5051 = vmatpush1.bf16.msra.mxu0 0
        %5052 = vmatprep.subr.bf16.mxu0 %v2530
        %5053 = vmatpush1.bf16.msra.mxu0 %v2529
        %5054 = vmatprep.subr.bf16.mxu0 %v2330
        %5055 = vmatpush1.bf16.msra.mxu0 %v2329
        %5056 = vmatprep.subr.bf16.mxu0 0
        %5057 = vmatpush2.bf16.msra.mxu0 0
        %5058 = vmatprep.subr.bf16.mxu0 0
        %5059 = vmatpush2.bf16.msra.mxu0 0
        %5060 = vmatprep.subr.bf16.mxu0 0
        %5061 = vmatpush2.bf16.msra.mxu0 0
        %5062 = vmatprep.subr.bf16.mxu0 0
        %5063 = vmatpush2.bf16.msra.mxu0 0
        %5064 = vmatprep.subr.bf16.mxu0 0
        %5065 = vmatpush2.bf16.msra.mxu0 0
        %5066 = vmatprep.subr.bf16.mxu0 0
        %5067 = vmatpush2.bf16.msra.mxu0 0
        %5068 = vmatprep.subr.bf16.mxu0 0
        %5069 = vmatpush2.bf16.msra.mxu0 0
        %5070 = vmatprep.subr.bf16.mxu0 0
        %5071 = vmatpush2.bf16.msra.mxu0 0
        %5072 = vmatprep.mubr.bf16.mxu0 0
        %5073 = vmatmul.mubr.bf16.gmra.mxu0 %v4136
        %v5074 = vpop.f32.mrf.mxu0
        %v5075 = vadd.f32 %v3314, %v5074
        %v5076 = vpop.f32.mrf.mxu0
        %v5077 = vadd.f32 %v3318, %v5076
        %v5078 = vpop.f32.mrf.mxu0
        %v5079 = vpop.f32.mrf.mxu0
        %5080 = vdwg.mxu0
        %5081 = vmatprep.subr.bf16.mxu0 0
        %5082 = vmatpush1.bf16.msra.mxu0 0
        %5083 = vmatprep.subr.bf16.mxu0 0
        %5084 = vmatpush1.bf16.msra.mxu0 0
        %5085 = vmatprep.subr.bf16.mxu0 0
        %5086 = vmatpush1.bf16.msra.mxu0 0
        %5087 = vmatprep.subr.bf16.mxu0 0
        %5088 = vmatpush1.bf16.msra.mxu0 0
        %5089 = vmatprep.subr.bf16.mxu0 0
        %5090 = vmatpush1.bf16.msra.mxu0 0
        %5091 = vmatprep.subr.bf16.mxu0 0
        %5092 = vmatpush1.bf16.msra.mxu0 0
        %5093 = vmatprep.subr.bf16.mxu0 %v2532
        %5094 = vmatpush1.bf16.msra.mxu0 %v2531
        %5095 = vmatprep.subr.bf16.mxu0 %v2332
        %5096 = vmatpush1.bf16.msra.mxu0 %v2331
        %5097 = vmatprep.subr.bf16.mxu0 0
        %5098 = vmatpush2.bf16.msra.mxu0 0
        %5099 = vmatprep.subr.bf16.mxu0 0
        %5100 = vmatpush2.bf16.msra.mxu0 0
        %5101 = vmatprep.subr.bf16.mxu0 0
        %5102 = vmatpush2.bf16.msra.mxu0 0
        %5103 = vmatprep.subr.bf16.mxu0 0
        %5104 = vmatpush2.bf16.msra.mxu0 0
        %5105 = vmatprep.subr.bf16.mxu0 0
        %5106 = vmatpush2.bf16.msra.mxu0 0
        %5107 = vmatprep.subr.bf16.mxu0 0
        %5108 = vmatpush2.bf16.msra.mxu0 0
        %5109 = vmatprep.subr.bf16.mxu0 0
        %5110 = vmatpush2.bf16.msra.mxu0 0
        %5111 = vmatprep.subr.bf16.mxu0 0
        %5112 = vmatpush2.bf16.msra.mxu0 0
        %5113 = vmatprep.mubr.bf16.mxu0 0
        %5114 = vmatmul.mubr.bf16.gmra.mxu0 %v4136
        %v5115 = vpop.f32.mrf.mxu0
        %v5116 = vadd.f32 %v3322, %v5115
        %v5117 = vpop.f32.mrf.mxu0
        %v5118 = vadd.f32 %v3326, %v5117
        %v5119 = vpop.f32.mrf.mxu0
        %v5120 = vpop.f32.mrf.mxu0
        %5121 = vdwg.mxu0
        %5122 = vmatprep.subr.bf16.mxu0 0
        %5123 = vmatpush1.bf16.msra.mxu0 0
        %5124 = vmatprep.subr.bf16.mxu0 0
        %5125 = vmatpush1.bf16.msra.mxu0 0
        %5126 = vmatprep.subr.bf16.mxu0 0
        %5127 = vmatpush1.bf16.msra.mxu0 0
        %5128 = vmatprep.subr.bf16.mxu0 0
        %5129 = vmatpush1.bf16.msra.mxu0 0
        %5130 = vmatprep.subr.bf16.mxu0 0
        %5131 = vmatpush1.bf16.msra.mxu0 0
        %5132 = vmatprep.subr.bf16.mxu0 0
        %5133 = vmatpush1.bf16.msra.mxu0 0
        %5134 = vmatprep.subr.bf16.mxu0 %v2534
        %5135 = vmatpush1.bf16.msra.mxu0 %v2533
        %5136 = vmatprep.subr.bf16.mxu0 %v2334
        %5137 = vmatpush1.bf16.msra.mxu0 %v2333
        %5138 = vmatprep.subr.bf16.mxu0 0
        %5139 = vmatpush2.bf16.msra.mxu0 0
        %5140 = vmatprep.subr.bf16.mxu0 0
        %5141 = vmatpush2.bf16.msra.mxu0 0
        %5142 = vmatprep.subr.bf16.mxu0 0
        %5143 = vmatpush2.bf16.msra.mxu0 0
        %5144 = vmatprep.subr.bf16.mxu0 0
        %5145 = vmatpush2.bf16.msra.mxu0 0
        %5146 = vmatprep.subr.bf16.mxu0 0
        %5147 = vmatpush2.bf16.msra.mxu0 0
        %5148 = vmatprep.subr.bf16.mxu0 0
        %5149 = vmatpush2.bf16.msra.mxu0 0
        %5150 = vmatprep.subr.bf16.mxu0 0
        %5151 = vmatpush2.bf16.msra.mxu0 0
        %5152 = vmatprep.subr.bf16.mxu0 0
        %5153 = vmatpush2.bf16.msra.mxu0 0
        %5154 = vmatprep.mubr.bf16.mxu0 0
        %5155 = vmatmul.mubr.bf16.gmra.mxu0 %v4136
        %v5156 = vpop.f32.mrf.mxu0
        %v5157 = vadd.f32 %v3330, %v5156
        %v5158 = vpop.f32.mrf.mxu0
        %v5159 = vadd.f32 %v3334, %v5158
        %v5160 = vpop.f32.mrf.mxu0
        %v5161 = vpop.f32.mrf.mxu0
        %5162 = vdwg.mxu0
        %5163 = vmatprep.subr.bf16.mxu0 0
        %5164 = vmatpush1.bf16.msra.mxu0 0
        %5165 = vmatprep.subr.bf16.mxu0 0
        %5166 = vmatpush1.bf16.msra.mxu0 0
        %5167 = vmatprep.subr.bf16.mxu0 0
        %5168 = vmatpush1.bf16.msra.mxu0 0
        %5169 = vmatprep.subr.bf16.mxu0 0
        %5170 = vmatpush1.bf16.msra.mxu0 0
        %5171 = vmatprep.subr.bf16.mxu0 0
        %5172 = vmatpush1.bf16.msra.mxu0 0
        %5173 = vmatprep.subr.bf16.mxu0 0
        %5174 = vmatpush1.bf16.msra.mxu0 0
        %5175 = vmatprep.subr.bf16.mxu0 %v2536
        %5176 = vmatpush1.bf16.msra.mxu0 %v2535
        %5177 = vmatprep.subr.bf16.mxu0 %v2336
        %5178 = vmatpush1.bf16.msra.mxu0 %v2335
        %5179 = vmatprep.subr.bf16.mxu0 0
        %5180 = vmatpush2.bf16.msra.mxu0 0
        %5181 = vmatprep.subr.bf16.mxu0 0
        %5182 = vmatpush2.bf16.msra.mxu0 0
        %5183 = vmatprep.subr.bf16.mxu0 0
        %5184 = vmatpush2.bf16.msra.mxu0 0
        %5185 = vmatprep.subr.bf16.mxu0 0
        %5186 = vmatpush2.bf16.msra.mxu0 0
        %5187 = vmatprep.subr.bf16.mxu0 0
        %5188 = vmatpush2.bf16.msra.mxu0 0
        %5189 = vmatprep.subr.bf16.mxu0 0
        %5190 = vmatpush2.bf16.msra.mxu0 0
        %5191 = vmatprep.subr.bf16.mxu0 0
        %5192 = vmatpush2.bf16.msra.mxu0 0
        %5193 = vmatprep.subr.bf16.mxu0 0
        %5194 = vmatpush2.bf16.msra.mxu0 0
        %5195 = vmatprep.mubr.bf16.mxu0 0
        %5196 = vmatmul.mubr.bf16.gmra.mxu0 %v4136
        %v5197 = vpop.f32.mrf.mxu0
        %v5198 = vadd.f32 %v3338, %v5197
        %v5199 = vpop.f32.mrf.mxu0
        %v5200 = vadd.f32 %v3342, %v5199
        %v5201 = vpop.f32.mrf.mxu0
        %v5202 = vpop.f32.mrf.mxu0
        %5203 = vdwg.mxu0
        %5204 = vmatprep.subr.bf16.mxu0 0
        %5205 = vmatpush1.bf16.msra.mxu0 0
        %5206 = vmatprep.subr.bf16.mxu0 0
        %5207 = vmatpush1.bf16.msra.mxu0 0
        %5208 = vmatprep.subr.bf16.mxu0 0
        %5209 = vmatpush1.bf16.msra.mxu0 0
        %5210 = vmatprep.subr.bf16.mxu0 0
        %5211 = vmatpush1.bf16.msra.mxu0 0
        %5212 = vmatprep.subr.bf16.mxu0 0
        %5213 = vmatpush1.bf16.msra.mxu0 0
        %5214 = vmatprep.subr.bf16.mxu0 0
        %5215 = vmatpush1.bf16.msra.mxu0 0
        %5216 = vmatprep.subr.bf16.mxu0 %v2538
        %5217 = vmatpush1.bf16.msra.mxu0 %v2537
        %5218 = vmatprep.subr.bf16.mxu0 %v2338
        %5219 = vmatpush1.bf16.msra.mxu0 %v2337
        %5220 = vmatprep.subr.bf16.mxu0 0
        %5221 = vmatpush2.bf16.msra.mxu0 0
        %5222 = vmatprep.subr.bf16.mxu0 0
        %5223 = vmatpush2.bf16.msra.mxu0 0
        %5224 = vmatprep.subr.bf16.mxu0 0
        %5225 = vmatpush2.bf16.msra.mxu0 0
        %5226 = vmatprep.subr.bf16.mxu0 0
        %5227 = vmatpush2.bf16.msra.mxu0 0
        %5228 = vmatprep.subr.bf16.mxu0 0
        %5229 = vmatpush2.bf16.msra.mxu0 0
        %5230 = vmatprep.subr.bf16.mxu0 0
        %5231 = vmatpush2.bf16.msra.mxu0 0
        %5232 = vmatprep.subr.bf16.mxu0 0
        %5233 = vmatpush2.bf16.msra.mxu0 0
        %5234 = vmatprep.subr.bf16.mxu0 0
        %5235 = vmatpush2.bf16.msra.mxu0 0
        %5236 = vmatprep.mubr.bf16.mxu0 0
        %5237 = vmatmul.mubr.bf16.gmra.mxu0 %v4136
        %v5238 = vpop.f32.mrf.mxu0
        %v5239 = vadd.f32 %v3346, %v5238
        %v5240 = vpop.f32.mrf.mxu0
        %v5241 = vadd.f32 %v3350, %v5240
        %v5242 = vpop.f32.mrf.mxu0
        %v5243 = vpop.f32.mrf.mxu0
        %5244 = vdwg.mxu0
        %5245 = vmatprep.subr.bf16.mxu0 0
        %5246 = vmatpush1.bf16.msra.mxu0 0
        %5247 = vmatprep.subr.bf16.mxu0 0
        %5248 = vmatpush1.bf16.msra.mxu0 0
        %5249 = vmatprep.subr.bf16.mxu0 0
        %5250 = vmatpush1.bf16.msra.mxu0 0
        %5251 = vmatprep.subr.bf16.mxu0 0
        %5252 = vmatpush1.bf16.msra.mxu0 0
        %5253 = vmatprep.subr.bf16.mxu0 0
        %5254 = vmatpush1.bf16.msra.mxu0 0
        %5255 = vmatprep.subr.bf16.mxu0 0
        %5256 = vmatpush1.bf16.msra.mxu0 0
        %5257 = vmatprep.subr.bf16.mxu0 %v2540
        %5258 = vmatpush1.bf16.msra.mxu0 %v2539
        %5259 = vmatprep.subr.bf16.mxu0 %v2340
        %5260 = vmatpush1.bf16.msra.mxu0 %v2339
        %5261 = vmatprep.subr.bf16.mxu0 0
        %5262 = vmatpush2.bf16.msra.mxu0 0
        %5263 = vmatprep.subr.bf16.mxu0 0
        %5264 = vmatpush2.bf16.msra.mxu0 0
        %5265 = vmatprep.subr.bf16.mxu0 0
        %5266 = vmatpush2.bf16.msra.mxu0 0
        %5267 = vmatprep.subr.bf16.mxu0 0
        %5268 = vmatpush2.bf16.msra.mxu0 0
        %5269 = vmatprep.subr.bf16.mxu0 0
        %5270 = vmatpush2.bf16.msra.mxu0 0
        %5271 = vmatprep.subr.bf16.mxu0 0
        %5272 = vmatpush2.bf16.msra.mxu0 0
        %5273 = vmatprep.subr.bf16.mxu0 0
        %5274 = vmatpush2.bf16.msra.mxu0 0
        %5275 = vmatprep.subr.bf16.mxu0 0
        %5276 = vmatpush2.bf16.msra.mxu0 0
        %5277 = vmatprep.mubr.bf16.mxu0 0
        %5278 = vmatmul.mubr.bf16.gmra.mxu0 %v4136
        %v5279 = vpop.f32.mrf.mxu0
        %v5280 = vadd.f32 %v3354, %v5279
        %v5281 = vpop.f32.mrf.mxu0
        %v5282 = vadd.f32 %v3358, %v5281
        %v5283 = vpop.f32.mrf.mxu0
        %v5284 = vpop.f32.mrf.mxu0
        %5285 = vdwg.mxu0
        %5286 = vmatprep.subr.bf16.mxu0 0
        %5287 = vmatpush1.bf16.msra.mxu0 0
        %5288 = vmatprep.subr.bf16.mxu0 0
        %5289 = vmatpush1.bf16.msra.mxu0 0
        %5290 = vmatprep.subr.bf16.mxu0 0
        %5291 = vmatpush1.bf16.msra.mxu0 0
        %5292 = vmatprep.subr.bf16.mxu0 0
        %5293 = vmatpush1.bf16.msra.mxu0 0
        %5294 = vmatprep.subr.bf16.mxu0 0
        %5295 = vmatpush1.bf16.msra.mxu0 0
        %5296 = vmatprep.subr.bf16.mxu0 0
        %5297 = vmatpush1.bf16.msra.mxu0 0
        %5298 = vmatprep.subr.bf16.mxu0 %v2542
        %5299 = vmatpush1.bf16.msra.mxu0 %v2541
        %5300 = vmatprep.subr.bf16.mxu0 %v2342
        %5301 = vmatpush1.bf16.msra.mxu0 %v2341
        %5302 = vmatprep.subr.bf16.mxu0 0
        %5303 = vmatpush2.bf16.msra.mxu0 0
        %5304 = vmatprep.subr.bf16.mxu0 0
        %5305 = vmatpush2.bf16.msra.mxu0 0
        %5306 = vmatprep.subr.bf16.mxu0 0
        %5307 = vmatpush2.bf16.msra.mxu0 0
        %5308 = vmatprep.subr.bf16.mxu0 0
        %5309 = vmatpush2.bf16.msra.mxu0 0
        %5310 = vmatprep.subr.bf16.mxu0 0
        %5311 = vmatpush2.bf16.msra.mxu0 0
        %5312 = vmatprep.subr.bf16.mxu0 0
        %5313 = vmatpush2.bf16.msra.mxu0 0
        %5314 = vmatprep.subr.bf16.mxu0 0
        %5315 = vmatpush2.bf16.msra.mxu0 0
        %5316 = vmatprep.subr.bf16.mxu0 0
        %5317 = vmatpush2.bf16.msra.mxu0 0
        %5318 = vmatprep.mubr.bf16.mxu0 0
        %5319 = vmatmul.mubr.bf16.gmra.mxu0 %v4136
        %v5320 = vpop.f32.mrf.mxu0
        %v5321 = vadd.f32 %v3362, %v5320
        %v5322 = vpop.f32.mrf.mxu0
        %v5323 = vadd.f32 %v3366, %v5322
        %v5324 = vpop.f32.mrf.mxu0
        %v5325 = vpop.f32.mrf.mxu0
        %5326 = vdwg.mxu0
        %5327 = vmatprep.subr.bf16.mxu0 0
        %5328 = vmatpush1.bf16.msra.mxu0 0
        %5329 = vmatprep.subr.bf16.mxu0 0
        %5330 = vmatpush1.bf16.msra.mxu0 0
        %5331 = vmatprep.subr.bf16.mxu0 0
        %5332 = vmatpush1.bf16.msra.mxu0 0
        %5333 = vmatprep.subr.bf16.mxu0 0
        %5334 = vmatpush1.bf16.msra.mxu0 0
        %5335 = vmatprep.subr.bf16.mxu0 0
        %5336 = vmatpush1.bf16.msra.mxu0 0
        %5337 = vmatprep.subr.bf16.mxu0 0
        %5338 = vmatpush1.bf16.msra.mxu0 0
        %5339 = vmatprep.subr.bf16.mxu0 %v2544
        %5340 = vmatpush1.bf16.msra.mxu0 %v2543
        %5341 = vmatprep.subr.bf16.mxu0 %v2344
        %5342 = vmatpush1.bf16.msra.mxu0 %v2343
        %5343 = vmatprep.subr.bf16.mxu0 0
        %5344 = vmatpush2.bf16.msra.mxu0 0
        %5345 = vmatprep.subr.bf16.mxu0 0
        %5346 = vmatpush2.bf16.msra.mxu0 0
        %5347 = vmatprep.subr.bf16.mxu0 0
        %5348 = vmatpush2.bf16.msra.mxu0 0
        %5349 = vmatprep.subr.bf16.mxu0 0
        %5350 = vmatpush2.bf16.msra.mxu0 0
        %5351 = vmatprep.subr.bf16.mxu0 0
        %5352 = vmatpush2.bf16.msra.mxu0 0
        %5353 = vmatprep.subr.bf16.mxu0 0
        %5354 = vmatpush2.bf16.msra.mxu0 0
        %5355 = vmatprep.subr.bf16.mxu0 0
        %5356 = vmatpush2.bf16.msra.mxu0 0
        %5357 = vmatprep.subr.bf16.mxu0 0
        %5358 = vmatpush2.bf16.msra.mxu0 0
        %5359 = vmatprep.mubr.bf16.mxu0 0
        %5360 = vmatmul.mubr.bf16.gmra.mxu0 %v4136
        %v5361 = vpop.f32.mrf.mxu0
        %v5362 = vadd.f32 %v3370, %v5361
        %v5363 = vpop.f32.mrf.mxu0
        %v5364 = vadd.f32 %v3374, %v5363
        %v5365 = vpop.f32.mrf.mxu0
        %v5366 = vpop.f32.mrf.mxu0
        %5367 = vdwg.mxu0
        %5368 = vmatprep.subr.bf16.mxu0 0
        %5369 = vmatpush1.bf16.msra.mxu0 0
        %5370 = vmatprep.subr.bf16.mxu0 0
        %5371 = vmatpush1.bf16.msra.mxu0 0
        %5372 = vmatprep.subr.bf16.mxu0 0
        %5373 = vmatpush1.bf16.msra.mxu0 0
        %5374 = vmatprep.subr.bf16.mxu0 0
        %5375 = vmatpush1.bf16.msra.mxu0 0
        %5376 = vmatprep.subr.bf16.mxu0 0
        %5377 = vmatpush1.bf16.msra.mxu0 0
        %5378 = vmatprep.subr.bf16.mxu0 0
        %5379 = vmatpush1.bf16.msra.mxu0 0
        %5380 = vmatprep.subr.bf16.mxu0 %v2546
        %5381 = vmatpush1.bf16.msra.mxu0 %v2545
        %5382 = vmatprep.subr.bf16.mxu0 %v2346
        %5383 = vmatpush1.bf16.msra.mxu0 %v2345
        %5384 = vmatprep.subr.bf16.mxu0 0
        %5385 = vmatpush2.bf16.msra.mxu0 0
        %5386 = vmatprep.subr.bf16.mxu0 0
        %5387 = vmatpush2.bf16.msra.mxu0 0
        %5388 = vmatprep.subr.bf16.mxu0 0
        %5389 = vmatpush2.bf16.msra.mxu0 0
        %5390 = vmatprep.subr.bf16.mxu0 0
        %5391 = vmatpush2.bf16.msra.mxu0 0
        %5392 = vmatprep.subr.bf16.mxu0 0
        %5393 = vmatpush2.bf16.msra.mxu0 0
        %5394 = vmatprep.subr.bf16.mxu0 0
        %5395 = vmatpush2.bf16.msra.mxu0 0
        %5396 = vmatprep.subr.bf16.mxu0 0
        %5397 = vmatpush2.bf16.msra.mxu0 0
        %5398 = vmatprep.subr.bf16.mxu0 0
        %5399 = vmatpush2.bf16.msra.mxu0 0
        %5400 = vmatprep.mubr.bf16.mxu0 0
        %5401 = vmatmul.mubr.bf16.gmra.mxu0 %v4136
        %v5402 = vpop.f32.mrf.mxu0
        %v5403 = vadd.f32 %v3378, %v5402
        %v5404 = vpop.f32.mrf.mxu0
        %v5405 = vadd.f32 %v3382, %v5404
        %v5406 = vpop.f32.mrf.mxu0
        %v5407 = vpop.f32.mrf.mxu0
        %5408 = vdwg.mxu0
        %5409 = vmatprep.subr.bf16.mxu0 0
        %5410 = vmatpush1.bf16.msra.mxu0 0
        %5411 = vmatprep.subr.bf16.mxu0 0
        %5412 = vmatpush1.bf16.msra.mxu0 0
        %5413 = vmatprep.subr.bf16.mxu0 0
        %5414 = vmatpush1.bf16.msra.mxu0 0
        %5415 = vmatprep.subr.bf16.mxu0 0
        %5416 = vmatpush1.bf16.msra.mxu0 0
        %5417 = vmatprep.subr.bf16.mxu0 0
        %5418 = vmatpush1.bf16.msra.mxu0 0
        %5419 = vmatprep.subr.bf16.mxu0 0
        %5420 = vmatpush1.bf16.msra.mxu0 0
        %5421 = vmatprep.subr.bf16.mxu0 %v2548
        %5422 = vmatpush1.bf16.msra.mxu0 %v2547
        %5423 = vmatprep.subr.bf16.mxu0 %v2348
        %5424 = vmatpush1.bf16.msra.mxu0 %v2347
        %5425 = vmatprep.subr.bf16.mxu0 0
        %5426 = vmatpush2.bf16.msra.mxu0 0
        %5427 = vmatprep.subr.bf16.mxu0 0
        %5428 = vmatpush2.bf16.msra.mxu0 0
        %5429 = vmatprep.subr.bf16.mxu0 0
        %5430 = vmatpush2.bf16.msra.mxu0 0
        %5431 = vmatprep.subr.bf16.mxu0 0
        %5432 = vmatpush2.bf16.msra.mxu0 0
        %5433 = vmatprep.subr.bf16.mxu0 0
        %5434 = vmatpush2.bf16.msra.mxu0 0
        %5435 = vmatprep.subr.bf16.mxu0 0
        %5436 = vmatpush2.bf16.msra.mxu0 0
        %5437 = vmatprep.subr.bf16.mxu0 0
        %5438 = vmatpush2.bf16.msra.mxu0 0
        %5439 = vmatprep.subr.bf16.mxu0 0
        %5440 = vmatpush2.bf16.msra.mxu0 0
        %5441 = vmatprep.mubr.bf16.mxu0 0
        %5442 = vmatmul.mubr.bf16.gmra.mxu0 %v4136
        %v5443 = vpop.f32.mrf.mxu0
        %v5444 = vadd.f32 %v3386, %v5443
        %v5445 = vpop.f32.mrf.mxu0
        %v5446 = vadd.f32 %v3390, %v5445
        %v5447 = vpop.f32.mrf.mxu0
        %v5448 = vpop.f32.mrf.mxu0
        %5449 = vdwg.mxu0
        %5450 = vmatprep.subr.bf16.mxu0 0
        %5451 = vmatpush1.bf16.msra.mxu0 0
        %5452 = vmatprep.subr.bf16.mxu0 0
        %5453 = vmatpush1.bf16.msra.mxu0 0
        %5454 = vmatprep.subr.bf16.mxu0 0
        %5455 = vmatpush1.bf16.msra.mxu0 0
        %5456 = vmatprep.subr.bf16.mxu0 0
        %5457 = vmatpush1.bf16.msra.mxu0 0
        %5458 = vmatprep.subr.bf16.mxu0 0
        %5459 = vmatpush1.bf16.msra.mxu0 0
        %5460 = vmatprep.subr.bf16.mxu0 0
        %5461 = vmatpush1.bf16.msra.mxu0 0
        %5462 = vmatprep.subr.bf16.mxu0 %v2550
        %5463 = vmatpush1.bf16.msra.mxu0 %v2549
        %5464 = vmatprep.subr.bf16.mxu0 %v2350
        %5465 = vmatpush1.bf16.msra.mxu0 %v2349
        %5466 = vmatprep.subr.bf16.mxu0 0
        %5467 = vmatpush2.bf16.msra.mxu0 0
        %5468 = vmatprep.subr.bf16.mxu0 0
        %5469 = vmatpush2.bf16.msra.mxu0 0
        %5470 = vmatprep.subr.bf16.mxu0 0
        %5471 = vmatpush2.bf16.msra.mxu0 0
        %5472 = vmatprep.subr.bf16.mxu0 0
        %5473 = vmatpush2.bf16.msra.mxu0 0
        %5474 = vmatprep.subr.bf16.mxu0 0
        %5475 = vmatpush2.bf16.msra.mxu0 0
        %5476 = vmatprep.subr.bf16.mxu0 0
        %5477 = vmatpush2.bf16.msra.mxu0 0
        %5478 = vmatprep.subr.bf16.mxu0 0
        %5479 = vmatpush2.bf16.msra.mxu0 0
        %5480 = vmatprep.subr.bf16.mxu0 0
        %5481 = vmatpush2.bf16.msra.mxu0 0
        %5482 = vmatprep.mubr.bf16.mxu0 0
        %5483 = vmatmul.mubr.bf16.gmra.mxu0 %v4136
        %v5484 = vpop.f32.mrf.mxu0
        %v5485 = vadd.f32 %v3394, %v5484
        %v5486 = vpop.f32.mrf.mxu0
        %v5487 = vadd.f32 %v3398, %v5486
        %v5488 = vpop.f32.mrf.mxu0
        %v5489 = vpop.f32.mrf.mxu0
        %5490 = vdwg.mxu0
        %5491 = vmatprep.subr.bf16.mxu0 0
        %5492 = vmatpush1.bf16.msra.mxu0 0
        %5493 = vmatprep.subr.bf16.mxu0 0
        %5494 = vmatpush1.bf16.msra.mxu0 0
        %5495 = vmatprep.subr.bf16.mxu0 0
        %5496 = vmatpush1.bf16.msra.mxu0 0
        %5497 = vmatprep.subr.bf16.mxu0 0
        %5498 = vmatpush1.bf16.msra.mxu0 0
        %5499 = vmatprep.subr.bf16.mxu0 0
        %5500 = vmatpush1.bf16.msra.mxu0 0
        %5501 = vmatprep.subr.bf16.mxu0 0
        %5502 = vmatpush1.bf16.msra.mxu0 0
        %5503 = vmatprep.subr.bf16.mxu0 %v2552
        %5504 = vmatpush1.bf16.msra.mxu0 %v2551
        %5505 = vmatprep.subr.bf16.mxu0 %v2352
        %5506 = vmatpush1.bf16.msra.mxu0 %v2351
        %5507 = vmatprep.subr.bf16.mxu0 0
        %5508 = vmatpush2.bf16.msra.mxu0 0
        %5509 = vmatprep.subr.bf16.mxu0 0
        %5510 = vmatpush2.bf16.msra.mxu0 0
        %5511 = vmatprep.subr.bf16.mxu0 0
        %5512 = vmatpush2.bf16.msra.mxu0 0
        %5513 = vmatprep.subr.bf16.mxu0 0
        %5514 = vmatpush2.bf16.msra.mxu0 0
        %5515 = vmatprep.subr.bf16.mxu0 0
        %5516 = vmatpush2.bf16.msra.mxu0 0
        %5517 = vmatprep.subr.bf16.mxu0 0
        %5518 = vmatpush2.bf16.msra.mxu0 0
        %5519 = vmatprep.subr.bf16.mxu0 0
        %5520 = vmatpush2.bf16.msra.mxu0 0
        %5521 = vmatprep.subr.bf16.mxu0 0
        %5522 = vmatpush2.bf16.msra.mxu0 0
        %5523 = vmatprep.mubr.bf16.mxu0 0
        %5524 = vmatmul.mubr.bf16.gmra.mxu0 %v4136
        %v5525 = vpop.f32.mrf.mxu0
        %v5526 = vadd.f32 %v3402, %v5525
        %v5527 = vpop.f32.mrf.mxu0
        %v5528 = vadd.f32 %v3406, %v5527
        %v5529 = vpop.f32.mrf.mxu0
        %v5530 = vpop.f32.mrf.mxu0
        %5531 = vdwg.mxu0
        %5532 = vmatprep.subr.bf16.mxu0 0
        %5533 = vmatpush1.bf16.msra.mxu0 0
        %5534 = vmatprep.subr.bf16.mxu0 0
        %5535 = vmatpush1.bf16.msra.mxu0 0
        %5536 = vmatprep.subr.bf16.mxu0 0
        %5537 = vmatpush1.bf16.msra.mxu0 0
        %5538 = vmatprep.subr.bf16.mxu0 0
        %5539 = vmatpush1.bf16.msra.mxu0 0
        %5540 = vmatprep.subr.bf16.mxu0 0
        %5541 = vmatpush1.bf16.msra.mxu0 0
        %5542 = vmatprep.subr.bf16.mxu0 0
        %5543 = vmatpush1.bf16.msra.mxu0 0
        %5544 = vmatprep.subr.bf16.mxu0 %v2554
        %5545 = vmatpush1.bf16.msra.mxu0 %v2553
        %5546 = vmatprep.subr.bf16.mxu0 %v2354
        %5547 = vmatpush1.bf16.msra.mxu0 %v2353
        %5548 = vmatprep.subr.bf16.mxu0 0
        %5549 = vmatpush2.bf16.msra.mxu0 0
        %5550 = vmatprep.subr.bf16.mxu0 0
        %5551 = vmatpush2.bf16.msra.mxu0 0
        %5552 = vmatprep.subr.bf16.mxu0 0
        %5553 = vmatpush2.bf16.msra.mxu0 0
        %5554 = vmatprep.subr.bf16.mxu0 0
        %5555 = vmatpush2.bf16.msra.mxu0 0
        %5556 = vmatprep.subr.bf16.mxu0 0
        %5557 = vmatpush2.bf16.msra.mxu0 0
        %5558 = vmatprep.subr.bf16.mxu0 0
        %5559 = vmatpush2.bf16.msra.mxu0 0
        %5560 = vmatprep.subr.bf16.mxu0 0
        %5561 = vmatpush2.bf16.msra.mxu0 0
        %5562 = vmatprep.subr.bf16.mxu0 0
        %5563 = vmatpush2.bf16.msra.mxu0 0
        %5564 = vmatprep.mubr.bf16.mxu0 0
        %5565 = vmatmul.mubr.bf16.gmra.mxu0 %v4136
        %v5566 = vpop.f32.mrf.mxu0
        %v5567 = vadd.f32 %v3410, %v5566
        %v5568 = vpop.f32.mrf.mxu0
        %v5569 = vadd.f32 %v3414, %v5568
        %v5570 = vpop.f32.mrf.mxu0
        %v5571 = vpop.f32.mrf.mxu0
        %5572 = vdwg.mxu0
        %5573 = vmatprep.subr.bf16.mxu0 0
        %5574 = vmatpush1.bf16.msra.mxu0 0
        %5575 = vmatprep.subr.bf16.mxu0 0
        %5576 = vmatpush1.bf16.msra.mxu0 0
        %5577 = vmatprep.subr.bf16.mxu0 0
        %5578 = vmatpush1.bf16.msra.mxu0 0
        %5579 = vmatprep.subr.bf16.mxu0 0
        %5580 = vmatpush1.bf16.msra.mxu0 0
        %5581 = vmatprep.subr.bf16.mxu0 0
        %5582 = vmatpush1.bf16.msra.mxu0 0
        %5583 = vmatprep.subr.bf16.mxu0 0
        %5584 = vmatpush1.bf16.msra.mxu0 0
        %5585 = vmatprep.subr.bf16.mxu0 %v2556
        %5586 = vmatpush1.bf16.msra.mxu0 %v2555
        %5587 = vmatprep.subr.bf16.mxu0 %v2356
        %5588 = vmatpush1.bf16.msra.mxu0 %v2355
        %5589 = vmatprep.subr.bf16.mxu0 0
        %5590 = vmatpush2.bf16.msra.mxu0 0
        %5591 = vmatprep.subr.bf16.mxu0 0
        %5592 = vmatpush2.bf16.msra.mxu0 0
        %5593 = vmatprep.subr.bf16.mxu0 0
        %5594 = vmatpush2.bf16.msra.mxu0 0
        %5595 = vmatprep.subr.bf16.mxu0 0
        %5596 = vmatpush2.bf16.msra.mxu0 0
        %5597 = vmatprep.subr.bf16.mxu0 0
        %5598 = vmatpush2.bf16.msra.mxu0 0
        %5599 = vmatprep.subr.bf16.mxu0 0
        %5600 = vmatpush2.bf16.msra.mxu0 0
        %5601 = vmatprep.subr.bf16.mxu0 0
        %5602 = vmatpush2.bf16.msra.mxu0 0
        %5603 = vmatprep.subr.bf16.mxu0 0
        %5604 = vmatpush2.bf16.msra.mxu0 0
        %5605 = vmatprep.mubr.bf16.mxu0 0
        %5606 = vmatmul.mubr.bf16.gmra.mxu0 %v4136
        %v5607 = vpop.f32.mrf.mxu0
        %v5608 = vadd.f32 %v3418, %v5607
        %v5609 = vpop.f32.mrf.mxu0
        %v5610 = vadd.f32 %v3422, %v5609
        %v5611 = vpop.f32.mrf.mxu0
        %v5612 = vpop.f32.mrf.mxu0
        %5613 = vdwg.mxu0
        %5614 = vmatprep.subr.bf16.mxu0 0
        %5615 = vmatpush1.bf16.msra.mxu0 0
        %5616 = vmatprep.subr.bf16.mxu0 0
        %5617 = vmatpush1.bf16.msra.mxu0 0
        %5618 = vmatprep.subr.bf16.mxu0 0
        %5619 = vmatpush1.bf16.msra.mxu0 0
        %5620 = vmatprep.subr.bf16.mxu0 0
        %5621 = vmatpush1.bf16.msra.mxu0 0
        %5622 = vmatprep.subr.bf16.mxu0 0
        %5623 = vmatpush1.bf16.msra.mxu0 0
        %5624 = vmatprep.subr.bf16.mxu0 0
        %5625 = vmatpush1.bf16.msra.mxu0 0
        %5626 = vmatprep.subr.bf16.mxu0 %v2558
        %5627 = vmatpush1.bf16.msra.mxu0 %v2557
        %5628 = vmatprep.subr.bf16.mxu0 %v2358
        %5629 = vmatpush1.bf16.msra.mxu0 %v2357
        %5630 = vmatprep.subr.bf16.mxu0 0
        %5631 = vmatpush2.bf16.msra.mxu0 0
        %5632 = vmatprep.subr.bf16.mxu0 0
        %5633 = vmatpush2.bf16.msra.mxu0 0
        %5634 = vmatprep.subr.bf16.mxu0 0
        %5635 = vmatpush2.bf16.msra.mxu0 0
        %5636 = vmatprep.subr.bf16.mxu0 0
        %5637 = vmatpush2.bf16.msra.mxu0 0
        %5638 = vmatprep.subr.bf16.mxu0 0
        %5639 = vmatpush2.bf16.msra.mxu0 0
        %5640 = vmatprep.subr.bf16.mxu0 0
        %5641 = vmatpush2.bf16.msra.mxu0 0
        %5642 = vmatprep.subr.bf16.mxu0 0
        %5643 = vmatpush2.bf16.msra.mxu0 0
        %5644 = vmatprep.subr.bf16.mxu0 0
        %5645 = vmatpush2.bf16.msra.mxu0 0
        %5646 = vmatprep.mubr.bf16.mxu0 0
        %5647 = vmatmul.mubr.bf16.gmra.mxu0 %v4136
        %v5648 = vpop.f32.mrf.mxu0
        %v5649 = vadd.f32 %v3426, %v5648
        %v5650 = vpop.f32.mrf.mxu0
        %v5651 = vadd.f32 %v3430, %v5650
        %v5652 = vpop.f32.mrf.mxu0
        %v5653 = vpop.f32.mrf.mxu0
        %5654 = vdwg.mxu0
        %5655 = vmatprep.subr.bf16.mxu0 0
        %5656 = vmatpush1.bf16.msra.mxu0 0
        %5657 = vmatprep.subr.bf16.mxu0 0
        %5658 = vmatpush1.bf16.msra.mxu0 0
        %5659 = vmatprep.subr.bf16.mxu0 0
        %5660 = vmatpush1.bf16.msra.mxu0 0
        %5661 = vmatprep.subr.bf16.mxu0 0
        %5662 = vmatpush1.bf16.msra.mxu0 0
        %5663 = vmatprep.subr.bf16.mxu0 0
        %5664 = vmatpush1.bf16.msra.mxu0 0
        %5665 = vmatprep.subr.bf16.mxu0 0
        %5666 = vmatpush1.bf16.msra.mxu0 0
        %5667 = vmatprep.subr.bf16.mxu0 %v2560
        %5668 = vmatpush1.bf16.msra.mxu0 %v2559
        %5669 = vmatprep.subr.bf16.mxu0 %v2360
        %5670 = vmatpush1.bf16.msra.mxu0 %v2359
        %5671 = vmatprep.subr.bf16.mxu0 0
        %5672 = vmatpush2.bf16.msra.mxu0 0
        %5673 = vmatprep.subr.bf16.mxu0 0
        %5674 = vmatpush2.bf16.msra.mxu0 0
        %5675 = vmatprep.subr.bf16.mxu0 0
        %5676 = vmatpush2.bf16.msra.mxu0 0
        %5677 = vmatprep.subr.bf16.mxu0 0
        %5678 = vmatpush2.bf16.msra.mxu0 0
        %5679 = vmatprep.subr.bf16.mxu0 0
        %5680 = vmatpush2.bf16.msra.mxu0 0
        %5681 = vmatprep.subr.bf16.mxu0 0
        %5682 = vmatpush2.bf16.msra.mxu0 0
        %5683 = vmatprep.subr.bf16.mxu0 0
        %5684 = vmatpush2.bf16.msra.mxu0 0
        %5685 = vmatprep.subr.bf16.mxu0 0
        %5686 = vmatpush2.bf16.msra.mxu0 0
        %5687 = vmatprep.mubr.bf16.mxu0 0
        %5688 = vmatmul.mubr.bf16.gmra.mxu0 %v4136
        %v5689 = vpop.f32.mrf.mxu0
        %v5690 = vadd.f32 %v3434, %v5689
        %v5691 = vpop.f32.mrf.mxu0
        %v5692 = vadd.f32 %v3438, %v5691
        %v5693 = vpop.f32.mrf.mxu0
        %v5694 = vpop.f32.mrf.mxu0
        %5695 = vdwg.mxu0
        %5696 = vmatprep.subr.bf16.mxu0 0
        %5697 = vmatpush1.bf16.msra.mxu0 0
        %5698 = vmatprep.subr.bf16.mxu0 0
        %5699 = vmatpush1.bf16.msra.mxu0 0
        %5700 = vmatprep.subr.bf16.mxu0 0
        %5701 = vmatpush1.bf16.msra.mxu0 0
        %5702 = vmatprep.subr.bf16.mxu0 0
        %5703 = vmatpush1.bf16.msra.mxu0 0
        %5704 = vmatprep.subr.bf16.mxu0 0
        %5705 = vmatpush1.bf16.msra.mxu0 0
        %5706 = vmatprep.subr.bf16.mxu0 0
        %5707 = vmatpush1.bf16.msra.mxu0 0
        %5708 = vmatprep.subr.bf16.mxu0 %v2562
        %5709 = vmatpush1.bf16.msra.mxu0 %v2561
        %5710 = vmatprep.subr.bf16.mxu0 %v2362
        %5711 = vmatpush1.bf16.msra.mxu0 %v2361
        %5712 = vmatprep.subr.bf16.mxu0 0
        %5713 = vmatpush2.bf16.msra.mxu0 0
        %5714 = vmatprep.subr.bf16.mxu0 0
        %5715 = vmatpush2.bf16.msra.mxu0 0
        %5716 = vmatprep.subr.bf16.mxu0 0
        %5717 = vmatpush2.bf16.msra.mxu0 0
        %5718 = vmatprep.subr.bf16.mxu0 0
        %5719 = vmatpush2.bf16.msra.mxu0 0
        %5720 = vmatprep.subr.bf16.mxu0 0
        %5721 = vmatpush2.bf16.msra.mxu0 0
        %5722 = vmatprep.subr.bf16.mxu0 0
        %5723 = vmatpush2.bf16.msra.mxu0 0
        %5724 = vmatprep.subr.bf16.mxu0 0
        %5725 = vmatpush2.bf16.msra.mxu0 0
        %5726 = vmatprep.subr.bf16.mxu0 0
        %5727 = vmatpush2.bf16.msra.mxu0 0
        %5728 = vmatprep.mubr.bf16.mxu0 0
        %5729 = vmatmul.mubr.bf16.gmra.mxu0 %v4136
        %v5730 = vpop.f32.mrf.mxu0
        %v5731 = vadd.f32 %v3442, %v5730
        %v5732 = vpop.f32.mrf.mxu0
        %v5733 = vadd.f32 %v3446, %v5732
        %v5734 = vpop.f32.mrf.mxu0
        %v5735 = vpop.f32.mrf.mxu0
        %5736 = vdwg.mxu0
        %5737 = vmatprep.subr.bf16.mxu0 0
        %5738 = vmatpush1.bf16.msra.mxu0 0
        %5739 = vmatprep.subr.bf16.mxu0 0
        %5740 = vmatpush1.bf16.msra.mxu0 0
        %5741 = vmatprep.subr.bf16.mxu0 0
        %5742 = vmatpush1.bf16.msra.mxu0 0
        %5743 = vmatprep.subr.bf16.mxu0 0
        %5744 = vmatpush1.bf16.msra.mxu0 0
        %5745 = vmatprep.subr.bf16.mxu0 0
        %5746 = vmatpush1.bf16.msra.mxu0 0
        %5747 = vmatprep.subr.bf16.mxu0 0
        %5748 = vmatpush1.bf16.msra.mxu0 0
        %5749 = vmatprep.subr.bf16.mxu0 %v2564
        %5750 = vmatpush1.bf16.msra.mxu0 %v2563
        %5751 = vmatprep.subr.bf16.mxu0 %v2364
        %5752 = vmatpush1.bf16.msra.mxu0 %v2363
        %5753 = vmatprep.subr.bf16.mxu0 0
        %5754 = vmatpush2.bf16.msra.mxu0 0
        %5755 = vmatprep.subr.bf16.mxu0 0
        %5756 = vmatpush2.bf16.msra.mxu0 0
        %5757 = vmatprep.subr.bf16.mxu0 0
        %5758 = vmatpush2.bf16.msra.mxu0 0
        %5759 = vmatprep.subr.bf16.mxu0 0
        %5760 = vmatpush2.bf16.msra.mxu0 0
        %5761 = vmatprep.subr.bf16.mxu0 0
        %5762 = vmatpush2.bf16.msra.mxu0 0
        %5763 = vmatprep.subr.bf16.mxu0 0
        %5764 = vmatpush2.bf16.msra.mxu0 0
        %5765 = vmatprep.subr.bf16.mxu0 0
        %5766 = vmatpush2.bf16.msra.mxu0 0
        %5767 = vmatprep.subr.bf16.mxu0 0
        %5768 = vmatpush2.bf16.msra.mxu0 0
        %5769 = vmatprep.mubr.bf16.mxu0 0
        %5770 = vmatmul.mubr.bf16.gmra.mxu0 %v4136
        %v5771 = vpop.f32.mrf.mxu0
        %v5772 = vadd.f32 %v3450, %v5771
        %v5773 = vpop.f32.mrf.mxu0
        %v5774 = vadd.f32 %v3454, %v5773
        %v5775 = vpop.f32.mrf.mxu0
        %v5776 = vpop.f32.mrf.mxu0
        %5777 = vdwg.mxu0
        %5778 = vmatprep.subr.bf16.mxu0 0
        %5779 = vmatpush1.bf16.msra.mxu0 0
        %5780 = vmatprep.subr.bf16.mxu0 0
        %5781 = vmatpush1.bf16.msra.mxu0 0
        %5782 = vmatprep.subr.bf16.mxu0 0
        %5783 = vmatpush1.bf16.msra.mxu0 0
        %5784 = vmatprep.subr.bf16.mxu0 0
        %5785 = vmatpush1.bf16.msra.mxu0 0
        %5786 = vmatprep.subr.bf16.mxu0 0
        %5787 = vmatpush1.bf16.msra.mxu0 0
        %5788 = vmatprep.subr.bf16.mxu0 0
        %5789 = vmatpush1.bf16.msra.mxu0 0
        %5790 = vmatprep.subr.bf16.mxu0 %v2566
        %5791 = vmatpush1.bf16.msra.mxu0 %v2565
        %5792 = vmatprep.subr.bf16.mxu0 %v2366
        %5793 = vmatpush1.bf16.msra.mxu0 %v2365
        %5794 = vmatprep.subr.bf16.mxu0 0
        %5795 = vmatpush2.bf16.msra.mxu0 0
        %5796 = vmatprep.subr.bf16.mxu0 0
        %5797 = vmatpush2.bf16.msra.mxu0 0
        %5798 = vmatprep.subr.bf16.mxu0 0
        %5799 = vmatpush2.bf16.msra.mxu0 0
        %5800 = vmatprep.subr.bf16.mxu0 0
        %5801 = vmatpush2.bf16.msra.mxu0 0
        %5802 = vmatprep.subr.bf16.mxu0 0
        %5803 = vmatpush2.bf16.msra.mxu0 0
        %5804 = vmatprep.subr.bf16.mxu0 0
        %5805 = vmatpush2.bf16.msra.mxu0 0
        %5806 = vmatprep.subr.bf16.mxu0 0
        %5807 = vmatpush2.bf16.msra.mxu0 0
        %5808 = vmatprep.subr.bf16.mxu0 0
        %5809 = vmatpush2.bf16.msra.mxu0 0
        %5810 = vmatprep.mubr.bf16.mxu0 0
        %5811 = vmatmul.mubr.bf16.gmra.mxu0 %v4136
        %v5812 = vpop.f32.mrf.mxu0
        %v5813 = vadd.f32 %v3458, %v5812
        %v5814 = vpop.f32.mrf.mxu0
        %v5815 = vadd.f32 %v3462, %v5814
        %v5816 = vpop.f32.mrf.mxu0
        %v5817 = vpop.f32.mrf.mxu0
        %5818 = vdwg.mxu0
        %5819 = vmatprep.subr.bf16.mxu0 0
        %5820 = vmatpush1.bf16.msra.mxu0 0
        %5821 = vmatprep.subr.bf16.mxu0 0
        %5822 = vmatpush1.bf16.msra.mxu0 0
        %5823 = vmatprep.subr.bf16.mxu0 0
        %5824 = vmatpush1.bf16.msra.mxu0 0
        %5825 = vmatprep.subr.bf16.mxu0 0
        %5826 = vmatpush1.bf16.msra.mxu0 0
        %5827 = vmatprep.subr.bf16.mxu0 0
        %5828 = vmatpush1.bf16.msra.mxu0 0
        %5829 = vmatprep.subr.bf16.mxu0 0
        %5830 = vmatpush1.bf16.msra.mxu0 0
        %5831 = vmatprep.subr.bf16.mxu0 %v2568
        %5832 = vmatpush1.bf16.msra.mxu0 %v2567
        %5833 = vmatprep.subr.bf16.mxu0 %v2368
        %5834 = vmatpush1.bf16.msra.mxu0 %v2367
        %5835 = vmatprep.subr.bf16.mxu0 0
        %5836 = vmatpush2.bf16.msra.mxu0 0
        %5837 = vmatprep.subr.bf16.mxu0 0
        %5838 = vmatpush2.bf16.msra.mxu0 0
        %5839 = vmatprep.subr.bf16.mxu0 0
        %5840 = vmatpush2.bf16.msra.mxu0 0
        %5841 = vmatprep.subr.bf16.mxu0 0
        %5842 = vmatpush2.bf16.msra.mxu0 0
        %5843 = vmatprep.subr.bf16.mxu0 0
        %5844 = vmatpush2.bf16.msra.mxu0 0
        %5845 = vmatprep.subr.bf16.mxu0 0
        %5846 = vmatpush2.bf16.msra.mxu0 0
        %5847 = vmatprep.subr.bf16.mxu0 0
        %5848 = vmatpush2.bf16.msra.mxu0 0
        %5849 = vmatprep.subr.bf16.mxu0 0
        %5850 = vmatpush2.bf16.msra.mxu0 0
        %5851 = vmatprep.mubr.bf16.mxu0 0
        %5852 = vmatmul.mubr.bf16.gmra.mxu0 %v4136
        %v5853 = vpop.f32.mrf.mxu0
        %v5854 = vadd.f32 %v3466, %v5853
        %v5855 = vpop.f32.mrf.mxu0
        %v5856 = vadd.f32 %v3470, %v5855
        %v5857 = vpop.f32.mrf.mxu0
        %v5858 = vpop.f32.mrf.mxu0
        %5859 = vdwg.mxu0
        %5860 = vmatprep.subr.bf16.mxu0 0
        %5861 = vmatpush1.bf16.msra.mxu0 0
        %5862 = vmatprep.subr.bf16.mxu0 0
        %5863 = vmatpush1.bf16.msra.mxu0 0
        %5864 = vmatprep.subr.bf16.mxu0 0
        %5865 = vmatpush1.bf16.msra.mxu0 0
        %5866 = vmatprep.subr.bf16.mxu0 0
        %5867 = vmatpush1.bf16.msra.mxu0 0
        %5868 = vmatprep.subr.bf16.mxu0 0
        %5869 = vmatpush1.bf16.msra.mxu0 0
        %5870 = vmatprep.subr.bf16.mxu0 0
        %5871 = vmatpush1.bf16.msra.mxu0 0
        %5872 = vmatprep.subr.bf16.mxu0 %v2570
        %5873 = vmatpush1.bf16.msra.mxu0 %v2569
        %5874 = vmatprep.subr.bf16.mxu0 %v2370
        %5875 = vmatpush1.bf16.msra.mxu0 %v2369
        %5876 = vmatprep.subr.bf16.mxu0 0
        %5877 = vmatpush2.bf16.msra.mxu0 0
        %5878 = vmatprep.subr.bf16.mxu0 0
        %5879 = vmatpush2.bf16.msra.mxu0 0
        %5880 = vmatprep.subr.bf16.mxu0 0
        %5881 = vmatpush2.bf16.msra.mxu0 0
        %5882 = vmatprep.subr.bf16.mxu0 0
        %5883 = vmatpush2.bf16.msra.mxu0 0
        %5884 = vmatprep.subr.bf16.mxu0 0
        %5885 = vmatpush2.bf16.msra.mxu0 0
        %5886 = vmatprep.subr.bf16.mxu0 0
        %5887 = vmatpush2.bf16.msra.mxu0 0
        %5888 = vmatprep.subr.bf16.mxu0 0
        %5889 = vmatpush2.bf16.msra.mxu0 0
        %5890 = vmatprep.subr.bf16.mxu0 0
        %5891 = vmatpush2.bf16.msra.mxu0 0
        %5892 = vmatprep.mubr.bf16.mxu0 0
        %5893 = vmatmul.mubr.bf16.gmra.mxu0 %v4136
        %v5894 = vpop.f32.mrf.mxu0
        %v5895 = vadd.f32 %v3474, %v5894
        %v5896 = vpop.f32.mrf.mxu0
        %v5897 = vadd.f32 %v3478, %v5896
        %v5898 = vpop.f32.mrf.mxu0
        %v5899 = vpop.f32.mrf.mxu0
        %5900 = vdwg.mxu0
        %5901 = vmatprep.subr.bf16.mxu0 0
        %5902 = vmatpush1.bf16.msra.mxu0 0
        %5903 = vmatprep.subr.bf16.mxu0 0
        %5904 = vmatpush1.bf16.msra.mxu0 0
        %5905 = vmatprep.subr.bf16.mxu0 0
        %5906 = vmatpush1.bf16.msra.mxu0 0
        %5907 = vmatprep.subr.bf16.mxu0 0
        %5908 = vmatpush1.bf16.msra.mxu0 0
        %5909 = vmatprep.subr.bf16.mxu0 0
        %5910 = vmatpush1.bf16.msra.mxu0 0
        %5911 = vmatprep.subr.bf16.mxu0 0
        %5912 = vmatpush1.bf16.msra.mxu0 0
        %5913 = vmatprep.subr.bf16.mxu0 %v2572
        %5914 = vmatpush1.bf16.msra.mxu0 %v2571
        %5915 = vmatprep.subr.bf16.mxu0 %v2372
        %5916 = vmatpush1.bf16.msra.mxu0 %v2371
        %5917 = vmatprep.subr.bf16.mxu0 0
        %5918 = vmatpush2.bf16.msra.mxu0 0
        %5919 = vmatprep.subr.bf16.mxu0 0
        %5920 = vmatpush2.bf16.msra.mxu0 0
        %5921 = vmatprep.subr.bf16.mxu0 0
        %5922 = vmatpush2.bf16.msra.mxu0 0
        %5923 = vmatprep.subr.bf16.mxu0 0
        %5924 = vmatpush2.bf16.msra.mxu0 0
        %5925 = vmatprep.subr.bf16.mxu0 0
        %5926 = vmatpush2.bf16.msra.mxu0 0
        %5927 = vmatprep.subr.bf16.mxu0 0
        %5928 = vmatpush2.bf16.msra.mxu0 0
        %5929 = vmatprep.subr.bf16.mxu0 0
        %5930 = vmatpush2.bf16.msra.mxu0 0
        %5931 = vmatprep.subr.bf16.mxu0 0
        %5932 = vmatpush2.bf16.msra.mxu0 0
        %5933 = vmatprep.mubr.bf16.mxu0 0
        %5934 = vmatmul.mubr.bf16.gmra.mxu0 %v4136
        %v5935 = vpop.f32.mrf.mxu0
        %v5936 = vadd.f32 %v3482, %v5935
        %v5937 = vpop.f32.mrf.mxu0
        %v5938 = vadd.f32 %v3486, %v5937
        %v5939 = vpop.f32.mrf.mxu0
        %v5940 = vpop.f32.mrf.mxu0
        %5941 = vdwg.mxu0
        %5942 = vmatprep.subr.bf16.mxu0 0
        %5943 = vmatpush1.bf16.msra.mxu0 0
        %5944 = vmatprep.subr.bf16.mxu0 0
        %5945 = vmatpush1.bf16.msra.mxu0 0
        %5946 = vmatprep.subr.bf16.mxu0 0
        %5947 = vmatpush1.bf16.msra.mxu0 0
        %5948 = vmatprep.subr.bf16.mxu0 0
        %5949 = vmatpush1.bf16.msra.mxu0 0
        %5950 = vmatprep.subr.bf16.mxu0 0
        %5951 = vmatpush1.bf16.msra.mxu0 0
        %5952 = vmatprep.subr.bf16.mxu0 0
        %5953 = vmatpush1.bf16.msra.mxu0 0
        %5954 = vmatprep.subr.bf16.mxu0 %v2574
        %5955 = vmatpush1.bf16.msra.mxu0 %v2573
        %5956 = vmatprep.subr.bf16.mxu0 %v2374
        %5957 = vmatpush1.bf16.msra.mxu0 %v2373
        %5958 = vmatprep.subr.bf16.mxu0 0
        %5959 = vmatpush2.bf16.msra.mxu0 0
        %5960 = vmatprep.subr.bf16.mxu0 0
        %5961 = vmatpush2.bf16.msra.mxu0 0
        %5962 = vmatprep.subr.bf16.mxu0 0
        %5963 = vmatpush2.bf16.msra.mxu0 0
        %5964 = vmatprep.subr.bf16.mxu0 0
        %5965 = vmatpush2.bf16.msra.mxu0 0
        %5966 = vmatprep.subr.bf16.mxu0 0
        %5967 = vmatpush2.bf16.msra.mxu0 0
        %5968 = vmatprep.subr.bf16.mxu0 0
        %5969 = vmatpush2.bf16.msra.mxu0 0
        %5970 = vmatprep.subr.bf16.mxu0 0
        %5971 = vmatpush2.bf16.msra.mxu0 0
        %5972 = vmatprep.subr.bf16.mxu0 0
        %5973 = vmatpush2.bf16.msra.mxu0 0
        %5974 = vmatprep.mubr.bf16.mxu0 0
        %5975 = vmatmul.mubr.bf16.gmra.mxu0 %v4136
        %v5976 = vpop.f32.mrf.mxu0
        %v5977 = vadd.f32 %v3490, %v5976
        %v5978 = vpop.f32.mrf.mxu0
        %v5979 = vadd.f32 %v3494, %v5978
        %v5980 = vpop.f32.mrf.mxu0
        %v5981 = vpop.f32.mrf.mxu0
        %5982 = vdwg.mxu0
        %5983 = vmatprep.subr.bf16.mxu0 0
        %5984 = vmatpush1.bf16.msra.mxu0 0
        %5985 = vmatprep.subr.bf16.mxu0 0
        %5986 = vmatpush1.bf16.msra.mxu0 0
        %5987 = vmatprep.subr.bf16.mxu0 0
        %5988 = vmatpush1.bf16.msra.mxu0 0
        %5989 = vmatprep.subr.bf16.mxu0 0
        %5990 = vmatpush1.bf16.msra.mxu0 0
        %5991 = vmatprep.subr.bf16.mxu0 0
        %5992 = vmatpush1.bf16.msra.mxu0 0
        %5993 = vmatprep.subr.bf16.mxu0 0
        %5994 = vmatpush1.bf16.msra.mxu0 0
        %5995 = vmatprep.subr.bf16.mxu0 %v2576
        %5996 = vmatpush1.bf16.msra.mxu0 %v2575
        %5997 = vmatprep.subr.bf16.mxu0 %v2376
        %5998 = vmatpush1.bf16.msra.mxu0 %v2375
        %5999 = vmatprep.subr.bf16.mxu0 0
        %6000 = vmatpush2.bf16.msra.mxu0 0
        %6001 = vmatprep.subr.bf16.mxu0 0
        %6002 = vmatpush2.bf16.msra.mxu0 0
        %6003 = vmatprep.subr.bf16.mxu0 0
        %6004 = vmatpush2.bf16.msra.mxu0 0
        %6005 = vmatprep.subr.bf16.mxu0 0
        %6006 = vmatpush2.bf16.msra.mxu0 0
        %6007 = vmatprep.subr.bf16.mxu0 0
        %6008 = vmatpush2.bf16.msra.mxu0 0
        %6009 = vmatprep.subr.bf16.mxu0 0
        %6010 = vmatpush2.bf16.msra.mxu0 0
        %6011 = vmatprep.subr.bf16.mxu0 0
        %6012 = vmatpush2.bf16.msra.mxu0 0
        %6013 = vmatprep.subr.bf16.mxu0 0
        %6014 = vmatpush2.bf16.msra.mxu0 0
        %6015 = vmatprep.mubr.bf16.mxu0 0
        %6016 = vmatmul.mubr.bf16.gmra.mxu0 %v4136
        %v6017 = vpop.f32.mrf.mxu0
        %v6018 = vadd.f32 %v3498, %v6017
        %v6019 = vpop.f32.mrf.mxu0
        %v6020 = vadd.f32 %v3502, %v6019
        %v6021 = vpop.f32.mrf.mxu0
        %v6022 = vpop.f32.mrf.mxu0
        %6023 = vdwg.mxu0
        %6024 = vmatprep.subr.bf16.mxu0 0
        %6025 = vmatpush1.bf16.msra.mxu0 0
        %6026 = vmatprep.subr.bf16.mxu0 0
        %6027 = vmatpush1.bf16.msra.mxu0 0
        %6028 = vmatprep.subr.bf16.mxu0 0
        %6029 = vmatpush1.bf16.msra.mxu0 0
        %6030 = vmatprep.subr.bf16.mxu0 0
        %6031 = vmatpush1.bf16.msra.mxu0 0
        %6032 = vmatprep.subr.bf16.mxu0 0
        %6033 = vmatpush1.bf16.msra.mxu0 0
        %6034 = vmatprep.subr.bf16.mxu0 0
        %6035 = vmatpush1.bf16.msra.mxu0 0
        %6036 = vmatprep.subr.bf16.mxu0 %v2578
        %6037 = vmatpush1.bf16.msra.mxu0 %v2577
        %6038 = vmatprep.subr.bf16.mxu0 %v2378
        %6039 = vmatpush1.bf16.msra.mxu0 %v2377
        %6040 = vmatprep.subr.bf16.mxu0 0
        %6041 = vmatpush2.bf16.msra.mxu0 0
        %6042 = vmatprep.subr.bf16.mxu0 0
        %6043 = vmatpush2.bf16.msra.mxu0 0
        %6044 = vmatprep.subr.bf16.mxu0 0
        %6045 = vmatpush2.bf16.msra.mxu0 0
        %6046 = vmatprep.subr.bf16.mxu0 0
        %6047 = vmatpush2.bf16.msra.mxu0 0
        %6048 = vmatprep.subr.bf16.mxu0 0
        %6049 = vmatpush2.bf16.msra.mxu0 0
        %6050 = vmatprep.subr.bf16.mxu0 0
        %6051 = vmatpush2.bf16.msra.mxu0 0
        %6052 = vmatprep.subr.bf16.mxu0 0
        %6053 = vmatpush2.bf16.msra.mxu0 0
        %6054 = vmatprep.subr.bf16.mxu0 0
        %6055 = vmatpush2.bf16.msra.mxu0 0
        %6056 = vmatprep.mubr.bf16.mxu0 0
        %6057 = vmatmul.mubr.bf16.gmra.mxu0 %v4136
        %v6058 = vpop.f32.mrf.mxu0
        %v6059 = vadd.f32 %v3506, %v6058
        %v6060 = vpop.f32.mrf.mxu0
        %v6061 = vadd.f32 %v3510, %v6060
        %v6062 = vpop.f32.mrf.mxu0
        %v6063 = vpop.f32.mrf.mxu0
        %6064 = vdwg.mxu0
        %6065 = vmatprep.subr.bf16.mxu0 0
        %6066 = vmatpush1.bf16.msra.mxu0 0
        %6067 = vmatprep.subr.bf16.mxu0 0
        %6068 = vmatpush1.bf16.msra.mxu0 0
        %6069 = vmatprep.subr.bf16.mxu0 0
        %6070 = vmatpush1.bf16.msra.mxu0 0
        %6071 = vmatprep.subr.bf16.mxu0 0
        %6072 = vmatpush1.bf16.msra.mxu0 0
        %6073 = vmatprep.subr.bf16.mxu0 0
        %6074 = vmatpush1.bf16.msra.mxu0 0
        %6075 = vmatprep.subr.bf16.mxu0 0
        %6076 = vmatpush1.bf16.msra.mxu0 0
        %6077 = vmatprep.subr.bf16.mxu0 %v2580
        %6078 = vmatpush1.bf16.msra.mxu0 %v2579
        %6079 = vmatprep.subr.bf16.mxu0 %v2380
        %6080 = vmatpush1.bf16.msra.mxu0 %v2379
        %6081 = vmatprep.subr.bf16.mxu0 0
        %6082 = vmatpush2.bf16.msra.mxu0 0
        %6083 = vmatprep.subr.bf16.mxu0 0
        %6084 = vmatpush2.bf16.msra.mxu0 0
        %6085 = vmatprep.subr.bf16.mxu0 0
        %6086 = vmatpush2.bf16.msra.mxu0 0
        %6087 = vmatprep.subr.bf16.mxu0 0
        %6088 = vmatpush2.bf16.msra.mxu0 0
        %6089 = vmatprep.subr.bf16.mxu0 0
        %6090 = vmatpush2.bf16.msra.mxu0 0
        %6091 = vmatprep.subr.bf16.mxu0 0
        %6092 = vmatpush2.bf16.msra.mxu0 0
        %6093 = vmatprep.subr.bf16.mxu0 0
        %6094 = vmatpush2.bf16.msra.mxu0 0
        %6095 = vmatprep.subr.bf16.mxu0 0
        %6096 = vmatpush2.bf16.msra.mxu0 0
        %6097 = vmatprep.mubr.bf16.mxu0 0
        %6098 = vmatmul.mubr.bf16.gmra.mxu0 %v4136
        %v6099 = vpop.f32.mrf.mxu0
        %v6100 = vadd.f32 %v3514, %v6099
        %v6101 = vpop.f32.mrf.mxu0
        %v6102 = vadd.f32 %v3518, %v6101
        %v6103 = vpop.f32.mrf.mxu0
        %v6104 = vpop.f32.mrf.mxu0
        %6105 = vdwg.mxu0
        %6106 = vmatprep.subr.bf16.mxu0 0
        %6107 = vmatpush1.bf16.msra.mxu0 0
        %6108 = vmatprep.subr.bf16.mxu0 0
        %6109 = vmatpush1.bf16.msra.mxu0 0
        %6110 = vmatprep.subr.bf16.mxu0 0
        %6111 = vmatpush1.bf16.msra.mxu0 0
        %6112 = vmatprep.subr.bf16.mxu0 0
        %6113 = vmatpush1.bf16.msra.mxu0 0
        %6114 = vmatprep.subr.bf16.mxu0 0
        %6115 = vmatpush1.bf16.msra.mxu0 0
        %6116 = vmatprep.subr.bf16.mxu0 0
        %6117 = vmatpush1.bf16.msra.mxu0 0
        %6118 = vmatprep.subr.bf16.mxu0 %v2582
        %6119 = vmatpush1.bf16.msra.mxu0 %v2581
        %6120 = vmatprep.subr.bf16.mxu0 %v2382
        %6121 = vmatpush1.bf16.msra.mxu0 %v2381
        %6122 = vmatprep.subr.bf16.mxu0 0
        %6123 = vmatpush2.bf16.msra.mxu0 0
        %6124 = vmatprep.subr.bf16.mxu0 0
        %6125 = vmatpush2.bf16.msra.mxu0 0
        %6126 = vmatprep.subr.bf16.mxu0 0
        %6127 = vmatpush2.bf16.msra.mxu0 0
        %6128 = vmatprep.subr.bf16.mxu0 0
        %6129 = vmatpush2.bf16.msra.mxu0 0
        %6130 = vmatprep.subr.bf16.mxu0 0
        %6131 = vmatpush2.bf16.msra.mxu0 0
        %6132 = vmatprep.subr.bf16.mxu0 0
        %6133 = vmatpush2.bf16.msra.mxu0 0
        %6134 = vmatprep.subr.bf16.mxu0 0
        %6135 = vmatpush2.bf16.msra.mxu0 0
        %6136 = vmatprep.subr.bf16.mxu0 0
        %6137 = vmatpush2.bf16.msra.mxu0 0
        %6138 = vmatprep.mubr.bf16.mxu0 0
        %6139 = vmatmul.mubr.bf16.gmra.mxu0 %v4136
        %v6140 = vpop.f32.mrf.mxu0
        %v6141 = vadd.f32 %v3522, %v6140
        %v6142 = vpop.f32.mrf.mxu0
        %v6143 = vadd.f32 %v3526, %v6142
        %v6144 = vpop.f32.mrf.mxu0
        %v6145 = vpop.f32.mrf.mxu0
        %6146 = vdwg.mxu0
        %6147 = vmatprep.subr.bf16.mxu0 0
        %6148 = vmatpush1.bf16.msra.mxu0 0
        %6149 = vmatprep.subr.bf16.mxu0 0
        %6150 = vmatpush1.bf16.msra.mxu0 0
        %6151 = vmatprep.subr.bf16.mxu0 0
        %6152 = vmatpush1.bf16.msra.mxu0 0
        %6153 = vmatprep.subr.bf16.mxu0 0
        %6154 = vmatpush1.bf16.msra.mxu0 0
        %6155 = vmatprep.subr.bf16.mxu0 0
        %6156 = vmatpush1.bf16.msra.mxu0 0
        %6157 = vmatprep.subr.bf16.mxu0 0
        %6158 = vmatpush1.bf16.msra.mxu0 0
        %6159 = vmatprep.subr.bf16.mxu0 %v2584
        %6160 = vmatpush1.bf16.msra.mxu0 %v2583
        %6161 = vmatprep.subr.bf16.mxu0 %v2384
        %6162 = vmatpush1.bf16.msra.mxu0 %v2383
        %6163 = vmatprep.subr.bf16.mxu0 0
        %6164 = vmatpush2.bf16.msra.mxu0 0
        %6165 = vmatprep.subr.bf16.mxu0 0
        %6166 = vmatpush2.bf16.msra.mxu0 0
        %6167 = vmatprep.subr.bf16.mxu0 0
        %6168 = vmatpush2.bf16.msra.mxu0 0
        %6169 = vmatprep.subr.bf16.mxu0 0
        %6170 = vmatpush2.bf16.msra.mxu0 0
        %6171 = vmatprep.subr.bf16.mxu0 0
        %6172 = vmatpush2.bf16.msra.mxu0 0
        %6173 = vmatprep.subr.bf16.mxu0 0
        %6174 = vmatpush2.bf16.msra.mxu0 0
        %6175 = vmatprep.subr.bf16.mxu0 0
        %6176 = vmatpush2.bf16.msra.mxu0 0
        %6177 = vmatprep.subr.bf16.mxu0 0
        %6178 = vmatpush2.bf16.msra.mxu0 0
        %6179 = vmatprep.mubr.bf16.mxu0 0
        %6180 = vmatmul.mubr.bf16.gmra.mxu0 %v4136
        %v6181 = vpop.f32.mrf.mxu0
        %v6182 = vadd.f32 %v3530, %v6181
        %v6183 = vpop.f32.mrf.mxu0
        %v6184 = vadd.f32 %v3534, %v6183
        %v6185 = vpop.f32.mrf.mxu0
        %v6186 = vpop.f32.mrf.mxu0
        %6187 = vdwg.mxu0
        %6188 = vmatprep.subr.bf16.mxu0 0
        %6189 = vmatpush1.bf16.msra.mxu0 0
        %6190 = vmatprep.subr.bf16.mxu0 0
        %6191 = vmatpush1.bf16.msra.mxu0 0
        %6192 = vmatprep.subr.bf16.mxu0 0
        %6193 = vmatpush1.bf16.msra.mxu0 0
        %6194 = vmatprep.subr.bf16.mxu0 0
        %6195 = vmatpush1.bf16.msra.mxu0 0
        %6196 = vmatprep.subr.bf16.mxu0 0
        %6197 = vmatpush1.bf16.msra.mxu0 0
        %6198 = vmatprep.subr.bf16.mxu0 0
        %6199 = vmatpush1.bf16.msra.mxu0 0
        %6200 = vmatprep.subr.bf16.mxu0 %v2586
        %6201 = vmatpush1.bf16.msra.mxu0 %v2585
        %6202 = vmatprep.subr.bf16.mxu0 %v2386
        %6203 = vmatpush1.bf16.msra.mxu0 %v2385
        %6204 = vmatprep.subr.bf16.mxu0 0
        %6205 = vmatpush2.bf16.msra.mxu0 0
        %6206 = vmatprep.subr.bf16.mxu0 0
        %6207 = vmatpush2.bf16.msra.mxu0 0
        %6208 = vmatprep.subr.bf16.mxu0 0
        %6209 = vmatpush2.bf16.msra.mxu0 0
        %6210 = vmatprep.subr.bf16.mxu0 0
        %6211 = vmatpush2.bf16.msra.mxu0 0
        %6212 = vmatprep.subr.bf16.mxu0 0
        %6213 = vmatpush2.bf16.msra.mxu0 0
        %6214 = vmatprep.subr.bf16.mxu0 0
        %6215 = vmatpush2.bf16.msra.mxu0 0
        %6216 = vmatprep.subr.bf16.mxu0 0
        %6217 = vmatpush2.bf16.msra.mxu0 0
        %6218 = vmatprep.subr.bf16.mxu0 0
        %6219 = vmatpush2.bf16.msra.mxu0 0
        %6220 = vmatprep.mubr.bf16.mxu0 0
        %6221 = vmatmul.mubr.bf16.gmra.mxu0 %v4136
        %v6222 = vpop.f32.mrf.mxu0
        %v6223 = vadd.f32 %v3538, %v6222
        %v6224 = vpop.f32.mrf.mxu0
        %v6225 = vadd.f32 %v3542, %v6224
        %v6226 = vpop.f32.mrf.mxu0
        %v6227 = vpop.f32.mrf.mxu0
        %6228 = vdwg.mxu0
        %6229 = vmatprep.subr.bf16.mxu0 0
        %6230 = vmatpush1.bf16.msra.mxu0 0
        %6231 = vmatprep.subr.bf16.mxu0 0
        %6232 = vmatpush1.bf16.msra.mxu0 0
        %6233 = vmatprep.subr.bf16.mxu0 0
        %6234 = vmatpush1.bf16.msra.mxu0 0
        %6235 = vmatprep.subr.bf16.mxu0 0
        %6236 = vmatpush1.bf16.msra.mxu0 0
        %6237 = vmatprep.subr.bf16.mxu0 0
        %6238 = vmatpush1.bf16.msra.mxu0 0
        %6239 = vmatprep.subr.bf16.mxu0 0
        %6240 = vmatpush1.bf16.msra.mxu0 0
        %6241 = vmatprep.subr.bf16.mxu0 %v2588
        %6242 = vmatpush1.bf16.msra.mxu0 %v2587
        %6243 = vmatprep.subr.bf16.mxu0 %v2388
        %6244 = vmatpush1.bf16.msra.mxu0 %v2387
        %6245 = vmatprep.subr.bf16.mxu0 0
        %6246 = vmatpush2.bf16.msra.mxu0 0
        %6247 = vmatprep.subr.bf16.mxu0 0
        %6248 = vmatpush2.bf16.msra.mxu0 0
        %6249 = vmatprep.subr.bf16.mxu0 0
        %6250 = vmatpush2.bf16.msra.mxu0 0
        %6251 = vmatprep.subr.bf16.mxu0 0
        %6252 = vmatpush2.bf16.msra.mxu0 0
        %6253 = vmatprep.subr.bf16.mxu0 0
        %6254 = vmatpush2.bf16.msra.mxu0 0
        %6255 = vmatprep.subr.bf16.mxu0 0
        %6256 = vmatpush2.bf16.msra.mxu0 0
        %6257 = vmatprep.subr.bf16.mxu0 0
        %6258 = vmatpush2.bf16.msra.mxu0 0
        %6259 = vmatprep.subr.bf16.mxu0 0
        %6260 = vmatpush2.bf16.msra.mxu0 0
        %6261 = vmatprep.mubr.bf16.mxu0 0
        %6262 = vmatmul.mubr.bf16.gmra.mxu0 %v4136
        %v6263 = vpop.f32.mrf.mxu0
        %v6264 = vadd.f32 %v3546, %v6263
        %v6265 = vpop.f32.mrf.mxu0
        %v6266 = vadd.f32 %v3550, %v6265
        %v6267 = vpop.f32.mrf.mxu0
        %v6268 = vpop.f32.mrf.mxu0
        %6269 = vdwg.mxu0
        %6270 = vmatprep.subr.bf16.mxu0 0
        %6271 = vmatpush1.bf16.msra.mxu0 0
        %6272 = vmatprep.subr.bf16.mxu0 0
        %6273 = vmatpush1.bf16.msra.mxu0 0
        %6274 = vmatprep.subr.bf16.mxu0 0
        %6275 = vmatpush1.bf16.msra.mxu0 0
        %6276 = vmatprep.subr.bf16.mxu0 0
        %6277 = vmatpush1.bf16.msra.mxu0 0
        %6278 = vmatprep.subr.bf16.mxu0 0
        %6279 = vmatpush1.bf16.msra.mxu0 0
        %6280 = vmatprep.subr.bf16.mxu0 0
        %6281 = vmatpush1.bf16.msra.mxu0 0
        %6282 = vmatprep.subr.bf16.mxu0 %v2590
        %6283 = vmatpush1.bf16.msra.mxu0 %v2589
        %6284 = vmatprep.subr.bf16.mxu0 %v2390
        %6285 = vmatpush1.bf16.msra.mxu0 %v2389
        %6286 = vmatprep.subr.bf16.mxu0 0
        %6287 = vmatpush2.bf16.msra.mxu0 0
        %6288 = vmatprep.subr.bf16.mxu0 0
        %6289 = vmatpush2.bf16.msra.mxu0 0
        %6290 = vmatprep.subr.bf16.mxu0 0
        %6291 = vmatpush2.bf16.msra.mxu0 0
        %6292 = vmatprep.subr.bf16.mxu0 0
        %6293 = vmatpush2.bf16.msra.mxu0 0
        %6294 = vmatprep.subr.bf16.mxu0 0
        %6295 = vmatpush2.bf16.msra.mxu0 0
        %6296 = vmatprep.subr.bf16.mxu0 0
        %6297 = vmatpush2.bf16.msra.mxu0 0
        %6298 = vmatprep.subr.bf16.mxu0 0
        %6299 = vmatpush2.bf16.msra.mxu0 0
        %6300 = vmatprep.subr.bf16.mxu0 0
        %6301 = vmatpush2.bf16.msra.mxu0 0
        %6302 = vmatprep.mubr.bf16.mxu0 0
        %6303 = vmatmul.mubr.bf16.gmra.mxu0 %v4136
        %v6304 = vpop.f32.mrf.mxu0
        %v6305 = vadd.f32 %v3554, %v6304
        %v6306 = vpop.f32.mrf.mxu0
        %v6307 = vadd.f32 %v3558, %v6306
        %v6308 = vpop.f32.mrf.mxu0
        %v6309 = vpop.f32.mrf.mxu0
        %6310 = vdwg.mxu0
        %6311 = vmatprep.subr.bf16.mxu0 0
        %6312 = vmatpush1.bf16.msra.mxu0 0
        %6313 = vmatprep.subr.bf16.mxu0 0
        %6314 = vmatpush1.bf16.msra.mxu0 0
        %6315 = vmatprep.subr.bf16.mxu0 0
        %6316 = vmatpush1.bf16.msra.mxu0 0
        %6317 = vmatprep.subr.bf16.mxu0 0
        %6318 = vmatpush1.bf16.msra.mxu0 0
        %6319 = vmatprep.subr.bf16.mxu0 0
        %6320 = vmatpush1.bf16.msra.mxu0 0
        %6321 = vmatprep.subr.bf16.mxu0 0
        %6322 = vmatpush1.bf16.msra.mxu0 0
        %6323 = vmatprep.subr.bf16.mxu0 %v2592
        %6324 = vmatpush1.bf16.msra.mxu0 %v2591
        %6325 = vmatprep.subr.bf16.mxu0 %v2392
        %6326 = vmatpush1.bf16.msra.mxu0 %v2391
        %6327 = vmatprep.subr.bf16.mxu0 0
        %6328 = vmatpush2.bf16.msra.mxu0 0
        %6329 = vmatprep.subr.bf16.mxu0 0
        %6330 = vmatpush2.bf16.msra.mxu0 0
        %6331 = vmatprep.subr.bf16.mxu0 0
        %6332 = vmatpush2.bf16.msra.mxu0 0
        %6333 = vmatprep.subr.bf16.mxu0 0
        %6334 = vmatpush2.bf16.msra.mxu0 0
        %6335 = vmatprep.subr.bf16.mxu0 0
        %6336 = vmatpush2.bf16.msra.mxu0 0
        %6337 = vmatprep.subr.bf16.mxu0 0
        %6338 = vmatpush2.bf16.msra.mxu0 0
        %6339 = vmatprep.subr.bf16.mxu0 0
        %6340 = vmatpush2.bf16.msra.mxu0 0
        %6341 = vmatprep.subr.bf16.mxu0 0
        %6342 = vmatpush2.bf16.msra.mxu0 0
        %6343 = vmatprep.mubr.bf16.mxu0 0
        %6344 = vmatmul.mubr.bf16.gmra.mxu0 %v4136
        %v6345 = vpop.f32.mrf.mxu0
        %v6346 = vadd.f32 %v3562, %v6345
        %v6347 = vpop.f32.mrf.mxu0
        %v6348 = vadd.f32 %v3566, %v6347
        %v6349 = vpop.f32.mrf.mxu0
        %v6350 = vpop.f32.mrf.mxu0
        %6351 = vdwg.mxu0
        %6352 = vmatprep.subr.bf16.mxu0 0
        %6353 = vmatpush1.bf16.msra.mxu0 0
        %6354 = vmatprep.subr.bf16.mxu0 0
        %6355 = vmatpush1.bf16.msra.mxu0 0
        %6356 = vmatprep.subr.bf16.mxu0 0
        %6357 = vmatpush1.bf16.msra.mxu0 0
        %6358 = vmatprep.subr.bf16.mxu0 0
        %6359 = vmatpush1.bf16.msra.mxu0 0
        %6360 = vmatprep.subr.bf16.mxu0 0
        %6361 = vmatpush1.bf16.msra.mxu0 0
        %6362 = vmatprep.subr.bf16.mxu0 0
        %6363 = vmatpush1.bf16.msra.mxu0 0
        %6364 = vmatprep.subr.bf16.mxu0 %v2594
        %6365 = vmatpush1.bf16.msra.mxu0 %v2593
        %6366 = vmatprep.subr.bf16.mxu0 %v2394
        %6367 = vmatpush1.bf16.msra.mxu0 %v2393
        %6368 = vmatprep.subr.bf16.mxu0 0
        %6369 = vmatpush2.bf16.msra.mxu0 0
        %6370 = vmatprep.subr.bf16.mxu0 0
        %6371 = vmatpush2.bf16.msra.mxu0 0
        %6372 = vmatprep.subr.bf16.mxu0 0
        %6373 = vmatpush2.bf16.msra.mxu0 0
        %6374 = vmatprep.subr.bf16.mxu0 0
        %6375 = vmatpush2.bf16.msra.mxu0 0
        %6376 = vmatprep.subr.bf16.mxu0 0
        %6377 = vmatpush2.bf16.msra.mxu0 0
        %6378 = vmatprep.subr.bf16.mxu0 0
        %6379 = vmatpush2.bf16.msra.mxu0 0
        %6380 = vmatprep.subr.bf16.mxu0 0
        %6381 = vmatpush2.bf16.msra.mxu0 0
        %6382 = vmatprep.subr.bf16.mxu0 0
        %6383 = vmatpush2.bf16.msra.mxu0 0
        %6384 = vmatprep.mubr.bf16.mxu0 0
        %6385 = vmatmul.mubr.bf16.gmra.mxu0 %v4136
        %v6386 = vpop.f32.mrf.mxu0
        %v6387 = vadd.f32 %v3570, %v6386
        %v6388 = vpop.f32.mrf.mxu0
        %v6389 = vadd.f32 %v3574, %v6388
        %v6390 = vpop.f32.mrf.mxu0
        %v6391 = vpop.f32.mrf.mxu0
        %6392 = vdwg.mxu0
        %6393 = vmatprep.subr.bf16.mxu0 0
        %6394 = vmatpush1.bf16.msra.mxu0 0
        %6395 = vmatprep.subr.bf16.mxu0 0
        %6396 = vmatpush1.bf16.msra.mxu0 0
        %6397 = vmatprep.subr.bf16.mxu0 0
        %6398 = vmatpush1.bf16.msra.mxu0 0
        %6399 = vmatprep.subr.bf16.mxu0 0
        %6400 = vmatpush1.bf16.msra.mxu0 0
        %6401 = vmatprep.subr.bf16.mxu0 0
        %6402 = vmatpush1.bf16.msra.mxu0 0
        %6403 = vmatprep.subr.bf16.mxu0 0
        %6404 = vmatpush1.bf16.msra.mxu0 0
        %6405 = vmatprep.subr.bf16.mxu0 %v2596
        %6406 = vmatpush1.bf16.msra.mxu0 %v2595
        %6407 = vmatprep.subr.bf16.mxu0 %v2396
        %6408 = vmatpush1.bf16.msra.mxu0 %v2395
        %6409 = vmatprep.subr.bf16.mxu0 0
        %6410 = vmatpush2.bf16.msra.mxu0 0
        %6411 = vmatprep.subr.bf16.mxu0 0
        %6412 = vmatpush2.bf16.msra.mxu0 0
        %6413 = vmatprep.subr.bf16.mxu0 0
        %6414 = vmatpush2.bf16.msra.mxu0 0
        %6415 = vmatprep.subr.bf16.mxu0 0
        %6416 = vmatpush2.bf16.msra.mxu0 0
        %6417 = vmatprep.subr.bf16.mxu0 0
        %6418 = vmatpush2.bf16.msra.mxu0 0
        %6419 = vmatprep.subr.bf16.mxu0 0
        %6420 = vmatpush2.bf16.msra.mxu0 0
        %6421 = vmatprep.subr.bf16.mxu0 0
        %6422 = vmatpush2.bf16.msra.mxu0 0
        %6423 = vmatprep.subr.bf16.mxu0 0
        %6424 = vmatpush2.bf16.msra.mxu0 0
        %6425 = vmatprep.mubr.bf16.mxu0 0
        %6426 = vmatmul.mubr.bf16.gmra.mxu0 %v4136
        %v6427 = vpop.f32.mrf.mxu0
        %v6428 = vadd.f32 %v3578, %v6427
        %v6429 = vpop.f32.mrf.mxu0
        %v6430 = vadd.f32 %v3582, %v6429
        %v6431 = vpop.f32.mrf.mxu0
        %v6432 = vpop.f32.mrf.mxu0
        %6433 = vdwg.mxu0
        %6434 = vmatprep.subr.bf16.mxu0 0
        %6435 = vmatpush1.bf16.msra.mxu0 0
        %6436 = vmatprep.subr.bf16.mxu0 0
        %6437 = vmatpush1.bf16.msra.mxu0 0
        %6438 = vmatprep.subr.bf16.mxu0 0
        %6439 = vmatpush1.bf16.msra.mxu0 0
        %6440 = vmatprep.subr.bf16.mxu0 0
        %6441 = vmatpush1.bf16.msra.mxu0 0
        %6442 = vmatprep.subr.bf16.mxu0 0
        %6443 = vmatpush1.bf16.msra.mxu0 0
        %6444 = vmatprep.subr.bf16.mxu0 0
        %6445 = vmatpush1.bf16.msra.mxu0 0
        %6446 = vmatprep.subr.bf16.mxu0 %v2598
        %6447 = vmatpush1.bf16.msra.mxu0 %v2597
        %6448 = vmatprep.subr.bf16.mxu0 %v2398
        %6449 = vmatpush1.bf16.msra.mxu0 %v2397
        %6450 = vmatprep.subr.bf16.mxu0 0
        %6451 = vmatpush2.bf16.msra.mxu0 0
        %6452 = vmatprep.subr.bf16.mxu0 0
        %6453 = vmatpush2.bf16.msra.mxu0 0
        %6454 = vmatprep.subr.bf16.mxu0 0
        %6455 = vmatpush2.bf16.msra.mxu0 0
        %6456 = vmatprep.subr.bf16.mxu0 0
        %6457 = vmatpush2.bf16.msra.mxu0 0
        %6458 = vmatprep.subr.bf16.mxu0 0
        %6459 = vmatpush2.bf16.msra.mxu0 0
        %6460 = vmatprep.subr.bf16.mxu0 0
        %6461 = vmatpush2.bf16.msra.mxu0 0
        %6462 = vmatprep.subr.bf16.mxu0 0
        %6463 = vmatpush2.bf16.msra.mxu0 0
        %6464 = vmatprep.subr.bf16.mxu0 0
        %6465 = vmatpush2.bf16.msra.mxu0 0
        %6466 = vmatprep.mubr.bf16.mxu0 0
        %6467 = vmatmul.mubr.bf16.gmra.mxu0 %v4136
        %v6468 = vpop.f32.mrf.mxu0
        %v6469 = vadd.f32 %v3586, %v6468
        %v6470 = vpop.f32.mrf.mxu0
        %v6471 = vadd.f32 %v3590, %v6470
        %v6472 = vpop.f32.mrf.mxu0
        %v6473 = vpop.f32.mrf.mxu0
        %6474 = vdwg.mxu0
        %6475 = vmatprep.subr.bf16.mxu0 0
        %6476 = vmatpush1.bf16.msra.mxu0 0
        %6477 = vmatprep.subr.bf16.mxu0 0
        %6478 = vmatpush1.bf16.msra.mxu0 0
        %6479 = vmatprep.subr.bf16.mxu0 0
        %6480 = vmatpush1.bf16.msra.mxu0 0
        %6481 = vmatprep.subr.bf16.mxu0 0
        %6482 = vmatpush1.bf16.msra.mxu0 0
        %6483 = vmatprep.subr.bf16.mxu0 0
        %6484 = vmatpush1.bf16.msra.mxu0 0
        %6485 = vmatprep.subr.bf16.mxu0 0
        %6486 = vmatpush1.bf16.msra.mxu0 0
        %6487 = vmatprep.subr.bf16.mxu0 %v2600
        %6488 = vmatpush1.bf16.msra.mxu0 %v2599
        %6489 = vmatprep.subr.bf16.mxu0 %v2400
        %6490 = vmatpush1.bf16.msra.mxu0 %v2399
        %6491 = vmatprep.subr.bf16.mxu0 0
        %6492 = vmatpush2.bf16.msra.mxu0 0
        %6493 = vmatprep.subr.bf16.mxu0 0
        %6494 = vmatpush2.bf16.msra.mxu0 0
        %6495 = vmatprep.subr.bf16.mxu0 0
        %6496 = vmatpush2.bf16.msra.mxu0 0
        %6497 = vmatprep.subr.bf16.mxu0 0
        %6498 = vmatpush2.bf16.msra.mxu0 0
        %6499 = vmatprep.subr.bf16.mxu0 0
        %6500 = vmatpush2.bf16.msra.mxu0 0
        %6501 = vmatprep.subr.bf16.mxu0 0
        %6502 = vmatpush2.bf16.msra.mxu0 0
        %6503 = vmatprep.subr.bf16.mxu0 0
        %6504 = vmatpush2.bf16.msra.mxu0 0
        %6505 = vmatprep.subr.bf16.mxu0 0
        %6506 = vmatpush2.bf16.msra.mxu0 0
        %6507 = vmatprep.mubr.bf16.mxu0 0
        %6508 = vmatmul.mubr.bf16.gmra.mxu0 %v4136
        %v6509 = vpop.f32.mrf.mxu0
        %v6510 = vadd.f32 %v3594, %v6509
        %v6511 = vpop.f32.mrf.mxu0
        %v6512 = vadd.f32 %v3598, %v6511
        %v6513 = vpop.f32.mrf.mxu0
        %v6514 = vpop.f32.mrf.mxu0
        %6515 = vdwg.mxu0
        %6516 = vmatprep.subr.bf16.mxu0 0
        %6517 = vmatpush1.bf16.msra.mxu0 0
        %6518 = vmatprep.subr.bf16.mxu0 0
        %6519 = vmatpush1.bf16.msra.mxu0 0
        %6520 = vmatprep.subr.bf16.mxu0 0
        %6521 = vmatpush1.bf16.msra.mxu0 0
        %6522 = vmatprep.subr.bf16.mxu0 0
        %6523 = vmatpush1.bf16.msra.mxu0 0
        %6524 = vmatprep.subr.bf16.mxu0 0
        %6525 = vmatpush1.bf16.msra.mxu0 0
        %6526 = vmatprep.subr.bf16.mxu0 0
        %6527 = vmatpush1.bf16.msra.mxu0 0
        %6528 = vmatprep.subr.bf16.mxu0 %v2602
        %6529 = vmatpush1.bf16.msra.mxu0 %v2601
        %6530 = vmatprep.subr.bf16.mxu0 %v2402
        %6531 = vmatpush1.bf16.msra.mxu0 %v2401
        %6532 = vmatprep.subr.bf16.mxu0 0
        %6533 = vmatpush2.bf16.msra.mxu0 0
        %6534 = vmatprep.subr.bf16.mxu0 0
        %6535 = vmatpush2.bf16.msra.mxu0 0
        %6536 = vmatprep.subr.bf16.mxu0 0
        %6537 = vmatpush2.bf16.msra.mxu0 0
        %6538 = vmatprep.subr.bf16.mxu0 0
        %6539 = vmatpush2.bf16.msra.mxu0 0
        %6540 = vmatprep.subr.bf16.mxu0 0
        %6541 = vmatpush2.bf16.msra.mxu0 0
        %6542 = vmatprep.subr.bf16.mxu0 0
        %6543 = vmatpush2.bf16.msra.mxu0 0
        %6544 = vmatprep.subr.bf16.mxu0 0
        %6545 = vmatpush2.bf16.msra.mxu0 0
        %6546 = vmatprep.subr.bf16.mxu0 0
        %6547 = vmatpush2.bf16.msra.mxu0 0
        %6548 = vmatprep.mubr.bf16.mxu0 0
        %6549 = vmatmul.mubr.bf16.gmra.mxu0 %v4136
        %v6550 = vpop.f32.mrf.mxu0
        %v6551 = vadd.f32 %v3602, %v6550
        %v6552 = vpop.f32.mrf.mxu0
        %v6553 = vadd.f32 %v3606, %v6552
        %v6554 = vpop.f32.mrf.mxu0
        %v6555 = vpop.f32.mrf.mxu0
        %6556 = vdwg.mxu0
        %6557 = vmatprep.subr.bf16.mxu0 0
        %6558 = vmatpush1.bf16.msra.mxu0 0
        %6559 = vmatprep.subr.bf16.mxu0 0
        %6560 = vmatpush1.bf16.msra.mxu0 0
        %6561 = vmatprep.subr.bf16.mxu0 0
        %6562 = vmatpush1.bf16.msra.mxu0 0
        %6563 = vmatprep.subr.bf16.mxu0 0
        %6564 = vmatpush1.bf16.msra.mxu0 0
        %6565 = vmatprep.subr.bf16.mxu0 0
        %6566 = vmatpush1.bf16.msra.mxu0 0
        %6567 = vmatprep.subr.bf16.mxu0 0
        %6568 = vmatpush1.bf16.msra.mxu0 0
        %6569 = vmatprep.subr.bf16.mxu0 %v2604
        %6570 = vmatpush1.bf16.msra.mxu0 %v2603
        %6571 = vmatprep.subr.bf16.mxu0 %v2404
        %6572 = vmatpush1.bf16.msra.mxu0 %v2403
        %6573 = vmatprep.subr.bf16.mxu0 0
        %6574 = vmatpush2.bf16.msra.mxu0 0
        %6575 = vmatprep.subr.bf16.mxu0 0
        %6576 = vmatpush2.bf16.msra.mxu0 0
        %6577 = vmatprep.subr.bf16.mxu0 0
        %6578 = vmatpush2.bf16.msra.mxu0 0
        %6579 = vmatprep.subr.bf16.mxu0 0
        %6580 = vmatpush2.bf16.msra.mxu0 0
        %6581 = vmatprep.subr.bf16.mxu0 0
        %6582 = vmatpush2.bf16.msra.mxu0 0
        %6583 = vmatprep.subr.bf16.mxu0 0
        %6584 = vmatpush2.bf16.msra.mxu0 0
        %6585 = vmatprep.subr.bf16.mxu0 0
        %6586 = vmatpush2.bf16.msra.mxu0 0
        %6587 = vmatprep.subr.bf16.mxu0 0
        %6588 = vmatpush2.bf16.msra.mxu0 0
        %6589 = vmatprep.mubr.bf16.mxu0 0
        %6590 = vmatmul.mubr.bf16.gmra.mxu0 %v4136
        %v6591 = vpop.f32.mrf.mxu0
        %v6592 = vadd.f32 %v3610, %v6591
        %v6593 = vpop.f32.mrf.mxu0
        %v6594 = vadd.f32 %v3614, %v6593
        %v6595 = vpop.f32.mrf.mxu0
        %v6596 = vpop.f32.mrf.mxu0
        %6597 = vdwg.mxu0
        %6598 = vmatprep.subr.bf16.mxu0 0
        %6599 = vmatpush1.bf16.msra.mxu0 0
        %6600 = vmatprep.subr.bf16.mxu0 0
        %6601 = vmatpush1.bf16.msra.mxu0 0
        %6602 = vmatprep.subr.bf16.mxu0 0
        %6603 = vmatpush1.bf16.msra.mxu0 0
        %6604 = vmatprep.subr.bf16.mxu0 0
        %6605 = vmatpush1.bf16.msra.mxu0 0
        %6606 = vmatprep.subr.bf16.mxu0 0
        %6607 = vmatpush1.bf16.msra.mxu0 0
        %6608 = vmatprep.subr.bf16.mxu0 0
        %6609 = vmatpush1.bf16.msra.mxu0 0
        %6610 = vmatprep.subr.bf16.mxu0 %v2606
        %6611 = vmatpush1.bf16.msra.mxu0 %v2605
        %6612 = vmatprep.subr.bf16.mxu0 %v2406
        %6613 = vmatpush1.bf16.msra.mxu0 %v2405
        %6614 = vmatprep.subr.bf16.mxu0 0
        %6615 = vmatpush2.bf16.msra.mxu0 0
        %6616 = vmatprep.subr.bf16.mxu0 0
        %6617 = vmatpush2.bf16.msra.mxu0 0
        %6618 = vmatprep.subr.bf16.mxu0 0
        %6619 = vmatpush2.bf16.msra.mxu0 0
        %6620 = vmatprep.subr.bf16.mxu0 0
        %6621 = vmatpush2.bf16.msra.mxu0 0
        %6622 = vmatprep.subr.bf16.mxu0 0
        %6623 = vmatpush2.bf16.msra.mxu0 0
        %6624 = vmatprep.subr.bf16.mxu0 0
        %6625 = vmatpush2.bf16.msra.mxu0 0
        %6626 = vmatprep.subr.bf16.mxu0 0
        %6627 = vmatpush2.bf16.msra.mxu0 0
        %6628 = vmatprep.subr.bf16.mxu0 0
        %6629 = vmatpush2.bf16.msra.mxu0 0
        %6630 = vmatprep.mubr.bf16.mxu0 0
        %6631 = vmatmul.mubr.bf16.gmra.mxu0 %v4136
        %v6632 = vpop.f32.mrf.mxu0
        %v6633 = vadd.f32 %v3618, %v6632
        %v6634 = vpop.f32.mrf.mxu0
        %v6635 = vadd.f32 %v3622, %v6634
        %v6636 = vpop.f32.mrf.mxu0
        %v6637 = vpop.f32.mrf.mxu0
        %6638 = vdwg.mxu0
        %6639 = vmatprep.subr.bf16.mxu0 0
        %6640 = vmatpush1.bf16.msra.mxu0 0
        %6641 = vmatprep.subr.bf16.mxu0 0
        %6642 = vmatpush1.bf16.msra.mxu0 0
        %6643 = vmatprep.subr.bf16.mxu0 0
        %6644 = vmatpush1.bf16.msra.mxu0 0
        %6645 = vmatprep.subr.bf16.mxu0 0
        %6646 = vmatpush1.bf16.msra.mxu0 0
        %6647 = vmatprep.subr.bf16.mxu0 0
        %6648 = vmatpush1.bf16.msra.mxu0 0
        %6649 = vmatprep.subr.bf16.mxu0 0
        %6650 = vmatpush1.bf16.msra.mxu0 0
        %6651 = vmatprep.subr.bf16.mxu0 %v2608
        %6652 = vmatpush1.bf16.msra.mxu0 %v2607
        %6653 = vmatprep.subr.bf16.mxu0 %v2408
        %6654 = vmatpush1.bf16.msra.mxu0 %v2407
        %6655 = vmatprep.subr.bf16.mxu0 0
        %6656 = vmatpush2.bf16.msra.mxu0 0
        %6657 = vmatprep.subr.bf16.mxu0 0
        %6658 = vmatpush2.bf16.msra.mxu0 0
        %6659 = vmatprep.subr.bf16.mxu0 0
        %6660 = vmatpush2.bf16.msra.mxu0 0
        %6661 = vmatprep.subr.bf16.mxu0 0
        %6662 = vmatpush2.bf16.msra.mxu0 0
        %6663 = vmatprep.subr.bf16.mxu0 0
        %6664 = vmatpush2.bf16.msra.mxu0 0
        %6665 = vmatprep.subr.bf16.mxu0 0
        %6666 = vmatpush2.bf16.msra.mxu0 0
        %6667 = vmatprep.subr.bf16.mxu0 0
        %6668 = vmatpush2.bf16.msra.mxu0 0
        %6669 = vmatprep.subr.bf16.mxu0 0
        %6670 = vmatpush2.bf16.msra.mxu0 0
        %6671 = vmatprep.mubr.bf16.mxu0 0
        %6672 = vmatmul.mubr.bf16.gmra.mxu0 %v4136
        %v6673 = vpop.f32.mrf.mxu0
        %v6674 = vadd.f32 %v3626, %v6673
        %v6675 = vpop.f32.mrf.mxu0
        %v6676 = vadd.f32 %v3630, %v6675
        %v6677 = vpop.f32.mrf.mxu0
        %v6678 = vpop.f32.mrf.mxu0
        %6679 = vdwg.mxu0
        %6680 = vmatprep.subr.bf16.mxu0 0
        %6681 = vmatpush1.bf16.msra.mxu0 0
        %6682 = vmatprep.subr.bf16.mxu0 0
        %6683 = vmatpush1.bf16.msra.mxu0 0
        %6684 = vmatprep.subr.bf16.mxu0 0
        %6685 = vmatpush1.bf16.msra.mxu0 0
        %6686 = vmatprep.subr.bf16.mxu0 0
        %6687 = vmatpush1.bf16.msra.mxu0 0
        %6688 = vmatprep.subr.bf16.mxu0 0
        %6689 = vmatpush1.bf16.msra.mxu0 0
        %6690 = vmatprep.subr.bf16.mxu0 0
        %6691 = vmatpush1.bf16.msra.mxu0 0
        %6692 = vmatprep.subr.bf16.mxu0 %v2610
        %6693 = vmatpush1.bf16.msra.mxu0 %v2609
        %6694 = vmatprep.subr.bf16.mxu0 %v2410
        %6695 = vmatpush1.bf16.msra.mxu0 %v2409
        %6696 = vmatprep.subr.bf16.mxu0 0
        %6697 = vmatpush2.bf16.msra.mxu0 0
        %6698 = vmatprep.subr.bf16.mxu0 0
        %6699 = vmatpush2.bf16.msra.mxu0 0
        %6700 = vmatprep.subr.bf16.mxu0 0
        %6701 = vmatpush2.bf16.msra.mxu0 0
        %6702 = vmatprep.subr.bf16.mxu0 0
        %6703 = vmatpush2.bf16.msra.mxu0 0
        %6704 = vmatprep.subr.bf16.mxu0 0
        %6705 = vmatpush2.bf16.msra.mxu0 0
        %6706 = vmatprep.subr.bf16.mxu0 0
        %6707 = vmatpush2.bf16.msra.mxu0 0
        %6708 = vmatprep.subr.bf16.mxu0 0
        %6709 = vmatpush2.bf16.msra.mxu0 0
        %6710 = vmatprep.subr.bf16.mxu0 0
        %6711 = vmatpush2.bf16.msra.mxu0 0
        %6712 = vmatprep.mubr.bf16.mxu0 0
        %6713 = vmatmul.mubr.bf16.gmra.mxu0 %v4136
        %v6714 = vpop.f32.mrf.mxu0
        %v6715 = vadd.f32 %v3634, %v6714
        %v6716 = vpop.f32.mrf.mxu0
        %v6717 = vadd.f32 %v3638, %v6716
        %v6718 = vpop.f32.mrf.mxu0
        %v6719 = vpop.f32.mrf.mxu0
        %6720 = vdwg.mxu0
        %6721 = vmatprep.subr.bf16.mxu0 0
        %6722 = vmatpush1.bf16.msra.mxu0 0
        %6723 = vmatprep.subr.bf16.mxu0 0
        %6724 = vmatpush1.bf16.msra.mxu0 0
        %6725 = vmatprep.subr.bf16.mxu0 0
        %6726 = vmatpush1.bf16.msra.mxu0 0
        %6727 = vmatprep.subr.bf16.mxu0 0
        %6728 = vmatpush1.bf16.msra.mxu0 0
        %6729 = vmatprep.subr.bf16.mxu0 0
        %6730 = vmatpush1.bf16.msra.mxu0 0
        %6731 = vmatprep.subr.bf16.mxu0 0
        %6732 = vmatpush1.bf16.msra.mxu0 0
        %6733 = vmatprep.subr.bf16.mxu0 %v2612
        %6734 = vmatpush1.bf16.msra.mxu0 %v2611
        %6735 = vmatprep.subr.bf16.mxu0 %v2412
        %6736 = vmatpush1.bf16.msra.mxu0 %v2411
        %6737 = vmatprep.subr.bf16.mxu0 0
        %6738 = vmatpush2.bf16.msra.mxu0 0
        %6739 = vmatprep.subr.bf16.mxu0 0
        %6740 = vmatpush2.bf16.msra.mxu0 0
        %6741 = vmatprep.subr.bf16.mxu0 0
        %6742 = vmatpush2.bf16.msra.mxu0 0
        %6743 = vmatprep.subr.bf16.mxu0 0
        %6744 = vmatpush2.bf16.msra.mxu0 0
        %6745 = vmatprep.subr.bf16.mxu0 0
        %6746 = vmatpush2.bf16.msra.mxu0 0
        %6747 = vmatprep.subr.bf16.mxu0 0
        %6748 = vmatpush2.bf16.msra.mxu0 0
        %6749 = vmatprep.subr.bf16.mxu0 0
        %6750 = vmatpush2.bf16.msra.mxu0 0
        %6751 = vmatprep.subr.bf16.mxu0 0
        %6752 = vmatpush2.bf16.msra.mxu0 0
        %6753 = vmatprep.mubr.bf16.mxu0 0
        %6754 = vmatmul.mubr.bf16.gmra.mxu0 %v4136
        %v6755 = vpop.f32.mrf.mxu0
        %v6756 = vadd.f32 %v3642, %v6755
        %v6757 = vpop.f32.mrf.mxu0
        %v6758 = vadd.f32 %v3646, %v6757
        %v6759 = vpop.f32.mrf.mxu0
        %v6760 = vpop.f32.mrf.mxu0
        %6761 = vdwg.mxu0
        %6762 = vmatprep.subr.bf16.mxu0 0
        %6763 = vmatpush1.bf16.msra.mxu0 0
        %6764 = vmatprep.subr.bf16.mxu0 0
        %6765 = vmatpush1.bf16.msra.mxu0 0
        %6766 = vmatprep.subr.bf16.mxu0 0
        %6767 = vmatpush1.bf16.msra.mxu0 0
        %6768 = vmatprep.subr.bf16.mxu0 0
        %6769 = vmatpush1.bf16.msra.mxu0 0
        %6770 = vmatprep.subr.bf16.mxu0 0
        %6771 = vmatpush1.bf16.msra.mxu0 0
        %6772 = vmatprep.subr.bf16.mxu0 0
        %6773 = vmatpush1.bf16.msra.mxu0 0
        %6774 = vmatprep.subr.bf16.mxu0 %v2614
        %6775 = vmatpush1.bf16.msra.mxu0 %v2613
        %6776 = vmatprep.subr.bf16.mxu0 %v2414
        %6777 = vmatpush1.bf16.msra.mxu0 %v2413
        %6778 = vmatprep.subr.bf16.mxu0 0
        %6779 = vmatpush2.bf16.msra.mxu0 0
        %6780 = vmatprep.subr.bf16.mxu0 0
        %6781 = vmatpush2.bf16.msra.mxu0 0
        %6782 = vmatprep.subr.bf16.mxu0 0
        %6783 = vmatpush2.bf16.msra.mxu0 0
        %6784 = vmatprep.subr.bf16.mxu0 0
        %6785 = vmatpush2.bf16.msra.mxu0 0
        %6786 = vmatprep.subr.bf16.mxu0 0
        %6787 = vmatpush2.bf16.msra.mxu0 0
        %6788 = vmatprep.subr.bf16.mxu0 0
        %6789 = vmatpush2.bf16.msra.mxu0 0
        %6790 = vmatprep.subr.bf16.mxu0 0
        %6791 = vmatpush2.bf16.msra.mxu0 0
        %6792 = vmatprep.subr.bf16.mxu0 0
        %6793 = vmatpush2.bf16.msra.mxu0 0
        %6794 = vmatprep.mubr.bf16.mxu0 0
        %6795 = vmatmul.mubr.bf16.gmra.mxu0 %v4136
        %v6796 = vpop.f32.mrf.mxu0
        %v6797 = vadd.f32 %v3650, %v6796
        %v6798 = vpop.f32.mrf.mxu0
        %v6799 = vadd.f32 %v3654, %v6798
        %v6800 = vpop.f32.mrf.mxu0
        %v6801 = vpop.f32.mrf.mxu0
        %6802 = vdwg.mxu0
        %6803 = vmatprep.subr.bf16.mxu0 0
        %6804 = vmatpush1.bf16.msra.mxu0 0
        %6805 = vmatprep.subr.bf16.mxu0 0
        %6806 = vmatpush1.bf16.msra.mxu0 0
        %6807 = vmatprep.subr.bf16.mxu0 0
        %6808 = vmatpush1.bf16.msra.mxu0 0
        %6809 = vmatprep.subr.bf16.mxu0 0
        %6810 = vmatpush1.bf16.msra.mxu0 0
        %6811 = vmatprep.subr.bf16.mxu0 0
        %6812 = vmatpush1.bf16.msra.mxu0 0
        %6813 = vmatprep.subr.bf16.mxu0 0
        %6814 = vmatpush1.bf16.msra.mxu0 0
        %6815 = vmatprep.subr.bf16.mxu0 %v2616
        %6816 = vmatpush1.bf16.msra.mxu0 %v2615
        %6817 = vmatprep.subr.bf16.mxu0 %v2416
        %6818 = vmatpush1.bf16.msra.mxu0 %v2415
        %6819 = vmatprep.subr.bf16.mxu0 0
        %6820 = vmatpush2.bf16.msra.mxu0 0
        %6821 = vmatprep.subr.bf16.mxu0 0
        %6822 = vmatpush2.bf16.msra.mxu0 0
        %6823 = vmatprep.subr.bf16.mxu0 0
        %6824 = vmatpush2.bf16.msra.mxu0 0
        %6825 = vmatprep.subr.bf16.mxu0 0
        %6826 = vmatpush2.bf16.msra.mxu0 0
        %6827 = vmatprep.subr.bf16.mxu0 0
        %6828 = vmatpush2.bf16.msra.mxu0 0
        %6829 = vmatprep.subr.bf16.mxu0 0
        %6830 = vmatpush2.bf16.msra.mxu0 0
        %6831 = vmatprep.subr.bf16.mxu0 0
        %6832 = vmatpush2.bf16.msra.mxu0 0
        %6833 = vmatprep.subr.bf16.mxu0 0
        %6834 = vmatpush2.bf16.msra.mxu0 0
        %6835 = vmatprep.mubr.bf16.mxu0 0
        %6836 = vmatmul.mubr.bf16.gmra.mxu0 %v4136
        %v6837 = vpop.f32.mrf.mxu0
        %v6838 = vadd.f32 %v3658, %v6837
        %v6839 = vpop.f32.mrf.mxu0
        %v6840 = vadd.f32 %v3662, %v6839
        %v6841 = vpop.f32.mrf.mxu0
        %v6842 = vpop.f32.mrf.mxu0
        %6843 = vdwg.mxu0
        %6844 = vmatprep.subr.bf16.mxu0 0
        %6845 = vmatpush1.bf16.msra.mxu0 0
        %6846 = vmatprep.subr.bf16.mxu0 0
        %6847 = vmatpush1.bf16.msra.mxu0 0
        %6848 = vmatprep.subr.bf16.mxu0 0
        %6849 = vmatpush1.bf16.msra.mxu0 0
        %6850 = vmatprep.subr.bf16.mxu0 0
        %6851 = vmatpush1.bf16.msra.mxu0 0
        %6852 = vmatprep.subr.bf16.mxu0 0
        %6853 = vmatpush1.bf16.msra.mxu0 0
        %6854 = vmatprep.subr.bf16.mxu0 0
        %6855 = vmatpush1.bf16.msra.mxu0 0
        %6856 = vmatprep.subr.bf16.mxu0 %v2618
        %6857 = vmatpush1.bf16.msra.mxu0 %v2617
        %6858 = vmatprep.subr.bf16.mxu0 %v2418
        %6859 = vmatpush1.bf16.msra.mxu0 %v2417
        %6860 = vmatprep.subr.bf16.mxu0 0
        %6861 = vmatpush2.bf16.msra.mxu0 0
        %6862 = vmatprep.subr.bf16.mxu0 0
        %6863 = vmatpush2.bf16.msra.mxu0 0
        %6864 = vmatprep.subr.bf16.mxu0 0
        %6865 = vmatpush2.bf16.msra.mxu0 0
        %6866 = vmatprep.subr.bf16.mxu0 0
        %6867 = vmatpush2.bf16.msra.mxu0 0
        %6868 = vmatprep.subr.bf16.mxu0 0
        %6869 = vmatpush2.bf16.msra.mxu0 0
        %6870 = vmatprep.subr.bf16.mxu0 0
        %6871 = vmatpush2.bf16.msra.mxu0 0
        %6872 = vmatprep.subr.bf16.mxu0 0
        %6873 = vmatpush2.bf16.msra.mxu0 0
        %6874 = vmatprep.subr.bf16.mxu0 0
        %6875 = vmatpush2.bf16.msra.mxu0 0
        %6876 = vmatprep.mubr.bf16.mxu0 0
        %6877 = vmatmul.mubr.bf16.gmra.mxu0 %v4136
        %v6878 = vpop.f32.mrf.mxu0
        %v6879 = vadd.f32 %v3666, %v6878
        %v6880 = vpop.f32.mrf.mxu0
        %v6881 = vadd.f32 %v3670, %v6880
        %v6882 = vpop.f32.mrf.mxu0
        %v6883 = vpop.f32.mrf.mxu0
        %6884 = vdwg.mxu0
        %6885 = vmatprep.subr.bf16.mxu0 0
        %6886 = vmatpush1.bf16.msra.mxu0 0
        %6887 = vmatprep.subr.bf16.mxu0 0
        %6888 = vmatpush1.bf16.msra.mxu0 0
        %6889 = vmatprep.subr.bf16.mxu0 0
        %6890 = vmatpush1.bf16.msra.mxu0 0
        %6891 = vmatprep.subr.bf16.mxu0 0
        %6892 = vmatpush1.bf16.msra.mxu0 0
        %6893 = vmatprep.subr.bf16.mxu0 0
        %6894 = vmatpush1.bf16.msra.mxu0 0
        %6895 = vmatprep.subr.bf16.mxu0 0
        %6896 = vmatpush1.bf16.msra.mxu0 0
        %6897 = vmatprep.subr.bf16.mxu0 %v2620
        %6898 = vmatpush1.bf16.msra.mxu0 %v2619
        %6899 = vmatprep.subr.bf16.mxu0 %v2420
        %6900 = vmatpush1.bf16.msra.mxu0 %v2419
        %6901 = vmatprep.subr.bf16.mxu0 0
        %6902 = vmatpush2.bf16.msra.mxu0 0
        %6903 = vmatprep.subr.bf16.mxu0 0
        %6904 = vmatpush2.bf16.msra.mxu0 0
        %6905 = vmatprep.subr.bf16.mxu0 0
        %6906 = vmatpush2.bf16.msra.mxu0 0
        %6907 = vmatprep.subr.bf16.mxu0 0
        %6908 = vmatpush2.bf16.msra.mxu0 0
        %6909 = vmatprep.subr.bf16.mxu0 0
        %6910 = vmatpush2.bf16.msra.mxu0 0
        %6911 = vmatprep.subr.bf16.mxu0 0
        %6912 = vmatpush2.bf16.msra.mxu0 0
        %6913 = vmatprep.subr.bf16.mxu0 0
        %6914 = vmatpush2.bf16.msra.mxu0 0
        %6915 = vmatprep.subr.bf16.mxu0 0
        %6916 = vmatpush2.bf16.msra.mxu0 0
        %6917 = vmatprep.mubr.bf16.mxu0 0
        %6918 = vmatmul.mubr.bf16.gmra.mxu0 %v4136
        %v6919 = vpop.f32.mrf.mxu0
        %v6920 = vadd.f32 %v3674, %v6919
        %v6921 = vpop.f32.mrf.mxu0
        %v6922 = vadd.f32 %v3678, %v6921
        %v6923 = vpop.f32.mrf.mxu0
        %v6924 = vpop.f32.mrf.mxu0
        %6925 = vdwg.mxu0
        %6926 = vmatprep.subr.bf16.mxu0 0
        %6927 = vmatpush1.bf16.msra.mxu0 0
        %6928 = vmatprep.subr.bf16.mxu0 0
        %6929 = vmatpush1.bf16.msra.mxu0 0
        %6930 = vmatprep.subr.bf16.mxu0 0
        %6931 = vmatpush1.bf16.msra.mxu0 0
        %6932 = vmatprep.subr.bf16.mxu0 0
        %6933 = vmatpush1.bf16.msra.mxu0 0
        %6934 = vmatprep.subr.bf16.mxu0 0
        %6935 = vmatpush1.bf16.msra.mxu0 0
        %6936 = vmatprep.subr.bf16.mxu0 0
        %6937 = vmatpush1.bf16.msra.mxu0 0
        %6938 = vmatprep.subr.bf16.mxu0 %v2622
        %6939 = vmatpush1.bf16.msra.mxu0 %v2621
        %6940 = vmatprep.subr.bf16.mxu0 %v2422
        %6941 = vmatpush1.bf16.msra.mxu0 %v2421
        %6942 = vmatprep.subr.bf16.mxu0 0
        %6943 = vmatpush2.bf16.msra.mxu0 0
        %6944 = vmatprep.subr.bf16.mxu0 0
        %6945 = vmatpush2.bf16.msra.mxu0 0
        %6946 = vmatprep.subr.bf16.mxu0 0
        %6947 = vmatpush2.bf16.msra.mxu0 0
        %6948 = vmatprep.subr.bf16.mxu0 0
        %6949 = vmatpush2.bf16.msra.mxu0 0
        %6950 = vmatprep.subr.bf16.mxu0 0
        %6951 = vmatpush2.bf16.msra.mxu0 0
        %6952 = vmatprep.subr.bf16.mxu0 0
        %6953 = vmatpush2.bf16.msra.mxu0 0
        %6954 = vmatprep.subr.bf16.mxu0 0
        %6955 = vmatpush2.bf16.msra.mxu0 0
        %6956 = vmatprep.subr.bf16.mxu0 0
        %6957 = vmatpush2.bf16.msra.mxu0 0
        %6958 = vmatprep.mubr.bf16.mxu0 0
        %6959 = vmatmul.mubr.bf16.gmra.mxu0 %v4136
        %v6960 = vpop.f32.mrf.mxu0
        %v6961 = vadd.f32 %v3682, %v6960
        %v6962 = vpop.f32.mrf.mxu0
        %v6963 = vadd.f32 %v3686, %v6962
        %v6964 = vpop.f32.mrf.mxu0
        %v6965 = vpop.f32.mrf.mxu0
        %6966 = vdwg.mxu0
        %6967 = vmatprep.subr.bf16.mxu0 0
        %6968 = vmatpush1.bf16.msra.mxu0 0
        %6969 = vmatprep.subr.bf16.mxu0 0
        %6970 = vmatpush1.bf16.msra.mxu0 0
        %6971 = vmatprep.subr.bf16.mxu0 0
        %6972 = vmatpush1.bf16.msra.mxu0 0
        %6973 = vmatprep.subr.bf16.mxu0 0
        %6974 = vmatpush1.bf16.msra.mxu0 0
        %6975 = vmatprep.subr.bf16.mxu0 0
        %6976 = vmatpush1.bf16.msra.mxu0 0
        %6977 = vmatprep.subr.bf16.mxu0 0
        %6978 = vmatpush1.bf16.msra.mxu0 0
        %6979 = vmatprep.subr.bf16.mxu0 %v2624
        %6980 = vmatpush1.bf16.msra.mxu0 %v2623
        %6981 = vmatprep.subr.bf16.mxu0 %v2424
        %6982 = vmatpush1.bf16.msra.mxu0 %v2423
        %6983 = vmatprep.subr.bf16.mxu0 0
        %6984 = vmatpush2.bf16.msra.mxu0 0
        %6985 = vmatprep.subr.bf16.mxu0 0
        %6986 = vmatpush2.bf16.msra.mxu0 0
        %6987 = vmatprep.subr.bf16.mxu0 0
        %6988 = vmatpush2.bf16.msra.mxu0 0
        %6989 = vmatprep.subr.bf16.mxu0 0
        %6990 = vmatpush2.bf16.msra.mxu0 0
        %6991 = vmatprep.subr.bf16.mxu0 0
        %6992 = vmatpush2.bf16.msra.mxu0 0
        %6993 = vmatprep.subr.bf16.mxu0 0
        %6994 = vmatpush2.bf16.msra.mxu0 0
        %6995 = vmatprep.subr.bf16.mxu0 0
        %6996 = vmatpush2.bf16.msra.mxu0 0
        %6997 = vmatprep.subr.bf16.mxu0 0
        %6998 = vmatpush2.bf16.msra.mxu0 0
        %6999 = vmatprep.mubr.bf16.mxu0 0
        %7000 = vmatmul.mubr.bf16.gmra.mxu0 %v4136
        %v7001 = vpop.f32.mrf.mxu0
        %v7002 = vadd.f32 %v3690, %v7001
        %v7003 = vpop.f32.mrf.mxu0
        %v7004 = vadd.f32 %v3694, %v7003
        %v7005 = vpop.f32.mrf.mxu0
        %v7006 = vpop.f32.mrf.mxu0
        %7007 = vdwg.mxu0
        %7008 = vmatprep.subr.bf16.mxu0 0
        %7009 = vmatpush1.bf16.msra.mxu0 0
        %7010 = vmatprep.subr.bf16.mxu0 0
        %7011 = vmatpush1.bf16.msra.mxu0 0
        %7012 = vmatprep.subr.bf16.mxu0 0
        %7013 = vmatpush1.bf16.msra.mxu0 0
        %7014 = vmatprep.subr.bf16.mxu0 0
        %7015 = vmatpush1.bf16.msra.mxu0 0
        %7016 = vmatprep.subr.bf16.mxu0 0
        %7017 = vmatpush1.bf16.msra.mxu0 0
        %7018 = vmatprep.subr.bf16.mxu0 0
        %7019 = vmatpush1.bf16.msra.mxu0 0
        %7020 = vmatprep.subr.bf16.mxu0 %v2626
        %7021 = vmatpush1.bf16.msra.mxu0 %v2625
        %7022 = vmatprep.subr.bf16.mxu0 %v2426
        %7023 = vmatpush1.bf16.msra.mxu0 %v2425
        %7024 = vmatprep.subr.bf16.mxu0 0
        %7025 = vmatpush2.bf16.msra.mxu0 0
        %7026 = vmatprep.subr.bf16.mxu0 0
        %7027 = vmatpush2.bf16.msra.mxu0 0
        %7028 = vmatprep.subr.bf16.mxu0 0
        %7029 = vmatpush2.bf16.msra.mxu0 0
        %7030 = vmatprep.subr.bf16.mxu0 0
        %7031 = vmatpush2.bf16.msra.mxu0 0
        %7032 = vmatprep.subr.bf16.mxu0 0
        %7033 = vmatpush2.bf16.msra.mxu0 0
        %7034 = vmatprep.subr.bf16.mxu0 0
        %7035 = vmatpush2.bf16.msra.mxu0 0
        %7036 = vmatprep.subr.bf16.mxu0 0
        %7037 = vmatpush2.bf16.msra.mxu0 0
        %7038 = vmatprep.subr.bf16.mxu0 0
        %7039 = vmatpush2.bf16.msra.mxu0 0
        %7040 = vmatprep.mubr.bf16.mxu0 0
        %7041 = vmatmul.mubr.bf16.gmra.mxu0 %v4136
        %v7042 = vpop.f32.mrf.mxu0
        %v7043 = vadd.f32 %v3698, %v7042
        %v7044 = vpop.f32.mrf.mxu0
        %v7045 = vadd.f32 %v3702, %v7044
        %v7046 = vpop.f32.mrf.mxu0
        %v7047 = vpop.f32.mrf.mxu0
        %7048 = vdwg.mxu0
        %7049 = vmatprep.subr.bf16.mxu0 0
        %7050 = vmatpush1.bf16.msra.mxu0 0
        %7051 = vmatprep.subr.bf16.mxu0 0
        %7052 = vmatpush1.bf16.msra.mxu0 0
        %7053 = vmatprep.subr.bf16.mxu0 0
        %7054 = vmatpush1.bf16.msra.mxu0 0
        %7055 = vmatprep.subr.bf16.mxu0 0
        %7056 = vmatpush1.bf16.msra.mxu0 0
        %7057 = vmatprep.subr.bf16.mxu0 0
        %7058 = vmatpush1.bf16.msra.mxu0 0
        %7059 = vmatprep.subr.bf16.mxu0 0
        %7060 = vmatpush1.bf16.msra.mxu0 0
        %7061 = vmatprep.subr.bf16.mxu0 %v2628
        %7062 = vmatpush1.bf16.msra.mxu0 %v2627
        %7063 = vmatprep.subr.bf16.mxu0 %v2428
        %7064 = vmatpush1.bf16.msra.mxu0 %v2427
        %7065 = vmatprep.subr.bf16.mxu0 0
        %7066 = vmatpush2.bf16.msra.mxu0 0
        %7067 = vmatprep.subr.bf16.mxu0 0
        %7068 = vmatpush2.bf16.msra.mxu0 0
        %7069 = vmatprep.subr.bf16.mxu0 0
        %7070 = vmatpush2.bf16.msra.mxu0 0
        %7071 = vmatprep.subr.bf16.mxu0 0
        %7072 = vmatpush2.bf16.msra.mxu0 0
        %7073 = vmatprep.subr.bf16.mxu0 0
        %7074 = vmatpush2.bf16.msra.mxu0 0
        %7075 = vmatprep.subr.bf16.mxu0 0
        %7076 = vmatpush2.bf16.msra.mxu0 0
        %7077 = vmatprep.subr.bf16.mxu0 0
        %7078 = vmatpush2.bf16.msra.mxu0 0
        %7079 = vmatprep.subr.bf16.mxu0 0
        %7080 = vmatpush2.bf16.msra.mxu0 0
        %7081 = vmatprep.mubr.bf16.mxu0 0
        %7082 = vmatmul.mubr.bf16.gmra.mxu0 %v4136
        %v7083 = vpop.f32.mrf.mxu0
        %v7084 = vadd.f32 %v3706, %v7083
        %v7085 = vpop.f32.mrf.mxu0
        %v7086 = vadd.f32 %v3710, %v7085
        %v7087 = vpop.f32.mrf.mxu0
        %v7088 = vpop.f32.mrf.mxu0
        %7089 = vdwg.mxu0
        %7090 = vmatprep.subr.bf16.mxu0 0
        %7091 = vmatpush1.bf16.msra.mxu0 0
        %7092 = vmatprep.subr.bf16.mxu0 0
        %7093 = vmatpush1.bf16.msra.mxu0 0
        %7094 = vmatprep.subr.bf16.mxu0 0
        %7095 = vmatpush1.bf16.msra.mxu0 0
        %7096 = vmatprep.subr.bf16.mxu0 0
        %7097 = vmatpush1.bf16.msra.mxu0 0
        %7098 = vmatprep.subr.bf16.mxu0 0
        %7099 = vmatpush1.bf16.msra.mxu0 0
        %7100 = vmatprep.subr.bf16.mxu0 0
        %7101 = vmatpush1.bf16.msra.mxu0 0
        %7102 = vmatprep.subr.bf16.mxu0 %v2630
        %7103 = vmatpush1.bf16.msra.mxu0 %v2629
        %7104 = vmatprep.subr.bf16.mxu0 %v2430
        %7105 = vmatpush1.bf16.msra.mxu0 %v2429
        %7106 = vmatprep.subr.bf16.mxu0 0
        %7107 = vmatpush2.bf16.msra.mxu0 0
        %7108 = vmatprep.subr.bf16.mxu0 0
        %7109 = vmatpush2.bf16.msra.mxu0 0
        %7110 = vmatprep.subr.bf16.mxu0 0
        %7111 = vmatpush2.bf16.msra.mxu0 0
        %7112 = vmatprep.subr.bf16.mxu0 0
        %7113 = vmatpush2.bf16.msra.mxu0 0
        %7114 = vmatprep.subr.bf16.mxu0 0
        %7115 = vmatpush2.bf16.msra.mxu0 0
        %7116 = vmatprep.subr.bf16.mxu0 0
        %7117 = vmatpush2.bf16.msra.mxu0 0
        %7118 = vmatprep.subr.bf16.mxu0 0
        %7119 = vmatpush2.bf16.msra.mxu0 0
        %7120 = vmatprep.subr.bf16.mxu0 0
        %7121 = vmatpush2.bf16.msra.mxu0 0
        %7122 = vmatprep.mubr.bf16.mxu0 0
        %7123 = vmatmul.mubr.bf16.gmra.mxu0 %v4136
        %v7124 = vpop.f32.mrf.mxu0
        %v7125 = vadd.f32 %v3714, %v7124
        %v7126 = vpop.f32.mrf.mxu0
        %v7127 = vadd.f32 %v3718, %v7126
        %v7128 = vpop.f32.mrf.mxu0
        %v7129 = vpop.f32.mrf.mxu0
        %7130 = vdwg.mxu0
        %7131 = vmatprep.subr.bf16.mxu0 0
        %7132 = vmatpush1.bf16.msra.mxu0 0
        %7133 = vmatprep.subr.bf16.mxu0 0
        %7134 = vmatpush1.bf16.msra.mxu0 0
        %7135 = vmatprep.subr.bf16.mxu0 0
        %7136 = vmatpush1.bf16.msra.mxu0 0
        %7137 = vmatprep.subr.bf16.mxu0 0
        %7138 = vmatpush1.bf16.msra.mxu0 0
        %7139 = vmatprep.subr.bf16.mxu0 0
        %7140 = vmatpush1.bf16.msra.mxu0 0
        %7141 = vmatprep.subr.bf16.mxu0 0
        %7142 = vmatpush1.bf16.msra.mxu0 0
        %7143 = vmatprep.subr.bf16.mxu0 %v2632
        %7144 = vmatpush1.bf16.msra.mxu0 %v2631
        %7145 = vmatprep.subr.bf16.mxu0 %v2432
        %7146 = vmatpush1.bf16.msra.mxu0 %v2431
        %7147 = vmatprep.subr.bf16.mxu0 0
        %7148 = vmatpush2.bf16.msra.mxu0 0
        %7149 = vmatprep.subr.bf16.mxu0 0
        %7150 = vmatpush2.bf16.msra.mxu0 0
        %7151 = vmatprep.subr.bf16.mxu0 0
        %7152 = vmatpush2.bf16.msra.mxu0 0
        %7153 = vmatprep.subr.bf16.mxu0 0
        %7154 = vmatpush2.bf16.msra.mxu0 0
        %7155 = vmatprep.subr.bf16.mxu0 0
        %7156 = vmatpush2.bf16.msra.mxu0 0
        %7157 = vmatprep.subr.bf16.mxu0 0
        %7158 = vmatpush2.bf16.msra.mxu0 0
        %7159 = vmatprep.subr.bf16.mxu0 0
        %7160 = vmatpush2.bf16.msra.mxu0 0
        %7161 = vmatprep.subr.bf16.mxu0 0
        %7162 = vmatpush2.bf16.msra.mxu0 0
        %7163 = vmatprep.mubr.bf16.mxu0 0
        %7164 = vmatmul.mubr.bf16.gmra.mxu0 %v4136
        %v7165 = vpop.f32.mrf.mxu0
        %v7166 = vadd.f32 %v3722, %v7165
        %v7167 = vpop.f32.mrf.mxu0
        %v7168 = vadd.f32 %v3726, %v7167
        %v7169 = vpop.f32.mrf.mxu0
        %v7170 = vpop.f32.mrf.mxu0
        %7171 = vdwg.mxu0
        %7172 = vmatprep.subr.bf16.mxu0 0
        %7173 = vmatpush1.bf16.msra.mxu0 0
        %7174 = vmatprep.subr.bf16.mxu0 0
        %7175 = vmatpush1.bf16.msra.mxu0 0
        %7176 = vmatprep.subr.bf16.mxu0 0
        %7177 = vmatpush1.bf16.msra.mxu0 0
        %7178 = vmatprep.subr.bf16.mxu0 0
        %7179 = vmatpush1.bf16.msra.mxu0 0
        %7180 = vmatprep.subr.bf16.mxu0 0
        %7181 = vmatpush1.bf16.msra.mxu0 0
        %7182 = vmatprep.subr.bf16.mxu0 0
        %7183 = vmatpush1.bf16.msra.mxu0 0
        %7184 = vmatprep.subr.bf16.mxu0 %v2634
        %7185 = vmatpush1.bf16.msra.mxu0 %v2633
        %7186 = vmatprep.subr.bf16.mxu0 %v2434
        %7187 = vmatpush1.bf16.msra.mxu0 %v2433
        %7188 = vmatprep.subr.bf16.mxu0 0
        %7189 = vmatpush2.bf16.msra.mxu0 0
        %7190 = vmatprep.subr.bf16.mxu0 0
        %7191 = vmatpush2.bf16.msra.mxu0 0
        %7192 = vmatprep.subr.bf16.mxu0 0
        %7193 = vmatpush2.bf16.msra.mxu0 0
        %7194 = vmatprep.subr.bf16.mxu0 0
        %7195 = vmatpush2.bf16.msra.mxu0 0
        %7196 = vmatprep.subr.bf16.mxu0 0
        %7197 = vmatpush2.bf16.msra.mxu0 0
        %7198 = vmatprep.subr.bf16.mxu0 0
        %7199 = vmatpush2.bf16.msra.mxu0 0
        %7200 = vmatprep.subr.bf16.mxu0 0
        %7201 = vmatpush2.bf16.msra.mxu0 0
        %7202 = vmatprep.subr.bf16.mxu0 0
        %7203 = vmatpush2.bf16.msra.mxu0 0
        %7204 = vmatprep.mubr.bf16.mxu0 0
        %7205 = vmatmul.mubr.bf16.gmra.mxu0 %v4136
        %v7206 = vpop.f32.mrf.mxu0
        %v7207 = vadd.f32 %v3730, %v7206
        %v7208 = vpop.f32.mrf.mxu0
        %v7209 = vadd.f32 %v3734, %v7208
        %v7210 = vpop.f32.mrf.mxu0
        %v7211 = vpop.f32.mrf.mxu0
        %7212 = vdwg.mxu0
        %7213 = vmatprep.subr.bf16.mxu0 0
        %7214 = vmatpush1.bf16.msra.mxu0 0
        %7215 = vmatprep.subr.bf16.mxu0 0
        %7216 = vmatpush1.bf16.msra.mxu0 0
        %7217 = vmatprep.subr.bf16.mxu0 0
        %7218 = vmatpush1.bf16.msra.mxu0 0
        %7219 = vmatprep.subr.bf16.mxu0 0
        %7220 = vmatpush1.bf16.msra.mxu0 0
        %7221 = vmatprep.subr.bf16.mxu0 0
        %7222 = vmatpush1.bf16.msra.mxu0 0
        %7223 = vmatprep.subr.bf16.mxu0 0
        %7224 = vmatpush1.bf16.msra.mxu0 0
        %7225 = vmatprep.subr.bf16.mxu0 %v2636
        %7226 = vmatpush1.bf16.msra.mxu0 %v2635
        %7227 = vmatprep.subr.bf16.mxu0 %v2436
        %7228 = vmatpush1.bf16.msra.mxu0 %v2435
        %7229 = vmatprep.subr.bf16.mxu0 0
        %7230 = vmatpush2.bf16.msra.mxu0 0
        %7231 = vmatprep.subr.bf16.mxu0 0
        %7232 = vmatpush2.bf16.msra.mxu0 0
        %7233 = vmatprep.subr.bf16.mxu0 0
        %7234 = vmatpush2.bf16.msra.mxu0 0
        %7235 = vmatprep.subr.bf16.mxu0 0
        %7236 = vmatpush2.bf16.msra.mxu0 0
        %7237 = vmatprep.subr.bf16.mxu0 0
        %7238 = vmatpush2.bf16.msra.mxu0 0
        %7239 = vmatprep.subr.bf16.mxu0 0
        %7240 = vmatpush2.bf16.msra.mxu0 0
        %7241 = vmatprep.subr.bf16.mxu0 0
        %7242 = vmatpush2.bf16.msra.mxu0 0
        %7243 = vmatprep.subr.bf16.mxu0 0
        %7244 = vmatpush2.bf16.msra.mxu0 0
        %7245 = vmatprep.mubr.bf16.mxu0 0
        %7246 = vmatmul.mubr.bf16.gmra.mxu0 %v4136
        %v7247 = vpop.f32.mrf.mxu0
        %v7248 = vadd.f32 %v3738, %v7247
        %v7249 = vpop.f32.mrf.mxu0
        %v7250 = vadd.f32 %v3742, %v7249
        %v7251 = vpop.f32.mrf.mxu0
        %v7252 = vpop.f32.mrf.mxu0
        %7253 = vdwg.mxu0
        %7254 = vmatprep.subr.bf16.mxu0 0
        %7255 = vmatpush1.bf16.msra.mxu0 0
        %7256 = vmatprep.subr.bf16.mxu0 0
        %7257 = vmatpush1.bf16.msra.mxu0 0
        %7258 = vmatprep.subr.bf16.mxu0 0
        %7259 = vmatpush1.bf16.msra.mxu0 0
        %7260 = vmatprep.subr.bf16.mxu0 0
        %7261 = vmatpush1.bf16.msra.mxu0 0
        %7262 = vmatprep.subr.bf16.mxu0 0
        %7263 = vmatpush1.bf16.msra.mxu0 0
        %7264 = vmatprep.subr.bf16.mxu0 0
        %7265 = vmatpush1.bf16.msra.mxu0 0
        %7266 = vmatprep.subr.bf16.mxu0 %v2638
        %7267 = vmatpush1.bf16.msra.mxu0 %v2637
        %7268 = vmatprep.subr.bf16.mxu0 %v2438
        %7269 = vmatpush1.bf16.msra.mxu0 %v2437
        %7270 = vmatprep.subr.bf16.mxu0 0
        %7271 = vmatpush2.bf16.msra.mxu0 0
        %7272 = vmatprep.subr.bf16.mxu0 0
        %7273 = vmatpush2.bf16.msra.mxu0 0
        %7274 = vmatprep.subr.bf16.mxu0 0
        %7275 = vmatpush2.bf16.msra.mxu0 0
        %7276 = vmatprep.subr.bf16.mxu0 0
        %7277 = vmatpush2.bf16.msra.mxu0 0
        %7278 = vmatprep.subr.bf16.mxu0 0
        %7279 = vmatpush2.bf16.msra.mxu0 0
        %7280 = vmatprep.subr.bf16.mxu0 0
        %7281 = vmatpush2.bf16.msra.mxu0 0
        %7282 = vmatprep.subr.bf16.mxu0 0
        %7283 = vmatpush2.bf16.msra.mxu0 0
        %7284 = vmatprep.subr.bf16.mxu0 0
        %7285 = vmatpush2.bf16.msra.mxu0 0
        %7286 = vmatprep.mubr.bf16.mxu0 0
        %7287 = vmatmul.mubr.bf16.gmra.mxu0 %v4136
        %v7288 = vpop.f32.mrf.mxu0
        %v7289 = vadd.f32 %v3746, %v7288
        %v7290 = vpop.f32.mrf.mxu0
        %v7291 = vadd.f32 %v3750, %v7290
        %v7292 = vpop.f32.mrf.mxu0
        %v7293 = vpop.f32.mrf.mxu0
        %7294 = vdwg.mxu0
        %7295 = vmatprep.subr.bf16.mxu0 0
        %7296 = vmatpush1.bf16.msra.mxu0 0
        %7297 = vmatprep.subr.bf16.mxu0 0
        %7298 = vmatpush1.bf16.msra.mxu0 0
        %7299 = vmatprep.subr.bf16.mxu0 0
        %7300 = vmatpush1.bf16.msra.mxu0 0
        %7301 = vmatprep.subr.bf16.mxu0 0
        %7302 = vmatpush1.bf16.msra.mxu0 0
        %7303 = vmatprep.subr.bf16.mxu0 0
        %7304 = vmatpush1.bf16.msra.mxu0 0
        %7305 = vmatprep.subr.bf16.mxu0 0
        %7306 = vmatpush1.bf16.msra.mxu0 0
        %7307 = vmatprep.subr.bf16.mxu0 %v2640
        %7308 = vmatpush1.bf16.msra.mxu0 %v2639
        %7309 = vmatprep.subr.bf16.mxu0 %v2440
        %7310 = vmatpush1.bf16.msra.mxu0 %v2439
        %7311 = vmatprep.subr.bf16.mxu0 0
        %7312 = vmatpush2.bf16.msra.mxu0 0
        %7313 = vmatprep.subr.bf16.mxu0 0
        %7314 = vmatpush2.bf16.msra.mxu0 0
        %7315 = vmatprep.subr.bf16.mxu0 0
        %7316 = vmatpush2.bf16.msra.mxu0 0
        %7317 = vmatprep.subr.bf16.mxu0 0
        %7318 = vmatpush2.bf16.msra.mxu0 0
        %7319 = vmatprep.subr.bf16.mxu0 0
        %7320 = vmatpush2.bf16.msra.mxu0 0
        %7321 = vmatprep.subr.bf16.mxu0 0
        %7322 = vmatpush2.bf16.msra.mxu0 0
        %7323 = vmatprep.subr.bf16.mxu0 0
        %7324 = vmatpush2.bf16.msra.mxu0 0
        %7325 = vmatprep.subr.bf16.mxu0 0
        %7326 = vmatpush2.bf16.msra.mxu0 0
        %7327 = vmatprep.mubr.bf16.mxu0 0
        %7328 = vmatmul.mubr.bf16.gmra.mxu0 %v4136
        %v7329 = vpop.f32.mrf.mxu0
        %v7330 = vadd.f32 %v3754, %v7329
        %v7331 = vpop.f32.mrf.mxu0
        %v7332 = vadd.f32 %v3758, %v7331
        %v7333 = vpop.f32.mrf.mxu0
        %v7334 = vpop.f32.mrf.mxu0
        %7335 = vdwg.mxu0
        %7336 = vmatprep.subr.bf16.mxu0 0
        %7337 = vmatpush1.bf16.msra.mxu0 0
        %7338 = vmatprep.subr.bf16.mxu0 0
        %7339 = vmatpush1.bf16.msra.mxu0 0
        %7340 = vmatprep.subr.bf16.mxu0 0
        %7341 = vmatpush1.bf16.msra.mxu0 0
        %7342 = vmatprep.subr.bf16.mxu0 0
        %7343 = vmatpush1.bf16.msra.mxu0 0
        %7344 = vmatprep.subr.bf16.mxu0 0
        %7345 = vmatpush1.bf16.msra.mxu0 0
        %7346 = vmatprep.subr.bf16.mxu0 0
        %7347 = vmatpush1.bf16.msra.mxu0 0
        %7348 = vmatprep.subr.bf16.mxu0 %v2642
        %7349 = vmatpush1.bf16.msra.mxu0 %v2641
        %7350 = vmatprep.subr.bf16.mxu0 %v2442
        %7351 = vmatpush1.bf16.msra.mxu0 %v2441
        %7352 = vmatprep.subr.bf16.mxu0 0
        %7353 = vmatpush2.bf16.msra.mxu0 0
        %7354 = vmatprep.subr.bf16.mxu0 0
        %7355 = vmatpush2.bf16.msra.mxu0 0
        %7356 = vmatprep.subr.bf16.mxu0 0
        %7357 = vmatpush2.bf16.msra.mxu0 0
        %7358 = vmatprep.subr.bf16.mxu0 0
        %7359 = vmatpush2.bf16.msra.mxu0 0
        %7360 = vmatprep.subr.bf16.mxu0 0
        %7361 = vmatpush2.bf16.msra.mxu0 0
        %7362 = vmatprep.subr.bf16.mxu0 0
        %7363 = vmatpush2.bf16.msra.mxu0 0
        %7364 = vmatprep.subr.bf16.mxu0 0
        %7365 = vmatpush2.bf16.msra.mxu0 0
        %7366 = vmatprep.subr.bf16.mxu0 0
        %7367 = vmatpush2.bf16.msra.mxu0 0
        %7368 = vmatprep.mubr.bf16.mxu0 0
        %7369 = vmatmul.mubr.bf16.gmra.mxu0 %v4136
        %v7370 = vpop.f32.mrf.mxu0
        %v7371 = vadd.f32 %v3762, %v7370
        %v7372 = vpop.f32.mrf.mxu0
        %v7373 = vadd.f32 %v3766, %v7372
        %v7374 = vpop.f32.mrf.mxu0
        %v7375 = vpop.f32.mrf.mxu0
        %7376 = vdwg.mxu0
        %7377 = vmatprep.subr.bf16.mxu0 0
        %7378 = vmatpush1.bf16.msra.mxu0 0
        %7379 = vmatprep.subr.bf16.mxu0 0
        %7380 = vmatpush1.bf16.msra.mxu0 0
        %7381 = vmatprep.subr.bf16.mxu0 0
        %7382 = vmatpush1.bf16.msra.mxu0 0
        %7383 = vmatprep.subr.bf16.mxu0 0
        %7384 = vmatpush1.bf16.msra.mxu0 0
        %7385 = vmatprep.subr.bf16.mxu0 0
        %7386 = vmatpush1.bf16.msra.mxu0 0
        %7387 = vmatprep.subr.bf16.mxu0 0
        %7388 = vmatpush1.bf16.msra.mxu0 0
        %7389 = vmatprep.subr.bf16.mxu0 %v2644
        %7390 = vmatpush1.bf16.msra.mxu0 %v2643
        %7391 = vmatprep.subr.bf16.mxu0 %v2444
        %7392 = vmatpush1.bf16.msra.mxu0 %v2443
        %7393 = vmatprep.subr.bf16.mxu0 0
        %7394 = vmatpush2.bf16.msra.mxu0 0
        %7395 = vmatprep.subr.bf16.mxu0 0
        %7396 = vmatpush2.bf16.msra.mxu0 0
        %7397 = vmatprep.subr.bf16.mxu0 0
        %7398 = vmatpush2.bf16.msra.mxu0 0
        %7399 = vmatprep.subr.bf16.mxu0 0
        %7400 = vmatpush2.bf16.msra.mxu0 0
        %7401 = vmatprep.subr.bf16.mxu0 0
        %7402 = vmatpush2.bf16.msra.mxu0 0
        %7403 = vmatprep.subr.bf16.mxu0 0
        %7404 = vmatpush2.bf16.msra.mxu0 0
        %7405 = vmatprep.subr.bf16.mxu0 0
        %7406 = vmatpush2.bf16.msra.mxu0 0
        %7407 = vmatprep.subr.bf16.mxu0 0
        %7408 = vmatpush2.bf16.msra.mxu0 0
        %7409 = vmatprep.mubr.bf16.mxu0 0
        %7410 = vmatmul.mubr.bf16.gmra.mxu0 %v4136
        %v7411 = vpop.f32.mrf.mxu0
        %v7412 = vadd.f32 %v3770, %v7411
        %v7413 = vpop.f32.mrf.mxu0
        %v7414 = vadd.f32 %v3774, %v7413
        %v7415 = vpop.f32.mrf.mxu0
        %v7416 = vpop.f32.mrf.mxu0
        %7417 = vdwg.mxu0
        %7418 = vmatprep.subr.bf16.mxu0 0
        %7419 = vmatpush1.bf16.msra.mxu0 0
        %7420 = vmatprep.subr.bf16.mxu0 0
        %7421 = vmatpush1.bf16.msra.mxu0 0
        %7422 = vmatprep.subr.bf16.mxu0 0
        %7423 = vmatpush1.bf16.msra.mxu0 0
        %7424 = vmatprep.subr.bf16.mxu0 0
        %7425 = vmatpush1.bf16.msra.mxu0 0
        %7426 = vmatprep.subr.bf16.mxu0 0
        %7427 = vmatpush1.bf16.msra.mxu0 0
        %7428 = vmatprep.subr.bf16.mxu0 0
        %7429 = vmatpush1.bf16.msra.mxu0 0
        %7430 = vmatprep.subr.bf16.mxu0 %v2646
        %7431 = vmatpush1.bf16.msra.mxu0 %v2645
        %7432 = vmatprep.subr.bf16.mxu0 %v2446
        %7433 = vmatpush1.bf16.msra.mxu0 %v2445
        %7434 = vmatprep.subr.bf16.mxu0 0
        %7435 = vmatpush2.bf16.msra.mxu0 0
        %7436 = vmatprep.subr.bf16.mxu0 0
        %7437 = vmatpush2.bf16.msra.mxu0 0
        %7438 = vmatprep.subr.bf16.mxu0 0
        %7439 = vmatpush2.bf16.msra.mxu0 0
        %7440 = vmatprep.subr.bf16.mxu0 0
        %7441 = vmatpush2.bf16.msra.mxu0 0
        %7442 = vmatprep.subr.bf16.mxu0 0
        %7443 = vmatpush2.bf16.msra.mxu0 0
        %7444 = vmatprep.subr.bf16.mxu0 0
        %7445 = vmatpush2.bf16.msra.mxu0 0
        %7446 = vmatprep.subr.bf16.mxu0 0
        %7447 = vmatpush2.bf16.msra.mxu0 0
        %7448 = vmatprep.subr.bf16.mxu0 0
        %7449 = vmatpush2.bf16.msra.mxu0 0
        %7450 = vmatprep.mubr.bf16.mxu0 0
        %7451 = vmatmul.mubr.bf16.gmra.mxu0 %v4136
        %v7452 = vpop.f32.mrf.mxu0
        %v7453 = vadd.f32 %v3778, %v7452
        %v7454 = vpop.f32.mrf.mxu0
        %v7455 = vadd.f32 %v3782, %v7454
        %v7456 = vpop.f32.mrf.mxu0
        %v7457 = vpop.f32.mrf.mxu0
        %7458 = vdwg.mxu0
        %7459 = vmatprep.subr.bf16.mxu0 0
        %7460 = vmatpush1.bf16.msra.mxu0 0
        %7461 = vmatprep.subr.bf16.mxu0 0
        %7462 = vmatpush1.bf16.msra.mxu0 0
        %7463 = vmatprep.subr.bf16.mxu0 0
        %7464 = vmatpush1.bf16.msra.mxu0 0
        %7465 = vmatprep.subr.bf16.mxu0 0
        %7466 = vmatpush1.bf16.msra.mxu0 0
        %7467 = vmatprep.subr.bf16.mxu0 0
        %7468 = vmatpush1.bf16.msra.mxu0 0
        %7469 = vmatprep.subr.bf16.mxu0 0
        %7470 = vmatpush1.bf16.msra.mxu0 0
        %7471 = vmatprep.subr.bf16.mxu0 %v2648
        %7472 = vmatpush1.bf16.msra.mxu0 %v2647
        %7473 = vmatprep.subr.bf16.mxu0 %v2448
        %7474 = vmatpush1.bf16.msra.mxu0 %v2447
        %7475 = vmatprep.subr.bf16.mxu0 0
        %7476 = vmatpush2.bf16.msra.mxu0 0
        %7477 = vmatprep.subr.bf16.mxu0 0
        %7478 = vmatpush2.bf16.msra.mxu0 0
        %7479 = vmatprep.subr.bf16.mxu0 0
        %7480 = vmatpush2.bf16.msra.mxu0 0
        %7481 = vmatprep.subr.bf16.mxu0 0
        %7482 = vmatpush2.bf16.msra.mxu0 0
        %7483 = vmatprep.subr.bf16.mxu0 0
        %7484 = vmatpush2.bf16.msra.mxu0 0
        %7485 = vmatprep.subr.bf16.mxu0 0
        %7486 = vmatpush2.bf16.msra.mxu0 0
        %7487 = vmatprep.subr.bf16.mxu0 0
        %7488 = vmatpush2.bf16.msra.mxu0 0
        %7489 = vmatprep.subr.bf16.mxu0 0
        %7490 = vmatpush2.bf16.msra.mxu0 0
        %7491 = vmatprep.mubr.bf16.mxu0 0
        %7492 = vmatmul.mubr.bf16.gmra.mxu0 %v4136
        %v7493 = vpop.f32.mrf.mxu0
        %v7494 = vadd.f32 %v3786, %v7493
        %v7495 = vpop.f32.mrf.mxu0
        %v7496 = vadd.f32 %v3790, %v7495
        %v7497 = vpop.f32.mrf.mxu0
        %v7498 = vpop.f32.mrf.mxu0
        %7499 = vdwg.mxu0
        %7500 = vmatprep.subr.bf16.mxu0 0
        %7501 = vmatpush1.bf16.msra.mxu0 0
        %7502 = vmatprep.subr.bf16.mxu0 0
        %7503 = vmatpush1.bf16.msra.mxu0 0
        %7504 = vmatprep.subr.bf16.mxu0 0
        %7505 = vmatpush1.bf16.msra.mxu0 0
        %7506 = vmatprep.subr.bf16.mxu0 0
        %7507 = vmatpush1.bf16.msra.mxu0 0
        %7508 = vmatprep.subr.bf16.mxu0 0
        %7509 = vmatpush1.bf16.msra.mxu0 0
        %7510 = vmatprep.subr.bf16.mxu0 0
        %7511 = vmatpush1.bf16.msra.mxu0 0
        %7512 = vmatprep.subr.bf16.mxu0 %v2650
        %7513 = vmatpush1.bf16.msra.mxu0 %v2649
        %7514 = vmatprep.subr.bf16.mxu0 %v2450
        %7515 = vmatpush1.bf16.msra.mxu0 %v2449
        %7516 = vmatprep.subr.bf16.mxu0 0
        %7517 = vmatpush2.bf16.msra.mxu0 0
        %7518 = vmatprep.subr.bf16.mxu0 0
        %7519 = vmatpush2.bf16.msra.mxu0 0
        %7520 = vmatprep.subr.bf16.mxu0 0
        %7521 = vmatpush2.bf16.msra.mxu0 0
        %7522 = vmatprep.subr.bf16.mxu0 0
        %7523 = vmatpush2.bf16.msra.mxu0 0
        %7524 = vmatprep.subr.bf16.mxu0 0
        %7525 = vmatpush2.bf16.msra.mxu0 0
        %7526 = vmatprep.subr.bf16.mxu0 0
        %7527 = vmatpush2.bf16.msra.mxu0 0
        %7528 = vmatprep.subr.bf16.mxu0 0
        %7529 = vmatpush2.bf16.msra.mxu0 0
        %7530 = vmatprep.subr.bf16.mxu0 0
        %7531 = vmatpush2.bf16.msra.mxu0 0
        %7532 = vmatprep.mubr.bf16.mxu0 0
        %7533 = vmatmul.mubr.bf16.gmra.mxu0 %v4136
        %v7534 = vpop.f32.mrf.mxu0
        %v7535 = vadd.f32 %v3794, %v7534
        %v7536 = vpop.f32.mrf.mxu0
        %v7537 = vadd.f32 %v3798, %v7536
        %v7538 = vpop.f32.mrf.mxu0
        %v7539 = vpop.f32.mrf.mxu0
        %7540 = vdwg.mxu0
        %7541 = vmatprep.subr.bf16.mxu0 0
        %7542 = vmatpush1.bf16.msra.mxu0 0
        %7543 = vmatprep.subr.bf16.mxu0 0
        %7544 = vmatpush1.bf16.msra.mxu0 0
        %7545 = vmatprep.subr.bf16.mxu0 0
        %7546 = vmatpush1.bf16.msra.mxu0 0
        %7547 = vmatprep.subr.bf16.mxu0 0
        %7548 = vmatpush1.bf16.msra.mxu0 0
        %7549 = vmatprep.subr.bf16.mxu0 0
        %7550 = vmatpush1.bf16.msra.mxu0 0
        %7551 = vmatprep.subr.bf16.mxu0 0
        %7552 = vmatpush1.bf16.msra.mxu0 0
        %7553 = vmatprep.subr.bf16.mxu0 %v2652
        %7554 = vmatpush1.bf16.msra.mxu0 %v2651
        %7555 = vmatprep.subr.bf16.mxu0 %v2452
        %7556 = vmatpush1.bf16.msra.mxu0 %v2451
        %7557 = vmatprep.subr.bf16.mxu0 0
        %7558 = vmatpush2.bf16.msra.mxu0 0
        %7559 = vmatprep.subr.bf16.mxu0 0
        %7560 = vmatpush2.bf16.msra.mxu0 0
        %7561 = vmatprep.subr.bf16.mxu0 0
        %7562 = vmatpush2.bf16.msra.mxu0 0
        %7563 = vmatprep.subr.bf16.mxu0 0
        %7564 = vmatpush2.bf16.msra.mxu0 0
        %7565 = vmatprep.subr.bf16.mxu0 0
        %7566 = vmatpush2.bf16.msra.mxu0 0
        %7567 = vmatprep.subr.bf16.mxu0 0
        %7568 = vmatpush2.bf16.msra.mxu0 0
        %7569 = vmatprep.subr.bf16.mxu0 0
        %7570 = vmatpush2.bf16.msra.mxu0 0
        %7571 = vmatprep.subr.bf16.mxu0 0
        %7572 = vmatpush2.bf16.msra.mxu0 0
        %7573 = vmatprep.mubr.bf16.mxu0 0
        %7574 = vmatmul.mubr.bf16.gmra.mxu0 %v4136
        %v7575 = vpop.f32.mrf.mxu0
        %v7576 = vadd.f32 %v3802, %v7575
        %v7577 = vpop.f32.mrf.mxu0
        %v7578 = vadd.f32 %v3806, %v7577
        %v7579 = vpop.f32.mrf.mxu0
        %v7580 = vpop.f32.mrf.mxu0
        %7581 = vdwg.mxu0
        %7582 = vmatprep.subr.bf16.mxu0 0
        %7583 = vmatpush1.bf16.msra.mxu0 0
        %7584 = vmatprep.subr.bf16.mxu0 0
        %7585 = vmatpush1.bf16.msra.mxu0 0
        %7586 = vmatprep.subr.bf16.mxu0 0
        %7587 = vmatpush1.bf16.msra.mxu0 0
        %7588 = vmatprep.subr.bf16.mxu0 0
        %7589 = vmatpush1.bf16.msra.mxu0 0
        %7590 = vmatprep.subr.bf16.mxu0 0
        %7591 = vmatpush1.bf16.msra.mxu0 0
        %7592 = vmatprep.subr.bf16.mxu0 0
        %7593 = vmatpush1.bf16.msra.mxu0 0
        %7594 = vmatprep.subr.bf16.mxu0 %v2654
        %7595 = vmatpush1.bf16.msra.mxu0 %v2653
        %7596 = vmatprep.subr.bf16.mxu0 %v2454
        %7597 = vmatpush1.bf16.msra.mxu0 %v2453
        %7598 = vmatprep.subr.bf16.mxu0 0
        %7599 = vmatpush2.bf16.msra.mxu0 0
        %7600 = vmatprep.subr.bf16.mxu0 0
        %7601 = vmatpush2.bf16.msra.mxu0 0
        %7602 = vmatprep.subr.bf16.mxu0 0
        %7603 = vmatpush2.bf16.msra.mxu0 0
        %7604 = vmatprep.subr.bf16.mxu0 0
        %7605 = vmatpush2.bf16.msra.mxu0 0
        %7606 = vmatprep.subr.bf16.mxu0 0
        %7607 = vmatpush2.bf16.msra.mxu0 0
        %7608 = vmatprep.subr.bf16.mxu0 0
        %7609 = vmatpush2.bf16.msra.mxu0 0
        %7610 = vmatprep.subr.bf16.mxu0 0
        %7611 = vmatpush2.bf16.msra.mxu0 0
        %7612 = vmatprep.subr.bf16.mxu0 0
        %7613 = vmatpush2.bf16.msra.mxu0 0
        %7614 = vmatprep.mubr.bf16.mxu0 0
        %7615 = vmatmul.mubr.bf16.gmra.mxu0 %v4136
        %v7616 = vpop.f32.mrf.mxu0
        %v7617 = vadd.f32 %v3810, %v7616
        %v7618 = vpop.f32.mrf.mxu0
        %v7619 = vadd.f32 %v3814, %v7618
        %v7620 = vpop.f32.mrf.mxu0
        %v7621 = vpop.f32.mrf.mxu0
        %7622 = vdwg.mxu0
        %7623 = vmatprep.subr.bf16.mxu0 0
        %7624 = vmatpush1.bf16.msra.mxu0 0
        %7625 = vmatprep.subr.bf16.mxu0 0
        %7626 = vmatpush1.bf16.msra.mxu0 0
        %7627 = vmatprep.subr.bf16.mxu0 0
        %7628 = vmatpush1.bf16.msra.mxu0 0
        %7629 = vmatprep.subr.bf16.mxu0 0
        %7630 = vmatpush1.bf16.msra.mxu0 0
        %7631 = vmatprep.subr.bf16.mxu0 0
        %7632 = vmatpush1.bf16.msra.mxu0 0
        %7633 = vmatprep.subr.bf16.mxu0 0
        %7634 = vmatpush1.bf16.msra.mxu0 0
        %7635 = vmatprep.subr.bf16.mxu0 %v2656
        %7636 = vmatpush1.bf16.msra.mxu0 %v2655
        %7637 = vmatprep.subr.bf16.mxu0 %v2456
        %7638 = vmatpush1.bf16.msra.mxu0 %v2455
        %7639 = vmatprep.subr.bf16.mxu0 0
        %7640 = vmatpush2.bf16.msra.mxu0 0
        %7641 = vmatprep.subr.bf16.mxu0 0
        %7642 = vmatpush2.bf16.msra.mxu0 0
        %7643 = vmatprep.subr.bf16.mxu0 0
        %7644 = vmatpush2.bf16.msra.mxu0 0
        %7645 = vmatprep.subr.bf16.mxu0 0
        %7646 = vmatpush2.bf16.msra.mxu0 0
        %7647 = vmatprep.subr.bf16.mxu0 0
        %7648 = vmatpush2.bf16.msra.mxu0 0
        %7649 = vmatprep.subr.bf16.mxu0 0
        %7650 = vmatpush2.bf16.msra.mxu0 0
        %7651 = vmatprep.subr.bf16.mxu0 0
        %7652 = vmatpush2.bf16.msra.mxu0 0
        %7653 = vmatprep.subr.bf16.mxu0 0
        %7654 = vmatpush2.bf16.msra.mxu0 0
        %7655 = vmatprep.mubr.bf16.mxu0 0
        %7656 = vmatmul.mubr.bf16.gmra.mxu0 %v4136
        %v7657 = vpop.f32.mrf.mxu0
        %v7658 = vadd.f32 %v3818, %v7657
        %v7659 = vpop.f32.mrf.mxu0
        %v7660 = vadd.f32 %v3822, %v7659
        %v7661 = vpop.f32.mrf.mxu0
        %v7662 = vpop.f32.mrf.mxu0
        %7663 = vdwg.mxu0
        %7664 = vmatprep.subr.bf16.mxu0 0
        %7665 = vmatpush1.bf16.msra.mxu0 0
        %7666 = vmatprep.subr.bf16.mxu0 0
        %7667 = vmatpush1.bf16.msra.mxu0 0
        %7668 = vmatprep.subr.bf16.mxu0 0
        %7669 = vmatpush1.bf16.msra.mxu0 0
        %7670 = vmatprep.subr.bf16.mxu0 0
        %7671 = vmatpush1.bf16.msra.mxu0 0
        %7672 = vmatprep.subr.bf16.mxu0 0
        %7673 = vmatpush1.bf16.msra.mxu0 0
        %7674 = vmatprep.subr.bf16.mxu0 0
        %7675 = vmatpush1.bf16.msra.mxu0 0
        %7676 = vmatprep.subr.bf16.mxu0 %v2658
        %7677 = vmatpush1.bf16.msra.mxu0 %v2657
        %7678 = vmatprep.subr.bf16.mxu0 %v2458
        %7679 = vmatpush1.bf16.msra.mxu0 %v2457
        %7680 = vmatprep.subr.bf16.mxu0 0
        %7681 = vmatpush2.bf16.msra.mxu0 0
        %7682 = vmatprep.subr.bf16.mxu0 0
        %7683 = vmatpush2.bf16.msra.mxu0 0
        %7684 = vmatprep.subr.bf16.mxu0 0
        %7685 = vmatpush2.bf16.msra.mxu0 0
        %7686 = vmatprep.subr.bf16.mxu0 0
        %7687 = vmatpush2.bf16.msra.mxu0 0
        %7688 = vmatprep.subr.bf16.mxu0 0
        %7689 = vmatpush2.bf16.msra.mxu0 0
        %7690 = vmatprep.subr.bf16.mxu0 0
        %7691 = vmatpush2.bf16.msra.mxu0 0
        %7692 = vmatprep.subr.bf16.mxu0 0
        %7693 = vmatpush2.bf16.msra.mxu0 0
        %7694 = vmatprep.subr.bf16.mxu0 0
        %7695 = vmatpush2.bf16.msra.mxu0 0
        %7696 = vmatprep.mubr.bf16.mxu0 0
        %7697 = vmatmul.mubr.bf16.gmra.mxu0 %v4136
        %v7698 = vpop.f32.mrf.mxu0
        %v7699 = vadd.f32 %v3826, %v7698
        %v7700 = vpop.f32.mrf.mxu0
        %v7701 = vadd.f32 %v3830, %v7700
        %v7702 = vpop.f32.mrf.mxu0
        %v7703 = vpop.f32.mrf.mxu0
        %7704 = vdwg.mxu0
        %7705 = vmatprep.subr.bf16.mxu0 0
        %7706 = vmatpush1.bf16.msra.mxu0 0
        %7707 = vmatprep.subr.bf16.mxu0 0
        %7708 = vmatpush1.bf16.msra.mxu0 0
        %7709 = vmatprep.subr.bf16.mxu0 0
        %7710 = vmatpush1.bf16.msra.mxu0 0
        %7711 = vmatprep.subr.bf16.mxu0 0
        %7712 = vmatpush1.bf16.msra.mxu0 0
        %7713 = vmatprep.subr.bf16.mxu0 0
        %7714 = vmatpush1.bf16.msra.mxu0 0
        %7715 = vmatprep.subr.bf16.mxu0 0
        %7716 = vmatpush1.bf16.msra.mxu0 0
        %7717 = vmatprep.subr.bf16.mxu0 %v2660
        %7718 = vmatpush1.bf16.msra.mxu0 %v2659
        %7719 = vmatprep.subr.bf16.mxu0 %v2460
        %7720 = vmatpush1.bf16.msra.mxu0 %v2459
        %7721 = vmatprep.subr.bf16.mxu0 0
        %7722 = vmatpush2.bf16.msra.mxu0 0
        %7723 = vmatprep.subr.bf16.mxu0 0
        %7724 = vmatpush2.bf16.msra.mxu0 0
        %7725 = vmatprep.subr.bf16.mxu0 0
        %7726 = vmatpush2.bf16.msra.mxu0 0
        %7727 = vmatprep.subr.bf16.mxu0 0
        %7728 = vmatpush2.bf16.msra.mxu0 0
        %7729 = vmatprep.subr.bf16.mxu0 0
        %7730 = vmatpush2.bf16.msra.mxu0 0
        %7731 = vmatprep.subr.bf16.mxu0 0
        %7732 = vmatpush2.bf16.msra.mxu0 0
        %7733 = vmatprep.subr.bf16.mxu0 0
        %7734 = vmatpush2.bf16.msra.mxu0 0
        %7735 = vmatprep.subr.bf16.mxu0 0
        %7736 = vmatpush2.bf16.msra.mxu0 0
        %7737 = vmatprep.mubr.bf16.mxu0 0
        %7738 = vmatmul.mubr.bf16.gmra.mxu0 %v4136
        %v7739 = vpop.f32.mrf.mxu0
        %v7740 = vadd.f32 %v3834, %v7739
        %v7741 = vpop.f32.mrf.mxu0
        %v7742 = vadd.f32 %v3838, %v7741
        %v7743 = vpop.f32.mrf.mxu0
        %v7744 = vpop.f32.mrf.mxu0
        %7745 = vdwg.mxu0
        %7746 = vmatprep.subr.bf16.mxu0 0
        %7747 = vmatpush1.bf16.msra.mxu0 0
        %7748 = vmatprep.subr.bf16.mxu0 0
        %7749 = vmatpush1.bf16.msra.mxu0 0
        %7750 = vmatprep.subr.bf16.mxu0 0
        %7751 = vmatpush1.bf16.msra.mxu0 0
        %7752 = vmatprep.subr.bf16.mxu0 0
        %7753 = vmatpush1.bf16.msra.mxu0 0
        %7754 = vmatprep.subr.bf16.mxu0 0
        %7755 = vmatpush1.bf16.msra.mxu0 0
        %7756 = vmatprep.subr.bf16.mxu0 0
        %7757 = vmatpush1.bf16.msra.mxu0 0
        %7758 = vmatprep.subr.bf16.mxu0 %v2662
        %7759 = vmatpush1.bf16.msra.mxu0 %v2661
        %7760 = vmatprep.subr.bf16.mxu0 %v2462
        %7761 = vmatpush1.bf16.msra.mxu0 %v2461
        %7762 = vmatprep.subr.bf16.mxu0 0
        %7763 = vmatpush2.bf16.msra.mxu0 0
        %7764 = vmatprep.subr.bf16.mxu0 0
        %7765 = vmatpush2.bf16.msra.mxu0 0
        %7766 = vmatprep.subr.bf16.mxu0 0
        %7767 = vmatpush2.bf16.msra.mxu0 0
        %7768 = vmatprep.subr.bf16.mxu0 0
        %7769 = vmatpush2.bf16.msra.mxu0 0
        %7770 = vmatprep.subr.bf16.mxu0 0
        %7771 = vmatpush2.bf16.msra.mxu0 0
        %7772 = vmatprep.subr.bf16.mxu0 0
        %7773 = vmatpush2.bf16.msra.mxu0 0
        %7774 = vmatprep.subr.bf16.mxu0 0
        %7775 = vmatpush2.bf16.msra.mxu0 0
        %7776 = vmatprep.subr.bf16.mxu0 0
        %7777 = vmatpush2.bf16.msra.mxu0 0
        %7778 = vmatprep.mubr.bf16.mxu0 0
        %7779 = vmatmul.mubr.bf16.gmra.mxu0 %v4136
        %v7780 = vpop.f32.mrf.mxu0
        %v7781 = vadd.f32 %v3842, %v7780
        %v7782 = vpop.f32.mrf.mxu0
        %v7783 = vadd.f32 %v3846, %v7782
        %v7784 = vpop.f32.mrf.mxu0
        %v7785 = vpop.f32.mrf.mxu0
        %7786 = vdwg.mxu0
        %7787 = vmatprep.subr.bf16.mxu0 0
        %7788 = vmatpush1.bf16.msra.mxu0 0
        %7789 = vmatprep.subr.bf16.mxu0 0
        %7790 = vmatpush1.bf16.msra.mxu0 0
        %7791 = vmatprep.subr.bf16.mxu0 0
        %7792 = vmatpush1.bf16.msra.mxu0 0
        %7793 = vmatprep.subr.bf16.mxu0 0
        %7794 = vmatpush1.bf16.msra.mxu0 0
        %7795 = vmatprep.subr.bf16.mxu0 0
        %7796 = vmatpush1.bf16.msra.mxu0 0
        %7797 = vmatprep.subr.bf16.mxu0 0
        %7798 = vmatpush1.bf16.msra.mxu0 0
        %7799 = vmatprep.subr.bf16.mxu0 %v2664
        %7800 = vmatpush1.bf16.msra.mxu0 %v2663
        %7801 = vmatprep.subr.bf16.mxu0 %v2464
        %7802 = vmatpush1.bf16.msra.mxu0 %v2463
        %7803 = vmatprep.subr.bf16.mxu0 0
        %7804 = vmatpush2.bf16.msra.mxu0 0
        %7805 = vmatprep.subr.bf16.mxu0 0
        %7806 = vmatpush2.bf16.msra.mxu0 0
        %7807 = vmatprep.subr.bf16.mxu0 0
        %7808 = vmatpush2.bf16.msra.mxu0 0
        %7809 = vmatprep.subr.bf16.mxu0 0
        %7810 = vmatpush2.bf16.msra.mxu0 0
        %7811 = vmatprep.subr.bf16.mxu0 0
        %7812 = vmatpush2.bf16.msra.mxu0 0
        %7813 = vmatprep.subr.bf16.mxu0 0
        %7814 = vmatpush2.bf16.msra.mxu0 0
        %7815 = vmatprep.subr.bf16.mxu0 0
        %7816 = vmatpush2.bf16.msra.mxu0 0
        %7817 = vmatprep.subr.bf16.mxu0 0
        %7818 = vmatpush2.bf16.msra.mxu0 0
        %7819 = vmatprep.mubr.bf16.mxu0 0
        %7820 = vmatmul.mubr.bf16.gmra.mxu0 %v4136
        %v7821 = vpop.f32.mrf.mxu0
        %v7822 = vadd.f32 %v3850, %v7821
        %v7823 = vpop.f32.mrf.mxu0
        %v7824 = vadd.f32 %v3854, %v7823
        %v7825 = vpop.f32.mrf.mxu0
        %v7826 = vpop.f32.mrf.mxu0
        %7827 = vdwg.mxu0
        %7828 = vmatprep.subr.bf16.mxu0 0
        %7829 = vmatpush1.bf16.msra.mxu0 0
        %7830 = vmatprep.subr.bf16.mxu0 0
        %7831 = vmatpush1.bf16.msra.mxu0 0
        %7832 = vmatprep.subr.bf16.mxu0 0
        %7833 = vmatpush1.bf16.msra.mxu0 0
        %7834 = vmatprep.subr.bf16.mxu0 0
        %7835 = vmatpush1.bf16.msra.mxu0 0
        %7836 = vmatprep.subr.bf16.mxu0 0
        %7837 = vmatpush1.bf16.msra.mxu0 0
        %7838 = vmatprep.subr.bf16.mxu0 0
        %7839 = vmatpush1.bf16.msra.mxu0 0
        %7840 = vmatprep.subr.bf16.mxu0 %v2666
        %7841 = vmatpush1.bf16.msra.mxu0 %v2665
        %7842 = vmatprep.subr.bf16.mxu0 %v2466
        %7843 = vmatpush1.bf16.msra.mxu0 %v2465
        %7844 = vmatprep.subr.bf16.mxu0 0
        %7845 = vmatpush2.bf16.msra.mxu0 0
        %7846 = vmatprep.subr.bf16.mxu0 0
        %7847 = vmatpush2.bf16.msra.mxu0 0
        %7848 = vmatprep.subr.bf16.mxu0 0
        %7849 = vmatpush2.bf16.msra.mxu0 0
        %7850 = vmatprep.subr.bf16.mxu0 0
        %7851 = vmatpush2.bf16.msra.mxu0 0
        %7852 = vmatprep.subr.bf16.mxu0 0
        %7853 = vmatpush2.bf16.msra.mxu0 0
        %7854 = vmatprep.subr.bf16.mxu0 0
        %7855 = vmatpush2.bf16.msra.mxu0 0
        %7856 = vmatprep.subr.bf16.mxu0 0
        %7857 = vmatpush2.bf16.msra.mxu0 0
        %7858 = vmatprep.subr.bf16.mxu0 0
        %7859 = vmatpush2.bf16.msra.mxu0 0
        %7860 = vmatprep.mubr.bf16.mxu0 0
        %7861 = vmatmul.mubr.bf16.gmra.mxu0 %v4136
        %v7862 = vpop.f32.mrf.mxu0
        %v7863 = vadd.f32 %v3858, %v7862
        %v7864 = vpop.f32.mrf.mxu0
        %v7865 = vadd.f32 %v3862, %v7864
        %v7866 = vpop.f32.mrf.mxu0
        %v7867 = vpop.f32.mrf.mxu0
        %7868 = vdwg.mxu0
        %7869 = vmatprep.subr.bf16.mxu0 0
        %7870 = vmatpush1.bf16.msra.mxu0 0
        %7871 = vmatprep.subr.bf16.mxu0 0
        %7872 = vmatpush1.bf16.msra.mxu0 0
        %7873 = vmatprep.subr.bf16.mxu0 0
        %7874 = vmatpush1.bf16.msra.mxu0 0
        %7875 = vmatprep.subr.bf16.mxu0 0
        %7876 = vmatpush1.bf16.msra.mxu0 0
        %7877 = vmatprep.subr.bf16.mxu0 0
        %7878 = vmatpush1.bf16.msra.mxu0 0
        %7879 = vmatprep.subr.bf16.mxu0 0
        %7880 = vmatpush1.bf16.msra.mxu0 0
        %7881 = vmatprep.subr.bf16.mxu0 %v2668
        %7882 = vmatpush1.bf16.msra.mxu0 %v2667
        %7883 = vmatprep.subr.bf16.mxu0 %v2468
        %7884 = vmatpush1.bf16.msra.mxu0 %v2467
        %7885 = vmatprep.subr.bf16.mxu0 0
        %7886 = vmatpush2.bf16.msra.mxu0 0
        %7887 = vmatprep.subr.bf16.mxu0 0
        %7888 = vmatpush2.bf16.msra.mxu0 0
        %7889 = vmatprep.subr.bf16.mxu0 0
        %7890 = vmatpush2.bf16.msra.mxu0 0
        %7891 = vmatprep.subr.bf16.mxu0 0
        %7892 = vmatpush2.bf16.msra.mxu0 0
        %7893 = vmatprep.subr.bf16.mxu0 0
        %7894 = vmatpush2.bf16.msra.mxu0 0
        %7895 = vmatprep.subr.bf16.mxu0 0
        %7896 = vmatpush2.bf16.msra.mxu0 0
        %7897 = vmatprep.subr.bf16.mxu0 0
        %7898 = vmatpush2.bf16.msra.mxu0 0
        %7899 = vmatprep.subr.bf16.mxu0 0
        %7900 = vmatpush2.bf16.msra.mxu0 0
        %7901 = vmatprep.mubr.bf16.mxu0 0
        %7902 = vmatmul.mubr.bf16.gmra.mxu0 %v4136
        %v7903 = vpop.f32.mrf.mxu0
        %v7904 = vadd.f32 %v3866, %v7903
        %v7905 = vpop.f32.mrf.mxu0
        %v7906 = vadd.f32 %v3870, %v7905
        %v7907 = vpop.f32.mrf.mxu0
        %v7908 = vpop.f32.mrf.mxu0
        %7909 = vdwg.mxu0
        %7910 = vmatprep.subr.bf16.mxu0 0
        %7911 = vmatpush1.bf16.msra.mxu0 0
        %7912 = vmatprep.subr.bf16.mxu0 0
        %7913 = vmatpush1.bf16.msra.mxu0 0
        %7914 = vmatprep.subr.bf16.mxu0 0
        %7915 = vmatpush1.bf16.msra.mxu0 0
        %7916 = vmatprep.subr.bf16.mxu0 0
        %7917 = vmatpush1.bf16.msra.mxu0 0
        %7918 = vmatprep.subr.bf16.mxu0 0
        %7919 = vmatpush1.bf16.msra.mxu0 0
        %7920 = vmatprep.subr.bf16.mxu0 0
        %7921 = vmatpush1.bf16.msra.mxu0 0
        %7922 = vmatprep.subr.bf16.mxu0 %v2670
        %7923 = vmatpush1.bf16.msra.mxu0 %v2669
        %7924 = vmatprep.subr.bf16.mxu0 %v2470
        %7925 = vmatpush1.bf16.msra.mxu0 %v2469
        %7926 = vmatprep.subr.bf16.mxu0 0
        %7927 = vmatpush2.bf16.msra.mxu0 0
        %7928 = vmatprep.subr.bf16.mxu0 0
        %7929 = vmatpush2.bf16.msra.mxu0 0
        %7930 = vmatprep.subr.bf16.mxu0 0
        %7931 = vmatpush2.bf16.msra.mxu0 0
        %7932 = vmatprep.subr.bf16.mxu0 0
        %7933 = vmatpush2.bf16.msra.mxu0 0
        %7934 = vmatprep.subr.bf16.mxu0 0
        %7935 = vmatpush2.bf16.msra.mxu0 0
        %7936 = vmatprep.subr.bf16.mxu0 0
        %7937 = vmatpush2.bf16.msra.mxu0 0
        %7938 = vmatprep.subr.bf16.mxu0 0
        %7939 = vmatpush2.bf16.msra.mxu0 0
        %7940 = vmatprep.subr.bf16.mxu0 0
        %7941 = vmatpush2.bf16.msra.mxu0 0
        %7942 = vmatprep.mubr.bf16.mxu0 0
        %7943 = vmatmul.mubr.bf16.gmra.mxu0 %v4136
        %v7944 = vpop.f32.mrf.mxu0
        %v7945 = vadd.f32 %v3874, %v7944
        %v7946 = vpop.f32.mrf.mxu0
        %v7947 = vadd.f32 %v3878, %v7946
        %v7948 = vpop.f32.mrf.mxu0
        %v7949 = vpop.f32.mrf.mxu0
        %7950 = vdwg.mxu0
        %7951 = vmatprep.subr.bf16.mxu0 0
        %7952 = vmatpush1.bf16.msra.mxu0 0
        %7953 = vmatprep.subr.bf16.mxu0 0
        %7954 = vmatpush1.bf16.msra.mxu0 0
        %7955 = vmatprep.subr.bf16.mxu0 0
        %7956 = vmatpush1.bf16.msra.mxu0 0
        %7957 = vmatprep.subr.bf16.mxu0 0
        %7958 = vmatpush1.bf16.msra.mxu0 0
        %7959 = vmatprep.subr.bf16.mxu0 0
        %7960 = vmatpush1.bf16.msra.mxu0 0
        %7961 = vmatprep.subr.bf16.mxu0 0
        %7962 = vmatpush1.bf16.msra.mxu0 0
        %7963 = vmatprep.subr.bf16.mxu0 %v2672
        %7964 = vmatpush1.bf16.msra.mxu0 %v2671
        %7965 = vmatprep.subr.bf16.mxu0 %v2472
        %7966 = vmatpush1.bf16.msra.mxu0 %v2471
        %7967 = vmatprep.subr.bf16.mxu0 0
        %7968 = vmatpush2.bf16.msra.mxu0 0
        %7969 = vmatprep.subr.bf16.mxu0 0
        %7970 = vmatpush2.bf16.msra.mxu0 0
        %7971 = vmatprep.subr.bf16.mxu0 0
        %7972 = vmatpush2.bf16.msra.mxu0 0
        %7973 = vmatprep.subr.bf16.mxu0 0
        %7974 = vmatpush2.bf16.msra.mxu0 0
        %7975 = vmatprep.subr.bf16.mxu0 0
        %7976 = vmatpush2.bf16.msra.mxu0 0
        %7977 = vmatprep.subr.bf16.mxu0 0
        %7978 = vmatpush2.bf16.msra.mxu0 0
        %7979 = vmatprep.subr.bf16.mxu0 0
        %7980 = vmatpush2.bf16.msra.mxu0 0
        %7981 = vmatprep.subr.bf16.mxu0 0
        %7982 = vmatpush2.bf16.msra.mxu0 0
        %7983 = vmatprep.mubr.bf16.mxu0 0
        %7984 = vmatmul.mubr.bf16.gmra.mxu0 %v4136
        %v7985 = vpop.f32.mrf.mxu0
        %v7986 = vadd.f32 %v3882, %v7985
        %v7987 = vpop.f32.mrf.mxu0
        %v7988 = vadd.f32 %v3886, %v7987
        %v7989 = vpop.f32.mrf.mxu0
        %v7990 = vpop.f32.mrf.mxu0
        %7991 = vdwg.mxu0
        %7992 = vmatprep.subr.bf16.mxu0 0
        %7993 = vmatpush1.bf16.msra.mxu0 0
        %7994 = vmatprep.subr.bf16.mxu0 0
        %7995 = vmatpush1.bf16.msra.mxu0 0
        %7996 = vmatprep.subr.bf16.mxu0 0
        %7997 = vmatpush1.bf16.msra.mxu0 0
        %7998 = vmatprep.subr.bf16.mxu0 0
        %7999 = vmatpush1.bf16.msra.mxu0 0
        %8000 = vmatprep.subr.bf16.mxu0 0
        %8001 = vmatpush1.bf16.msra.mxu0 0
        %8002 = vmatprep.subr.bf16.mxu0 0
        %8003 = vmatpush1.bf16.msra.mxu0 0
        %8004 = vmatprep.subr.bf16.mxu0 %v2674
        %8005 = vmatpush1.bf16.msra.mxu0 %v2673
        %8006 = vmatprep.subr.bf16.mxu0 %v2474
        %8007 = vmatpush1.bf16.msra.mxu0 %v2473
        %8008 = vmatprep.subr.bf16.mxu0 0
        %8009 = vmatpush2.bf16.msra.mxu0 0
        %8010 = vmatprep.subr.bf16.mxu0 0
        %8011 = vmatpush2.bf16.msra.mxu0 0
        %8012 = vmatprep.subr.bf16.mxu0 0
        %8013 = vmatpush2.bf16.msra.mxu0 0
        %8014 = vmatprep.subr.bf16.mxu0 0
        %8015 = vmatpush2.bf16.msra.mxu0 0
        %8016 = vmatprep.subr.bf16.mxu0 0
        %8017 = vmatpush2.bf16.msra.mxu0 0
        %8018 = vmatprep.subr.bf16.mxu0 0
        %8019 = vmatpush2.bf16.msra.mxu0 0
        %8020 = vmatprep.subr.bf16.mxu0 0
        %8021 = vmatpush2.bf16.msra.mxu0 0
        %8022 = vmatprep.subr.bf16.mxu0 0
        %8023 = vmatpush2.bf16.msra.mxu0 0
        %8024 = vmatprep.mubr.bf16.mxu0 0
        %8025 = vmatmul.mubr.bf16.gmra.mxu0 %v4136
        %v8026 = vpop.f32.mrf.mxu0
        %v8027 = vadd.f32 %v3890, %v8026
        %v8028 = vpop.f32.mrf.mxu0
        %v8029 = vadd.f32 %v3894, %v8028
        %v8030 = vpop.f32.mrf.mxu0
        %v8031 = vpop.f32.mrf.mxu0
        %8032 = vdwg.mxu0
        %8033 = vmatprep.subr.bf16.mxu0 0
        %8034 = vmatpush1.bf16.msra.mxu0 0
        %8035 = vmatprep.subr.bf16.mxu0 0
        %8036 = vmatpush1.bf16.msra.mxu0 0
        %8037 = vmatprep.subr.bf16.mxu0 0
        %8038 = vmatpush1.bf16.msra.mxu0 0
        %8039 = vmatprep.subr.bf16.mxu0 0
        %8040 = vmatpush1.bf16.msra.mxu0 0
        %8041 = vmatprep.subr.bf16.mxu0 0
        %8042 = vmatpush1.bf16.msra.mxu0 0
        %8043 = vmatprep.subr.bf16.mxu0 0
        %8044 = vmatpush1.bf16.msra.mxu0 0
        %8045 = vmatprep.subr.bf16.mxu0 %v2676
        %8046 = vmatpush1.bf16.msra.mxu0 %v2675
        %8047 = vmatprep.subr.bf16.mxu0 %v2476
        %8048 = vmatpush1.bf16.msra.mxu0 %v2475
        %8049 = vmatprep.subr.bf16.mxu0 0
        %8050 = vmatpush2.bf16.msra.mxu0 0
        %8051 = vmatprep.subr.bf16.mxu0 0
        %8052 = vmatpush2.bf16.msra.mxu0 0
        %8053 = vmatprep.subr.bf16.mxu0 0
        %8054 = vmatpush2.bf16.msra.mxu0 0
        %8055 = vmatprep.subr.bf16.mxu0 0
        %8056 = vmatpush2.bf16.msra.mxu0 0
        %8057 = vmatprep.subr.bf16.mxu0 0
        %8058 = vmatpush2.bf16.msra.mxu0 0
        %8059 = vmatprep.subr.bf16.mxu0 0
        %8060 = vmatpush2.bf16.msra.mxu0 0
        %8061 = vmatprep.subr.bf16.mxu0 0
        %8062 = vmatpush2.bf16.msra.mxu0 0
        %8063 = vmatprep.subr.bf16.mxu0 0
        %8064 = vmatpush2.bf16.msra.mxu0 0
        %8065 = vmatprep.mubr.bf16.mxu0 0
        %8066 = vmatmul.mubr.bf16.gmra.mxu0 %v4136
        %v8067 = vpop.f32.mrf.mxu0
        %v8068 = vadd.f32 %v3898, %v8067
        %v8069 = vpop.f32.mrf.mxu0
        %v8070 = vadd.f32 %v3902, %v8069
        %v8071 = vpop.f32.mrf.mxu0
        %v8072 = vpop.f32.mrf.mxu0
        %8073 = vdwg.mxu0
        %8074 = vmatprep.subr.bf16.mxu0 0
        %8075 = vmatpush1.bf16.msra.mxu0 0
        %8076 = vmatprep.subr.bf16.mxu0 0
        %8077 = vmatpush1.bf16.msra.mxu0 0
        %8078 = vmatprep.subr.bf16.mxu0 0
        %8079 = vmatpush1.bf16.msra.mxu0 0
        %8080 = vmatprep.subr.bf16.mxu0 0
        %8081 = vmatpush1.bf16.msra.mxu0 0
        %8082 = vmatprep.subr.bf16.mxu0 0
        %8083 = vmatpush1.bf16.msra.mxu0 0
        %8084 = vmatprep.subr.bf16.mxu0 0
        %8085 = vmatpush1.bf16.msra.mxu0 0
        %8086 = vmatprep.subr.bf16.mxu0 %v2678
        %8087 = vmatpush1.bf16.msra.mxu0 %v2677
        %8088 = vmatprep.subr.bf16.mxu0 %v2478
        %8089 = vmatpush1.bf16.msra.mxu0 %v2477
        %8090 = vmatprep.subr.bf16.mxu0 0
        %8091 = vmatpush2.bf16.msra.mxu0 0
        %8092 = vmatprep.subr.bf16.mxu0 0
        %8093 = vmatpush2.bf16.msra.mxu0 0
        %8094 = vmatprep.subr.bf16.mxu0 0
        %8095 = vmatpush2.bf16.msra.mxu0 0
        %8096 = vmatprep.subr.bf16.mxu0 0
        %8097 = vmatpush2.bf16.msra.mxu0 0
        %8098 = vmatprep.subr.bf16.mxu0 0
        %8099 = vmatpush2.bf16.msra.mxu0 0
        %8100 = vmatprep.subr.bf16.mxu0 0
        %8101 = vmatpush2.bf16.msra.mxu0 0
        %8102 = vmatprep.subr.bf16.mxu0 0
        %8103 = vmatpush2.bf16.msra.mxu0 0
        %8104 = vmatprep.subr.bf16.mxu0 0
        %8105 = vmatpush2.bf16.msra.mxu0 0
        %8106 = vmatprep.mubr.bf16.mxu0 0
        %8107 = vmatmul.mubr.bf16.gmra.mxu0 %v4136
        %v8108 = vpop.f32.mrf.mxu0
        %v8109 = vadd.f32 %v3906, %v8108
        %v8110 = vpop.f32.mrf.mxu0
        %v8111 = vadd.f32 %v3910, %v8110
        %v8112 = vpop.f32.mrf.mxu0
        %v8113 = vpop.f32.mrf.mxu0
        %8114 = vdwg.mxu0
        %8115 = vmatprep.subr.bf16.mxu0 0
        %8116 = vmatpush1.bf16.msra.mxu0 0
        %8117 = vmatprep.subr.bf16.mxu0 0
        %8118 = vmatpush1.bf16.msra.mxu0 0
        %8119 = vmatprep.subr.bf16.mxu0 0
        %8120 = vmatpush1.bf16.msra.mxu0 0
        %8121 = vmatprep.subr.bf16.mxu0 0
        %8122 = vmatpush1.bf16.msra.mxu0 0
        %8123 = vmatprep.subr.bf16.mxu0 0
        %8124 = vmatpush1.bf16.msra.mxu0 0
        %8125 = vmatprep.subr.bf16.mxu0 0
        %8126 = vmatpush1.bf16.msra.mxu0 0
        %8127 = vmatprep.subr.bf16.mxu0 %v2680
        %8128 = vmatpush1.bf16.msra.mxu0 %v2679
        %8129 = vmatprep.subr.bf16.mxu0 %v2480
        %8130 = vmatpush1.bf16.msra.mxu0 %v2479
        %8131 = vmatprep.subr.bf16.mxu0 0
        %8132 = vmatpush2.bf16.msra.mxu0 0
        %8133 = vmatprep.subr.bf16.mxu0 0
        %8134 = vmatpush2.bf16.msra.mxu0 0
        %8135 = vmatprep.subr.bf16.mxu0 0
        %8136 = vmatpush2.bf16.msra.mxu0 0
        %8137 = vmatprep.subr.bf16.mxu0 0
        %8138 = vmatpush2.bf16.msra.mxu0 0
        %8139 = vmatprep.subr.bf16.mxu0 0
        %8140 = vmatpush2.bf16.msra.mxu0 0
        %8141 = vmatprep.subr.bf16.mxu0 0
        %8142 = vmatpush2.bf16.msra.mxu0 0
        %8143 = vmatprep.subr.bf16.mxu0 0
        %8144 = vmatpush2.bf16.msra.mxu0 0
        %8145 = vmatprep.subr.bf16.mxu0 0
        %8146 = vmatpush2.bf16.msra.mxu0 0
        %8147 = vmatprep.mubr.bf16.mxu0 0
        %8148 = vmatmul.mubr.bf16.gmra.mxu0 %v4136
        %v8149 = vpop.f32.mrf.mxu0
        %v8150 = vadd.f32 %v3914, %v8149
        %v8151 = vpop.f32.mrf.mxu0
        %v8152 = vadd.f32 %v3918, %v8151
        %v8153 = vpop.f32.mrf.mxu0
        %v8154 = vpop.f32.mrf.mxu0
        %8155 = vdwg.mxu0
        %8156 = vmatprep.subr.bf16.mxu0 0
        %8157 = vmatpush1.bf16.msra.mxu0 0
        %8158 = vmatprep.subr.bf16.mxu0 0
        %8159 = vmatpush1.bf16.msra.mxu0 0
        %8160 = vmatprep.subr.bf16.mxu0 0
        %8161 = vmatpush1.bf16.msra.mxu0 0
        %8162 = vmatprep.subr.bf16.mxu0 0
        %8163 = vmatpush1.bf16.msra.mxu0 0
        %8164 = vmatprep.subr.bf16.mxu0 0
        %8165 = vmatpush1.bf16.msra.mxu0 0
        %8166 = vmatprep.subr.bf16.mxu0 0
        %8167 = vmatpush1.bf16.msra.mxu0 0
        %8168 = vmatprep.subr.bf16.mxu0 %v2682
        %8169 = vmatpush1.bf16.msra.mxu0 %v2681
        %8170 = vmatprep.subr.bf16.mxu0 %v2482
        %8171 = vmatpush1.bf16.msra.mxu0 %v2481
        %8172 = vmatprep.subr.bf16.mxu0 0
        %8173 = vmatpush2.bf16.msra.mxu0 0
        %8174 = vmatprep.subr.bf16.mxu0 0
        %8175 = vmatpush2.bf16.msra.mxu0 0
        %8176 = vmatprep.subr.bf16.mxu0 0
        %8177 = vmatpush2.bf16.msra.mxu0 0
        %8178 = vmatprep.subr.bf16.mxu0 0
        %8179 = vmatpush2.bf16.msra.mxu0 0
        %8180 = vmatprep.subr.bf16.mxu0 0
        %8181 = vmatpush2.bf16.msra.mxu0 0
        %8182 = vmatprep.subr.bf16.mxu0 0
        %8183 = vmatpush2.bf16.msra.mxu0 0
        %8184 = vmatprep.subr.bf16.mxu0 0
        %8185 = vmatpush2.bf16.msra.mxu0 0
        %8186 = vmatprep.subr.bf16.mxu0 0
        %8187 = vmatpush2.bf16.msra.mxu0 0
        %8188 = vmatprep.mubr.bf16.mxu0 0
        %8189 = vmatmul.mubr.bf16.gmra.mxu0 %v4136
        %v8190 = vpop.f32.mrf.mxu0
        %v8191 = vadd.f32 %v3922, %v8190
        %v8192 = vpop.f32.mrf.mxu0
        %v8193 = vadd.f32 %v3926, %v8192
        %v8194 = vpop.f32.mrf.mxu0
        %v8195 = vpop.f32.mrf.mxu0
        %8196 = vdwg.mxu0
        %8197 = vmatprep.subr.bf16.mxu0 0
        %8198 = vmatpush1.bf16.msra.mxu0 0
        %8199 = vmatprep.subr.bf16.mxu0 0
        %8200 = vmatpush1.bf16.msra.mxu0 0
        %8201 = vmatprep.subr.bf16.mxu0 0
        %8202 = vmatpush1.bf16.msra.mxu0 0
        %8203 = vmatprep.subr.bf16.mxu0 0
        %8204 = vmatpush1.bf16.msra.mxu0 0
        %8205 = vmatprep.subr.bf16.mxu0 0
        %8206 = vmatpush1.bf16.msra.mxu0 0
        %8207 = vmatprep.subr.bf16.mxu0 0
        %8208 = vmatpush1.bf16.msra.mxu0 0
        %8209 = vmatprep.subr.bf16.mxu0 %v2684
        %8210 = vmatpush1.bf16.msra.mxu0 %v2683
        %8211 = vmatprep.subr.bf16.mxu0 %v2484
        %8212 = vmatpush1.bf16.msra.mxu0 %v2483
        %8213 = vmatprep.subr.bf16.mxu0 0
        %8214 = vmatpush2.bf16.msra.mxu0 0
        %8215 = vmatprep.subr.bf16.mxu0 0
        %8216 = vmatpush2.bf16.msra.mxu0 0
        %8217 = vmatprep.subr.bf16.mxu0 0
        %8218 = vmatpush2.bf16.msra.mxu0 0
        %8219 = vmatprep.subr.bf16.mxu0 0
        %8220 = vmatpush2.bf16.msra.mxu0 0
        %8221 = vmatprep.subr.bf16.mxu0 0
        %8222 = vmatpush2.bf16.msra.mxu0 0
        %8223 = vmatprep.subr.bf16.mxu0 0
        %8224 = vmatpush2.bf16.msra.mxu0 0
        %8225 = vmatprep.subr.bf16.mxu0 0
        %8226 = vmatpush2.bf16.msra.mxu0 0
        %8227 = vmatprep.subr.bf16.mxu0 0
        %8228 = vmatpush2.bf16.msra.mxu0 0
        %8229 = vmatprep.mubr.bf16.mxu0 0
        %8230 = vmatmul.mubr.bf16.gmra.mxu0 %v4136
        %v8231 = vpop.f32.mrf.mxu0
        %v8232 = vadd.f32 %v3930, %v8231
        %v8233 = vpop.f32.mrf.mxu0
        %v8234 = vadd.f32 %v3934, %v8233
        %v8235 = vpop.f32.mrf.mxu0
        %v8236 = vpop.f32.mrf.mxu0
        %8237 = vdwg.mxu0
        %v8438 = vcombine.low %v4173, %v4175
        %v8439 = vcombine.low %v4214, %v4216
        %v8440 = vcombine.low %v4255, %v4257
        %v8441 = vcombine.low %v4296, %v4298
        %v8443 = vunpack.c.l.s4 1966171168
        %v8444 = vunpack.c.0.s8 %v8443
        %v8445 = vlaneseq
        %v8446 = vshrl.u32 %v8445, 7
        %v8447 = vsub.s32 %v8444, %v8446
        %v8448 = vrot.slane %v8438, %v8447
        %v8450 = vunpack.c.l.s4 1966171168
        %v8451 = vunpack.c.0.s8 %v8450
        %v8452 = vlaneseq
        %v8453 = vshrl.u32 %v8452, 7
        %v8454 = vsub.s32 %v8451, %v8453
        %v8455 = vrot.slane %v8439, %v8454
        %v8457 = vunpack.c.l.s4 1966171168
        %v8458 = vunpack.c.0.s8 %v8457
        %v8459 = vlaneseq
        %v8460 = vshrl.u32 %v8459, 7
        %v8461 = vsub.s32 %v8458, %v8460
        %v8462 = vrot.slane %v8440, %v8461
        %v8464 = vunpack.c.l.s4 1966171168
        %v8465 = vunpack.c.0.s8 %v8464
        %v8466 = vlaneseq
        %v8467 = vshrl.u32 %v8466, 7
        %v8468 = vsub.s32 %v8465, %v8467
        %v8469 = vrot.slane %v8441, %v8468
        %v8470 = vcombine.low %v8448, %v8455
        %v8471 = vcombine.low %v8462, %v8469
        %v8473 = vunpack.c.l.s4 1966171168
        %v8474 = vunpack.c.0.s8 %v8473
        %v8475 = vlaneseq
        %v8476 = vshrl.u32 %v8475, 7
        %v8477 = vsub.s32 %v8474, %v8476
        %v8478 = vrot.slane %v8470, %v8477
        %v8480 = vunpack.c.l.s4 1966171168
        %v8481 = vunpack.c.0.s8 %v8480
        %v8482 = vlaneseq
        %v8483 = vshrl.u32 %v8482, 7
        %v8484 = vsub.s32 %v8481, %v8483
        %v8485 = vrot.slane %v8471, %v8484
        %v8486 = vcombine.low %v8478, %v8485
        %v8487 = vcombine.low %v4337, %v4339
        %v8488 = vcombine.low %v4378, %v4380
        %v8489 = vcombine.low %v4419, %v4421
        %v8490 = vcombine.low %v4460, %v4462
        %v8492 = vunpack.c.l.s4 1966171168
        %v8493 = vunpack.c.0.s8 %v8492
        %v8494 = vlaneseq
        %v8495 = vshrl.u32 %v8494, 7
        %v8496 = vsub.s32 %v8493, %v8495
        %v8497 = vrot.slane %v8487, %v8496
        %v8499 = vunpack.c.l.s4 1966171168
        %v8500 = vunpack.c.0.s8 %v8499
        %v8501 = vlaneseq
        %v8502 = vshrl.u32 %v8501, 7
        %v8503 = vsub.s32 %v8500, %v8502
        %v8504 = vrot.slane %v8488, %v8503
        %v8506 = vunpack.c.l.s4 1966171168
        %v8507 = vunpack.c.0.s8 %v8506
        %v8508 = vlaneseq
        %v8509 = vshrl.u32 %v8508, 7
        %v8510 = vsub.s32 %v8507, %v8509
        %v8511 = vrot.slane %v8489, %v8510
        %v8513 = vunpack.c.l.s4 1966171168
        %v8514 = vunpack.c.0.s8 %v8513
        %v8515 = vlaneseq
        %v8516 = vshrl.u32 %v8515, 7
        %v8517 = vsub.s32 %v8514, %v8516
        %v8518 = vrot.slane %v8490, %v8517
        %v8519 = vcombine.low %v8497, %v8504
        %v8520 = vcombine.low %v8511, %v8518
        %v8522 = vunpack.c.l.s4 1966171168
        %v8523 = vunpack.c.0.s8 %v8522
        %v8524 = vlaneseq
        %v8525 = vshrl.u32 %v8524, 7
        %v8526 = vsub.s32 %v8523, %v8525
        %v8527 = vrot.slane %v8519, %v8526
        %v8529 = vunpack.c.l.s4 1966171168
        %v8530 = vunpack.c.0.s8 %v8529
        %v8531 = vlaneseq
        %v8532 = vshrl.u32 %v8531, 7
        %v8533 = vsub.s32 %v8530, %v8532
        %v8534 = vrot.slane %v8520, %v8533
        %v8535 = vcombine.low %v8527, %v8534
        %v8536 = vcombine.low %v4501, %v4503
        %v8537 = vcombine.low %v4542, %v4544
        %v8538 = vcombine.low %v4583, %v4585
        %v8539 = vcombine.low %v4624, %v4626
        %v8541 = vunpack.c.l.s4 1966171168
        %v8542 = vunpack.c.0.s8 %v8541
        %v8543 = vlaneseq
        %v8544 = vshrl.u32 %v8543, 7
        %v8545 = vsub.s32 %v8542, %v8544
        %v8546 = vrot.slane %v8536, %v8545
        %v8548 = vunpack.c.l.s4 1966171168
        %v8549 = vunpack.c.0.s8 %v8548
        %v8550 = vlaneseq
        %v8551 = vshrl.u32 %v8550, 7
        %v8552 = vsub.s32 %v8549, %v8551
        %v8553 = vrot.slane %v8537, %v8552
        %v8555 = vunpack.c.l.s4 1966171168
        %v8556 = vunpack.c.0.s8 %v8555
        %v8557 = vlaneseq
        %v8558 = vshrl.u32 %v8557, 7
        %v8559 = vsub.s32 %v8556, %v8558
        %v8560 = vrot.slane %v8538, %v8559
        %v8562 = vunpack.c.l.s4 1966171168
        %v8563 = vunpack.c.0.s8 %v8562
        %v8564 = vlaneseq
        %v8565 = vshrl.u32 %v8564, 7
        %v8566 = vsub.s32 %v8563, %v8565
        %v8567 = vrot.slane %v8539, %v8566
        %v8568 = vcombine.low %v8546, %v8553
        %v8569 = vcombine.low %v8560, %v8567
        %v8571 = vunpack.c.l.s4 1966171168
        %v8572 = vunpack.c.0.s8 %v8571
        %v8573 = vlaneseq
        %v8574 = vshrl.u32 %v8573, 7
        %v8575 = vsub.s32 %v8572, %v8574
        %v8576 = vrot.slane %v8568, %v8575
        %v8578 = vunpack.c.l.s4 1966171168
        %v8579 = vunpack.c.0.s8 %v8578
        %v8580 = vlaneseq
        %v8581 = vshrl.u32 %v8580, 7
        %v8582 = vsub.s32 %v8579, %v8581
        %v8583 = vrot.slane %v8569, %v8582
        %v8584 = vcombine.low %v8576, %v8583
        %v8585 = vcombine.low %v4665, %v4667
        %v8586 = vcombine.low %v4706, %v4708
        %v8587 = vcombine.low %v4747, %v4749
        %v8588 = vcombine.low %v4788, %v4790
        %v8590 = vunpack.c.l.s4 1966171168
        %v8591 = vunpack.c.0.s8 %v8590
        %v8592 = vlaneseq
        %v8593 = vshrl.u32 %v8592, 7
        %v8594 = vsub.s32 %v8591, %v8593
        %v8595 = vrot.slane %v8585, %v8594
        %v8597 = vunpack.c.l.s4 1966171168
        %v8598 = vunpack.c.0.s8 %v8597
        %v8599 = vlaneseq
        %v8600 = vshrl.u32 %v8599, 7
        %v8601 = vsub.s32 %v8598, %v8600
        %v8602 = vrot.slane %v8586, %v8601
        %v8604 = vunpack.c.l.s4 1966171168
        %v8605 = vunpack.c.0.s8 %v8604
        %v8606 = vlaneseq
        %v8607 = vshrl.u32 %v8606, 7
        %v8608 = vsub.s32 %v8605, %v8607
        %v8609 = vrot.slane %v8587, %v8608
        %v8611 = vunpack.c.l.s4 1966171168
        %v8612 = vunpack.c.0.s8 %v8611
        %v8613 = vlaneseq
        %v8614 = vshrl.u32 %v8613, 7
        %v8615 = vsub.s32 %v8612, %v8614
        %v8616 = vrot.slane %v8588, %v8615
        %v8617 = vcombine.low %v8595, %v8602
        %v8618 = vcombine.low %v8609, %v8616
        %v8620 = vunpack.c.l.s4 1966171168
        %v8621 = vunpack.c.0.s8 %v8620
        %v8622 = vlaneseq
        %v8623 = vshrl.u32 %v8622, 7
        %v8624 = vsub.s32 %v8621, %v8623
        %v8625 = vrot.slane %v8617, %v8624
        %v8627 = vunpack.c.l.s4 1966171168
        %v8628 = vunpack.c.0.s8 %v8627
        %v8629 = vlaneseq
        %v8630 = vshrl.u32 %v8629, 7
        %v8631 = vsub.s32 %v8628, %v8630
        %v8632 = vrot.slane %v8618, %v8631
        %v8633 = vcombine.low %v8625, %v8632
        %v8634 = vcombine.low %v4829, %v4831
        %v8635 = vcombine.low %v4870, %v4872
        %v8636 = vcombine.low %v4911, %v4913
        %v8637 = vcombine.low %v4952, %v4954
        %v8639 = vunpack.c.l.s4 1966171168
        %v8640 = vunpack.c.0.s8 %v8639
        %v8641 = vlaneseq
        %v8642 = vshrl.u32 %v8641, 7
        %v8643 = vsub.s32 %v8640, %v8642
        %v8644 = vrot.slane %v8634, %v8643
        %v8646 = vunpack.c.l.s4 1966171168
        %v8647 = vunpack.c.0.s8 %v8646
        %v8648 = vlaneseq
        %v8649 = vshrl.u32 %v8648, 7
        %v8650 = vsub.s32 %v8647, %v8649
        %v8651 = vrot.slane %v8635, %v8650
        %v8653 = vunpack.c.l.s4 1966171168
        %v8654 = vunpack.c.0.s8 %v8653
        %v8655 = vlaneseq
        %v8656 = vshrl.u32 %v8655, 7
        %v8657 = vsub.s32 %v8654, %v8656
        %v8658 = vrot.slane %v8636, %v8657
        %v8660 = vunpack.c.l.s4 1966171168
        %v8661 = vunpack.c.0.s8 %v8660
        %v8662 = vlaneseq
        %v8663 = vshrl.u32 %v8662, 7
        %v8664 = vsub.s32 %v8661, %v8663
        %v8665 = vrot.slane %v8637, %v8664
        %v8666 = vcombine.low %v8644, %v8651
        %v8667 = vcombine.low %v8658, %v8665
        %v8669 = vunpack.c.l.s4 1966171168
        %v8670 = vunpack.c.0.s8 %v8669
        %v8671 = vlaneseq
        %v8672 = vshrl.u32 %v8671, 7
        %v8673 = vsub.s32 %v8670, %v8672
        %v8674 = vrot.slane %v8666, %v8673
        %v8676 = vunpack.c.l.s4 1966171168
        %v8677 = vunpack.c.0.s8 %v8676
        %v8678 = vlaneseq
        %v8679 = vshrl.u32 %v8678, 7
        %v8680 = vsub.s32 %v8677, %v8679
        %v8681 = vrot.slane %v8667, %v8680
        %v8682 = vcombine.low %v8674, %v8681
        %v8683 = vcombine.low %v4993, %v4995
        %v8684 = vcombine.low %v5034, %v5036
        %v8685 = vcombine.low %v5075, %v5077
        %v8686 = vcombine.low %v5116, %v5118
        %v8688 = vunpack.c.l.s4 1966171168
        %v8689 = vunpack.c.0.s8 %v8688
        %v8690 = vlaneseq
        %v8691 = vshrl.u32 %v8690, 7
        %v8692 = vsub.s32 %v8689, %v8691
        %v8693 = vrot.slane %v8683, %v8692
        %v8695 = vunpack.c.l.s4 1966171168
        %v8696 = vunpack.c.0.s8 %v8695
        %v8697 = vlaneseq
        %v8698 = vshrl.u32 %v8697, 7
        %v8699 = vsub.s32 %v8696, %v8698
        %v8700 = vrot.slane %v8684, %v8699
        %v8702 = vunpack.c.l.s4 1966171168
        %v8703 = vunpack.c.0.s8 %v8702
        %v8704 = vlaneseq
        %v8705 = vshrl.u32 %v8704, 7
        %v8706 = vsub.s32 %v8703, %v8705
        %v8707 = vrot.slane %v8685, %v8706
        %v8709 = vunpack.c.l.s4 1966171168
        %v8710 = vunpack.c.0.s8 %v8709
        %v8711 = vlaneseq
        %v8712 = vshrl.u32 %v8711, 7
        %v8713 = vsub.s32 %v8710, %v8712
        %v8714 = vrot.slane %v8686, %v8713
        %v8715 = vcombine.low %v8693, %v8700
        %v8716 = vcombine.low %v8707, %v8714
        %v8718 = vunpack.c.l.s4 1966171168
        %v8719 = vunpack.c.0.s8 %v8718
        %v8720 = vlaneseq
        %v8721 = vshrl.u32 %v8720, 7
        %v8722 = vsub.s32 %v8719, %v8721
        %v8723 = vrot.slane %v8715, %v8722
        %v8725 = vunpack.c.l.s4 1966171168
        %v8726 = vunpack.c.0.s8 %v8725
        %v8727 = vlaneseq
        %v8728 = vshrl.u32 %v8727, 7
        %v8729 = vsub.s32 %v8726, %v8728
        %v8730 = vrot.slane %v8716, %v8729
        %v8731 = vcombine.low %v8723, %v8730
        %v8732 = vcombine.low %v5157, %v5159
        %v8733 = vcombine.low %v5198, %v5200
        %v8734 = vcombine.low %v5239, %v5241
        %v8735 = vcombine.low %v5280, %v5282
        %v8737 = vunpack.c.l.s4 1966171168
        %v8738 = vunpack.c.0.s8 %v8737
        %v8739 = vlaneseq
        %v8740 = vshrl.u32 %v8739, 7
        %v8741 = vsub.s32 %v8738, %v8740
        %v8742 = vrot.slane %v8732, %v8741
        %v8744 = vunpack.c.l.s4 1966171168
        %v8745 = vunpack.c.0.s8 %v8744
        %v8746 = vlaneseq
        %v8747 = vshrl.u32 %v8746, 7
        %v8748 = vsub.s32 %v8745, %v8747
        %v8749 = vrot.slane %v8733, %v8748
        %v8751 = vunpack.c.l.s4 1966171168
        %v8752 = vunpack.c.0.s8 %v8751
        %v8753 = vlaneseq
        %v8754 = vshrl.u32 %v8753, 7
        %v8755 = vsub.s32 %v8752, %v8754
        %v8756 = vrot.slane %v8734, %v8755
        %v8758 = vunpack.c.l.s4 1966171168
        %v8759 = vunpack.c.0.s8 %v8758
        %v8760 = vlaneseq
        %v8761 = vshrl.u32 %v8760, 7
        %v8762 = vsub.s32 %v8759, %v8761
        %v8763 = vrot.slane %v8735, %v8762
        %v8764 = vcombine.low %v8742, %v8749
        %v8765 = vcombine.low %v8756, %v8763
        %v8767 = vunpack.c.l.s4 1966171168
        %v8768 = vunpack.c.0.s8 %v8767
        %v8769 = vlaneseq
        %v8770 = vshrl.u32 %v8769, 7
        %v8771 = vsub.s32 %v8768, %v8770
        %v8772 = vrot.slane %v8764, %v8771
        %v8774 = vunpack.c.l.s4 1966171168
        %v8775 = vunpack.c.0.s8 %v8774
        %v8776 = vlaneseq
        %v8777 = vshrl.u32 %v8776, 7
        %v8778 = vsub.s32 %v8775, %v8777
        %v8779 = vrot.slane %v8765, %v8778
        %v8780 = vcombine.low %v8772, %v8779
        %v8781 = vcombine.low %v5321, %v5323
        %v8782 = vcombine.low %v5362, %v5364
        %v8783 = vcombine.low %v5403, %v5405
        %v8784 = vcombine.low %v5444, %v5446
        %v8786 = vunpack.c.l.s4 1966171168
        %v8787 = vunpack.c.0.s8 %v8786
        %v8788 = vlaneseq
        %v8789 = vshrl.u32 %v8788, 7
        %v8790 = vsub.s32 %v8787, %v8789
        %v8791 = vrot.slane %v8781, %v8790
        %v8793 = vunpack.c.l.s4 1966171168
        %v8794 = vunpack.c.0.s8 %v8793
        %v8795 = vlaneseq
        %v8796 = vshrl.u32 %v8795, 7
        %v8797 = vsub.s32 %v8794, %v8796
        %v8798 = vrot.slane %v8782, %v8797
        %v8800 = vunpack.c.l.s4 1966171168
        %v8801 = vunpack.c.0.s8 %v8800
        %v8802 = vlaneseq
        %v8803 = vshrl.u32 %v8802, 7
        %v8804 = vsub.s32 %v8801, %v8803
        %v8805 = vrot.slane %v8783, %v8804
        %v8807 = vunpack.c.l.s4 1966171168
        %v8808 = vunpack.c.0.s8 %v8807
        %v8809 = vlaneseq
        %v8810 = vshrl.u32 %v8809, 7
        %v8811 = vsub.s32 %v8808, %v8810
        %v8812 = vrot.slane %v8784, %v8811
        %v8813 = vcombine.low %v8791, %v8798
        %v8814 = vcombine.low %v8805, %v8812
        %v8816 = vunpack.c.l.s4 1966171168
        %v8817 = vunpack.c.0.s8 %v8816
        %v8818 = vlaneseq
        %v8819 = vshrl.u32 %v8818, 7
        %v8820 = vsub.s32 %v8817, %v8819
        %v8821 = vrot.slane %v8813, %v8820
        %v8823 = vunpack.c.l.s4 1966171168
        %v8824 = vunpack.c.0.s8 %v8823
        %v8825 = vlaneseq
        %v8826 = vshrl.u32 %v8825, 7
        %v8827 = vsub.s32 %v8824, %v8826
        %v8828 = vrot.slane %v8814, %v8827
        %v8829 = vcombine.low %v8821, %v8828
        %v8830 = vcombine.low %v5485, %v5487
        %v8831 = vcombine.low %v5526, %v5528
        %v8832 = vcombine.low %v5567, %v5569
        %v8833 = vcombine.low %v5608, %v5610
        %v8835 = vunpack.c.l.s4 1966171168
        %v8836 = vunpack.c.0.s8 %v8835
        %v8837 = vlaneseq
        %v8838 = vshrl.u32 %v8837, 7
        %v8839 = vsub.s32 %v8836, %v8838
        %v8840 = vrot.slane %v8830, %v8839
        %v8842 = vunpack.c.l.s4 1966171168
        %v8843 = vunpack.c.0.s8 %v8842
        %v8844 = vlaneseq
        %v8845 = vshrl.u32 %v8844, 7
        %v8846 = vsub.s32 %v8843, %v8845
        %v8847 = vrot.slane %v8831, %v8846
        %v8849 = vunpack.c.l.s4 1966171168
        %v8850 = vunpack.c.0.s8 %v8849
        %v8851 = vlaneseq
        %v8852 = vshrl.u32 %v8851, 7
        %v8853 = vsub.s32 %v8850, %v8852
        %v8854 = vrot.slane %v8832, %v8853
        %v8856 = vunpack.c.l.s4 1966171168
        %v8857 = vunpack.c.0.s8 %v8856
        %v8858 = vlaneseq
        %v8859 = vshrl.u32 %v8858, 7
        %v8860 = vsub.s32 %v8857, %v8859
        %v8861 = vrot.slane %v8833, %v8860
        %v8862 = vcombine.low %v8840, %v8847
        %v8863 = vcombine.low %v8854, %v8861
        %v8865 = vunpack.c.l.s4 1966171168
        %v8866 = vunpack.c.0.s8 %v8865
        %v8867 = vlaneseq
        %v8868 = vshrl.u32 %v8867, 7
        %v8869 = vsub.s32 %v8866, %v8868
        %v8870 = vrot.slane %v8862, %v8869
        %v8872 = vunpack.c.l.s4 1966171168
        %v8873 = vunpack.c.0.s8 %v8872
        %v8874 = vlaneseq
        %v8875 = vshrl.u32 %v8874, 7
        %v8876 = vsub.s32 %v8873, %v8875
        %v8877 = vrot.slane %v8863, %v8876
        %v8878 = vcombine.low %v8870, %v8877
        %v8879 = vcombine.low %v5649, %v5651
        %v8880 = vcombine.low %v5690, %v5692
        %v8881 = vcombine.low %v5731, %v5733
        %v8882 = vcombine.low %v5772, %v5774
        %v8884 = vunpack.c.l.s4 1966171168
        %v8885 = vunpack.c.0.s8 %v8884
        %v8886 = vlaneseq
        %v8887 = vshrl.u32 %v8886, 7
        %v8888 = vsub.s32 %v8885, %v8887
        %v8889 = vrot.slane %v8879, %v8888
        %v8891 = vunpack.c.l.s4 1966171168
        %v8892 = vunpack.c.0.s8 %v8891
        %v8893 = vlaneseq
        %v8894 = vshrl.u32 %v8893, 7
        %v8895 = vsub.s32 %v8892, %v8894
        %v8896 = vrot.slane %v8880, %v8895
        %v8898 = vunpack.c.l.s4 1966171168
        %v8899 = vunpack.c.0.s8 %v8898
        %v8900 = vlaneseq
        %v8901 = vshrl.u32 %v8900, 7
        %v8902 = vsub.s32 %v8899, %v8901
        %v8903 = vrot.slane %v8881, %v8902
        %v8905 = vunpack.c.l.s4 1966171168
        %v8906 = vunpack.c.0.s8 %v8905
        %v8907 = vlaneseq
        %v8908 = vshrl.u32 %v8907, 7
        %v8909 = vsub.s32 %v8906, %v8908
        %v8910 = vrot.slane %v8882, %v8909
        %v8911 = vcombine.low %v8889, %v8896
        %v8912 = vcombine.low %v8903, %v8910
        %v8914 = vunpack.c.l.s4 1966171168
        %v8915 = vunpack.c.0.s8 %v8914
        %v8916 = vlaneseq
        %v8917 = vshrl.u32 %v8916, 7
        %v8918 = vsub.s32 %v8915, %v8917
        %v8919 = vrot.slane %v8911, %v8918
        %v8921 = vunpack.c.l.s4 1966171168
        %v8922 = vunpack.c.0.s8 %v8921
        %v8923 = vlaneseq
        %v8924 = vshrl.u32 %v8923, 7
        %v8925 = vsub.s32 %v8922, %v8924
        %v8926 = vrot.slane %v8912, %v8925
        %v8927 = vcombine.low %v8919, %v8926
        %v8928 = vcombine.low %v5813, %v5815
        %v8929 = vcombine.low %v5854, %v5856
        %v8930 = vcombine.low %v5895, %v5897
        %v8931 = vcombine.low %v5936, %v5938
        %v8933 = vunpack.c.l.s4 1966171168
        %v8934 = vunpack.c.0.s8 %v8933
        %v8935 = vlaneseq
        %v8936 = vshrl.u32 %v8935, 7
        %v8937 = vsub.s32 %v8934, %v8936
        %v8938 = vrot.slane %v8928, %v8937
        %v8940 = vunpack.c.l.s4 1966171168
        %v8941 = vunpack.c.0.s8 %v8940
        %v8942 = vlaneseq
        %v8943 = vshrl.u32 %v8942, 7
        %v8944 = vsub.s32 %v8941, %v8943
        %v8945 = vrot.slane %v8929, %v8944
        %v8947 = vunpack.c.l.s4 1966171168
        %v8948 = vunpack.c.0.s8 %v8947
        %v8949 = vlaneseq
        %v8950 = vshrl.u32 %v8949, 7
        %v8951 = vsub.s32 %v8948, %v8950
        %v8952 = vrot.slane %v8930, %v8951
        %v8954 = vunpack.c.l.s4 1966171168
        %v8955 = vunpack.c.0.s8 %v8954
        %v8956 = vlaneseq
        %v8957 = vshrl.u32 %v8956, 7
        %v8958 = vsub.s32 %v8955, %v8957
        %v8959 = vrot.slane %v8931, %v8958
        %v8960 = vcombine.low %v8938, %v8945
        %v8961 = vcombine.low %v8952, %v8959
        %v8963 = vunpack.c.l.s4 1966171168
        %v8964 = vunpack.c.0.s8 %v8963
        %v8965 = vlaneseq
        %v8966 = vshrl.u32 %v8965, 7
        %v8967 = vsub.s32 %v8964, %v8966
        %v8968 = vrot.slane %v8960, %v8967
        %v8970 = vunpack.c.l.s4 1966171168
        %v8971 = vunpack.c.0.s8 %v8970
        %v8972 = vlaneseq
        %v8973 = vshrl.u32 %v8972, 7
        %v8974 = vsub.s32 %v8971, %v8973
        %v8975 = vrot.slane %v8961, %v8974
        %v8976 = vcombine.low %v8968, %v8975
        %v8977 = vcombine.low %v5977, %v5979
        %v8978 = vcombine.low %v6018, %v6020
        %v8979 = vcombine.low %v6059, %v6061
        %v8980 = vcombine.low %v6100, %v6102
        %v8982 = vunpack.c.l.s4 1966171168
        %v8983 = vunpack.c.0.s8 %v8982
        %v8984 = vlaneseq
        %v8985 = vshrl.u32 %v8984, 7
        %v8986 = vsub.s32 %v8983, %v8985
        %v8987 = vrot.slane %v8977, %v8986
        %v8989 = vunpack.c.l.s4 1966171168
        %v8990 = vunpack.c.0.s8 %v8989
        %v8991 = vlaneseq
        %v8992 = vshrl.u32 %v8991, 7
        %v8993 = vsub.s32 %v8990, %v8992
        %v8994 = vrot.slane %v8978, %v8993
        %v8996 = vunpack.c.l.s4 1966171168
        %v8997 = vunpack.c.0.s8 %v8996
        %v8998 = vlaneseq
        %v8999 = vshrl.u32 %v8998, 7
        %v9000 = vsub.s32 %v8997, %v8999
        %v9001 = vrot.slane %v8979, %v9000
        %v9003 = vunpack.c.l.s4 1966171168
        %v9004 = vunpack.c.0.s8 %v9003
        %v9005 = vlaneseq
        %v9006 = vshrl.u32 %v9005, 7
        %v9007 = vsub.s32 %v9004, %v9006
        %v9008 = vrot.slane %v8980, %v9007
        %v9009 = vcombine.low %v8987, %v8994
        %v9010 = vcombine.low %v9001, %v9008
        %v9012 = vunpack.c.l.s4 1966171168
        %v9013 = vunpack.c.0.s8 %v9012
        %v9014 = vlaneseq
        %v9015 = vshrl.u32 %v9014, 7
        %v9016 = vsub.s32 %v9013, %v9015
        %v9017 = vrot.slane %v9009, %v9016
        %v9019 = vunpack.c.l.s4 1966171168
        %v9020 = vunpack.c.0.s8 %v9019
        %v9021 = vlaneseq
        %v9022 = vshrl.u32 %v9021, 7
        %v9023 = vsub.s32 %v9020, %v9022
        %v9024 = vrot.slane %v9010, %v9023
        %v9025 = vcombine.low %v9017, %v9024
        %v9026 = vcombine.low %v6141, %v6143
        %v9027 = vcombine.low %v6182, %v6184
        %v9028 = vcombine.low %v6223, %v6225
        %v9029 = vcombine.low %v6264, %v6266
        %v9031 = vunpack.c.l.s4 1966171168
        %v9032 = vunpack.c.0.s8 %v9031
        %v9033 = vlaneseq
        %v9034 = vshrl.u32 %v9033, 7
        %v9035 = vsub.s32 %v9032, %v9034
        %v9036 = vrot.slane %v9026, %v9035
        %v9038 = vunpack.c.l.s4 1966171168
        %v9039 = vunpack.c.0.s8 %v9038
        %v9040 = vlaneseq
        %v9041 = vshrl.u32 %v9040, 7
        %v9042 = vsub.s32 %v9039, %v9041
        %v9043 = vrot.slane %v9027, %v9042
        %v9045 = vunpack.c.l.s4 1966171168
        %v9046 = vunpack.c.0.s8 %v9045
        %v9047 = vlaneseq
        %v9048 = vshrl.u32 %v9047, 7
        %v9049 = vsub.s32 %v9046, %v9048
        %v9050 = vrot.slane %v9028, %v9049
        %v9052 = vunpack.c.l.s4 1966171168
        %v9053 = vunpack.c.0.s8 %v9052
        %v9054 = vlaneseq
        %v9055 = vshrl.u32 %v9054, 7
        %v9056 = vsub.s32 %v9053, %v9055
        %v9057 = vrot.slane %v9029, %v9056
        %v9058 = vcombine.low %v9036, %v9043
        %v9059 = vcombine.low %v9050, %v9057
        %v9061 = vunpack.c.l.s4 1966171168
        %v9062 = vunpack.c.0.s8 %v9061
        %v9063 = vlaneseq
        %v9064 = vshrl.u32 %v9063, 7
        %v9065 = vsub.s32 %v9062, %v9064
        %v9066 = vrot.slane %v9058, %v9065
        %v9068 = vunpack.c.l.s4 1966171168
        %v9069 = vunpack.c.0.s8 %v9068
        %v9070 = vlaneseq
        %v9071 = vshrl.u32 %v9070, 7
        %v9072 = vsub.s32 %v9069, %v9071
        %v9073 = vrot.slane %v9059, %v9072
        %v9074 = vcombine.low %v9066, %v9073
        %v9075 = vcombine.low %v6305, %v6307
        %v9076 = vcombine.low %v6346, %v6348
        %v9077 = vcombine.low %v6387, %v6389
        %v9078 = vcombine.low %v6428, %v6430
        %v9080 = vunpack.c.l.s4 1966171168
        %v9081 = vunpack.c.0.s8 %v9080
        %v9082 = vlaneseq
        %v9083 = vshrl.u32 %v9082, 7
        %v9084 = vsub.s32 %v9081, %v9083
        %v9085 = vrot.slane %v9075, %v9084
        %v9087 = vunpack.c.l.s4 1966171168
        %v9088 = vunpack.c.0.s8 %v9087
        %v9089 = vlaneseq
        %v9090 = vshrl.u32 %v9089, 7
        %v9091 = vsub.s32 %v9088, %v9090
        %v9092 = vrot.slane %v9076, %v9091
        %v9094 = vunpack.c.l.s4 1966171168
        %v9095 = vunpack.c.0.s8 %v9094
        %v9096 = vlaneseq
        %v9097 = vshrl.u32 %v9096, 7
        %v9098 = vsub.s32 %v9095, %v9097
        %v9099 = vrot.slane %v9077, %v9098
        %v9101 = vunpack.c.l.s4 1966171168
        %v9102 = vunpack.c.0.s8 %v9101
        %v9103 = vlaneseq
        %v9104 = vshrl.u32 %v9103, 7
        %v9105 = vsub.s32 %v9102, %v9104
        %v9106 = vrot.slane %v9078, %v9105
        %v9107 = vcombine.low %v9085, %v9092
        %v9108 = vcombine.low %v9099, %v9106
        %v9110 = vunpack.c.l.s4 1966171168
        %v9111 = vunpack.c.0.s8 %v9110
        %v9112 = vlaneseq
        %v9113 = vshrl.u32 %v9112, 7
        %v9114 = vsub.s32 %v9111, %v9113
        %v9115 = vrot.slane %v9107, %v9114
        %v9117 = vunpack.c.l.s4 1966171168
        %v9118 = vunpack.c.0.s8 %v9117
        %v9119 = vlaneseq
        %v9120 = vshrl.u32 %v9119, 7
        %v9121 = vsub.s32 %v9118, %v9120
        %v9122 = vrot.slane %v9108, %v9121
        %v9123 = vcombine.low %v9115, %v9122
        %v9124 = vcombine.low %v6469, %v6471
        %v9125 = vcombine.low %v6510, %v6512
        %v9126 = vcombine.low %v6551, %v6553
        %v9127 = vcombine.low %v6592, %v6594
        %v9129 = vunpack.c.l.s4 1966171168
        %v9130 = vunpack.c.0.s8 %v9129
        %v9131 = vlaneseq
        %v9132 = vshrl.u32 %v9131, 7
        %v9133 = vsub.s32 %v9130, %v9132
        %v9134 = vrot.slane %v9124, %v9133
        %v9136 = vunpack.c.l.s4 1966171168
        %v9137 = vunpack.c.0.s8 %v9136
        %v9138 = vlaneseq
        %v9139 = vshrl.u32 %v9138, 7
        %v9140 = vsub.s32 %v9137, %v9139
        %v9141 = vrot.slane %v9125, %v9140
        %v9143 = vunpack.c.l.s4 1966171168
        %v9144 = vunpack.c.0.s8 %v9143
        %v9145 = vlaneseq
        %v9146 = vshrl.u32 %v9145, 7
        %v9147 = vsub.s32 %v9144, %v9146
        %v9148 = vrot.slane %v9126, %v9147
        %v9150 = vunpack.c.l.s4 1966171168
        %v9151 = vunpack.c.0.s8 %v9150
        %v9152 = vlaneseq
        %v9153 = vshrl.u32 %v9152, 7
        %v9154 = vsub.s32 %v9151, %v9153
        %v9155 = vrot.slane %v9127, %v9154
        %v9156 = vcombine.low %v9134, %v9141
        %v9157 = vcombine.low %v9148, %v9155
        %v9159 = vunpack.c.l.s4 1966171168
        %v9160 = vunpack.c.0.s8 %v9159
        %v9161 = vlaneseq
        %v9162 = vshrl.u32 %v9161, 7
        %v9163 = vsub.s32 %v9160, %v9162
        %v9164 = vrot.slane %v9156, %v9163
        %v9166 = vunpack.c.l.s4 1966171168
        %v9167 = vunpack.c.0.s8 %v9166
        %v9168 = vlaneseq
        %v9169 = vshrl.u32 %v9168, 7
        %v9170 = vsub.s32 %v9167, %v9169
        %v9171 = vrot.slane %v9157, %v9170
        %v9172 = vcombine.low %v9164, %v9171
        %v9173 = vcombine.low %v6633, %v6635
        %v9174 = vcombine.low %v6674, %v6676
        %v9175 = vcombine.low %v6715, %v6717
        %v9176 = vcombine.low %v6756, %v6758
        %v9178 = vunpack.c.l.s4 1966171168
        %v9179 = vunpack.c.0.s8 %v9178
        %v9180 = vlaneseq
        %v9181 = vshrl.u32 %v9180, 7
        %v9182 = vsub.s32 %v9179, %v9181
        %v9183 = vrot.slane %v9173, %v9182
        %v9185 = vunpack.c.l.s4 1966171168
        %v9186 = vunpack.c.0.s8 %v9185
        %v9187 = vlaneseq
        %v9188 = vshrl.u32 %v9187, 7
        %v9189 = vsub.s32 %v9186, %v9188
        %v9190 = vrot.slane %v9174, %v9189
        %v9192 = vunpack.c.l.s4 1966171168
        %v9193 = vunpack.c.0.s8 %v9192
        %v9194 = vlaneseq
        %v9195 = vshrl.u32 %v9194, 7
        %v9196 = vsub.s32 %v9193, %v9195
        %v9197 = vrot.slane %v9175, %v9196
        %v9199 = vunpack.c.l.s4 1966171168
        %v9200 = vunpack.c.0.s8 %v9199
        %v9201 = vlaneseq
        %v9202 = vshrl.u32 %v9201, 7
        %v9203 = vsub.s32 %v9200, %v9202
        %v9204 = vrot.slane %v9176, %v9203
        %v9205 = vcombine.low %v9183, %v9190
        %v9206 = vcombine.low %v9197, %v9204
        %v9208 = vunpack.c.l.s4 1966171168
        %v9209 = vunpack.c.0.s8 %v9208
        %v9210 = vlaneseq
        %v9211 = vshrl.u32 %v9210, 7
        %v9212 = vsub.s32 %v9209, %v9211
        %v9213 = vrot.slane %v9205, %v9212
        %v9215 = vunpack.c.l.s4 1966171168
        %v9216 = vunpack.c.0.s8 %v9215
        %v9217 = vlaneseq
        %v9218 = vshrl.u32 %v9217, 7
        %v9219 = vsub.s32 %v9216, %v9218
        %v9220 = vrot.slane %v9206, %v9219
        %v9221 = vcombine.low %v9213, %v9220
        %v9222 = vcombine.low %v6797, %v6799
        %v9223 = vcombine.low %v6838, %v6840
        %v9224 = vcombine.low %v6879, %v6881
        %v9225 = vcombine.low %v6920, %v6922
        %v9227 = vunpack.c.l.s4 1966171168
        %v9228 = vunpack.c.0.s8 %v9227
        %v9229 = vlaneseq
        %v9230 = vshrl.u32 %v9229, 7
        %v9231 = vsub.s32 %v9228, %v9230
        %v9232 = vrot.slane %v9222, %v9231
        %v9234 = vunpack.c.l.s4 1966171168
        %v9235 = vunpack.c.0.s8 %v9234
        %v9236 = vlaneseq
        %v9237 = vshrl.u32 %v9236, 7
        %v9238 = vsub.s32 %v9235, %v9237
        %v9239 = vrot.slane %v9223, %v9238
        %v9241 = vunpack.c.l.s4 1966171168
        %v9242 = vunpack.c.0.s8 %v9241
        %v9243 = vlaneseq
        %v9244 = vshrl.u32 %v9243, 7
        %v9245 = vsub.s32 %v9242, %v9244
        %v9246 = vrot.slane %v9224, %v9245
        %v9248 = vunpack.c.l.s4 1966171168
        %v9249 = vunpack.c.0.s8 %v9248
        %v9250 = vlaneseq
        %v9251 = vshrl.u32 %v9250, 7
        %v9252 = vsub.s32 %v9249, %v9251
        %v9253 = vrot.slane %v9225, %v9252
        %v9254 = vcombine.low %v9232, %v9239
        %v9255 = vcombine.low %v9246, %v9253
        %v9257 = vunpack.c.l.s4 1966171168
        %v9258 = vunpack.c.0.s8 %v9257
        %v9259 = vlaneseq
        %v9260 = vshrl.u32 %v9259, 7
        %v9261 = vsub.s32 %v9258, %v9260
        %v9262 = vrot.slane %v9254, %v9261
        %v9264 = vunpack.c.l.s4 1966171168
        %v9265 = vunpack.c.0.s8 %v9264
        %v9266 = vlaneseq
        %v9267 = vshrl.u32 %v9266, 7
        %v9268 = vsub.s32 %v9265, %v9267
        %v9269 = vrot.slane %v9255, %v9268
        %v9270 = vcombine.low %v9262, %v9269
        %v9271 = vcombine.low %v6961, %v6963
        %v9272 = vcombine.low %v7002, %v7004
        %v9273 = vcombine.low %v7043, %v7045
        %v9274 = vcombine.low %v7084, %v7086
        %v9276 = vunpack.c.l.s4 1966171168
        %v9277 = vunpack.c.0.s8 %v9276
        %v9278 = vlaneseq
        %v9279 = vshrl.u32 %v9278, 7
        %v9280 = vsub.s32 %v9277, %v9279
        %v9281 = vrot.slane %v9271, %v9280
        %v9283 = vunpack.c.l.s4 1966171168
        %v9284 = vunpack.c.0.s8 %v9283
        %v9285 = vlaneseq
        %v9286 = vshrl.u32 %v9285, 7
        %v9287 = vsub.s32 %v9284, %v9286
        %v9288 = vrot.slane %v9272, %v9287
        %v9290 = vunpack.c.l.s4 1966171168
        %v9291 = vunpack.c.0.s8 %v9290
        %v9292 = vlaneseq
        %v9293 = vshrl.u32 %v9292, 7
        %v9294 = vsub.s32 %v9291, %v9293
        %v9295 = vrot.slane %v9273, %v9294
        %v9297 = vunpack.c.l.s4 1966171168
        %v9298 = vunpack.c.0.s8 %v9297
        %v9299 = vlaneseq
        %v9300 = vshrl.u32 %v9299, 7
        %v9301 = vsub.s32 %v9298, %v9300
        %v9302 = vrot.slane %v9274, %v9301
        %v9303 = vcombine.low %v9281, %v9288
        %v9304 = vcombine.low %v9295, %v9302
        %v9306 = vunpack.c.l.s4 1966171168
        %v9307 = vunpack.c.0.s8 %v9306
        %v9308 = vlaneseq
        %v9309 = vshrl.u32 %v9308, 7
        %v9310 = vsub.s32 %v9307, %v9309
        %v9311 = vrot.slane %v9303, %v9310
        %v9313 = vunpack.c.l.s4 1966171168
        %v9314 = vunpack.c.0.s8 %v9313
        %v9315 = vlaneseq
        %v9316 = vshrl.u32 %v9315, 7
        %v9317 = vsub.s32 %v9314, %v9316
        %v9318 = vrot.slane %v9304, %v9317
        %v9319 = vcombine.low %v9311, %v9318
        %v9320 = vcombine.low %v7125, %v7127
        %v9321 = vcombine.low %v7166, %v7168
        %v9322 = vcombine.low %v7207, %v7209
        %v9323 = vcombine.low %v7248, %v7250
        %v9325 = vunpack.c.l.s4 1966171168
        %v9326 = vunpack.c.0.s8 %v9325
        %v9327 = vlaneseq
        %v9328 = vshrl.u32 %v9327, 7
        %v9329 = vsub.s32 %v9326, %v9328
        %v9330 = vrot.slane %v9320, %v9329
        %v9332 = vunpack.c.l.s4 1966171168
        %v9333 = vunpack.c.0.s8 %v9332
        %v9334 = vlaneseq
        %v9335 = vshrl.u32 %v9334, 7
        %v9336 = vsub.s32 %v9333, %v9335
        %v9337 = vrot.slane %v9321, %v9336
        %v9339 = vunpack.c.l.s4 1966171168
        %v9340 = vunpack.c.0.s8 %v9339
        %v9341 = vlaneseq
        %v9342 = vshrl.u32 %v9341, 7
        %v9343 = vsub.s32 %v9340, %v9342
        %v9344 = vrot.slane %v9322, %v9343
        %v9346 = vunpack.c.l.s4 1966171168
        %v9347 = vunpack.c.0.s8 %v9346
        %v9348 = vlaneseq
        %v9349 = vshrl.u32 %v9348, 7
        %v9350 = vsub.s32 %v9347, %v9349
        %v9351 = vrot.slane %v9323, %v9350
        %v9352 = vcombine.low %v9330, %v9337
        %v9353 = vcombine.low %v9344, %v9351
        %v9355 = vunpack.c.l.s4 1966171168
        %v9356 = vunpack.c.0.s8 %v9355
        %v9357 = vlaneseq
        %v9358 = vshrl.u32 %v9357, 7
        %v9359 = vsub.s32 %v9356, %v9358
        %v9360 = vrot.slane %v9352, %v9359
        %v9362 = vunpack.c.l.s4 1966171168
        %v9363 = vunpack.c.0.s8 %v9362
        %v9364 = vlaneseq
        %v9365 = vshrl.u32 %v9364, 7
        %v9366 = vsub.s32 %v9363, %v9365
        %v9367 = vrot.slane %v9353, %v9366
        %v9368 = vcombine.low %v9360, %v9367
        %v9369 = vcombine.low %v7289, %v7291
        %v9370 = vcombine.low %v7330, %v7332
        %v9371 = vcombine.low %v7371, %v7373
        %v9372 = vcombine.low %v7412, %v7414
        %v9374 = vunpack.c.l.s4 1966171168
        %v9375 = vunpack.c.0.s8 %v9374
        %v9376 = vlaneseq
        %v9377 = vshrl.u32 %v9376, 7
        %v9378 = vsub.s32 %v9375, %v9377
        %v9379 = vrot.slane %v9369, %v9378
        %v9381 = vunpack.c.l.s4 1966171168
        %v9382 = vunpack.c.0.s8 %v9381
        %v9383 = vlaneseq
        %v9384 = vshrl.u32 %v9383, 7
        %v9385 = vsub.s32 %v9382, %v9384
        %v9386 = vrot.slane %v9370, %v9385
        %v9388 = vunpack.c.l.s4 1966171168
        %v9389 = vunpack.c.0.s8 %v9388
        %v9390 = vlaneseq
        %v9391 = vshrl.u32 %v9390, 7
        %v9392 = vsub.s32 %v9389, %v9391
        %v9393 = vrot.slane %v9371, %v9392
        %v9395 = vunpack.c.l.s4 1966171168
        %v9396 = vunpack.c.0.s8 %v9395
        %v9397 = vlaneseq
        %v9398 = vshrl.u32 %v9397, 7
        %v9399 = vsub.s32 %v9396, %v9398
        %v9400 = vrot.slane %v9372, %v9399
        %v9401 = vcombine.low %v9379, %v9386
        %v9402 = vcombine.low %v9393, %v9400
        %v9404 = vunpack.c.l.s4 1966171168
        %v9405 = vunpack.c.0.s8 %v9404
        %v9406 = vlaneseq
        %v9407 = vshrl.u32 %v9406, 7
        %v9408 = vsub.s32 %v9405, %v9407
        %v9409 = vrot.slane %v9401, %v9408
        %v9411 = vunpack.c.l.s4 1966171168
        %v9412 = vunpack.c.0.s8 %v9411
        %v9413 = vlaneseq
        %v9414 = vshrl.u32 %v9413, 7
        %v9415 = vsub.s32 %v9412, %v9414
        %v9416 = vrot.slane %v9402, %v9415
        %v9417 = vcombine.low %v9409, %v9416
        %v9418 = vcombine.low %v7453, %v7455
        %v9419 = vcombine.low %v7494, %v7496
        %v9420 = vcombine.low %v7535, %v7537
        %v9421 = vcombine.low %v7576, %v7578
        %v9423 = vunpack.c.l.s4 1966171168
        %v9424 = vunpack.c.0.s8 %v9423
        %v9425 = vlaneseq
        %v9426 = vshrl.u32 %v9425, 7
        %v9427 = vsub.s32 %v9424, %v9426
        %v9428 = vrot.slane %v9418, %v9427
        %v9430 = vunpack.c.l.s4 1966171168
        %v9431 = vunpack.c.0.s8 %v9430
        %v9432 = vlaneseq
        %v9433 = vshrl.u32 %v9432, 7
        %v9434 = vsub.s32 %v9431, %v9433
        %v9435 = vrot.slane %v9419, %v9434
        %v9437 = vunpack.c.l.s4 1966171168
        %v9438 = vunpack.c.0.s8 %v9437
        %v9439 = vlaneseq
        %v9440 = vshrl.u32 %v9439, 7
        %v9441 = vsub.s32 %v9438, %v9440
        %v9442 = vrot.slane %v9420, %v9441
        %v9444 = vunpack.c.l.s4 1966171168
        %v9445 = vunpack.c.0.s8 %v9444
        %v9446 = vlaneseq
        %v9447 = vshrl.u32 %v9446, 7
        %v9448 = vsub.s32 %v9445, %v9447
        %v9449 = vrot.slane %v9421, %v9448
        %v9450 = vcombine.low %v9428, %v9435
        %v9451 = vcombine.low %v9442, %v9449
        %v9453 = vunpack.c.l.s4 1966171168
        %v9454 = vunpack.c.0.s8 %v9453
        %v9455 = vlaneseq
        %v9456 = vshrl.u32 %v9455, 7
        %v9457 = vsub.s32 %v9454, %v9456
        %v9458 = vrot.slane %v9450, %v9457
        %v9460 = vunpack.c.l.s4 1966171168
        %v9461 = vunpack.c.0.s8 %v9460
        %v9462 = vlaneseq
        %v9463 = vshrl.u32 %v9462, 7
        %v9464 = vsub.s32 %v9461, %v9463
        %v9465 = vrot.slane %v9451, %v9464
        %v9466 = vcombine.low %v9458, %v9465
        %v9467 = vcombine.low %v7617, %v7619
        %v9468 = vcombine.low %v7658, %v7660
        %v9469 = vcombine.low %v7699, %v7701
        %v9470 = vcombine.low %v7740, %v7742
        %v9472 = vunpack.c.l.s4 1966171168
        %v9473 = vunpack.c.0.s8 %v9472
        %v9474 = vlaneseq
        %v9475 = vshrl.u32 %v9474, 7
        %v9476 = vsub.s32 %v9473, %v9475
        %v9477 = vrot.slane %v9467, %v9476
        %v9479 = vunpack.c.l.s4 1966171168
        %v9480 = vunpack.c.0.s8 %v9479
        %v9481 = vlaneseq
        %v9482 = vshrl.u32 %v9481, 7
        %v9483 = vsub.s32 %v9480, %v9482
        %v9484 = vrot.slane %v9468, %v9483
        %v9486 = vunpack.c.l.s4 1966171168
        %v9487 = vunpack.c.0.s8 %v9486
        %v9488 = vlaneseq
        %v9489 = vshrl.u32 %v9488, 7
        %v9490 = vsub.s32 %v9487, %v9489
        %v9491 = vrot.slane %v9469, %v9490
        %v9493 = vunpack.c.l.s4 1966171168
        %v9494 = vunpack.c.0.s8 %v9493
        %v9495 = vlaneseq
        %v9496 = vshrl.u32 %v9495, 7
        %v9497 = vsub.s32 %v9494, %v9496
        %v9498 = vrot.slane %v9470, %v9497
        %v9499 = vcombine.low %v9477, %v9484
        %v9500 = vcombine.low %v9491, %v9498
        %v9502 = vunpack.c.l.s4 1966171168
        %v9503 = vunpack.c.0.s8 %v9502
        %v9504 = vlaneseq
        %v9505 = vshrl.u32 %v9504, 7
        %v9506 = vsub.s32 %v9503, %v9505
        %v9507 = vrot.slane %v9499, %v9506
        %v9509 = vunpack.c.l.s4 1966171168
        %v9510 = vunpack.c.0.s8 %v9509
        %v9511 = vlaneseq
        %v9512 = vshrl.u32 %v9511, 7
        %v9513 = vsub.s32 %v9510, %v9512
        %v9514 = vrot.slane %v9500, %v9513
        %v9515 = vcombine.low %v9507, %v9514
        %v9516 = vcombine.low %v7781, %v7783
        %v9517 = vcombine.low %v7822, %v7824
        %v9518 = vcombine.low %v7863, %v7865
        %v9519 = vcombine.low %v7904, %v7906
        %v9521 = vunpack.c.l.s4 1966171168
        %v9522 = vunpack.c.0.s8 %v9521
        %v9523 = vlaneseq
        %v9524 = vshrl.u32 %v9523, 7
        %v9525 = vsub.s32 %v9522, %v9524
        %v9526 = vrot.slane %v9516, %v9525
        %v9528 = vunpack.c.l.s4 1966171168
        %v9529 = vunpack.c.0.s8 %v9528
        %v9530 = vlaneseq
        %v9531 = vshrl.u32 %v9530, 7
        %v9532 = vsub.s32 %v9529, %v9531
        %v9533 = vrot.slane %v9517, %v9532
        %v9535 = vunpack.c.l.s4 1966171168
        %v9536 = vunpack.c.0.s8 %v9535
        %v9537 = vlaneseq
        %v9538 = vshrl.u32 %v9537, 7
        %v9539 = vsub.s32 %v9536, %v9538
        %v9540 = vrot.slane %v9518, %v9539
        %v9542 = vunpack.c.l.s4 1966171168
        %v9543 = vunpack.c.0.s8 %v9542
        %v9544 = vlaneseq
        %v9545 = vshrl.u32 %v9544, 7
        %v9546 = vsub.s32 %v9543, %v9545
        %v9547 = vrot.slane %v9519, %v9546
        %v9548 = vcombine.low %v9526, %v9533
        %v9549 = vcombine.low %v9540, %v9547
        %v9551 = vunpack.c.l.s4 1966171168
        %v9552 = vunpack.c.0.s8 %v9551
        %v9553 = vlaneseq
        %v9554 = vshrl.u32 %v9553, 7
        %v9555 = vsub.s32 %v9552, %v9554
        %v9556 = vrot.slane %v9548, %v9555
        %v9558 = vunpack.c.l.s4 1966171168
        %v9559 = vunpack.c.0.s8 %v9558
        %v9560 = vlaneseq
        %v9561 = vshrl.u32 %v9560, 7
        %v9562 = vsub.s32 %v9559, %v9561
        %v9563 = vrot.slane %v9549, %v9562
        %v9564 = vcombine.low %v9556, %v9563
        %v9565 = vcombine.low %v7945, %v7947
        %v9566 = vcombine.low %v7986, %v7988
        %v9567 = vcombine.low %v8027, %v8029
        %v9568 = vcombine.low %v8068, %v8070
        %v9570 = vunpack.c.l.s4 1966171168
        %v9571 = vunpack.c.0.s8 %v9570
        %v9572 = vlaneseq
        %v9573 = vshrl.u32 %v9572, 7
        %v9574 = vsub.s32 %v9571, %v9573
        %v9575 = vrot.slane %v9565, %v9574
        %v9577 = vunpack.c.l.s4 1966171168
        %v9578 = vunpack.c.0.s8 %v9577
        %v9579 = vlaneseq
        %v9580 = vshrl.u32 %v9579, 7
        %v9581 = vsub.s32 %v9578, %v9580
        %v9582 = vrot.slane %v9566, %v9581
        %v9584 = vunpack.c.l.s4 1966171168
        %v9585 = vunpack.c.0.s8 %v9584
        %v9586 = vlaneseq
        %v9587 = vshrl.u32 %v9586, 7
        %v9588 = vsub.s32 %v9585, %v9587
        %v9589 = vrot.slane %v9567, %v9588
        %v9591 = vunpack.c.l.s4 1966171168
        %v9592 = vunpack.c.0.s8 %v9591
        %v9593 = vlaneseq
        %v9594 = vshrl.u32 %v9593, 7
        %v9595 = vsub.s32 %v9592, %v9594
        %v9596 = vrot.slane %v9568, %v9595
        %v9597 = vcombine.low %v9575, %v9582
        %v9598 = vcombine.low %v9589, %v9596
        %v9600 = vunpack.c.l.s4 1966171168
        %v9601 = vunpack.c.0.s8 %v9600
        %v9602 = vlaneseq
        %v9603 = vshrl.u32 %v9602, 7
        %v9604 = vsub.s32 %v9601, %v9603
        %v9605 = vrot.slane %v9597, %v9604
        %v9607 = vunpack.c.l.s4 1966171168
        %v9608 = vunpack.c.0.s8 %v9607
        %v9609 = vlaneseq
        %v9610 = vshrl.u32 %v9609, 7
        %v9611 = vsub.s32 %v9608, %v9610
        %v9612 = vrot.slane %v9598, %v9611
        %v9613 = vcombine.low %v9605, %v9612
        %v9614 = vcombine.low %v8109, %v8111
        %v9615 = vcombine.low %v8150, %v8152
        %v9616 = vcombine.low %v8191, %v8193
        %v9617 = vcombine.low %v8232, %v8234
        %v9619 = vunpack.c.l.s4 1966171168
        %v9620 = vunpack.c.0.s8 %v9619
        %v9621 = vlaneseq
        %v9622 = vshrl.u32 %v9621, 7
        %v9623 = vsub.s32 %v9620, %v9622
        %v9624 = vrot.slane %v9614, %v9623
        %v9626 = vunpack.c.l.s4 1966171168
        %v9627 = vunpack.c.0.s8 %v9626
        %v9628 = vlaneseq
        %v9629 = vshrl.u32 %v9628, 7
        %v9630 = vsub.s32 %v9627, %v9629
        %v9631 = vrot.slane %v9615, %v9630
        %v9633 = vunpack.c.l.s4 1966171168
        %v9634 = vunpack.c.0.s8 %v9633
        %v9635 = vlaneseq
        %v9636 = vshrl.u32 %v9635, 7
        %v9637 = vsub.s32 %v9634, %v9636
        %v9638 = vrot.slane %v9616, %v9637
        %v9640 = vunpack.c.l.s4 1966171168
        %v9641 = vunpack.c.0.s8 %v9640
        %v9642 = vlaneseq
        %v9643 = vshrl.u32 %v9642, 7
        %v9644 = vsub.s32 %v9641, %v9643
        %v9645 = vrot.slane %v9617, %v9644
        %v9646 = vcombine.low %v9624, %v9631
        %v9647 = vcombine.low %v9638, %v9645
        %v9649 = vunpack.c.l.s4 1966171168
        %v9650 = vunpack.c.0.s8 %v9649
        %v9651 = vlaneseq
        %v9652 = vshrl.u32 %v9651, 7
        %v9653 = vsub.s32 %v9650, %v9652
        %v9654 = vrot.slane %v9646, %v9653
        %v9656 = vunpack.c.l.s4 1966171168
        %v9657 = vunpack.c.0.s8 %v9656
        %v9658 = vlaneseq
        %v9659 = vshrl.u32 %v9658, 7
        %v9660 = vsub.s32 %v9657, %v9659
        %v9661 = vrot.slane %v9647, %v9660
        %v9662 = vcombine.low %v9654, %v9661
        %9688 = vst [vmem:[%s367] sm:$0xff] %v8486
        %9689 = vst [vmem:[%s367 + $0x8] sm:$0xff] %v8535
        %9690 = vst [vmem:[%s367 + $0x10] sm:$0xff] %v8584
        %9691 = vst [vmem:[%s367 + $0x18] sm:$0xff] %v8633
        %9692 = vst [vmem:[%s367 + $0x20] sm:$0xff] %v8682
        %9693 = vst [vmem:[%s367 + $0x28] sm:$0xff] %v8731
        %9694 = vst [vmem:[%s367 + $0x30] sm:$0xff] %v8780
        %9695 = vst [vmem:[%s367 + $0x38] sm:$0xff] %v8829
        %9696 = vst [vmem:[%s367 + $0x40] sm:$0xff] %v8878
        %9697 = vst [vmem:[%s367 + $0x48] sm:$0xff] %v8927
        %9698 = vst [vmem:[%s367 + $0x50] sm:$0xff] %v8976
        %9699 = vst [vmem:[%s367 + $0x58] sm:$0xff] %v9025
        %9700 = vst [vmem:[%s367 + $0x60] sm:$0xff] %v9074
        %9701 = vst [vmem:[%s367 + $0x68] sm:$0xff] %v9123
        %9702 = vst [vmem:[%s367 + $0x70] sm:$0xff] %v9172
        %9703 = vst [vmem:[%s367 + $0x78] sm:$0xff] %v9221
        %9704 = vst [vmem:[%s367 + $0x80] sm:$0xff] %v9270
        %9705 = vst [vmem:[%s367 + $0x88] sm:$0xff] %v9319
        %9706 = vst [vmem:[%s367 + $0x90] sm:$0xff] %v9368
        %9707 = vst [vmem:[%s367 + $0x98] sm:$0xff] %v9417
        %9708 = vst [vmem:[%s367 + $0xa0] sm:$0xff] %v9466
        %9709 = vst [vmem:[%s367 + $0xa8] sm:$0xff] %v9515
        %9710 = vst [vmem:[%s367 + $0xb0] sm:$0xff] %v9564
        %9711 = vst [vmem:[%s367 + $0xb8] sm:$0xff] %v9613
        %9712 = vst [vmem:[%s367 + $0xc0] sm:$0xff] %v9662
        %s9713 = smul.u32 200, %s21
        %p9714 = scmp.lt.s32.totalorder %s9713, 1599
        %s9715 = scalar_select %p9714, %s9713, 1599
        %s9716 = scalar_lea.vmem %s7, %s9715
        // Predicated region
        $region69: #{cnn_hyper_forward.1} parent=47 // pred_check
          %p9717 = pneg %p196
        $region70: #{cnn_hyper_forward.1} parent=47 // pred_check_branch
          %9719 = sbr.rel (%p9717) target = $region72
        $region71: #{cnn_hyper_forward.1} parent=47 // pred_region
          %s9720 = smul.u32 200, %s21
        $region72: #{cnn_hyper_forward.1} parent=47 // pred_fallthru
          _
      $region48: #{cnn_hyper_forward.1} parent=5 // pred_fallthru
        _
      %p9721 = scmp.le.s32.totalorder 2, %s16
      // Predicated region
      $region73: #{cnn_hyper_forward.1} parent=5 // pred_check
        %p9722 = pneg %p9721
      $region74: #{cnn_hyper_forward.1} parent=5 // pred_check_branch
        %9724 = sbr.rel (%p9722) target = $region76
      $region75: #{cnn_hyper_forward.1} parent=5 // pred_region
        %s9725 = ssub.s32 %s16, 2
        // Predicated region
        $region77: #{cnn_hyper_forward.1} parent=75 // pred_check
          %p9726 = pneg %p202
        $region78: #{cnn_hyper_forward.1} parent=75 // pred_check_branch
          %9728 = sbr.rel (%p9726) target = $region80
        $region79: #{cnn_hyper_forward.1} parent=75 // pred_region
          %s9729 = smul.u32 200, %s22
          %p9730 = scmp.lt.s32.totalorder %s9729, 1599
          %s9731 = scalar_select %p9730, %s9729, 1599
          %s9732 = scalar_lea.vmem %s7, %s9731
        $region80: #{cnn_hyper_forward.1} parent=75 // pred_fallthru
          _
      $region76: #{cnn_hyper_forward.1} parent=5 // pred_fallthru
        _
    $region6: #{cnn_hyper_forward.1} parent=1 // loop_footer
      %s20 = sadd.s32 1, %s16
    $region7: #{cnn_hyper_forward.1} parent=1 // loop_footer_branch
      %15 = sbr.rel target = $region3
    $region8: #{cnn_hyper_forward.1} parent=1 // loop_exit
      _
    %9733 = vsyncpa [#allocation3], 1
    %s9734 = scalar_lea.sflag [#allocation3], 1
    %9735 = vsyncpa %s9734, 1
    %9736 = vsyncpa [#allocation5], 1
    %9737 = vsyncpa [#allocation8], 1

</llo_original>
